<compile_context>
chip_gen: v7x
topology: tpu7x:2x2x1
jax: 0.10.0
libtpu: 0.0.40
codegen_flags: <defaults>
</compile_context>

<pallas_src>
import math
import functools

import jax
import jax.numpy as jnp
from jax.experimental import pallas as pl
from jax.experimental.pallas import tpu as pltpu

EPS = 1e-6
NEG_BIG = -1e9


# ---------------------------------------------------------------------------
# Single fused forward kernel: one grid step == one batch element.
# ---------------------------------------------------------------------------

def _fused_forward_kernel(
    src_ref, trg_ref, pe_ref, tmask_ref, smask_ref,
    wq_ref, bq_ref, wkv_ref, bkv_ref, wqkv_ref, bqkv_ref, wo_ref, bo_ref,
    w1_ref, b1_ref, w2_ref, b2_ref,
    ffn_g_ref, ffn_b_ref, sub_a_ref, sub_b_ref,
    genw_ref, genb_ref,
    out_ref,
    *, n_heads, n_layers, d_model, inv_sqrt_d, scale):

    f32 = jnp.float32
    D = d_model
    H = n_heads
    dk = D // H

    # Load shared weights once (constant index maps -> resident across grid steps).
    wq, bq = wq_ref[...], bq_ref[...]
    wkv, bkv = wkv_ref[...], bkv_ref[...]
    wqkv, bqkv = wqkv_ref[...], bqkv_ref[...]
    wo, bo = wo_ref[...], bo_ref[...]
    w1, b1 = w1_ref[...], b1_ref[...]
    w2, b2 = w2_ref[...], b2_ref[...]
    ffn_g, ffn_b = ffn_g_ref[...], ffn_b_ref[...]
    sub_a, sub_b = sub_a_ref[...], sub_b_ref[...]

    def ffn(x):
        # PositionWiseFeedForward: w2(relu(w1(nn.LayerNorm(x)))) ; biased variance.
        mean = jnp.mean(x, axis=-1, keepdims=True)
        var = jnp.mean((x - mean) ** 2, axis=-1, keepdims=True)
        xn = (x - mean) * jax.lax.rsqrt(var + EPS) * ffn_g + ffn_b
        h = jnp.maximum(jnp.dot(xn, w1, preferred_element_type=f32) + b1, 0.0)
        return jnp.dot(h, w2, preferred_element_type=f32) + b2

    def add_norm(x, y):
        # SublayerConnection: custom LN(x + y) with unbiased std (torch .std, N-1).
        z = x + y
        mean = jnp.mean(z, axis=-1, keepdims=True)
        var_unb = jnp.sum((z - mean) ** 2, axis=-1, keepdims=True) / (D - 1)
        std = jnp.sqrt(var_unb)
        return sub_a * (z - mean) / (std + EPS) + sub_b

    def split_heads(x):   # [S, D] -> [H, S, dk]; major-axis stack of static lane slices
        return jnp.stack([x[:, h * dk:(h + 1) * dk] for h in range(H)], axis=0)

    def merge_heads(x):   # [H, S, dk] -> [S, D]
        return jnp.concatenate([x[h] for h in range(H)], axis=-1)

    def attend(q3, k3, v3, keep_mask):
        # q3 [H,Sq,dk]; k3/v3 [H,Sk,dk]; keep_mask broadcastable to [H,Sq,Sk] (1=keep).
        sc = jnp.einsum('hqd,hkd->hqk', q3, k3, preferred_element_type=f32) * scale
        sc = jnp.where(keep_mask != 0.0, sc, NEG_BIG)    # masked_fill(mask==0, -1e9)
        sc = sc - jnp.max(sc, axis=-1, keepdims=True)
        p = jnp.exp(sc)
        p = p / jnp.sum(p, axis=-1, keepdims=True)       # exact division (ref parity)
        ctx = jnp.einsum('hqk,hkd->hqd', p, v3, preferred_element_type=f32)
        return jnp.dot(merge_heads(ctx), wo, preferred_element_type=f32) + bo

    # ---- Positional embedding on src only (dropout = identity) ----
    x = src_ref[...] * inv_sqrt_d + pe_ref[...]

    # ---- Encoder: reference feeds x (not the attention output) into the FFN ----
    for _ in range(n_layers):
        x = add_norm(x, ffn(x))
    memory = x

    # ---- L2R decoder (r2l branch is None in the reference forward) ----
    tmask = tmask_ref[...][None, :, :]       # [1, S_trg, S_trg]
    smask = smask_ref[...][None, :, :]       # [1, 1,     S_src]

    # Cross-attention K/V of `memory` hoisted out of the layer loop: all layers share
    # one deepcopied-at-init weight set, so these projections are identical per layer.
    kv_mem = jnp.dot(memory, wkv, preferred_element_type=f32) + bkv
    k_mem = split_heads(kv_mem[:, :D])
    v_mem = split_heads(kv_mem[:, D:])

    y = trg_ref[...]   # reference applies NO positional embedding / scaling to trg
    # TODO(synk): switch these static layer loops to lax.fori_loop once n_layers > ~4.
    for _ in range(n_layers):
        # masked self-attention: one fused [S,D]@[D,3D] QKV projection
        qkv = jnp.dot(y, wqkv, preferred_element_type=f32) + bqkv
        y = add_norm(y, attend(split_heads(qkv[:, :D]),
                               split_heads(qkv[:, D:2 * D]),
                               split_heads(qkv[:, 2 * D:]), tmask))
        # cross-attention against precomputed memory K/V
        q = jnp.dot(y, wq, preferred_element_type=f32) + bq
        y = add_norm(y, attend(split_heads(q), k_mem, v_mem, smask))
        # feed-forward
        y = add_norm(y, ffn(y))

    # ---- Generator: log_softmax(y @ W + b) over the (lane-padded) vocab ----
    logits = jnp.dot(y, genw_ref[...], preferred_element_type=f32) + genb_ref[...]
    m = jnp.max(logits, axis=-1, keepdims=True)
    lse = jnp.log(jnp.sum(jnp.exp(logits - m), axis=-1, keepdims=True)) + m
    out_ref[...] = (logits - lse).astype(out_ref.dtype)


# ---------------------------------------------------------------------------
# Forward wrapper: one pallas_call for the whole model.
# ---------------------------------------------------------------------------

def abd_transformer_forward(src, r2l_trg, trg, masks, params, n_heads, n_layers):
    src_mask, trg_mask, r2l_trg_mask, r2l_pad_mask = masks
    del r2l_trg, r2l_trg_mask, r2l_pad_mask   # unused in the reference L2R forward path
    p = params

    b, s_src, d = src.shape
    s_trg = trg.shape[1]
    d_ff = p["w1"].shape[1]
    vpad = p["gen_w_pad"].shape[1]
    vocab = p["vocab"]

    # Thin keep-masks (1 = keep, 0 = masked); masked_fill happens inside the kernel.
    tmask_f = trg_mask.astype(jnp.float32)         # [Bt, S_trg, S_trg]
    smask_f = src_mask.astype(jnp.float32)         # [Bs, 1,     S_src]
    bt, bs = tmask_f.shape[0], smask_f.shape[0]

    kern = functools.partial(
        _fused_forward_kernel,
        n_heads=n_heads, n_layers=n_layers, d_model=d,
        inv_sqrt_d=1.0 / math.sqrt(d),
        scale=1.0 / math.sqrt(d // n_heads))

    def batch_spec(s1, s2):
        return pl.BlockSpec((None, s1, s2), lambda i: (i, 0, 0))

    def full_spec(shape):
        zeros = (0,) * len(shape)
        return pl.BlockSpec(shape, lambda i: zeros)

    tmask_spec = pl.BlockSpec(
        (None, s_trg, s_trg),
        (lambda i: (i, 0, 0)) if bt == b else (lambda i: (0, 0, 0)))
    smask_spec = pl.BlockSpec(
        (None, 1, s_src),
        (lambda i: (i, 0, 0)) if bs == b else (lambda i: (0, 0, 0)))

    out = pl.pallas_call(
        kern,
        grid=(b,),
        in_specs=[
            batch_spec(s_src, d),                          # src
            batch_spec(s_trg, d),                          # trg
            full_spec((s_src, d)),                         # positional-encoding slice
            tmask_spec,                                    # trg keep-mask
            smask_spec,                                    # src keep-mask
            full_spec((d, d)), full_spec((1, d)),          # wq, bq  (cross-attn Q)
            full_spec((d, 2 * d)), full_spec((1, 2 * d)),  # wkv, bkv (memory K|V)
            full_spec((d, 3 * d)), full_spec((1, 3 * d)),  # wqkv, bqkv (self-attn QKV)
            full_spec((d, d)), full_spec((1, d)),          # wo, bo
            full_spec((d, d_ff)), full_spec((1, d_ff)),    # w1, b1
            full_spec((d_ff, d)), full_spec((1, d)),       # w2, b2
            full_spec((1, d)), full_spec((1, d)),          # ffn nn.LayerNorm gamma/beta
            full_spec((1, d)), full_spec((1, d)),          # sublayer custom LN a2/b2
            full_spec((d, vpad)), full_spec((1, vpad)),    # generator (lane-padded)
        ],
        out_specs=pl.BlockSpec((None, s_trg, vpad), lambda i: (i, 0, 0)),
        out_shape=jax.ShapeDtypeStruct((b, s_trg, vpad), jnp.float32),
        compiler_params=pltpu.CompilerParams(
            dimension_semantics=("parallel",)),            # batch across TCs on v7x
    )(src, trg, p["pe"][:s_src, :], tmask_f, smask_f,
      p["wq"], p["bq"], p["wkv"], p["bkv"], p["wqkv"], p["bqkv"], p["wo"], p["bo"],
      p["w1"], p["b1"], p["w2"], p["b2"],
      p["ffn_ln_g"], p["ffn_ln_b"], p["subln_a"], p["subln_b"],
      p["gen_w_pad"], p["gen_b_pad"])

    return out[:, :, :vocab]   # drop lane-padding columns


# ---------------------------------------------------------------------------
# Deterministic parameter construction (single shared set: deepcopy-at-init
# in the reference makes every layer's params identical).
# ---------------------------------------------------------------------------

def make_params(key, d_model, d_ff, vocab_size):
    keys = jax.random.split(key, 8)

    def lin(k, fan_in, fan_out):
        bound = 1.0 / math.sqrt(fan_in)   # nn.Linear default init range
        kw, kb = jax.random.split(k)
        w = jax.random.uniform(kw, (fan_in, fan_out), jnp.float32, -bound, bound)
        b = jax.random.uniform(kb, (1, fan_out), jnp.float32, -bound, bound)
        return w, b

    p = {}
    p["wq"], p["bq"] = lin(keys[0], d_model, d_model)
    wk, bk = lin(keys[1], d_model, d_model)
    wv, bv = lin(keys[2], d_model, d_model)
    p["wkv"] = jnp.concatenate([wk, wv], axis=1)               # fused K|V  [D, 2D]
    p["bkv"] = jnp.concatenate([bk, bv], axis=1)
    p["wqkv"] = jnp.concatenate([p["wq"], wk, wv], axis=1)     # fused Q|K|V [D, 3D]
    p["bqkv"] = jnp.concatenate([p["bq"], bk, bv], axis=1)
    p["wo"], p["bo"] = lin(keys[3], d_model, d_model)
    p["w1"], p["b1"] = lin(keys[4], d_model, d_ff)
    p["w2"], p["b2"] = lin(keys[5], d_ff, d_model)

    gw, gb = lin(keys[6], d_model, vocab_size)
    vpad = 128 * pl.cdiv(vocab_size, 128)             # lane-dense generator output
    p["vocab"] = vocab_size
    p["gen_w_pad"] = jnp.zeros((d_model, vpad), jnp.float32).at[:, :vocab_size].set(gw)
    # padded columns get bias -1e30 so exp() of them is exactly 0 in the log_softmax
    p["gen_b_pad"] = jnp.full((1, vpad), -1e30, jnp.float32).at[:, :vocab_size].set(gb)

    p["ffn_ln_g"] = jnp.ones((1, d_model), jnp.float32)
    p["ffn_ln_b"] = jnp.zeros((1, d_model), jnp.float32)
    p["subln_a"] = jnp.ones((1, d_model), jnp.float32)
    p["subln_b"] = jnp.zeros((1, d_model), jnp.float32)

    # sinusoidal table; max_seq_len == vocab.n_vocabs in the reference ctor,
    # and the reference (quirkily) uses pos / div_term — reproduced literally.
    pos = jnp.arange(vocab_size, dtype=jnp.float32)[:, None]
    div = jnp.exp(jnp.arange(0, d_model, 2, dtype=jnp.float32)
                  * -(math.log(10000.0) / d_model))
    pe = jnp.zeros((vocab_size, d_model), jnp.float32)
    pe = pe.at[:, 0::2].set(jnp.sin(pos / div))
    pe = pe.at[:, 1::2].set(jnp.cos(pos / div))
    p["pe"] = pe                                       # [max_seq, d_model]
    return p


if __name__ == "__main__":
    d_model, d_ff, n_heads, n_layers = 32, 64, 4, 2
    vocab_size = 50
    B, S_src, S_trg = 2, 8, 8

    key = jax.random.PRNGKey(0)
    kp, ks, kt = jax.random.split(key, 3)
    params = make_params(kp, d_model, d_ff, vocab_size)

    src = jax.random.normal(ks, (B, S_src, d_model), jnp.float32)
    trg = jax.random.normal(kt, (B, S_trg, d_model), jnp.float32)
    r2l_trg = jnp.zeros_like(trg)   # unused by the reference forward

    src_mask = jnp.ones((B, 1, S_src), jnp.float32)
    trg_mask = jnp.tril(jnp.ones((S_trg, S_trg), jnp.float32))[None, :, :]
    masks = (src_mask, trg_mask, None, None)

    out = abd_transformer_forward(src, r2l_trg, trg, masks, params, n_heads, n_layers)
    out = jax.block_until_ready(out)
    assert out.shape == (B, S_trg, vocab_size)
    assert bool(jnp.all(jnp.isfinite(out)))
    # log_softmax invariant: probabilities over the real vocab sum to 1
    assert bool(jnp.all(jnp.abs(jnp.sum(jnp.exp(out), axis=-1) - 1.0) < 1e-3))
    print("KERNEL_OK")
</pallas_src>

<mosaic_0001>
module attributes {stable_mosaic.version = 11 : i64} {
  func.func @_fused_forward_kernel(%arg0: i32, %arg1: memref<1x8x32xf32, #tpu.memory_space<vmem>>, %arg2: memref<1x8x32xf32, #tpu.memory_space<vmem>>, %arg3: memref<8x32xf32, #tpu.memory_space<vmem>>, %arg4: memref<1x8x8xf32, #tpu.memory_space<vmem>>, %arg5: memref<1x1x8xf32, #tpu.memory_space<vmem>>, %arg6: memref<32x32xf32, #tpu.memory_space<vmem>>, %arg7: memref<1x32xf32, #tpu.memory_space<vmem>>, %arg8: memref<32x64xf32, #tpu.memory_space<vmem>>, %arg9: memref<1x64xf32, #tpu.memory_space<vmem>>, %arg10: memref<32x96xf32, #tpu.memory_space<vmem>>, %arg11: memref<1x96xf32, #tpu.memory_space<vmem>>, %arg12: memref<32x32xf32, #tpu.memory_space<vmem>>, %arg13: memref<1x32xf32, #tpu.memory_space<vmem>>, %arg14: memref<32x64xf32, #tpu.memory_space<vmem>>, %arg15: memref<1x64xf32, #tpu.memory_space<vmem>>, %arg16: memref<64x32xf32, #tpu.memory_space<vmem>>, %arg17: memref<1x32xf32, #tpu.memory_space<vmem>>, %arg18: memref<1x32xf32, #tpu.memory_space<vmem>>, %arg19: memref<1x32xf32, #tpu.memory_space<vmem>>, %arg20: memref<1x32xf32, #tpu.memory_space<vmem>>, %arg21: memref<1x32xf32, #tpu.memory_space<vmem>>, %arg22: memref<32x128xf32, #tpu.memory_space<vmem>>, %arg23: memref<1x128xf32, #tpu.memory_space<vmem>>, %arg24: memref<1x8x128xf32, #tpu.memory_space<vmem>>) attributes {dimension_semantics = [#tpu.dimension_semantics<parallel>], iteration_bounds = array<i64: 2>, scalar_prefetch = 0 : i64, scratch_operands = 0 : i64, tpu.core_type = #tpu.core_type<tc>, window_params = [{transform_indices = @transform_0, window_bounds = array<i64: 1, 8, 32>}, {transform_indices = @transform_1, window_bounds = array<i64: 1, 8, 32>}, {pipeline_mode = #tpu.pipeline_mode<synchronous>, transform_indices = @transform_2, window_bounds = array<i64: 8, 32>}, {pipeline_mode = #tpu.pipeline_mode<synchronous>, transform_indices = @transform_3, window_bounds = array<i64: 1, 8, 8>}, {transform_indices = @transform_4, window_bounds = array<i64: 1, 1, 8>}, {pipeline_mode = #tpu.pipeline_mode<synchronous>, transform_indices = @transform_5, window_bounds = array<i64: 32, 32>}, {pipeline_mode = #tpu.pipeline_mode<synchronous>, transform_indices = @transform_6, window_bounds = array<i64: 1, 32>}, {pipeline_mode = #tpu.pipeline_mode<synchronous>, transform_indices = @transform_7, window_bounds = array<i64: 32, 64>}, {pipeline_mode = #tpu.pipeline_mode<synchronous>, transform_indices = @transform_8, window_bounds = array<i64: 1, 64>}, {pipeline_mode = #tpu.pipeline_mode<synchronous>, transform_indices = @transform_9, window_bounds = array<i64: 32, 96>}, {pipeline_mode = #tpu.pipeline_mode<synchronous>, transform_indices = @transform_10, window_bounds = array<i64: 1, 96>}, {pipeline_mode = #tpu.pipeline_mode<synchronous>, transform_indices = @transform_11, window_bounds = array<i64: 32, 32>}, {pipeline_mode = #tpu.pipeline_mode<synchronous>, transform_indices = @transform_12, window_bounds = array<i64: 1, 32>}, {pipeline_mode = #tpu.pipeline_mode<synchronous>, transform_indices = @transform_13, window_bounds = array<i64: 32, 64>}, {pipeline_mode = #tpu.pipeline_mode<synchronous>, transform_indices = @transform_14, window_bounds = array<i64: 1, 64>}, {pipeline_mode = #tpu.pipeline_mode<synchronous>, transform_indices = @transform_15, window_bounds = array<i64: 64, 32>}, {pipeline_mode = #tpu.pipeline_mode<synchronous>, transform_indices = @transform_16, window_bounds = array<i64: 1, 32>}, {pipeline_mode = #tpu.pipeline_mode<synchronous>, transform_indices = @transform_17, window_bounds = array<i64: 1, 32>}, {pipeline_mode = #tpu.pipeline_mode<synchronous>, transform_indices = @transform_18, window_bounds = array<i64: 1, 32>}, {pipeline_mode = #tpu.pipeline_mode<synchronous>, transform_indices = @transform_19, window_bounds = array<i64: 1, 32>}, {pipeline_mode = #tpu.pipeline_mode<synchronous>, transform_indices = @transform_20, window_bounds = array<i64: 1, 32>}, {pipeline_mode = #tpu.pipeline_mode<synchronous>, transform_indices = @transform_21, window_bounds = array<i64: 32, 128>}, {pipeline_mode = #tpu.pipeline_mode<synchronous>, transform_indices = @transform_22, window_bounds = array<i64: 1, 128>}, {transform_indices = @transform_23, window_bounds = array<i64: 1, 8, 128>}]} {
    %c0 = arith.constant 0 : index
    %c0_0 = arith.constant 0 : index
    %0 = vector.load %arg6[%c0, %c0_0] : memref<32x32xf32, #tpu.memory_space<vmem>>, vector<32x32xf32>
    %c0_1 = arith.constant 0 : index
    %c0_2 = arith.constant 0 : index
    %1 = vector.load %arg7[%c0_1, %c0_2] : memref<1x32xf32, #tpu.memory_space<vmem>>, vector<1x32xf32>
    %c0_3 = arith.constant 0 : index
    %c0_4 = arith.constant 0 : index
    %2 = vector.load %arg8[%c0_3, %c0_4] : memref<32x64xf32, #tpu.memory_space<vmem>>, vector<32x64xf32>
    %c0_5 = arith.constant 0 : index
    %c0_6 = arith.constant 0 : index
    %3 = vector.load %arg9[%c0_5, %c0_6] : memref<1x64xf32, #tpu.memory_space<vmem>>, vector<1x64xf32>
    %c0_7 = arith.constant 0 : index
    %c0_8 = arith.constant 0 : index
    %4 = vector.load %arg10[%c0_7, %c0_8] : memref<32x96xf32, #tpu.memory_space<vmem>>, vector<32x96xf32>
    %c0_9 = arith.constant 0 : index
    %c0_10 = arith.constant 0 : index
    %5 = vector.load %arg11[%c0_9, %c0_10] : memref<1x96xf32, #tpu.memory_space<vmem>>, vector<1x96xf32>
    %c0_11 = arith.constant 0 : index
    %c0_12 = arith.constant 0 : index
    %6 = vector.load %arg12[%c0_11, %c0_12] : memref<32x32xf32, #tpu.memory_space<vmem>>, vector<32x32xf32>
    %c0_13 = arith.constant 0 : index
    %c0_14 = arith.constant 0 : index
    %7 = vector.load %arg13[%c0_13, %c0_14] : memref<1x32xf32, #tpu.memory_space<vmem>>, vector<1x32xf32>
    %c0_15 = arith.constant 0 : index
    %c0_16 = arith.constant 0 : index
    %8 = vector.load %arg14[%c0_15, %c0_16] : memref<32x64xf32, #tpu.memory_space<vmem>>, vector<32x64xf32>
    %c0_17 = arith.constant 0 : index
    %c0_18 = arith.constant 0 : index
    %9 = vector.load %arg15[%c0_17, %c0_18] : memref<1x64xf32, #tpu.memory_space<vmem>>, vector<1x64xf32>
    %c0_19 = arith.constant 0 : index
    %c0_20 = arith.constant 0 : index
    %10 = vector.load %arg16[%c0_19, %c0_20] : memref<64x32xf32, #tpu.memory_space<vmem>>, vector<64x32xf32>
    %c0_21 = arith.constant 0 : index
    %c0_22 = arith.constant 0 : index
    %11 = vector.load %arg17[%c0_21, %c0_22] : memref<1x32xf32, #tpu.memory_space<vmem>>, vector<1x32xf32>
    %c0_23 = arith.constant 0 : index
    %c0_24 = arith.constant 0 : index
    %12 = vector.load %arg18[%c0_23, %c0_24] : memref<1x32xf32, #tpu.memory_space<vmem>>, vector<1x32xf32>
    %c0_25 = arith.constant 0 : index
    %c0_26 = arith.constant 0 : index
    %13 = vector.load %arg19[%c0_25, %c0_26] : memref<1x32xf32, #tpu.memory_space<vmem>>, vector<1x32xf32>
    %c0_27 = arith.constant 0 : index
    %c0_28 = arith.constant 0 : index
    %14 = vector.load %arg20[%c0_27, %c0_28] : memref<1x32xf32, #tpu.memory_space<vmem>>, vector<1x32xf32>
    %c0_29 = arith.constant 0 : index
    %c0_30 = arith.constant 0 : index
    %15 = vector.load %arg21[%c0_29, %c0_30] : memref<1x32xf32, #tpu.memory_space<vmem>>, vector<1x32xf32>
    %c0_31 = arith.constant 0 : index
    %c0_32 = arith.constant 0 : index
    %c0_33 = arith.constant 0 : index
    %16 = vector.load %arg1[%c0_31, %c0_32, %c0_33] : memref<1x8x32xf32, #tpu.memory_space<vmem>>, vector<1x8x32xf32>
    %17 = vector.shape_cast %16 : vector<1x8x32xf32> to vector<8x32xf32>
    %cst = arith.constant 0.176776692 : f32
    %18 = vector.broadcast %cst : f32 to vector<8x32xf32>
    %19 = arith.mulf %17, %18 : vector<8x32xf32>
    %c0_34 = arith.constant 0 : index
    %c0_35 = arith.constant 0 : index
    %20 = vector.load %arg3[%c0_34, %c0_35] : memref<8x32xf32, #tpu.memory_space<vmem>>, vector<8x32xf32>
    %21 = arith.addf %19, %20 : vector<8x32xf32>
    %cst_36 = arith.constant dense<0.000000e+00> : vector<8xf32>
    %22 = vector.multi_reduction <add>, %21, %cst_36 [1] : vector<8x32xf32> to vector<8xf32>
    %23 = vector.shape_cast %22 : vector<8xf32> to vector<8x1xf32>
    %cst_37 = arith.constant 3.200000e+01 : f32
    %24 = vector.broadcast %cst_37 : f32 to vector<8x1xf32>
    %25 = arith.divf %23, %24 : vector<8x1xf32>
    %26 = vector.broadcast %25 : vector<8x1xf32> to vector<8x32xf32>
    %27 = arith.subf %21, %26 : vector<8x32xf32>
    %28 = arith.mulf %27, %27 : vector<8x32xf32>
    %cst_38 = arith.constant dense<0.000000e+00> : vector<8xf32>
    %29 = vector.multi_reduction <add>, %28, %cst_38 [1] : vector<8x32xf32> to vector<8xf32>
    %30 = vector.shape_cast %29 : vector<8xf32> to vector<8x1xf32>
    %cst_39 = arith.constant 3.200000e+01 : f32
    %31 = vector.broadcast %cst_39 : f32 to vector<8x1xf32>
    %32 = arith.divf %30, %31 : vector<8x1xf32>
    %33 = vector.broadcast %25 : vector<8x1xf32> to vector<8x32xf32>
    %34 = arith.subf %21, %33 : vector<8x32xf32>
    %cst_40 = arith.constant 9.99999997E-7 : f32
    %35 = vector.broadcast %cst_40 : f32 to vector<8x1xf32>
    %36 = arith.addf %32, %35 : vector<8x1xf32>
    %37 = math.rsqrt %36 : vector<8x1xf32>
    %38 = vector.broadcast %37 : vector<8x1xf32> to vector<8x32xf32>
    %39 = arith.mulf %34, %38 : vector<8x32xf32>
    %40 = vector.broadcast %12 : vector<1x32xf32> to vector<8x32xf32>
    %41 = arith.mulf %39, %40 : vector<8x32xf32>
    %42 = vector.broadcast %13 : vector<1x32xf32> to vector<8x32xf32>
    %43 = arith.addf %41, %42 : vector<8x32xf32>
    %cst_41 = arith.constant dense<0.000000e+00> : vector<8x64xf32>
    %44 = tpu.matmul %43, %8, %cst_41 {dimension_numbers = #tpu.dot_dimension_numbers<[1], [0], [0], [1], [0, 0, 1, 1], [], []>} : vector<8x32xf32>, vector<32x64xf32>, vector<8x64xf32> -> vector<8x64xf32>
    %45 = vector.broadcast %9 : vector<1x64xf32> to vector<8x64xf32>
    %46 = arith.addf %44, %45 : vector<8x64xf32>
    %cst_42 = arith.constant 0.000000e+00 : f32
    %47 = vector.broadcast %cst_42 : f32 to vector<8x64xf32>
    %48 = arith.maximumf %46, %47 : vector<8x64xf32>
    %cst_43 = arith.constant dense<0.000000e+00> : vector<8x32xf32>
    %49 = tpu.matmul %48, %10, %cst_43 {dimension_numbers = #tpu.dot_dimension_numbers<[1], [0], [0], [1], [0, 0, 1, 1], [], []>} : vector<8x64xf32>, vector<64x32xf32>, vector<8x32xf32> -> vector<8x32xf32>
    %50 = vector.broadcast %11 : vector<1x32xf32> to vector<8x32xf32>
    %51 = arith.addf %49, %50 : vector<8x32xf32>
    %52 = arith.addf %21, %51 : vector<8x32xf32>
    %cst_44 = arith.constant dense<0.000000e+00> : vector<8xf32>
    %53 = vector.multi_reduction <add>, %52, %cst_44 [1] : vector<8x32xf32> to vector<8xf32>
    %54 = vector.shape_cast %53 : vector<8xf32> to vector<8x1xf32>
    %cst_45 = arith.constant 3.200000e+01 : f32
    %55 = vector.broadcast %cst_45 : f32 to vector<8x1xf32>
    %56 = arith.divf %54, %55 : vector<8x1xf32>
    %57 = vector.broadcast %56 : vector<8x1xf32> to vector<8x32xf32>
    %58 = arith.subf %52, %57 : vector<8x32xf32>
    %59 = arith.mulf %58, %58 : vector<8x32xf32>
    %cst_46 = arith.constant dense<0.000000e+00> : vector<8xf32>
    %60 = vector.multi_reduction <add>, %59, %cst_46 [1] : vector<8x32xf32> to vector<8xf32>
    %61 = vector.shape_cast %60 : vector<8xf32> to vector<8x1xf32>
    %cst_47 = arith.constant 3.100000e+01 : f32
    %62 = vector.broadcast %cst_47 : f32 to vector<8x1xf32>
    %63 = arith.divf %61, %62 : vector<8x1xf32>
    %64 = math.sqrt %63 : vector<8x1xf32>
    %65 = vector.broadcast %56 : vector<8x1xf32> to vector<8x32xf32>
    %66 = arith.subf %52, %65 : vector<8x32xf32>
    %67 = vector.broadcast %14 : vector<1x32xf32> to vector<8x32xf32>
    %68 = arith.mulf %67, %66 : vector<8x32xf32>
    %cst_48 = arith.constant 9.99999997E-7 : f32
    %69 = vector.broadcast %cst_48 : f32 to vector<8x1xf32>
    %70 = arith.addf %64, %69 : vector<8x1xf32>
    %71 = vector.broadcast %70 : vector<8x1xf32> to vector<8x32xf32>
    %72 = arith.divf %68, %71 : vector<8x32xf32>
    %73 = vector.broadcast %15 : vector<1x32xf32> to vector<8x32xf32>
    %74 = arith.addf %72, %73 : vector<8x32xf32>
    %cst_49 = arith.constant dense<0.000000e+00> : vector<8xf32>
    %75 = vector.multi_reduction <add>, %74, %cst_49 [1] : vector<8x32xf32> to vector<8xf32>
    %76 = vector.shape_cast %75 : vector<8xf32> to vector<8x1xf32>
    %cst_50 = arith.constant 3.200000e+01 : f32
    %77 = vector.broadcast %cst_50 : f32 to vector<8x1xf32>
    %78 = arith.divf %76, %77 : vector<8x1xf32>
    %79 = vector.broadcast %78 : vector<8x1xf32> to vector<8x32xf32>
    %80 = arith.subf %74, %79 : vector<8x32xf32>
    %81 = arith.mulf %80, %80 : vector<8x32xf32>
    %cst_51 = arith.constant dense<0.000000e+00> : vector<8xf32>
    %82 = vector.multi_reduction <add>, %81, %cst_51 [1] : vector<8x32xf32> to vector<8xf32>
    %83 = vector.shape_cast %82 : vector<8xf32> to vector<8x1xf32>
    %cst_52 = arith.constant 3.200000e+01 : f32
    %84 = vector.broadcast %cst_52 : f32 to vector<8x1xf32>
    %85 = arith.divf %83, %84 : vector<8x1xf32>
    %86 = vector.broadcast %78 : vector<8x1xf32> to vector<8x32xf32>
    %87 = arith.subf %74, %86 : vector<8x32xf32>
    %cst_53 = arith.constant 9.99999997E-7 : f32
    %88 = vector.broadcast %cst_53 : f32 to vector<8x1xf32>
    %89 = arith.addf %85, %88 : vector<8x1xf32>
    %90 = math.rsqrt %89 : vector<8x1xf32>
    %91 = vector.broadcast %90 : vector<8x1xf32> to vector<8x32xf32>
    %92 = arith.mulf %87, %91 : vector<8x32xf32>
    %93 = vector.broadcast %12 : vector<1x32xf32> to vector<8x32xf32>
    %94 = arith.mulf %92, %93 : vector<8x32xf32>
    %95 = vector.broadcast %13 : vector<1x32xf32> to vector<8x32xf32>
    %96 = arith.addf %94, %95 : vector<8x32xf32>
    %cst_54 = arith.constant dense<0.000000e+00> : vector<8x64xf32>
    %97 = tpu.matmul %96, %8, %cst_54 {dimension_numbers = #tpu.dot_dimension_numbers<[1], [0], [0], [1], [0, 0, 1, 1], [], []>} : vector<8x32xf32>, vector<32x64xf32>, vector<8x64xf32> -> vector<8x64xf32>
    %98 = vector.broadcast %9 : vector<1x64xf32> to vector<8x64xf32>
    %99 = arith.addf %97, %98 : vector<8x64xf32>
    %cst_55 = arith.constant 0.000000e+00 : f32
    %100 = vector.broadcast %cst_55 : f32 to vector<8x64xf32>
    %101 = arith.maximumf %99, %100 : vector<8x64xf32>
    %cst_56 = arith.constant dense<0.000000e+00> : vector<8x32xf32>
    %102 = tpu.matmul %101, %10, %cst_56 {dimension_numbers = #tpu.dot_dimension_numbers<[1], [0], [0], [1], [0, 0, 1, 1], [], []>} : vector<8x64xf32>, vector<64x32xf32>, vector<8x32xf32> -> vector<8x32xf32>
    %103 = vector.broadcast %11 : vector<1x32xf32> to vector<8x32xf32>
    %104 = arith.addf %102, %103 : vector<8x32xf32>
    %105 = arith.addf %74, %104 : vector<8x32xf32>
    %cst_57 = arith.constant dense<0.000000e+00> : vector<8xf32>
    %106 = vector.multi_reduction <add>, %105, %cst_57 [1] : vector<8x32xf32> to vector<8xf32>
    %107 = vector.shape_cast %106 : vector<8xf32> to vector<8x1xf32>
    %cst_58 = arith.constant 3.200000e+01 : f32
    %108 = vector.broadcast %cst_58 : f32 to vector<8x1xf32>
    %109 = arith.divf %107, %108 : vector<8x1xf32>
    %110 = vector.broadcast %109 : vector<8x1xf32> to vector<8x32xf32>
    %111 = arith.subf %105, %110 : vector<8x32xf32>
    %112 = arith.mulf %111, %111 : vector<8x32xf32>
    %cst_59 = arith.constant dense<0.000000e+00> : vector<8xf32>
    %113 = vector.multi_reduction <add>, %112, %cst_59 [1] : vector<8x32xf32> to vector<8xf32>
    %114 = vector.shape_cast %113 : vector<8xf32> to vector<8x1xf32>
    %cst_60 = arith.constant 3.100000e+01 : f32
    %115 = vector.broadcast %cst_60 : f32 to vector<8x1xf32>
    %116 = arith.divf %114, %115 : vector<8x1xf32>
    %117 = math.sqrt %116 : vector<8x1xf32>
    %118 = vector.broadcast %109 : vector<8x1xf32> to vector<8x32xf32>
    %119 = arith.subf %105, %118 : vector<8x32xf32>
    %120 = vector.broadcast %14 : vector<1x32xf32> to vector<8x32xf32>
    %121 = arith.mulf %120, %119 : vector<8x32xf32>
    %cst_61 = arith.constant 9.99999997E-7 : f32
    %122 = vector.broadcast %cst_61 : f32 to vector<8x1xf32>
    %123 = arith.addf %117, %122 : vector<8x1xf32>
    %124 = vector.broadcast %123 : vector<8x1xf32> to vector<8x32xf32>
    %125 = arith.divf %121, %124 : vector<8x32xf32>
    %126 = vector.broadcast %15 : vector<1x32xf32> to vector<8x32xf32>
    %127 = arith.addf %125, %126 : vector<8x32xf32>
    %c0_62 = arith.constant 0 : index
    %c0_63 = arith.constant 0 : index
    %c0_64 = arith.constant 0 : index
    %128 = vector.load %arg4[%c0_62, %c0_63, %c0_64] : memref<1x8x8xf32, #tpu.memory_space<vmem>>, vector<1x8x8xf32>
    %129 = vector.shape_cast %128 : vector<1x8x8xf32> to vector<8x8xf32>
    %130 = vector.shape_cast %129 : vector<8x8xf32> to vector<1x8x8xf32>
    %c0_65 = arith.constant 0 : index
    %c0_66 = arith.constant 0 : index
    %c0_67 = arith.constant 0 : index
    %131 = vector.load %arg5[%c0_65, %c0_66, %c0_67] : memref<1x1x8xf32, #tpu.memory_space<vmem>>, vector<1x1x8xf32>
    %132 = vector.shape_cast %131 : vector<1x1x8xf32> to vector<1x8xf32>
    %133 = vector.shape_cast %132 : vector<1x8xf32> to vector<1x1x8xf32>
    %cst_68 = arith.constant dense<0.000000e+00> : vector<8x64xf32>
    %134 = tpu.matmul %127, %2, %cst_68 {dimension_numbers = #tpu.dot_dimension_numbers<[1], [0], [0], [1], [0, 0, 1, 1], [], []>} : vector<8x32xf32>, vector<32x64xf32>, vector<8x64xf32> -> vector<8x64xf32>
    %135 = vector.broadcast %3 : vector<1x64xf32> to vector<8x64xf32>
    %136 = arith.addf %134, %135 : vector<8x64xf32>
    %137 = vector.extract_strided_slice %136 {offsets = [0, 0], sizes = [8, 32], strides = [1, 1]} : vector<8x64xf32> to vector<8x32xf32>
    %138 = vector.extract_strided_slice %137 {offsets = [0, 0], sizes = [8, 8], strides = [1, 1]} : vector<8x32xf32> to vector<8x8xf32>
    %139 = vector.extract_strided_slice %137 {offsets = [0, 8], sizes = [8, 8], strides = [1, 1]} : vector<8x32xf32> to vector<8x8xf32>
    %140 = vector.extract_strided_slice %137 {offsets = [0, 16], sizes = [8, 8], strides = [1, 1]} : vector<8x32xf32> to vector<8x8xf32>
    %141 = vector.extract_strided_slice %137 {offsets = [0, 24], sizes = [8, 8], strides = [1, 1]} : vector<8x32xf32> to vector<8x8xf32>
    %142 = vector.shape_cast %138 : vector<8x8xf32> to vector<1x8x8xf32>
    %143 = vector.shape_cast %139 : vector<8x8xf32> to vector<1x8x8xf32>
    %144 = vector.shape_cast %140 : vector<8x8xf32> to vector<1x8x8xf32>
    %145 = vector.shape_cast %141 : vector<8x8xf32> to vector<1x8x8xf32>
    %146 = tpu.concatenate %142, %143, %144, %145 in 0 : vector<1x8x8xf32>, vector<1x8x8xf32>, vector<1x8x8xf32>, vector<1x8x8xf32> -> vector<4x8x8xf32>
    %147 = vector.extract_strided_slice %136 {offsets = [0, 32], sizes = [8, 32], strides = [1, 1]} : vector<8x64xf32> to vector<8x32xf32>
    %148 = vector.extract_strided_slice %147 {offsets = [0, 0], sizes = [8, 8], strides = [1, 1]} : vector<8x32xf32> to vector<8x8xf32>
    %149 = vector.extract_strided_slice %147 {offsets = [0, 8], sizes = [8, 8], strides = [1, 1]} : vector<8x32xf32> to vector<8x8xf32>
    %150 = vector.extract_strided_slice %147 {offsets = [0, 16], sizes = [8, 8], strides = [1, 1]} : vector<8x32xf32> to vector<8x8xf32>
    %151 = vector.extract_strided_slice %147 {offsets = [0, 24], sizes = [8, 8], strides = [1, 1]} : vector<8x32xf32> to vector<8x8xf32>
    %152 = vector.shape_cast %148 : vector<8x8xf32> to vector<1x8x8xf32>
    %153 = vector.shape_cast %149 : vector<8x8xf32> to vector<1x8x8xf32>
    %154 = vector.shape_cast %150 : vector<8x8xf32> to vector<1x8x8xf32>
    %155 = vector.shape_cast %151 : vector<8x8xf32> to vector<1x8x8xf32>
    %156 = tpu.concatenate %152, %153, %154, %155 in 0 : vector<1x8x8xf32>, vector<1x8x8xf32>, vector<1x8x8xf32>, vector<1x8x8xf32> -> vector<4x8x8xf32>
    %c0_69 = arith.constant 0 : index
    %c0_70 = arith.constant 0 : index
    %c0_71 = arith.constant 0 : index
    %157 = vector.load %arg2[%c0_69, %c0_70, %c0_71] : memref<1x8x32xf32, #tpu.memory_space<vmem>>, vector<1x8x32xf32>
    %158 = vector.shape_cast %157 : vector<1x8x32xf32> to vector<8x32xf32>
    %cst_72 = arith.constant dense<0.000000e+00> : vector<8x96xf32>
    %159 = tpu.matmul %158, %4, %cst_72 {dimension_numbers = #tpu.dot_dimension_numbers<[1], [0], [0], [1], [0, 0, 1, 1], [], []>} : vector<8x32xf32>, vector<32x96xf32>, vector<8x96xf32> -> vector<8x96xf32>
    %160 = vector.broadcast %5 : vector<1x96xf32> to vector<8x96xf32>
    %161 = arith.addf %159, %160 : vector<8x96xf32>
    %162 = vector.extract_strided_slice %161 {offsets = [0, 0], sizes = [8, 32], strides = [1, 1]} : vector<8x96xf32> to vector<8x32xf32>
    %163 = vector.extract_strided_slice %162 {offsets = [0, 0], sizes = [8, 8], strides = [1, 1]} : vector<8x32xf32> to vector<8x8xf32>
    %164 = vector.extract_strided_slice %162 {offsets = [0, 8], sizes = [8, 8], strides = [1, 1]} : vector<8x32xf32> to vector<8x8xf32>
    %165 = vector.extract_strided_slice %162 {offsets = [0, 16], sizes = [8, 8], strides = [1, 1]} : vector<8x32xf32> to vector<8x8xf32>
    %166 = vector.extract_strided_slice %162 {offsets = [0, 24], sizes = [8, 8], strides = [1, 1]} : vector<8x32xf32> to vector<8x8xf32>
    %167 = vector.shape_cast %163 : vector<8x8xf32> to vector<1x8x8xf32>
    %168 = vector.shape_cast %164 : vector<8x8xf32> to vector<1x8x8xf32>
    %169 = vector.shape_cast %165 : vector<8x8xf32> to vector<1x8x8xf32>
    %170 = vector.shape_cast %166 : vector<8x8xf32> to vector<1x8x8xf32>
    %171 = tpu.concatenate %167, %168, %169, %170 in 0 : vector<1x8x8xf32>, vector<1x8x8xf32>, vector<1x8x8xf32>, vector<1x8x8xf32> -> vector<4x8x8xf32>
    %172 = vector.extract_strided_slice %161 {offsets = [0, 32], sizes = [8, 32], strides = [1, 1]} : vector<8x96xf32> to vector<8x32xf32>
    %173 = vector.extract_strided_slice %172 {offsets = [0, 0], sizes = [8, 8], strides = [1, 1]} : vector<8x32xf32> to vector<8x8xf32>
    %174 = vector.extract_strided_slice %172 {offsets = [0, 8], sizes = [8, 8], strides = [1, 1]} : vector<8x32xf32> to vector<8x8xf32>
    %175 = vector.extract_strided_slice %172 {offsets = [0, 16], sizes = [8, 8], strides = [1, 1]} : vector<8x32xf32> to vector<8x8xf32>
    %176 = vector.extract_strided_slice %172 {offsets = [0, 24], sizes = [8, 8], strides = [1, 1]} : vector<8x32xf32> to vector<8x8xf32>
    %177 = vector.shape_cast %173 : vector<8x8xf32> to vector<1x8x8xf32>
    %178 = vector.shape_cast %174 : vector<8x8xf32> to vector<1x8x8xf32>
    %179 = vector.shape_cast %175 : vector<8x8xf32> to vector<1x8x8xf32>
    %180 = vector.shape_cast %176 : vector<8x8xf32> to vector<1x8x8xf32>
    %181 = tpu.concatenate %177, %178, %179, %180 in 0 : vector<1x8x8xf32>, vector<1x8x8xf32>, vector<1x8x8xf32>, vector<1x8x8xf32> -> vector<4x8x8xf32>
    %182 = vector.extract_strided_slice %161 {offsets = [0, 64], sizes = [8, 32], strides = [1, 1]} : vector<8x96xf32> to vector<8x32xf32>
    %183 = vector.extract_strided_slice %182 {offsets = [0, 0], sizes = [8, 8], strides = [1, 1]} : vector<8x32xf32> to vector<8x8xf32>
    %184 = vector.extract_strided_slice %182 {offsets = [0, 8], sizes = [8, 8], strides = [1, 1]} : vector<8x32xf32> to vector<8x8xf32>
    %185 = vector.extract_strided_slice %182 {offsets = [0, 16], sizes = [8, 8], strides = [1, 1]} : vector<8x32xf32> to vector<8x8xf32>
    %186 = vector.extract_strided_slice %182 {offsets = [0, 24], sizes = [8, 8], strides = [1, 1]} : vector<8x32xf32> to vector<8x8xf32>
    %187 = vector.shape_cast %183 : vector<8x8xf32> to vector<1x8x8xf32>
    %188 = vector.shape_cast %184 : vector<8x8xf32> to vector<1x8x8xf32>
    %189 = vector.shape_cast %185 : vector<8x8xf32> to vector<1x8x8xf32>
    %190 = vector.shape_cast %186 : vector<8x8xf32> to vector<1x8x8xf32>
    %191 = tpu.concatenate %187, %188, %189, %190 in 0 : vector<1x8x8xf32>, vector<1x8x8xf32>, vector<1x8x8xf32>, vector<1x8x8xf32> -> vector<4x8x8xf32>
    "tpu.trace_start"() <{level = 10 : i32, message = "hqd,hkd->hqk"}> : () -> ()
    %cst_73 = arith.constant dense<0.000000e+00> : vector<4x8x8xf32>
    %192 = tpu.matmul %171, %181, %cst_73 {dimension_numbers = #tpu.dot_dimension_numbers<[2], [2], [1], [1], [0, 0, 0, 1, 1, 1], [0], [0]>} : vector<4x8x8xf32>, vector<4x8x8xf32>, vector<4x8x8xf32> -> vector<4x8x8xf32>
    "tpu.trace_stop"() : () -> ()
    %cst_74 = arith.constant 0.353553385 : f32
    %193 = vector.broadcast %cst_74 : f32 to vector<4x8x8xf32>
    %194 = arith.mulf %192, %193 : vector<4x8x8xf32>
    %cst_75 = arith.constant 0.000000e+00 : f32
    %195 = vector.broadcast %cst_75 : f32 to vector<1x8x8xf32>
    %196 = arith.cmpf one, %130, %195 : vector<1x8x8xf32>
    %cst_76 = arith.constant -1.000000e+09 : f32
    %197 = vector.shape_cast %196 : vector<1x8x8xi1> to vector<1x8x8xi1>
    %198 = vector.broadcast %197 : vector<1x8x8xi1> to vector<4x8x8xi1>
    %199 = vector.broadcast %cst_76 : f32 to vector<4x8x8xf32>
    %200 = arith.select %198, %194, %199 : vector<4x8x8xi1>, vector<4x8x8xf32>
    %cst_77 = arith.constant dense<0xFF800000> : vector<4x8xf32>
    %201 = vector.multi_reduction <maximumf>, %200, %cst_77 [2] : vector<4x8x8xf32> to vector<4x8xf32>
    %202 = vector.shape_cast %201 : vector<4x8xf32> to vector<4x8x1xf32>
    %203 = vector.broadcast %202 : vector<4x8x1xf32> to vector<4x8x8xf32>
    %204 = arith.subf %200, %203 : vector<4x8x8xf32>
    %205 = math.exp %204 : vector<4x8x8xf32>
    %cst_78 = arith.constant dense<0.000000e+00> : vector<4x8xf32>
    %206 = vector.multi_reduction <add>, %205, %cst_78 [2] : vector<4x8x8xf32> to vector<4x8xf32>
    %207 = vector.shape_cast %206 : vector<4x8xf32> to vector<4x8x1xf32>
    %208 = vector.broadcast %207 : vector<4x8x1xf32> to vector<4x8x8xf32>
    %209 = arith.divf %205, %208 : vector<4x8x8xf32>
    "tpu.trace_start"() <{level = 10 : i32, message = "hqk,hkd->hqd"}> : () -> ()
    %cst_79 = arith.constant dense<0.000000e+00> : vector<4x8x8xf32>
    %210 = tpu.matmul %209, %191, %cst_79 {dimension_numbers = #tpu.dot_dimension_numbers<[2], [1], [1], [2], [0, 0, 0, 1, 1, 2], [0], [0]>} : vector<4x8x8xf32>, vector<4x8x8xf32>, vector<4x8x8xf32> -> vector<4x8x8xf32>
    "tpu.trace_stop"() : () -> ()
    %211 = vector.extract_strided_slice %210 {offsets = [0, 0, 0], sizes = [1, 8, 8], strides = [1, 1, 1]} : vector<4x8x8xf32> to vector<1x8x8xf32>
    %212 = vector.shape_cast %211 : vector<1x8x8xf32> to vector<8x8xf32>
    %213 = vector.extract_strided_slice %210 {offsets = [1, 0, 0], sizes = [1, 8, 8], strides = [1, 1, 1]} : vector<4x8x8xf32> to vector<1x8x8xf32>
    %214 = vector.shape_cast %213 : vector<1x8x8xf32> to vector<8x8xf32>
    %215 = vector.extract_strided_slice %210 {offsets = [2, 0, 0], sizes = [1, 8, 8], strides = [1, 1, 1]} : vector<4x8x8xf32> to vector<1x8x8xf32>
    %216 = vector.shape_cast %215 : vector<1x8x8xf32> to vector<8x8xf32>
    %217 = vector.extract_strided_slice %210 {offsets = [3, 0, 0], sizes = [1, 8, 8], strides = [1, 1, 1]} : vector<4x8x8xf32> to vector<1x8x8xf32>
    %218 = vector.shape_cast %217 : vector<1x8x8xf32> to vector<8x8xf32>
    %219 = tpu.concatenate %212, %214, %216, %218 in 1 : vector<8x8xf32>, vector<8x8xf32>, vector<8x8xf32>, vector<8x8xf32> -> vector<8x32xf32>
    %cst_80 = arith.constant dense<0.000000e+00> : vector<8x32xf32>
    %220 = tpu.matmul %219, %6, %cst_80 {dimension_numbers = #tpu.dot_dimension_numbers<[1], [0], [0], [1], [0, 0, 1, 1], [], []>} : vector<8x32xf32>, vector<32x32xf32>, vector<8x32xf32> -> vector<8x32xf32>
    %221 = vector.broadcast %7 : vector<1x32xf32> to vector<8x32xf32>
    %222 = arith.addf %220, %221 : vector<8x32xf32>
    %223 = arith.addf %158, %222 : vector<8x32xf32>
    %cst_81 = arith.constant dense<0.000000e+00> : vector<8xf32>
    %224 = vector.multi_reduction <add>, %223, %cst_81 [1] : vector<8x32xf32> to vector<8xf32>
    %225 = vector.shape_cast %224 : vector<8xf32> to vector<8x1xf32>
    %cst_82 = arith.constant 3.200000e+01 : f32
    %226 = vector.broadcast %cst_82 : f32 to vector<8x1xf32>
    %227 = arith.divf %225, %226 : vector<8x1xf32>
    %228 = vector.broadcast %227 : vector<8x1xf32> to vector<8x32xf32>
    %229 = arith.subf %223, %228 : vector<8x32xf32>
    %230 = arith.mulf %229, %229 : vector<8x32xf32>
    %cst_83 = arith.constant dense<0.000000e+00> : vector<8xf32>
    %231 = vector.multi_reduction <add>, %230, %cst_83 [1] : vector<8x32xf32> to vector<8xf32>
    %232 = vector.shape_cast %231 : vector<8xf32> to vector<8x1xf32>
    %cst_84 = arith.constant 3.100000e+01 : f32
    %233 = vector.broadcast %cst_84 : f32 to vector<8x1xf32>
    %234 = arith.divf %232, %233 : vector<8x1xf32>
    %235 = math.sqrt %234 : vector<8x1xf32>
    %236 = vector.broadcast %227 : vector<8x1xf32> to vector<8x32xf32>
    %237 = arith.subf %223, %236 : vector<8x32xf32>
    %238 = vector.broadcast %14 : vector<1x32xf32> to vector<8x32xf32>
    %239 = arith.mulf %238, %237 : vector<8x32xf32>
    %cst_85 = arith.constant 9.99999997E-7 : f32
    %240 = vector.broadcast %cst_85 : f32 to vector<8x1xf32>
    %241 = arith.addf %235, %240 : vector<8x1xf32>
    %242 = vector.broadcast %241 : vector<8x1xf32> to vector<8x32xf32>
    %243 = arith.divf %239, %242 : vector<8x32xf32>
    %244 = vector.broadcast %15 : vector<1x32xf32> to vector<8x32xf32>
    %245 = arith.addf %243, %244 : vector<8x32xf32>
    %cst_86 = arith.constant dense<0.000000e+00> : vector<8x32xf32>
    %246 = tpu.matmul %245, %0, %cst_86 {dimension_numbers = #tpu.dot_dimension_numbers<[1], [0], [0], [1], [0, 0, 1, 1], [], []>} : vector<8x32xf32>, vector<32x32xf32>, vector<8x32xf32> -> vector<8x32xf32>
    %247 = vector.broadcast %1 : vector<1x32xf32> to vector<8x32xf32>
    %248 = arith.addf %246, %247 : vector<8x32xf32>
    %249 = vector.extract_strided_slice %248 {offsets = [0, 0], sizes = [8, 8], strides = [1, 1]} : vector<8x32xf32> to vector<8x8xf32>
    %250 = vector.extract_strided_slice %248 {offsets = [0, 8], sizes = [8, 8], strides = [1, 1]} : vector<8x32xf32> to vector<8x8xf32>
    %251 = vector.extract_strided_slice %248 {offsets = [0, 16], sizes = [8, 8], strides = [1, 1]} : vector<8x32xf32> to vector<8x8xf32>
    %252 = vector.extract_strided_slice %248 {offsets = [0, 24], sizes = [8, 8], strides = [1, 1]} : vector<8x32xf32> to vector<8x8xf32>
    %253 = vector.shape_cast %249 : vector<8x8xf32> to vector<1x8x8xf32>
    %254 = vector.shape_cast %250 : vector<8x8xf32> to vector<1x8x8xf32>
    %255 = vector.shape_cast %251 : vector<8x8xf32> to vector<1x8x8xf32>
    %256 = vector.shape_cast %252 : vector<8x8xf32> to vector<1x8x8xf32>
    %257 = tpu.concatenate %253, %254, %255, %256 in 0 : vector<1x8x8xf32>, vector<1x8x8xf32>, vector<1x8x8xf32>, vector<1x8x8xf32> -> vector<4x8x8xf32>
    "tpu.trace_start"() <{level = 10 : i32, message = "hqd,hkd->hqk"}> : () -> ()
    %cst_87 = arith.constant dense<0.000000e+00> : vector<4x8x8xf32>
    %258 = tpu.matmul %257, %146, %cst_87 {dimension_numbers = #tpu.dot_dimension_numbers<[2], [2], [1], [1], [0, 0, 0, 1, 1, 1], [0], [0]>} : vector<4x8x8xf32>, vector<4x8x8xf32>, vector<4x8x8xf32> -> vector<4x8x8xf32>
    "tpu.trace_stop"() : () -> ()
    %cst_88 = arith.constant 0.353553385 : f32
    %259 = vector.broadcast %cst_88 : f32 to vector<4x8x8xf32>
    %260 = arith.mulf %258, %259 : vector<4x8x8xf32>
    %cst_89 = arith.constant 0.000000e+00 : f32
    %261 = vector.broadcast %cst_89 : f32 to vector<1x1x8xf32>
    %262 = arith.cmpf one, %133, %261 : vector<1x1x8xf32>
    %cst_90 = arith.constant -1.000000e+09 : f32
    %263 = vector.shape_cast %262 : vector<1x1x8xi1> to vector<1x1x8xi1>
    %264 = vector.broadcast %263 : vector<1x1x8xi1> to vector<4x8x8xi1>
    %265 = vector.broadcast %cst_90 : f32 to vector<4x8x8xf32>
    %266 = arith.select %264, %260, %265 : vector<4x8x8xi1>, vector<4x8x8xf32>
    %cst_91 = arith.constant dense<0xFF800000> : vector<4x8xf32>
    %267 = vector.multi_reduction <maximumf>, %266, %cst_91 [2] : vector<4x8x8xf32> to vector<4x8xf32>
    %268 = vector.shape_cast %267 : vector<4x8xf32> to vector<4x8x1xf32>
    %269 = vector.broadcast %268 : vector<4x8x1xf32> to vector<4x8x8xf32>
    %270 = arith.subf %266, %269 : vector<4x8x8xf32>
    %271 = math.exp %270 : vector<4x8x8xf32>
    %cst_92 = arith.constant dense<0.000000e+00> : vector<4x8xf32>
    %272 = vector.multi_reduction <add>, %271, %cst_92 [2] : vector<4x8x8xf32> to vector<4x8xf32>
    %273 = vector.shape_cast %272 : vector<4x8xf32> to vector<4x8x1xf32>
    %274 = vector.broadcast %273 : vector<4x8x1xf32> to vector<4x8x8xf32>
    %275 = arith.divf %271, %274 : vector<4x8x8xf32>
    "tpu.trace_start"() <{level = 10 : i32, message = "hqk,hkd->hqd"}> : () -> ()
    %cst_93 = arith.constant dense<0.000000e+00> : vector<4x8x8xf32>
    %276 = tpu.matmul %275, %156, %cst_93 {dimension_numbers = #tpu.dot_dimension_numbers<[2], [1], [1], [2], [0, 0, 0, 1, 1, 2], [0], [0]>} : vector<4x8x8xf32>, vector<4x8x8xf32>, vector<4x8x8xf32> -> vector<4x8x8xf32>
    "tpu.trace_stop"() : () -> ()
    %277 = vector.extract_strided_slice %276 {offsets = [0, 0, 0], sizes = [1, 8, 8], strides = [1, 1, 1]} : vector<4x8x8xf32> to vector<1x8x8xf32>
    %278 = vector.shape_cast %277 : vector<1x8x8xf32> to vector<8x8xf32>
    %279 = vector.extract_strided_slice %276 {offsets = [1, 0, 0], sizes = [1, 8, 8], strides = [1, 1, 1]} : vector<4x8x8xf32> to vector<1x8x8xf32>
    %280 = vector.shape_cast %279 : vector<1x8x8xf32> to vector<8x8xf32>
    %281 = vector.extract_strided_slice %276 {offsets = [2, 0, 0], sizes = [1, 8, 8], strides = [1, 1, 1]} : vector<4x8x8xf32> to vector<1x8x8xf32>
    %282 = vector.shape_cast %281 : vector<1x8x8xf32> to vector<8x8xf32>
    %283 = vector.extract_strided_slice %276 {offsets = [3, 0, 0], sizes = [1, 8, 8], strides = [1, 1, 1]} : vector<4x8x8xf32> to vector<1x8x8xf32>
    %284 = vector.shape_cast %283 : vector<1x8x8xf32> to vector<8x8xf32>
    %285 = tpu.concatenate %278, %280, %282, %284 in 1 : vector<8x8xf32>, vector<8x8xf32>, vector<8x8xf32>, vector<8x8xf32> -> vector<8x32xf32>
    %cst_94 = arith.constant dense<0.000000e+00> : vector<8x32xf32>
    %286 = tpu.matmul %285, %6, %cst_94 {dimension_numbers = #tpu.dot_dimension_numbers<[1], [0], [0], [1], [0, 0, 1, 1], [], []>} : vector<8x32xf32>, vector<32x32xf32>, vector<8x32xf32> -> vector<8x32xf32>
    %287 = vector.broadcast %7 : vector<1x32xf32> to vector<8x32xf32>
    %288 = arith.addf %286, %287 : vector<8x32xf32>
    %289 = arith.addf %245, %288 : vector<8x32xf32>
    %cst_95 = arith.constant dense<0.000000e+00> : vector<8xf32>
    %290 = vector.multi_reduction <add>, %289, %cst_95 [1] : vector<8x32xf32> to vector<8xf32>
    %291 = vector.shape_cast %290 : vector<8xf32> to vector<8x1xf32>
    %cst_96 = arith.constant 3.200000e+01 : f32
    %292 = vector.broadcast %cst_96 : f32 to vector<8x1xf32>
    %293 = arith.divf %291, %292 : vector<8x1xf32>
    %294 = vector.broadcast %293 : vector<8x1xf32> to vector<8x32xf32>
    %295 = arith.subf %289, %294 : vector<8x32xf32>
    %296 = arith.mulf %295, %295 : vector<8x32xf32>
    %cst_97 = arith.constant dense<0.000000e+00> : vector<8xf32>
    %297 = vector.multi_reduction <add>, %296, %cst_97 [1] : vector<8x32xf32> to vector<8xf32>
    %298 = vector.shape_cast %297 : vector<8xf32> to vector<8x1xf32>
    %cst_98 = arith.constant 3.100000e+01 : f32
    %299 = vector.broadcast %cst_98 : f32 to vector<8x1xf32>
    %300 = arith.divf %298, %299 : vector<8x1xf32>
    %301 = math.sqrt %300 : vector<8x1xf32>
    %302 = vector.broadcast %293 : vector<8x1xf32> to vector<8x32xf32>
    %303 = arith.subf %289, %302 : vector<8x32xf32>
    %304 = vector.broadcast %14 : vector<1x32xf32> to vector<8x32xf32>
    %305 = arith.mulf %304, %303 : vector<8x32xf32>
    %cst_99 = arith.constant 9.99999997E-7 : f32
    %306 = vector.broadcast %cst_99 : f32 to vector<8x1xf32>
    %307 = arith.addf %301, %306 : vector<8x1xf32>
    %308 = vector.broadcast %307 : vector<8x1xf32> to vector<8x32xf32>
    %309 = arith.divf %305, %308 : vector<8x32xf32>
    %310 = vector.broadcast %15 : vector<1x32xf32> to vector<8x32xf32>
    %311 = arith.addf %309, %310 : vector<8x32xf32>
    %cst_100 = arith.constant dense<0.000000e+00> : vector<8xf32>
    %312 = vector.multi_reduction <add>, %311, %cst_100 [1] : vector<8x32xf32> to vector<8xf32>
    %313 = vector.shape_cast %312 : vector<8xf32> to vector<8x1xf32>
    %cst_101 = arith.constant 3.200000e+01 : f32
    %314 = vector.broadcast %cst_101 : f32 to vector<8x1xf32>
    %315 = arith.divf %313, %314 : vector<8x1xf32>
    %316 = vector.broadcast %315 : vector<8x1xf32> to vector<8x32xf32>
    %317 = arith.subf %311, %316 : vector<8x32xf32>
    %318 = arith.mulf %317, %317 : vector<8x32xf32>
    %cst_102 = arith.constant dense<0.000000e+00> : vector<8xf32>
    %319 = vector.multi_reduction <add>, %318, %cst_102 [1] : vector<8x32xf32> to vector<8xf32>
    %320 = vector.shape_cast %319 : vector<8xf32> to vector<8x1xf32>
    %cst_103 = arith.constant 3.200000e+01 : f32
    %321 = vector.broadcast %cst_103 : f32 to vector<8x1xf32>
    %322 = arith.divf %320, %321 : vector<8x1xf32>
    %323 = vector.broadcast %315 : vector<8x1xf32> to vector<8x32xf32>
    %324 = arith.subf %311, %323 : vector<8x32xf32>
    %cst_104 = arith.constant 9.99999997E-7 : f32
    %325 = vector.broadcast %cst_104 : f32 to vector<8x1xf32>
    %326 = arith.addf %322, %325 : vector<8x1xf32>
    %327 = math.rsqrt %326 : vector<8x1xf32>
    %328 = vector.broadcast %327 : vector<8x1xf32> to vector<8x32xf32>
    %329 = arith.mulf %324, %328 : vector<8x32xf32>
    %330 = vector.broadcast %12 : vector<1x32xf32> to vector<8x32xf32>
    %331 = arith.mulf %329, %330 : vector<8x32xf32>
    %332 = vector.broadcast %13 : vector<1x32xf32> to vector<8x32xf32>
    %333 = arith.addf %331, %332 : vector<8x32xf32>
    %cst_105 = arith.constant dense<0.000000e+00> : vector<8x64xf32>
    %334 = tpu.matmul %333, %8, %cst_105 {dimension_numbers = #tpu.dot_dimension_numbers<[1], [0], [0], [1], [0, 0, 1, 1], [], []>} : vector<8x32xf32>, vector<32x64xf32>, vector<8x64xf32> -> vector<8x64xf32>
    %335 = vector.broadcast %9 : vector<1x64xf32> to vector<8x64xf32>
    %336 = arith.addf %334, %335 : vector<8x64xf32>
    %cst_106 = arith.constant 0.000000e+00 : f32
    %337 = vector.broadcast %cst_106 : f32 to vector<8x64xf32>
    %338 = arith.maximumf %336, %337 : vector<8x64xf32>
    %cst_107 = arith.constant dense<0.000000e+00> : vector<8x32xf32>
    %339 = tpu.matmul %338, %10, %cst_107 {dimension_numbers = #tpu.dot_dimension_numbers<[1], [0], [0], [1], [0, 0, 1, 1], [], []>} : vector<8x64xf32>, vector<64x32xf32>, vector<8x32xf32> -> vector<8x32xf32>
    %340 = vector.broadcast %11 : vector<1x32xf32> to vector<8x32xf32>
    %341 = arith.addf %339, %340 : vector<8x32xf32>
    %342 = arith.addf %311, %341 : vector<8x32xf32>
    %cst_108 = arith.constant dense<0.000000e+00> : vector<8xf32>
    %343 = vector.multi_reduction <add>, %342, %cst_108 [1] : vector<8x32xf32> to vector<8xf32>
    %344 = vector.shape_cast %343 : vector<8xf32> to vector<8x1xf32>
    %cst_109 = arith.constant 3.200000e+01 : f32
    %345 = vector.broadcast %cst_109 : f32 to vector<8x1xf32>
    %346 = arith.divf %344, %345 : vector<8x1xf32>
    %347 = vector.broadcast %346 : vector<8x1xf32> to vector<8x32xf32>
    %348 = arith.subf %342, %347 : vector<8x32xf32>
    %349 = arith.mulf %348, %348 : vector<8x32xf32>
    %cst_110 = arith.constant dense<0.000000e+00> : vector<8xf32>
    %350 = vector.multi_reduction <add>, %349, %cst_110 [1] : vector<8x32xf32> to vector<8xf32>
    %351 = vector.shape_cast %350 : vector<8xf32> to vector<8x1xf32>
    %cst_111 = arith.constant 3.100000e+01 : f32
    %352 = vector.broadcast %cst_111 : f32 to vector<8x1xf32>
    %353 = arith.divf %351, %352 : vector<8x1xf32>
    %354 = math.sqrt %353 : vector<8x1xf32>
    %355 = vector.broadcast %346 : vector<8x1xf32> to vector<8x32xf32>
    %356 = arith.subf %342, %355 : vector<8x32xf32>
    %357 = vector.broadcast %14 : vector<1x32xf32> to vector<8x32xf32>
    %358 = arith.mulf %357, %356 : vector<8x32xf32>
    %cst_112 = arith.constant 9.99999997E-7 : f32
    %359 = vector.broadcast %cst_112 : f32 to vector<8x1xf32>
    %360 = arith.addf %354, %359 : vector<8x1xf32>
    %361 = vector.broadcast %360 : vector<8x1xf32> to vector<8x32xf32>
    %362 = arith.divf %358, %361 : vector<8x32xf32>
    %363 = vector.broadcast %15 : vector<1x32xf32> to vector<8x32xf32>
    %364 = arith.addf %362, %363 : vector<8x32xf32>
    %cst_113 = arith.constant dense<0.000000e+00> : vector<8x96xf32>
    %365 = tpu.matmul %364, %4, %cst_113 {dimension_numbers = #tpu.dot_dimension_numbers<[1], [0], [0], [1], [0, 0, 1, 1], [], []>} : vector<8x32xf32>, vector<32x96xf32>, vector<8x96xf32> -> vector<8x96xf32>
    %366 = vector.broadcast %5 : vector<1x96xf32> to vector<8x96xf32>
    %367 = arith.addf %365, %366 : vector<8x96xf32>
    %368 = vector.extract_strided_slice %367 {offsets = [0, 0], sizes = [8, 32], strides = [1, 1]} : vector<8x96xf32> to vector<8x32xf32>
    %369 = vector.extract_strided_slice %368 {offsets = [0, 0], sizes = [8, 8], strides = [1, 1]} : vector<8x32xf32> to vector<8x8xf32>
    %370 = vector.extract_strided_slice %368 {offsets = [0, 8], sizes = [8, 8], strides = [1, 1]} : vector<8x32xf32> to vector<8x8xf32>
    %371 = vector.extract_strided_slice %368 {offsets = [0, 16], sizes = [8, 8], strides = [1, 1]} : vector<8x32xf32> to vector<8x8xf32>
    %372 = vector.extract_strided_slice %368 {offsets = [0, 24], sizes = [8, 8], strides = [1, 1]} : vector<8x32xf32> to vector<8x8xf32>
    %373 = vector.shape_cast %369 : vector<8x8xf32> to vector<1x8x8xf32>
    %374 = vector.shape_cast %370 : vector<8x8xf32> to vector<1x8x8xf32>
    %375 = vector.shape_cast %371 : vector<8x8xf32> to vector<1x8x8xf32>
    %376 = vector.shape_cast %372 : vector<8x8xf32> to vector<1x8x8xf32>
    %377 = tpu.concatenate %373, %374, %375, %376 in 0 : vector<1x8x8xf32>, vector<1x8x8xf32>, vector<1x8x8xf32>, vector<1x8x8xf32> -> vector<4x8x8xf32>
    %378 = vector.extract_strided_slice %367 {offsets = [0, 32], sizes = [8, 32], strides = [1, 1]} : vector<8x96xf32> to vector<8x32xf32>
    %379 = vector.extract_strided_slice %378 {offsets = [0, 0], sizes = [8, 8], strides = [1, 1]} : vector<8x32xf32> to vector<8x8xf32>
    %380 = vector.extract_strided_slice %378 {offsets = [0, 8], sizes = [8, 8], strides = [1, 1]} : vector<8x32xf32> to vector<8x8xf32>
    %381 = vector.extract_strided_slice %378 {offsets = [0, 16], sizes = [8, 8], strides = [1, 1]} : vector<8x32xf32> to vector<8x8xf32>
    %382 = vector.extract_strided_slice %378 {offsets = [0, 24], sizes = [8, 8], strides = [1, 1]} : vector<8x32xf32> to vector<8x8xf32>
    %383 = vector.shape_cast %379 : vector<8x8xf32> to vector<1x8x8xf32>
    %384 = vector.shape_cast %380 : vector<8x8xf32> to vector<1x8x8xf32>
    %385 = vector.shape_cast %381 : vector<8x8xf32> to vector<1x8x8xf32>
    %386 = vector.shape_cast %382 : vector<8x8xf32> to vector<1x8x8xf32>
    %387 = tpu.concatenate %383, %384, %385, %386 in 0 : vector<1x8x8xf32>, vector<1x8x8xf32>, vector<1x8x8xf32>, vector<1x8x8xf32> -> vector<4x8x8xf32>
    %388 = vector.extract_strided_slice %367 {offsets = [0, 64], sizes = [8, 32], strides = [1, 1]} : vector<8x96xf32> to vector<8x32xf32>
    %389 = vector.extract_strided_slice %388 {offsets = [0, 0], sizes = [8, 8], strides = [1, 1]} : vector<8x32xf32> to vector<8x8xf32>
    %390 = vector.extract_strided_slice %388 {offsets = [0, 8], sizes = [8, 8], strides = [1, 1]} : vector<8x32xf32> to vector<8x8xf32>
    %391 = vector.extract_strided_slice %388 {offsets = [0, 16], sizes = [8, 8], strides = [1, 1]} : vector<8x32xf32> to vector<8x8xf32>
    %392 = vector.extract_strided_slice %388 {offsets = [0, 24], sizes = [8, 8], strides = [1, 1]} : vector<8x32xf32> to vector<8x8xf32>
    %393 = vector.shape_cast %389 : vector<8x8xf32> to vector<1x8x8xf32>
    %394 = vector.shape_cast %390 : vector<8x8xf32> to vector<1x8x8xf32>
    %395 = vector.shape_cast %391 : vector<8x8xf32> to vector<1x8x8xf32>
    %396 = vector.shape_cast %392 : vector<8x8xf32> to vector<1x8x8xf32>
    %397 = tpu.concatenate %393, %394, %395, %396 in 0 : vector<1x8x8xf32>, vector<1x8x8xf32>, vector<1x8x8xf32>, vector<1x8x8xf32> -> vector<4x8x8xf32>
    "tpu.trace_start"() <{level = 10 : i32, message = "hqd,hkd->hqk"}> : () -> ()
    %cst_114 = arith.constant dense<0.000000e+00> : vector<4x8x8xf32>
    %398 = tpu.matmul %377, %387, %cst_114 {dimension_numbers = #tpu.dot_dimension_numbers<[2], [2], [1], [1], [0, 0, 0, 1, 1, 1], [0], [0]>} : vector<4x8x8xf32>, vector<4x8x8xf32>, vector<4x8x8xf32> -> vector<4x8x8xf32>
    "tpu.trace_stop"() : () -> ()
    %cst_115 = arith.constant 0.353553385 : f32
    %399 = vector.broadcast %cst_115 : f32 to vector<4x8x8xf32>
    %400 = arith.mulf %398, %399 : vector<4x8x8xf32>
    %cst_116 = arith.constant 0.000000e+00 : f32
    %401 = vector.broadcast %cst_116 : f32 to vector<1x8x8xf32>
    %402 = arith.cmpf one, %130, %401 : vector<1x8x8xf32>
    %cst_117 = arith.constant -1.000000e+09 : f32
    %403 = vector.shape_cast %402 : vector<1x8x8xi1> to vector<1x8x8xi1>
    %404 = vector.broadcast %403 : vector<1x8x8xi1> to vector<4x8x8xi1>
    %405 = vector.broadcast %cst_117 : f32 to vector<4x8x8xf32>
    %406 = arith.select %404, %400, %405 : vector<4x8x8xi1>, vector<4x8x8xf32>
    %cst_118 = arith.constant dense<0xFF800000> : vector<4x8xf32>
    %407 = vector.multi_reduction <maximumf>, %406, %cst_118 [2] : vector<4x8x8xf32> to vector<4x8xf32>
    %408 = vector.shape_cast %407 : vector<4x8xf32> to vector<4x8x1xf32>
    %409 = vector.broadcast %408 : vector<4x8x1xf32> to vector<4x8x8xf32>
    %410 = arith.subf %406, %409 : vector<4x8x8xf32>
    %411 = math.exp %410 : vector<4x8x8xf32>
    %cst_119 = arith.constant dense<0.000000e+00> : vector<4x8xf32>
    %412 = vector.multi_reduction <add>, %411, %cst_119 [2] : vector<4x8x8xf32> to vector<4x8xf32>
    %413 = vector.shape_cast %412 : vector<4x8xf32> to vector<4x8x1xf32>
    %414 = vector.broadcast %413 : vector<4x8x1xf32> to vector<4x8x8xf32>
    %415 = arith.divf %411, %414 : vector<4x8x8xf32>
    "tpu.trace_start"() <{level = 10 : i32, message = "hqk,hkd->hqd"}> : () -> ()
    %cst_120 = arith.constant dense<0.000000e+00> : vector<4x8x8xf32>
    %416 = tpu.matmul %415, %397, %cst_120 {dimension_numbers = #tpu.dot_dimension_numbers<[2], [1], [1], [2], [0, 0, 0, 1, 1, 2], [0], [0]>} : vector<4x8x8xf32>, vector<4x8x8xf32>, vector<4x8x8xf32> -> vector<4x8x8xf32>
    "tpu.trace_stop"() : () -> ()
    %417 = vector.extract_strided_slice %416 {offsets = [0, 0, 0], sizes = [1, 8, 8], strides = [1, 1, 1]} : vector<4x8x8xf32> to vector<1x8x8xf32>
    %418 = vector.shape_cast %417 : vector<1x8x8xf32> to vector<8x8xf32>
    %419 = vector.extract_strided_slice %416 {offsets = [1, 0, 0], sizes = [1, 8, 8], strides = [1, 1, 1]} : vector<4x8x8xf32> to vector<1x8x8xf32>
    %420 = vector.shape_cast %419 : vector<1x8x8xf32> to vector<8x8xf32>
    %421 = vector.extract_strided_slice %416 {offsets = [2, 0, 0], sizes = [1, 8, 8], strides = [1, 1, 1]} : vector<4x8x8xf32> to vector<1x8x8xf32>
    %422 = vector.shape_cast %421 : vector<1x8x8xf32> to vector<8x8xf32>
    %423 = vector.extract_strided_slice %416 {offsets = [3, 0, 0], sizes = [1, 8, 8], strides = [1, 1, 1]} : vector<4x8x8xf32> to vector<1x8x8xf32>
    %424 = vector.shape_cast %423 : vector<1x8x8xf32> to vector<8x8xf32>
    %425 = tpu.concatenate %418, %420, %422, %424 in 1 : vector<8x8xf32>, vector<8x8xf32>, vector<8x8xf32>, vector<8x8xf32> -> vector<8x32xf32>
    %cst_121 = arith.constant dense<0.000000e+00> : vector<8x32xf32>
    %426 = tpu.matmul %425, %6, %cst_121 {dimension_numbers = #tpu.dot_dimension_numbers<[1], [0], [0], [1], [0, 0, 1, 1], [], []>} : vector<8x32xf32>, vector<32x32xf32>, vector<8x32xf32> -> vector<8x32xf32>
    %427 = vector.broadcast %7 : vector<1x32xf32> to vector<8x32xf32>
    %428 = arith.addf %426, %427 : vector<8x32xf32>
    %429 = arith.addf %364, %428 : vector<8x32xf32>
    %cst_122 = arith.constant dense<0.000000e+00> : vector<8xf32>
    %430 = vector.multi_reduction <add>, %429, %cst_122 [1] : vector<8x32xf32> to vector<8xf32>
    %431 = vector.shape_cast %430 : vector<8xf32> to vector<8x1xf32>
    %cst_123 = arith.constant 3.200000e+01 : f32
    %432 = vector.broadcast %cst_123 : f32 to vector<8x1xf32>
    %433 = arith.divf %431, %432 : vector<8x1xf32>
    %434 = vector.broadcast %433 : vector<8x1xf32> to vector<8x32xf32>
    %435 = arith.subf %429, %434 : vector<8x32xf32>
    %436 = arith.mulf %435, %435 : vector<8x32xf32>
    %cst_124 = arith.constant dense<0.000000e+00> : vector<8xf32>
    %437 = vector.multi_reduction <add>, %436, %cst_124 [1] : vector<8x32xf32> to vector<8xf32>
    %438 = vector.shape_cast %437 : vector<8xf32> to vector<8x1xf32>
    %cst_125 = arith.constant 3.100000e+01 : f32
    %439 = vector.broadcast %cst_125 : f32 to vector<8x1xf32>
    %440 = arith.divf %438, %439 : vector<8x1xf32>
    %441 = math.sqrt %440 : vector<8x1xf32>
    %442 = vector.broadcast %433 : vector<8x1xf32> to vector<8x32xf32>
    %443 = arith.subf %429, %442 : vector<8x32xf32>
    %444 = vector.broadcast %14 : vector<1x32xf32> to vector<8x32xf32>
    %445 = arith.mulf %444, %443 : vector<8x32xf32>
    %cst_126 = arith.constant 9.99999997E-7 : f32
    %446 = vector.broadcast %cst_126 : f32 to vector<8x1xf32>
    %447 = arith.addf %441, %446 : vector<8x1xf32>
    %448 = vector.broadcast %447 : vector<8x1xf32> to vector<8x32xf32>
    %449 = arith.divf %445, %448 : vector<8x32xf32>
    %450 = vector.broadcast %15 : vector<1x32xf32> to vector<8x32xf32>
    %451 = arith.addf %449, %450 : vector<8x32xf32>
    %cst_127 = arith.constant dense<0.000000e+00> : vector<8x32xf32>
    %452 = tpu.matmul %451, %0, %cst_127 {dimension_numbers = #tpu.dot_dimension_numbers<[1], [0], [0], [1], [0, 0, 1, 1], [], []>} : vector<8x32xf32>, vector<32x32xf32>, vector<8x32xf32> -> vector<8x32xf32>
    %453 = vector.broadcast %1 : vector<1x32xf32> to vector<8x32xf32>
    %454 = arith.addf %452, %453 : vector<8x32xf32>
    %455 = vector.extract_strided_slice %454 {offsets = [0, 0], sizes = [8, 8], strides = [1, 1]} : vector<8x32xf32> to vector<8x8xf32>
    %456 = vector.extract_strided_slice %454 {offsets = [0, 8], sizes = [8, 8], strides = [1, 1]} : vector<8x32xf32> to vector<8x8xf32>
    %457 = vector.extract_strided_slice %454 {offsets = [0, 16], sizes = [8, 8], strides = [1, 1]} : vector<8x32xf32> to vector<8x8xf32>
    %458 = vector.extract_strided_slice %454 {offsets = [0, 24], sizes = [8, 8], strides = [1, 1]} : vector<8x32xf32> to vector<8x8xf32>
    %459 = vector.shape_cast %455 : vector<8x8xf32> to vector<1x8x8xf32>
    %460 = vector.shape_cast %456 : vector<8x8xf32> to vector<1x8x8xf32>
    %461 = vector.shape_cast %457 : vector<8x8xf32> to vector<1x8x8xf32>
    %462 = vector.shape_cast %458 : vector<8x8xf32> to vector<1x8x8xf32>
    %463 = tpu.concatenate %459, %460, %461, %462 in 0 : vector<1x8x8xf32>, vector<1x8x8xf32>, vector<1x8x8xf32>, vector<1x8x8xf32> -> vector<4x8x8xf32>
    "tpu.trace_start"() <{level = 10 : i32, message = "hqd,hkd->hqk"}> : () -> ()
    %cst_128 = arith.constant dense<0.000000e+00> : vector<4x8x8xf32>
    %464 = tpu.matmul %463, %146, %cst_128 {dimension_numbers = #tpu.dot_dimension_numbers<[2], [2], [1], [1], [0, 0, 0, 1, 1, 1], [0], [0]>} : vector<4x8x8xf32>, vector<4x8x8xf32>, vector<4x8x8xf32> -> vector<4x8x8xf32>
    "tpu.trace_stop"() : () -> ()
    %cst_129 = arith.constant 0.353553385 : f32
    %465 = vector.broadcast %cst_129 : f32 to vector<4x8x8xf32>
    %466 = arith.mulf %464, %465 : vector<4x8x8xf32>
    %cst_130 = arith.constant 0.000000e+00 : f32
    %467 = vector.broadcast %cst_130 : f32 to vector<1x1x8xf32>
    %468 = arith.cmpf one, %133, %467 : vector<1x1x8xf32>
    %cst_131 = arith.constant -1.000000e+09 : f32
    %469 = vector.shape_cast %468 : vector<1x1x8xi1> to vector<1x1x8xi1>
    %470 = vector.broadcast %469 : vector<1x1x8xi1> to vector<4x8x8xi1>
    %471 = vector.broadcast %cst_131 : f32 to vector<4x8x8xf32>
    %472 = arith.select %470, %466, %471 : vector<4x8x8xi1>, vector<4x8x8xf32>
    %cst_132 = arith.constant dense<0xFF800000> : vector<4x8xf32>
    %473 = vector.multi_reduction <maximumf>, %472, %cst_132 [2] : vector<4x8x8xf32> to vector<4x8xf32>
    %474 = vector.shape_cast %473 : vector<4x8xf32> to vector<4x8x1xf32>
    %475 = vector.broadcast %474 : vector<4x8x1xf32> to vector<4x8x8xf32>
    %476 = arith.subf %472, %475 : vector<4x8x8xf32>
    %477 = math.exp %476 : vector<4x8x8xf32>
    %cst_133 = arith.constant dense<0.000000e+00> : vector<4x8xf32>
    %478 = vector.multi_reduction <add>, %477, %cst_133 [2] : vector<4x8x8xf32> to vector<4x8xf32>
    %479 = vector.shape_cast %478 : vector<4x8xf32> to vector<4x8x1xf32>
    %480 = vector.broadcast %479 : vector<4x8x1xf32> to vector<4x8x8xf32>
    %481 = arith.divf %477, %480 : vector<4x8x8xf32>
    "tpu.trace_start"() <{level = 10 : i32, message = "hqk,hkd->hqd"}> : () -> ()
    %cst_134 = arith.constant dense<0.000000e+00> : vector<4x8x8xf32>
    %482 = tpu.matmul %481, %156, %cst_134 {dimension_numbers = #tpu.dot_dimension_numbers<[2], [1], [1], [2], [0, 0, 0, 1, 1, 2], [0], [0]>} : vector<4x8x8xf32>, vector<4x8x8xf32>, vector<4x8x8xf32> -> vector<4x8x8xf32>
    "tpu.trace_stop"() : () -> ()
    %483 = vector.extract_strided_slice %482 {offsets = [0, 0, 0], sizes = [1, 8, 8], strides = [1, 1, 1]} : vector<4x8x8xf32> to vector<1x8x8xf32>
    %484 = vector.shape_cast %483 : vector<1x8x8xf32> to vector<8x8xf32>
    %485 = vector.extract_strided_slice %482 {offsets = [1, 0, 0], sizes = [1, 8, 8], strides = [1, 1, 1]} : vector<4x8x8xf32> to vector<1x8x8xf32>
    %486 = vector.shape_cast %485 : vector<1x8x8xf32> to vector<8x8xf32>
    %487 = vector.extract_strided_slice %482 {offsets = [2, 0, 0], sizes = [1, 8, 8], strides = [1, 1, 1]} : vector<4x8x8xf32> to vector<1x8x8xf32>
    %488 = vector.shape_cast %487 : vector<1x8x8xf32> to vector<8x8xf32>
    %489 = vector.extract_strided_slice %482 {offsets = [3, 0, 0], sizes = [1, 8, 8], strides = [1, 1, 1]} : vector<4x8x8xf32> to vector<1x8x8xf32>
    %490 = vector.shape_cast %489 : vector<1x8x8xf32> to vector<8x8xf32>
    %491 = tpu.concatenate %484, %486, %488, %490 in 1 : vector<8x8xf32>, vector<8x8xf32>, vector<8x8xf32>, vector<8x8xf32> -> vector<8x32xf32>
    %cst_135 = arith.constant dense<0.000000e+00> : vector<8x32xf32>
    %492 = tpu.matmul %491, %6, %cst_135 {dimension_numbers = #tpu.dot_dimension_numbers<[1], [0], [0], [1], [0, 0, 1, 1], [], []>} : vector<8x32xf32>, vector<32x32xf32>, vector<8x32xf32> -> vector<8x32xf32>
    %493 = vector.broadcast %7 : vector<1x32xf32> to vector<8x32xf32>
    %494 = arith.addf %492, %493 : vector<8x32xf32>
    %495 = arith.addf %451, %494 : vector<8x32xf32>
    %cst_136 = arith.constant dense<0.000000e+00> : vector<8xf32>
    %496 = vector.multi_reduction <add>, %495, %cst_136 [1] : vector<8x32xf32> to vector<8xf32>
    %497 = vector.shape_cast %496 : vector<8xf32> to vector<8x1xf32>
    %cst_137 = arith.constant 3.200000e+01 : f32
    %498 = vector.broadcast %cst_137 : f32 to vector<8x1xf32>
    %499 = arith.divf %497, %498 : vector<8x1xf32>
    %500 = vector.broadcast %499 : vector<8x1xf32> to vector<8x32xf32>
    %501 = arith.subf %495, %500 : vector<8x32xf32>
    %502 = arith.mulf %501, %501 : vector<8x32xf32>
    %cst_138 = arith.constant dense<0.000000e+00> : vector<8xf32>
    %503 = vector.multi_reduction <add>, %502, %cst_138 [1] : vector<8x32xf32> to vector<8xf32>
    %504 = vector.shape_cast %503 : vector<8xf32> to vector<8x1xf32>
    %cst_139 = arith.constant 3.100000e+01 : f32
    %505 = vector.broadcast %cst_139 : f32 to vector<8x1xf32>
    %506 = arith.divf %504, %505 : vector<8x1xf32>
    %507 = math.sqrt %506 : vector<8x1xf32>
    %508 = vector.broadcast %499 : vector<8x1xf32> to vector<8x32xf32>
    %509 = arith.subf %495, %508 : vector<8x32xf32>
    %510 = vector.broadcast %14 : vector<1x32xf32> to vector<8x32xf32>
    %511 = arith.mulf %510, %509 : vector<8x32xf32>
    %cst_140 = arith.constant 9.99999997E-7 : f32
    %512 = vector.broadcast %cst_140 : f32 to vector<8x1xf32>
    %513 = arith.addf %507, %512 : vector<8x1xf32>
    %514 = vector.broadcast %513 : vector<8x1xf32> to vector<8x32xf32>
    %515 = arith.divf %511, %514 : vector<8x32xf32>
    %516 = vector.broadcast %15 : vector<1x32xf32> to vector<8x32xf32>
    %517 = arith.addf %515, %516 : vector<8x32xf32>
    %cst_141 = arith.constant dense<0.000000e+00> : vector<8xf32>
    %518 = vector.multi_reduction <add>, %517, %cst_141 [1] : vector<8x32xf32> to vector<8xf32>
    %519 = vector.shape_cast %518 : vector<8xf32> to vector<8x1xf32>
    %cst_142 = arith.constant 3.200000e+01 : f32
    %520 = vector.broadcast %cst_142 : f32 to vector<8x1xf32>
    %521 = arith.divf %519, %520 : vector<8x1xf32>
    %522 = vector.broadcast %521 : vector<8x1xf32> to vector<8x32xf32>
    %523 = arith.subf %517, %522 : vector<8x32xf32>
    %524 = arith.mulf %523, %523 : vector<8x32xf32>
    %cst_143 = arith.constant dense<0.000000e+00> : vector<8xf32>
    %525 = vector.multi_reduction <add>, %524, %cst_143 [1] : vector<8x32xf32> to vector<8xf32>
    %526 = vector.shape_cast %525 : vector<8xf32> to vector<8x1xf32>
    %cst_144 = arith.constant 3.200000e+01 : f32
    %527 = vector.broadcast %cst_144 : f32 to vector<8x1xf32>
    %528 = arith.divf %526, %527 : vector<8x1xf32>
    %529 = vector.broadcast %521 : vector<8x1xf32> to vector<8x32xf32>
    %530 = arith.subf %517, %529 : vector<8x32xf32>
    %cst_145 = arith.constant 9.99999997E-7 : f32
    %531 = vector.broadcast %cst_145 : f32 to vector<8x1xf32>
    %532 = arith.addf %528, %531 : vector<8x1xf32>
    %533 = math.rsqrt %532 : vector<8x1xf32>
    %534 = vector.broadcast %533 : vector<8x1xf32> to vector<8x32xf32>
    %535 = arith.mulf %530, %534 : vector<8x32xf32>
    %536 = vector.broadcast %12 : vector<1x32xf32> to vector<8x32xf32>
    %537 = arith.mulf %535, %536 : vector<8x32xf32>
    %538 = vector.broadcast %13 : vector<1x32xf32> to vector<8x32xf32>
    %539 = arith.addf %537, %538 : vector<8x32xf32>
    %cst_146 = arith.constant dense<0.000000e+00> : vector<8x64xf32>
    %540 = tpu.matmul %539, %8, %cst_146 {dimension_numbers = #tpu.dot_dimension_numbers<[1], [0], [0], [1], [0, 0, 1, 1], [], []>} : vector<8x32xf32>, vector<32x64xf32>, vector<8x64xf32> -> vector<8x64xf32>
    %541 = vector.broadcast %9 : vector<1x64xf32> to vector<8x64xf32>
    %542 = arith.addf %540, %541 : vector<8x64xf32>
    %cst_147 = arith.constant 0.000000e+00 : f32
    %543 = vector.broadcast %cst_147 : f32 to vector<8x64xf32>
    %544 = arith.maximumf %542, %543 : vector<8x64xf32>
    %cst_148 = arith.constant dense<0.000000e+00> : vector<8x32xf32>
    %545 = tpu.matmul %544, %10, %cst_148 {dimension_numbers = #tpu.dot_dimension_numbers<[1], [0], [0], [1], [0, 0, 1, 1], [], []>} : vector<8x64xf32>, vector<64x32xf32>, vector<8x32xf32> -> vector<8x32xf32>
    %546 = vector.broadcast %11 : vector<1x32xf32> to vector<8x32xf32>
    %547 = arith.addf %545, %546 : vector<8x32xf32>
    %548 = arith.addf %517, %547 : vector<8x32xf32>
    %cst_149 = arith.constant dense<0.000000e+00> : vector<8xf32>
    %549 = vector.multi_reduction <add>, %548, %cst_149 [1] : vector<8x32xf32> to vector<8xf32>
    %550 = vector.shape_cast %549 : vector<8xf32> to vector<8x1xf32>
    %cst_150 = arith.constant 3.200000e+01 : f32
    %551 = vector.broadcast %cst_150 : f32 to vector<8x1xf32>
    %552 = arith.divf %550, %551 : vector<8x1xf32>
    %553 = vector.broadcast %552 : vector<8x1xf32> to vector<8x32xf32>
    %554 = arith.subf %548, %553 : vector<8x32xf32>
    %555 = arith.mulf %554, %554 : vector<8x32xf32>
    %cst_151 = arith.constant dense<0.000000e+00> : vector<8xf32>
    %556 = vector.multi_reduction <add>, %555, %cst_151 [1] : vector<8x32xf32> to vector<8xf32>
    %557 = vector.shape_cast %556 : vector<8xf32> to vector<8x1xf32>
    %cst_152 = arith.constant 3.100000e+01 : f32
    %558 = vector.broadcast %cst_152 : f32 to vector<8x1xf32>
    %559 = arith.divf %557, %558 : vector<8x1xf32>
    %560 = math.sqrt %559 : vector<8x1xf32>
    %561 = vector.broadcast %552 : vector<8x1xf32> to vector<8x32xf32>
    %562 = arith.subf %548, %561 : vector<8x32xf32>
    %563 = vector.broadcast %14 : vector<1x32xf32> to vector<8x32xf32>
    %564 = arith.mulf %563, %562 : vector<8x32xf32>
    %cst_153 = arith.constant 9.99999997E-7 : f32
    %565 = vector.broadcast %cst_153 : f32 to vector<8x1xf32>
    %566 = arith.addf %560, %565 : vector<8x1xf32>
    %567 = vector.broadcast %566 : vector<8x1xf32> to vector<8x32xf32>
    %568 = arith.divf %564, %567 : vector<8x32xf32>
    %569 = vector.broadcast %15 : vector<1x32xf32> to vector<8x32xf32>
    %570 = arith.addf %568, %569 : vector<8x32xf32>
    %c0_154 = arith.constant 0 : index
    %c0_155 = arith.constant 0 : index
    %571 = vector.load %arg22[%c0_154, %c0_155] : memref<32x128xf32, #tpu.memory_space<vmem>>, vector<32x128xf32>
    %cst_156 = arith.constant dense<0.000000e+00> : vector<8x128xf32>
    %572 = tpu.matmul %570, %571, %cst_156 {dimension_numbers = #tpu.dot_dimension_numbers<[1], [0], [0], [1], [0, 0, 1, 1], [], []>} : vector<8x32xf32>, vector<32x128xf32>, vector<8x128xf32> -> vector<8x128xf32>
    %c0_157 = arith.constant 0 : index
    %c0_158 = arith.constant 0 : index
    %573 = vector.load %arg23[%c0_157, %c0_158] : memref<1x128xf32, #tpu.memory_space<vmem>>, vector<1x128xf32>
    %574 = vector.broadcast %573 : vector<1x128xf32> to vector<8x128xf32>
    %575 = arith.addf %572, %574 : vector<8x128xf32>
    %cst_159 = arith.constant dense<0xFF800000> : vector<8xf32>
    %576 = vector.multi_reduction <maximumf>, %575, %cst_159 [1] : vector<8x128xf32> to vector<8xf32>
    %577 = vector.shape_cast %576 : vector<8xf32> to vector<8x1xf32>
    %578 = vector.broadcast %577 : vector<8x1xf32> to vector<8x128xf32>
    %579 = arith.subf %575, %578 : vector<8x128xf32>
    %580 = math.exp %579 : vector<8x128xf32>
    %cst_160 = arith.constant dense<0.000000e+00> : vector<8xf32>
    %581 = vector.multi_reduction <add>, %580, %cst_160 [1] : vector<8x128xf32> to vector<8xf32>
    %582 = vector.shape_cast %581 : vector<8xf32> to vector<8x1xf32>
    %583 = math.log %582 : vector<8x1xf32>
    %584 = arith.addf %583, %577 : vector<8x1xf32>
    %585 = vector.broadcast %584 : vector<8x1xf32> to vector<8x128xf32>
    %586 = arith.subf %575, %585 : vector<8x128xf32>
    %c0_161 = arith.constant 0 : index
    %c0_162 = arith.constant 0 : index
    %c0_163 = arith.constant 0 : index
    %587 = vector.load %arg24[%c0_161, %c0_162, %c0_163] : memref<1x8x128xf32, #tpu.memory_space<vmem>>, vector<1x8x128xf32>
    %588 = vector.shape_cast %587 : vector<1x8x128xf32> to vector<8x128xf32>
    %589 = vector.shape_cast %586 : vector<8x128xf32> to vector<1x8x128xf32>
    tpu.vector_store %arg24[%c0_161, %c0_162, %c0_163], %589 {strides = array<i32>} : memref<1x8x128xf32, #tpu.memory_space<vmem>>, vector<1x8x128xf32>,
    return
  }
  func.func @transform_0(%arg0: i32) -> (i32, i32, i32) {
    %c0_i32 = arith.constant 0 : i32
    %c0_i32_0 = arith.constant 0 : i32
    %c0_i32_1 = arith.constant 0 : i32
    return %arg0, %c0_i32, %c0_i32_0 : i32, i32, i32
  }
  func.func @transform_1(%arg0: i32) -> (i32, i32, i32) {
    %c0_i32 = arith.constant 0 : i32
    %c0_i32_0 = arith.constant 0 : i32
    %c0_i32_1 = arith.constant 0 : i32
    return %arg0, %c0_i32, %c0_i32_0 : i32, i32, i32
  }
  func.func @transform_2(%arg0: i32) -> (i32, i32) {
    %c0_i32 = arith.constant 0 : i32
    %c0_i32_0 = arith.constant 0 : i32
    %c0_i32_1 = arith.constant 0 : i32
    return %c0_i32, %c0_i32_0 : i32, i32
  }
  func.func @transform_3(%arg0: i32) -> (i32, i32, i32) {
    %c0_i32 = arith.constant 0 : i32
    %c0_i32_0 = arith.constant 0 : i32
    %c0_i32_1 = arith.constant 0 : i32
    %c0_i32_2 = arith.constant 0 : i32
    return %c0_i32, %c0_i32_0, %c0_i32_1 : i32, i32, i32
  }
  func.func @transform_4(%arg0: i32) -> (i32, i32, i32) {
    %c0_i32 = arith.constant 0 : i32
    %c0_i32_0 = arith.constant 0 : i32
    %c0_i32_1 = arith.constant 0 : i32
    return %arg0, %c0_i32, %c0_i32_0 : i32, i32, i32
  }
  func.func @transform_5(%arg0: i32) -> (i32, i32) {
    %c0_i32 = arith.constant 0 : i32
    %c0_i32_0 = arith.constant 0 : i32
    %c0_i32_1 = arith.constant 0 : i32
    return %c0_i32, %c0_i32_0 : i32, i32
  }
  func.func @transform_6(%arg0: i32) -> (i32, i32) {
    %c0_i32 = arith.constant 0 : i32
    %c0_i32_0 = arith.constant 0 : i32
    %c0_i32_1 = arith.constant 0 : i32
    return %c0_i32, %c0_i32_0 : i32, i32
  }
  func.func @transform_7(%arg0: i32) -> (i32, i32) {
    %c0_i32 = arith.constant 0 : i32
    %c0_i32_0 = arith.constant 0 : i32
    %c0_i32_1 = arith.constant 0 : i32
    return %c0_i32, %c0_i32_0 : i32, i32
  }
  func.func @transform_8(%arg0: i32) -> (i32, i32) {
    %c0_i32 = arith.constant 0 : i32
    %c0_i32_0 = arith.constant 0 : i32
    %c0_i32_1 = arith.constant 0 : i32
    return %c0_i32, %c0_i32_0 : i32, i32
  }
  func.func @transform_9(%arg0: i32) -> (i32, i32) {
    %c0_i32 = arith.constant 0 : i32
    %c0_i32_0 = arith.constant 0 : i32
    %c0_i32_1 = arith.constant 0 : i32
    return %c0_i32, %c0_i32_0 : i32, i32
  }
  func.func @transform_10(%arg0: i32) -> (i32, i32) {
    %c0_i32 = arith.constant 0 : i32
    %c0_i32_0 = arith.constant 0 : i32
    %c0_i32_1 = arith.constant 0 : i32
    return %c0_i32, %c0_i32_0 : i32, i32
  }
  func.func @transform_11(%arg0: i32) -> (i32, i32) {
    %c0_i32 = arith.constant 0 : i32
    %c0_i32_0 = arith.constant 0 : i32
    %c0_i32_1 = arith.constant 0 : i32
    return %c0_i32, %c0_i32_0 : i32, i32
  }
  func.func @transform_12(%arg0: i32) -> (i32, i32) {
    %c0_i32 = arith.constant 0 : i32
    %c0_i32_0 = arith.constant 0 : i32
    %c0_i32_1 = arith.constant 0 : i32
    return %c0_i32, %c0_i32_0 : i32, i32
  }
  func.func @transform_13(%arg0: i32) -> (i32, i32) {
    %c0_i32 = arith.constant 0 : i32
    %c0_i32_0 = arith.constant 0 : i32
    %c0_i32_1 = arith.constant 0 : i32
    return %c0_i32, %c0_i32_0 : i32, i32
  }
  func.func @transform_14(%arg0: i32) -> (i32, i32) {
    %c0_i32 = arith.constant 0 : i32
    %c0_i32_0 = arith.constant 0 : i32
    %c0_i32_1 = arith.constant 0 : i32
    return %c0_i32, %c0_i32_0 : i32, i32
  }
  func.func @transform_15(%arg0: i32) -> (i32, i32) {
    %c0_i32 = arith.constant 0 : i32
    %c0_i32_0 = arith.constant 0 : i32
    %c0_i32_1 = arith.constant 0 : i32
    return %c0_i32, %c0_i32_0 : i32, i32
  }
  func.func @transform_16(%arg0: i32) -> (i32, i32) {
    %c0_i32 = arith.constant 0 : i32
    %c0_i32_0 = arith.constant 0 : i32
    %c0_i32_1 = arith.constant 0 : i32
    return %c0_i32, %c0_i32_0 : i32, i32
  }
  func.func @transform_17(%arg0: i32) -> (i32, i32) {
    %c0_i32 = arith.constant 0 : i32
    %c0_i32_0 = arith.constant 0 : i32
    %c0_i32_1 = arith.constant 0 : i32
    return %c0_i32, %c0_i32_0 : i32, i32
  }
  func.func @transform_18(%arg0: i32) -> (i32, i32) {
    %c0_i32 = arith.constant 0 : i32
    %c0_i32_0 = arith.constant 0 : i32
    %c0_i32_1 = arith.constant 0 : i32
    return %c0_i32, %c0_i32_0 : i32, i32
  }
  func.func @transform_19(%arg0: i32) -> (i32, i32) {
    %c0_i32 = arith.constant 0 : i32
    %c0_i32_0 = arith.constant 0 : i32
    %c0_i32_1 = arith.constant 0 : i32
    return %c0_i32, %c0_i32_0 : i32, i32
  }
  func.func @transform_20(%arg0: i32) -> (i32, i32) {
    %c0_i32 = arith.constant 0 : i32
    %c0_i32_0 = arith.constant 0 : i32
    %c0_i32_1 = arith.constant 0 : i32
    return %c0_i32, %c0_i32_0 : i32, i32
  }
  func.func @transform_21(%arg0: i32) -> (i32, i32) {
    %c0_i32 = arith.constant 0 : i32
    %c0_i32_0 = arith.constant 0 : i32
    %c0_i32_1 = arith.constant 0 : i32
    return %c0_i32, %c0_i32_0 : i32, i32
  }
  func.func @transform_22(%arg0: i32) -> (i32, i32) {
    %c0_i32 = arith.constant 0 : i32
    %c0_i32_0 = arith.constant 0 : i32
    %c0_i32_1 = arith.constant 0 : i32
    return %c0_i32, %c0_i32_0 : i32, i32
  }
  func.func @transform_23(%arg0: i32) -> (i32, i32, i32) {
    %c0_i32 = arith.constant 0 : i32
    %c0_i32_0 = arith.constant 0 : i32
    %c0_i32_1 = arith.constant 0 : i32
    return %arg0, %c0_i32, %c0_i32_0 : i32, i32, i32
  }
}

</mosaic_0001>

<llo_original>
// kernel: tpu_custom_call.1
$region0: #{tpu_custom_call.1}
  #allocation0 [shape = 'u32[]', space=smem, size = 0x4, offset = 0x4, fixed_abs, tag = 'smem constant byte address 0x4 - core index']
  #allocation1 [shape = 'u32[144,128]{1,0:T(1,128)}', space=vmem, size = 0x12000, scoped, tag = 'internal scratch']
  %s0 = inlined_call_operand.hbm [shape: f32[2,8,32], index: 0, kind: input, shape index: {}]
  %s1 = inlined_call_operand.hbm [shape: f32[2,8,32], index: 1, kind: input, shape index: {}]
  %s2 = inlined_call_operand.hbm [shape: f32[8,32], index: 2, kind: input, shape index: {}]
  %s3 = inlined_call_operand.hbm [shape: f32[1,8,8], index: 3, kind: input, shape index: {}]
  %s4 = inlined_call_operand.hbm [shape: f32[2,1,8], index: 4, kind: input, shape index: {}]
  %s5 = inlined_call_operand.vmem [shape: f32[32,32], index: 5, kind: input, shape index: {}]
  %s6 = inlined_call_operand.hbm [shape: f32[1,32], index: 6, kind: input, shape index: {}]
  %s7 = inlined_call_operand.vmem [shape: f32[32,64], index: 7, kind: input, shape index: {}]
  %s8 = inlined_call_operand.hbm [shape: f32[1,64], index: 8, kind: input, shape index: {}]
  %s9 = inlined_call_operand.vmem [shape: f32[32,96], index: 9, kind: input, shape index: {}]
  %s10 = inlined_call_operand.hbm [shape: f32[1,96], index: 10, kind: input, shape index: {}]
  %s11 = inlined_call_operand.hbm [shape: f32[32,32], index: 11, kind: input, shape index: {}]
  %s12 = inlined_call_operand.hbm [shape: f32[1,32], index: 12, kind: input, shape index: {}]
  %s13 = inlined_call_operand.hbm [shape: f32[32,64], index: 13, kind: input, shape index: {}]
  %s14 = inlined_call_operand.hbm [shape: f32[1,64], index: 14, kind: input, shape index: {}]
  %s15 = inlined_call_operand.vmem [shape: f32[64,32], index: 15, kind: input, shape index: {}]
  %s16 = inlined_call_operand.hbm [shape: f32[1,32], index: 16, kind: input, shape index: {}]
  %s17 = inlined_call_operand.hbm [shape: f32[1,32], index: 17, kind: input, shape index: {}]
  %s18 = inlined_call_operand.vmem [shape: f32[1,32], index: 18, kind: input, shape index: {}]
  %s19 = inlined_call_operand.vmem [shape: f32[1,32], index: 19, kind: input, shape index: {}]
  %s20 = inlined_call_operand.vmem [shape: f32[1,32], index: 20, kind: input, shape index: {}]
  %s21 = inlined_call_operand.vmem [shape: f32[32,128], index: 21, kind: input, shape index: {}]
  %s22 = inlined_call_operand.vmem [shape: f32[1,128], index: 22, kind: input, shape index: {}]
  %s23 = inlined_call_operand.hbm [shape: f32[2,8,128], index: 23, kind: output, shape index: {}]
  %s24 = sld [smem:[#allocation0]]
  $region181: #{tpu_custom_call.1} parent=0
    _
  %s26 = ssub.s32 1, %s24
  %s27 = scalar_select 0, %s26, %s24
  $region1: #{tpu_custom_call.1} parent=0
    #allocation2 [shape = 'u8[8192]{0}', space=vmem, size = 0x2000, scoped, tag = 'input window, operand 0']
    #allocation3 [shape = 's32[2]{0}', space=sflag, size = 0x8, scoped, tag = 'scoped memory for tpu_custom_call.1']
    #allocation4 [shape = 's32[2]{0}', space=sflag, size = 0x8, scoped, tag = 'scoped memory for tpu_custom_call.1']
    #allocation5 [shape = 'u8[8192]{0}', space=vmem, size = 0x2000, scoped, tag = 'input window, operand 1']
    #allocation6 [shape = 's32[2]{0}', space=sflag, size = 0x8, scoped, tag = 'scoped memory for tpu_custom_call.1']
    #allocation7 [shape = 'u8[4096]{0}', space=vmem, size = 0x1000, scoped, tag = 'input window, operand 2, single buffered']
    #allocation8 [shape = 'u8[4096]{0}', space=vmem, size = 0x1000, scoped, tag = 'input window, operand 3, single buffered']
    #allocation9 [shape = 's32[1]{0}', space=sflag, size = 0x4, scoped, tag = 'scoped memory for tpu_custom_call.1']
    #allocation10 [shape = 'u8[1024]{0}', space=vmem, size = 0x400, scoped, tag = 'input window, operand 4']
    #allocation11 [shape = 'u8[512]{0}', space=vmem, size = 0x400, scoped, tag = 'input window, operand 6, single buffered']
    #allocation12 [shape = 'u8[512]{0}', space=vmem, size = 0x400, scoped, tag = 'input window, operand 8, single buffered']
    #allocation13 [shape = 'u8[512]{0}', space=vmem, size = 0x400, scoped, tag = 'input window, operand 10, single buffered']
    #allocation14 [shape = 's32[1]{0}', space=sflag, size = 0x4, scoped, tag = 'scoped memory for tpu_custom_call.1']
    #allocation15 [shape = 'u8[16384]{0}', space=vmem, size = 0x4000, scoped, tag = 'input window, operand 11, single buffered']
    #allocation16 [shape = 'u8[512]{0}', space=vmem, size = 0x400, scoped, tag = 'input window, operand 12, single buffered']
    #allocation17 [shape = 's32[1]{0}', space=sflag, size = 0x4, scoped, tag = 'scoped memory for tpu_custom_call.1']
    #allocation18 [shape = 'u8[16384]{0}', space=vmem, size = 0x4000, scoped, tag = 'input window, operand 13, single buffered']
    #allocation19 [shape = 'u8[512]{0}', space=vmem, size = 0x400, scoped, tag = 'input window, operand 14, single buffered']
    #allocation20 [shape = 's32[1]{0}', space=sflag, size = 0x4, scoped, tag = 'scoped memory for tpu_custom_call.1']
    #allocation21 [shape = 'u8[512]{0}', space=vmem, size = 0x400, scoped, tag = 'input window, operand 16, single buffered']
    #allocation22 [shape = 'u8[512]{0}', space=vmem, size = 0x400, scoped, tag = 'input window, operand 17, single buffered']
    #allocation23 [shape = 's32[1]{0}', space=sflag, size = 0x4, scoped, tag = 'scoped memory for tpu_custom_call.1']
    #allocation24 [shape = 'u8[8192]{0}', space=vmem, size = 0x2000, scoped, tag = 'output window, operand 0']
    %28 = vsyncpa [#allocation3], 0
    %s29 = scalar_lea.sflag [#allocation3], 1
    %30 = vsyncpa %s29, 0
    %31 = vsyncpa [#allocation6], 0
    %s32 = scalar_lea.sflag [#allocation6], 1
    %33 = vsyncpa %s32, 0
    %34 = vsyncpa [#allocation9], 0
    %35 = vsyncpa [#allocation14], 0
    %36 = vsyncpa [#allocation17], 0
    %37 = vsyncpa [#allocation20], 0
    %38 = vsyncpa [#allocation23], 0
    %39 = vsyncpa [#allocation4], 0
    %s40 = scalar_lea.sflag [#allocation4], 1
    %41 = vsyncpa %s40, 0
    loop: start=0, step=1, limit=4
    $region2: #{tpu_custom_call.1} parent=1 // loop_pre_header
      _
    $region3: #{tpu_custom_call.1} parent=1 // loop_header
      %s43 = sphi 0, %s47
      %p44 = scmp.ge.s32.totalorder %s43, 4
      %s53 = sphi 0, %s55
      %s56 = sphi 0, %s53
      %s57 = sphi 0, %s56
      %s73 = sphi 0, %s57
      %s79 = sphi 0, %s81
      %s82 = sphi 0, %s79
      %s83 = sphi 0, %s82
      %s99 = sphi 0, %s83
      %s103 = sphi 0, %s103
      %s105 = sphi 0, %s103
      %s106 = sphi 0, %s105
      %s120 = sphi 0, %s106
      %s124 = sphi 0, %s124
      %s126 = sphi 0, %s124
      %s127 = sphi 0, %s126
      %s141 = sphi 0, %s127
      %s147 = sphi 0, %s149
      %s150 = sphi 0, %s147
      %s151 = sphi 0, %s150
      %s167 = sphi 0, %s151
      %s171 = sphi 0, %s171
      %s173 = sphi 0, %s171
      %s174 = sphi 0, %s173
      %s188 = sphi 0, %s174
      %s192 = sphi 0, %s192
      %s194 = sphi 0, %s192
      %s195 = sphi 0, %s194
      %s209 = sphi 0, %s195
      %s213 = sphi 0, %s213
      %s215 = sphi 0, %s213
      %s216 = sphi 0, %s215
      %s230 = sphi 0, %s216
      %s234 = sphi 0, %s234
      %s236 = sphi 0, %s234
      %s237 = sphi 0, %s236
      %s251 = sphi 0, %s237
      %s255 = sphi 0, %s255
      %s257 = sphi 0, %s255
      %s258 = sphi 0, %s257
      %s272 = sphi 0, %s258
      %s276 = sphi 0, %s276
      %s278 = sphi 0, %s276
      %s279 = sphi 0, %s278
      %s293 = sphi 0, %s279
      %s297 = sphi 0, %s297
      %s299 = sphi 0, %s297
      %s300 = sphi 0, %s299
      %s314 = sphi 0, %s300
      %s318 = sphi 0, %s318
      %s320 = sphi 0, %s318
      %s321 = sphi 0, %s320
      %s335 = sphi 0, %s321
      %s339 = sphi 0, %s339
      %s341 = sphi 0, %s339
      %s342 = sphi 0, %s341
      %s356 = sphi 0, %s342
      %s360 = sphi 0, %s360
      %s362 = sphi 0, %s360
      %s363 = sphi 0, %s362
      %s377 = sphi 0, %s363
      %s381 = sphi 0, %s381
      %s383 = sphi 0, %s381
      %s384 = sphi 0, %s383
      %s398 = sphi 0, %s384
      %s402 = sphi 0, %s402
      %s404 = sphi 0, %s402
      %s405 = sphi 0, %s404
      %s419 = sphi 0, %s405
      %s423 = sphi 0, %s423
      %s425 = sphi 0, %s423
      %s426 = sphi 0, %s425
      %s440 = sphi 0, %s426
      %s444 = sphi 0, %s444
      %s446 = sphi 0, %s444
      %s447 = sphi 0, %s446
      %s461 = sphi 0, %s447
      %s465 = sphi 0, %s465
      %s467 = sphi 0, %s465
      %s468 = sphi 0, %s467
      %s482 = sphi 0, %s468
      %s486 = sphi 0, %s486
      %s488 = sphi 0, %s486
      %s489 = sphi 0, %s488
      %s503 = sphi 0, %s489
      %s507 = sphi 0, %s507
      %s509 = sphi 0, %s507
      %s510 = sphi 0, %s509
      %s524 = sphi 0, %s510
      %s528 = sphi 0, %s528
      %s530 = sphi 0, %s528
      %s531 = sphi 0, %s530
      %s545 = sphi 0, %s531
      %s551 = sphi 0, %s553
      %s554 = sphi 0, %s551
      %s555 = sphi 0, %s554
      %s571 = sphi 0, %s555
    $region4: #{tpu_custom_call.1} parent=1 // loop_header_branch
      %46 = sbr.rel (%p44) target = $region8
    $region5: #{tpu_custom_call.1} parent=1 // loop_body
      %s48 = ssub.s32 %s43, 1
      %s49 = ssub.s32 %s43, 2
      %s50 = sadd.s32 %s43, 1
      %s51 = ssub.s32 %s43, %s50
      %p52 = scmp.eq.s32.totalorder %s51, 0
      %s54 = sadd.s32 %s53, 1
      %s55 = scalar_select %p52, %s53, %s54
      %p58 = pneg %p52
      %p59 = scmp.eq.s32.totalorder %s43, 1
      %p60 = por %p58, %p59
      %p61 = scmp.ne.s32.totalorder %s53, %s56
      %p62 = scmp.eq.s32.totalorder %s43, 0
      %p63 = por %p61, %p62
      %p64 = scmp.ne.s32.totalorder %s53, %s56
      %p65 = scmp.eq.s32.totalorder %s48, 1
      %p66 = por %p64, %p65
      %p67 = scmp.ne.s32.totalorder %s56, %s57
      %p68 = scmp.eq.s32.totalorder %s48, 0
      %p69 = por %p67, %p68
      %p70 = scmp.ne.s32.totalorder %s56, %s57
      %p71 = scmp.eq.s32.totalorder %s49, 1
      %p72 = por %p70, %p71
      %p74 = scmp.ne.s32.totalorder %s57, %s73
      %p75 = scmp.eq.s32.totalorder %s49, 0
      %p76 = por %p74, %p75
      %s77 = ssub.s32 %s43, %s50
      %p78 = scmp.eq.s32.totalorder %s77, 0
      %s80 = sadd.s32 %s79, 1
      %s81 = scalar_select %p78, %s79, %s80
      %p84 = pneg %p78
      %p85 = scmp.eq.s32.totalorder %s43, 1
      %p86 = por %p84, %p85
      %p87 = scmp.ne.s32.totalorder %s79, %s82
      %p88 = scmp.eq.s32.totalorder %s43, 0
      %p89 = por %p87, %p88
      %p90 = scmp.ne.s32.totalorder %s79, %s82
      %p91 = scmp.eq.s32.totalorder %s48, 1
      %p92 = por %p90, %p91
      %p93 = scmp.ne.s32.totalorder %s82, %s83
      %p94 = scmp.eq.s32.totalorder %s48, 0
      %p95 = por %p93, %p94
      %p96 = scmp.ne.s32.totalorder %s82, %s83
      %p97 = scmp.eq.s32.totalorder %s49, 1
      %p98 = por %p96, %p97
      %p100 = scmp.ne.s32.totalorder %s83, %s99
      %p101 = scmp.eq.s32.totalorder %s49, 0
      %p102 = por %p100, %p101
      %s104 = sadd.s32 %s103, 1
      %p107 = scmp.eq.s32.totalorder %s43, 1
      %p108 = scmp.ne.s32.totalorder %s103, %s105
      %p109 = scmp.eq.s32.totalorder %s43, 0
      %p110 = por %p108, %p109
      %p111 = scmp.ne.s32.totalorder %s103, %s105
      %p112 = scmp.eq.s32.totalorder %s48, 1
      %p113 = por %p111, %p112
      %p114 = scmp.ne.s32.totalorder %s105, %s106
      %p115 = scmp.eq.s32.totalorder %s48, 0
      %p116 = por %p114, %p115
      %p117 = scmp.ne.s32.totalorder %s105, %s106
      %p118 = scmp.eq.s32.totalorder %s49, 1
      %p119 = por %p117, %p118
      %p121 = scmp.ne.s32.totalorder %s106, %s120
      %p122 = scmp.eq.s32.totalorder %s49, 0
      %p123 = por %p121, %p122
      %s125 = sadd.s32 %s124, 1
      %p128 = scmp.eq.s32.totalorder %s43, 1
      %p129 = scmp.ne.s32.totalorder %s124, %s126
      %p130 = scmp.eq.s32.totalorder %s43, 0
      %p131 = por %p129, %p130
      %p132 = scmp.ne.s32.totalorder %s124, %s126
      %p133 = scmp.eq.s32.totalorder %s48, 1
      %p134 = por %p132, %p133
      %p135 = scmp.ne.s32.totalorder %s126, %s127
      %p136 = scmp.eq.s32.totalorder %s48, 0
      %p137 = por %p135, %p136
      %p138 = scmp.ne.s32.totalorder %s126, %s127
      %p139 = scmp.eq.s32.totalorder %s49, 1
      %p140 = por %p138, %p139
      %p142 = scmp.ne.s32.totalorder %s127, %s141
      %p143 = scmp.eq.s32.totalorder %s49, 0
      %p144 = por %p142, %p143
      %s145 = ssub.s32 %s43, %s50
      %p146 = scmp.eq.s32.totalorder %s145, 0
      %s148 = sadd.s32 %s147, 1
      %s149 = scalar_select %p146, %s147, %s148
      %p152 = pneg %p146
      %p153 = scmp.eq.s32.totalorder %s43, 1
      %p154 = por %p152, %p153
      %p155 = scmp.ne.s32.totalorder %s147, %s150
      %p156 = scmp.eq.s32.totalorder %s43, 0
      %p157 = por %p155, %p156
      %p158 = scmp.ne.s32.totalorder %s147, %s150
      %p159 = scmp.eq.s32.totalorder %s48, 1
      %p160 = por %p158, %p159
      %p161 = scmp.ne.s32.totalorder %s150, %s151
      %p162 = scmp.eq.s32.totalorder %s48, 0
      %p163 = por %p161, %p162
      %p164 = scmp.ne.s32.totalorder %s150, %s151
      %p165 = scmp.eq.s32.totalorder %s49, 1
      %p166 = por %p164, %p165
      %p168 = scmp.ne.s32.totalorder %s151, %s167
      %p169 = scmp.eq.s32.totalorder %s49, 0
      %p170 = por %p168, %p169
      %s172 = sadd.s32 %s171, 1
      %p175 = scmp.eq.s32.totalorder %s43, 1
      %p176 = scmp.ne.s32.totalorder %s171, %s173
      %p177 = scmp.eq.s32.totalorder %s43, 0
      %p178 = por %p176, %p177
      %p179 = scmp.ne.s32.totalorder %s171, %s173
      %p180 = scmp.eq.s32.totalorder %s48, 1
      %p181 = por %p179, %p180
      %p182 = scmp.ne.s32.totalorder %s173, %s174
      %p183 = scmp.eq.s32.totalorder %s48, 0
      %p184 = por %p182, %p183
      %p185 = scmp.ne.s32.totalorder %s173, %s174
      %p186 = scmp.eq.s32.totalorder %s49, 1
      %p187 = por %p185, %p186
      %p189 = scmp.ne.s32.totalorder %s174, %s188
      %p190 = scmp.eq.s32.totalorder %s49, 0
      %p191 = por %p189, %p190
      %s193 = sadd.s32 %s192, 1
      %p196 = scmp.eq.s32.totalorder %s43, 1
      %p197 = scmp.ne.s32.totalorder %s192, %s194
      %p198 = scmp.eq.s32.totalorder %s43, 0
      %p199 = por %p197, %p198
      %p200 = scmp.ne.s32.totalorder %s192, %s194
      %p201 = scmp.eq.s32.totalorder %s48, 1
      %p202 = por %p200, %p201
      %p203 = scmp.ne.s32.totalorder %s194, %s195
      %p204 = scmp.eq.s32.totalorder %s48, 0
      %p205 = por %p203, %p204
      %p206 = scmp.ne.s32.totalorder %s194, %s195
      %p207 = scmp.eq.s32.totalorder %s49, 1
      %p208 = por %p206, %p207
      %p210 = scmp.ne.s32.totalorder %s195, %s209
      %p211 = scmp.eq.s32.totalorder %s49, 0
      %p212 = por %p210, %p211
      %s214 = sadd.s32 %s213, 1
      %p217 = scmp.eq.s32.totalorder %s43, 1
      %p218 = scmp.ne.s32.totalorder %s213, %s215
      %p219 = scmp.eq.s32.totalorder %s43, 0
      %p220 = por %p218, %p219
      %p221 = scmp.ne.s32.totalorder %s213, %s215
      %p222 = scmp.eq.s32.totalorder %s48, 1
      %p223 = por %p221, %p222
      %p224 = scmp.ne.s32.totalorder %s215, %s216
      %p225 = scmp.eq.s32.totalorder %s48, 0
      %p226 = por %p224, %p225
      %p227 = scmp.ne.s32.totalorder %s215, %s216
      %p228 = scmp.eq.s32.totalorder %s49, 1
      %p229 = por %p227, %p228
      %p231 = scmp.ne.s32.totalorder %s216, %s230
      %p232 = scmp.eq.s32.totalorder %s49, 0
      %p233 = por %p231, %p232
      %s235 = sadd.s32 %s234, 1
      %p238 = scmp.eq.s32.totalorder %s43, 1
      %p239 = scmp.ne.s32.totalorder %s234, %s236
      %p240 = scmp.eq.s32.totalorder %s43, 0
      %p241 = por %p239, %p240
      %p242 = scmp.ne.s32.totalorder %s234, %s236
      %p243 = scmp.eq.s32.totalorder %s48, 1
      %p244 = por %p242, %p243
      %p245 = scmp.ne.s32.totalorder %s236, %s237
      %p246 = scmp.eq.s32.totalorder %s48, 0
      %p247 = por %p245, %p246
      %p248 = scmp.ne.s32.totalorder %s236, %s237
      %p249 = scmp.eq.s32.totalorder %s49, 1
      %p250 = por %p248, %p249
      %p252 = scmp.ne.s32.totalorder %s237, %s251
      %p253 = scmp.eq.s32.totalorder %s49, 0
      %p254 = por %p252, %p253
      %s256 = sadd.s32 %s255, 1
      %p259 = scmp.eq.s32.totalorder %s43, 1
      %p260 = scmp.ne.s32.totalorder %s255, %s257
      %p261 = scmp.eq.s32.totalorder %s43, 0
      %p262 = por %p260, %p261
      %p263 = scmp.ne.s32.totalorder %s255, %s257
      %p264 = scmp.eq.s32.totalorder %s48, 1
      %p265 = por %p263, %p264
      %p266 = scmp.ne.s32.totalorder %s257, %s258
      %p267 = scmp.eq.s32.totalorder %s48, 0
      %p268 = por %p266, %p267
      %p269 = scmp.ne.s32.totalorder %s257, %s258
      %p270 = scmp.eq.s32.totalorder %s49, 1
      %p271 = por %p269, %p270
      %p273 = scmp.ne.s32.totalorder %s258, %s272
      %p274 = scmp.eq.s32.totalorder %s49, 0
      %p275 = por %p273, %p274
      %s277 = sadd.s32 %s276, 1
      %p280 = scmp.eq.s32.totalorder %s43, 1
      %p281 = scmp.ne.s32.totalorder %s276, %s278
      %p282 = scmp.eq.s32.totalorder %s43, 0
      %p283 = por %p281, %p282
      %p284 = scmp.ne.s32.totalorder %s276, %s278
      %p285 = scmp.eq.s32.totalorder %s48, 1
      %p286 = por %p284, %p285
      %p287 = scmp.ne.s32.totalorder %s278, %s279
      %p288 = scmp.eq.s32.totalorder %s48, 0
      %p289 = por %p287, %p288
      %p290 = scmp.ne.s32.totalorder %s278, %s279
      %p291 = scmp.eq.s32.totalorder %s49, 1
      %p292 = por %p290, %p291
      %p294 = scmp.ne.s32.totalorder %s279, %s293
      %p295 = scmp.eq.s32.totalorder %s49, 0
      %p296 = por %p294, %p295
      %s298 = sadd.s32 %s297, 1
      %p301 = scmp.eq.s32.totalorder %s43, 1
      %p302 = scmp.ne.s32.totalorder %s297, %s299
      %p303 = scmp.eq.s32.totalorder %s43, 0
      %p304 = por %p302, %p303
      %p305 = scmp.ne.s32.totalorder %s297, %s299
      %p306 = scmp.eq.s32.totalorder %s48, 1
      %p307 = por %p305, %p306
      %p308 = scmp.ne.s32.totalorder %s299, %s300
      %p309 = scmp.eq.s32.totalorder %s48, 0
      %p310 = por %p308, %p309
      %p311 = scmp.ne.s32.totalorder %s299, %s300
      %p312 = scmp.eq.s32.totalorder %s49, 1
      %p313 = por %p311, %p312
      %p315 = scmp.ne.s32.totalorder %s300, %s314
      %p316 = scmp.eq.s32.totalorder %s49, 0
      %p317 = por %p315, %p316
      %s319 = sadd.s32 %s318, 1
      %p322 = scmp.eq.s32.totalorder %s43, 1
      %p323 = scmp.ne.s32.totalorder %s318, %s320
      %p324 = scmp.eq.s32.totalorder %s43, 0
      %p325 = por %p323, %p324
      %p326 = scmp.ne.s32.totalorder %s318, %s320
      %p327 = scmp.eq.s32.totalorder %s48, 1
      %p328 = por %p326, %p327
      %p329 = scmp.ne.s32.totalorder %s320, %s321
      %p330 = scmp.eq.s32.totalorder %s48, 0
      %p331 = por %p329, %p330
      %p332 = scmp.ne.s32.totalorder %s320, %s321
      %p333 = scmp.eq.s32.totalorder %s49, 1
      %p334 = por %p332, %p333
      %p336 = scmp.ne.s32.totalorder %s321, %s335
      %p337 = scmp.eq.s32.totalorder %s49, 0
      %p338 = por %p336, %p337
      %s340 = sadd.s32 %s339, 1
      %p343 = scmp.eq.s32.totalorder %s43, 1
      %p344 = scmp.ne.s32.totalorder %s339, %s341
      %p345 = scmp.eq.s32.totalorder %s43, 0
      %p346 = por %p344, %p345
      %p347 = scmp.ne.s32.totalorder %s339, %s341
      %p348 = scmp.eq.s32.totalorder %s48, 1
      %p349 = por %p347, %p348
      %p350 = scmp.ne.s32.totalorder %s341, %s342
      %p351 = scmp.eq.s32.totalorder %s48, 0
      %p352 = por %p350, %p351
      %p353 = scmp.ne.s32.totalorder %s341, %s342
      %p354 = scmp.eq.s32.totalorder %s49, 1
      %p355 = por %p353, %p354
      %p357 = scmp.ne.s32.totalorder %s342, %s356
      %p358 = scmp.eq.s32.totalorder %s49, 0
      %p359 = por %p357, %p358
      %s361 = sadd.s32 %s360, 1
      %p364 = scmp.eq.s32.totalorder %s43, 1
      %p365 = scmp.ne.s32.totalorder %s360, %s362
      %p366 = scmp.eq.s32.totalorder %s43, 0
      %p367 = por %p365, %p366
      %p368 = scmp.ne.s32.totalorder %s360, %s362
      %p369 = scmp.eq.s32.totalorder %s48, 1
      %p370 = por %p368, %p369
      %p371 = scmp.ne.s32.totalorder %s362, %s363
      %p372 = scmp.eq.s32.totalorder %s48, 0
      %p373 = por %p371, %p372
      %p374 = scmp.ne.s32.totalorder %s362, %s363
      %p375 = scmp.eq.s32.totalorder %s49, 1
      %p376 = por %p374, %p375
      %p378 = scmp.ne.s32.totalorder %s363, %s377
      %p379 = scmp.eq.s32.totalorder %s49, 0
      %p380 = por %p378, %p379
      %s382 = sadd.s32 %s381, 1
      %p385 = scmp.eq.s32.totalorder %s43, 1
      %p386 = scmp.ne.s32.totalorder %s381, %s383
      %p387 = scmp.eq.s32.totalorder %s43, 0
      %p388 = por %p386, %p387
      %p389 = scmp.ne.s32.totalorder %s381, %s383
      %p390 = scmp.eq.s32.totalorder %s48, 1
      %p391 = por %p389, %p390
      %p392 = scmp.ne.s32.totalorder %s383, %s384
      %p393 = scmp.eq.s32.totalorder %s48, 0
      %p394 = por %p392, %p393
      %p395 = scmp.ne.s32.totalorder %s383, %s384
      %p396 = scmp.eq.s32.totalorder %s49, 1
      %p397 = por %p395, %p396
      %p399 = scmp.ne.s32.totalorder %s384, %s398
      %p400 = scmp.eq.s32.totalorder %s49, 0
      %p401 = por %p399, %p400
      %s403 = sadd.s32 %s402, 1
      %p406 = scmp.eq.s32.totalorder %s43, 1
      %p407 = scmp.ne.s32.totalorder %s402, %s404
      %p408 = scmp.eq.s32.totalorder %s43, 0
      %p409 = por %p407, %p408
      %p410 = scmp.ne.s32.totalorder %s402, %s404
      %p411 = scmp.eq.s32.totalorder %s48, 1
      %p412 = por %p410, %p411
      %p413 = scmp.ne.s32.totalorder %s404, %s405
      %p414 = scmp.eq.s32.totalorder %s48, 0
      %p415 = por %p413, %p414
      %p416 = scmp.ne.s32.totalorder %s404, %s405
      %p417 = scmp.eq.s32.totalorder %s49, 1
      %p418 = por %p416, %p417
      %p420 = scmp.ne.s32.totalorder %s405, %s419
      %p421 = scmp.eq.s32.totalorder %s49, 0
      %p422 = por %p420, %p421
      %s424 = sadd.s32 %s423, 1
      %p427 = scmp.eq.s32.totalorder %s43, 1
      %p428 = scmp.ne.s32.totalorder %s423, %s425
      %p429 = scmp.eq.s32.totalorder %s43, 0
      %p430 = por %p428, %p429
      %p431 = scmp.ne.s32.totalorder %s423, %s425
      %p432 = scmp.eq.s32.totalorder %s48, 1
      %p433 = por %p431, %p432
      %p434 = scmp.ne.s32.totalorder %s425, %s426
      %p435 = scmp.eq.s32.totalorder %s48, 0
      %p436 = por %p434, %p435
      %p437 = scmp.ne.s32.totalorder %s425, %s426
      %p438 = scmp.eq.s32.totalorder %s49, 1
      %p439 = por %p437, %p438
      %p441 = scmp.ne.s32.totalorder %s426, %s440
      %p442 = scmp.eq.s32.totalorder %s49, 0
      %p443 = por %p441, %p442
      %s445 = sadd.s32 %s444, 1
      %p448 = scmp.eq.s32.totalorder %s43, 1
      %p449 = scmp.ne.s32.totalorder %s444, %s446
      %p450 = scmp.eq.s32.totalorder %s43, 0
      %p451 = por %p449, %p450
      %p452 = scmp.ne.s32.totalorder %s444, %s446
      %p453 = scmp.eq.s32.totalorder %s48, 1
      %p454 = por %p452, %p453
      %p455 = scmp.ne.s32.totalorder %s446, %s447
      %p456 = scmp.eq.s32.totalorder %s48, 0
      %p457 = por %p455, %p456
      %p458 = scmp.ne.s32.totalorder %s446, %s447
      %p459 = scmp.eq.s32.totalorder %s49, 1
      %p460 = por %p458, %p459
      %p462 = scmp.ne.s32.totalorder %s447, %s461
      %p463 = scmp.eq.s32.totalorder %s49, 0
      %p464 = por %p462, %p463
      %s466 = sadd.s32 %s465, 1
      %p469 = scmp.eq.s32.totalorder %s43, 1
      %p470 = scmp.ne.s32.totalorder %s465, %s467
      %p471 = scmp.eq.s32.totalorder %s43, 0
      %p472 = por %p470, %p471
      %p473 = scmp.ne.s32.totalorder %s465, %s467
      %p474 = scmp.eq.s32.totalorder %s48, 1
      %p475 = por %p473, %p474
      %p476 = scmp.ne.s32.totalorder %s467, %s468
      %p477 = scmp.eq.s32.totalorder %s48, 0
      %p478 = por %p476, %p477
      %p479 = scmp.ne.s32.totalorder %s467, %s468
      %p480 = scmp.eq.s32.totalorder %s49, 1
      %p481 = por %p479, %p480
      %p483 = scmp.ne.s32.totalorder %s468, %s482
      %p484 = scmp.eq.s32.totalorder %s49, 0
      %p485 = por %p483, %p484
      %s487 = sadd.s32 %s486, 1
      %p490 = scmp.eq.s32.totalorder %s43, 1
      %p491 = scmp.ne.s32.totalorder %s486, %s488
      %p492 = scmp.eq.s32.totalorder %s43, 0
      %p493 = por %p491, %p492
      %p494 = scmp.ne.s32.totalorder %s486, %s488
      %p495 = scmp.eq.s32.totalorder %s48, 1
      %p496 = por %p494, %p495
      %p497 = scmp.ne.s32.totalorder %s488, %s489
      %p498 = scmp.eq.s32.totalorder %s48, 0
      %p499 = por %p497, %p498
      %p500 = scmp.ne.s32.totalorder %s488, %s489
      %p501 = scmp.eq.s32.totalorder %s49, 1
      %p502 = por %p500, %p501
      %p504 = scmp.ne.s32.totalorder %s489, %s503
      %p505 = scmp.eq.s32.totalorder %s49, 0
      %p506 = por %p504, %p505
      %s508 = sadd.s32 %s507, 1
      %p511 = scmp.eq.s32.totalorder %s43, 1
      %p512 = scmp.ne.s32.totalorder %s507, %s509
      %p513 = scmp.eq.s32.totalorder %s43, 0
      %p514 = por %p512, %p513
      %p515 = scmp.ne.s32.totalorder %s507, %s509
      %p516 = scmp.eq.s32.totalorder %s48, 1
      %p517 = por %p515, %p516
      %p518 = scmp.ne.s32.totalorder %s509, %s510
      %p519 = scmp.eq.s32.totalorder %s48, 0
      %p520 = por %p518, %p519
      %p521 = scmp.ne.s32.totalorder %s509, %s510
      %p522 = scmp.eq.s32.totalorder %s49, 1
      %p523 = por %p521, %p522
      %p525 = scmp.ne.s32.totalorder %s510, %s524
      %p526 = scmp.eq.s32.totalorder %s49, 0
      %p527 = por %p525, %p526
      %s529 = sadd.s32 %s528, 1
      %p532 = scmp.eq.s32.totalorder %s43, 1
      %p533 = scmp.ne.s32.totalorder %s528, %s530
      %p534 = scmp.eq.s32.totalorder %s43, 0
      %p535 = por %p533, %p534
      %p536 = scmp.ne.s32.totalorder %s528, %s530
      %p537 = scmp.eq.s32.totalorder %s48, 1
      %p538 = por %p536, %p537
      %p539 = scmp.ne.s32.totalorder %s530, %s531
      %p540 = scmp.eq.s32.totalorder %s48, 0
      %p541 = por %p539, %p540
      %p542 = scmp.ne.s32.totalorder %s530, %s531
      %p543 = scmp.eq.s32.totalorder %s49, 1
      %p544 = por %p542, %p543
      %p546 = scmp.ne.s32.totalorder %s531, %s545
      %p547 = scmp.eq.s32.totalorder %s49, 0
      %p548 = por %p546, %p547
      %s549 = ssub.s32 %s43, %s50
      %p550 = scmp.eq.s32.totalorder %s549, 0
      %s552 = sadd.s32 %s551, 1
      %s553 = scalar_select %p550, %s551, %s552
      %p556 = pneg %p550
      %p557 = scmp.eq.s32.totalorder %s43, 1
      %p558 = por %p556, %p557
      %p559 = scmp.ne.s32.totalorder %s551, %s554
      %p560 = scmp.eq.s32.totalorder %s43, 0
      %p561 = por %p559, %p560
      %p562 = scmp.ne.s32.totalorder %s551, %s554
      %p563 = scmp.eq.s32.totalorder %s48, 1
      %p564 = por %p562, %p563
      %p565 = scmp.ne.s32.totalorder %s554, %s555
      %p566 = scmp.eq.s32.totalorder %s48, 0
      %p567 = por %p565, %p566
      %p568 = scmp.ne.s32.totalorder %s554, %s555
      %p569 = scmp.eq.s32.totalorder %s49, 1
      %p570 = por %p568, %p569
      %p572 = scmp.ne.s32.totalorder %s555, %s571
      %p573 = scmp.eq.s32.totalorder %s49, 0
      %p574 = por %p572, %p573
      %p575 = scmp.le.s32.totalorder 1, %s43
      %p576 = scmp.lt.s32.totalorder %s43, 3
      %p577 = pnand %p575, %p576
      %p578 = pneg %p577
      // Predicated region
      $region9: #{tpu_custom_call.1} parent=5 // pred_check
        _
      $region10: #{tpu_custom_call.1} parent=5 // pred_check_branch
        %580 = sbr.rel (%p577) target = $region12
      $region11: #{tpu_custom_call.1} parent=5 // pred_region
        %s581 = ssub.s32 %s43, 1
        // Predicated region
        $region13: #{tpu_custom_call.1} parent=11 // pred_check
          %p582 = pneg %p116
        $region14: #{tpu_custom_call.1} parent=11 // pred_check_branch
          %584 = sbr.rel (%p582) target = $region16
        $region15: #{tpu_custom_call.1} parent=11 // pred_region
          %s586 = ssub.s32 128, 128
          %587 = vsyncadd [#allocation6], %s586
          %s589 = sshll.u32 [#allocation7], 4
          %s590 = int_to_ptr.vmem [resolvable:$true] %s589
          %592 = dma.hbm_to_vmem [thread:$0]  %s2, 128, %s590, [#allocation6]
        $region16: #{tpu_custom_call.1} parent=11 // pred_fallthru
          _
        // Predicated region
        $region17: #{tpu_custom_call.1} parent=11 // pred_check
          %p593 = pneg %p137
        $region18: #{tpu_custom_call.1} parent=11 // pred_check_branch
          %595 = sbr.rel (%p593) target = $region20
        $region19: #{tpu_custom_call.1} parent=11 // pred_region
          %s597 = ssub.s32 128, 128
          %598 = vsyncadd [#allocation9], %s597
          %s600 = sshll.u32 [#allocation8], 4
          %s601 = int_to_ptr.vmem [resolvable:$true] %s600
          %603 = dma.hbm_to_vmem [thread:$0]  %s3, 128, %s601, [#allocation9]
        $region20: #{tpu_custom_call.1} parent=11 // pred_fallthru
          _
        // Predicated region
        $region21: #{tpu_custom_call.1} parent=11 // pred_check
          %p604 = pneg %p184
        $region22: #{tpu_custom_call.1} parent=11 // pred_check_branch
          %606 = sbr.rel (%p604) target = $region24
        $region23: #{tpu_custom_call.1} parent=11 // pred_region
          _
        $region24: #{tpu_custom_call.1} parent=11 // pred_fallthru
          _
        // Predicated region
        $region25: #{tpu_custom_call.1} parent=11 // pred_check
          %p607 = pneg %p205
        $region26: #{tpu_custom_call.1} parent=11 // pred_check_branch
          %609 = sbr.rel (%p607) target = $region28
        $region27: #{tpu_custom_call.1} parent=11 // pred_region
          %s611 = ssub.s32 16, 16
          %612 = vsyncadd [#allocation6], %s611
          %s614 = sshll.u32 [#allocation11], 4
          %s615 = int_to_ptr.vmem [resolvable:$true] %s614
          %617 = dma.hbm_to_vmem [thread:$0]  %s6, 16, %s615, [#allocation6]
        $region28: #{tpu_custom_call.1} parent=11 // pred_fallthru
          _
        // Predicated region
        $region29: #{tpu_custom_call.1} parent=11 // pred_check
          %p618 = pneg %p226
        $region30: #{tpu_custom_call.1} parent=11 // pred_check_branch
          %620 = sbr.rel (%p618) target = $region32
        $region31: #{tpu_custom_call.1} parent=11 // pred_region
          _
        $region32: #{tpu_custom_call.1} parent=11 // pred_fallthru
          _
        // Predicated region
        $region33: #{tpu_custom_call.1} parent=11 // pred_check
          %p621 = pneg %p247
        $region34: #{tpu_custom_call.1} parent=11 // pred_check_branch
          %623 = sbr.rel (%p621) target = $region36
        $region35: #{tpu_custom_call.1} parent=11 // pred_region
          %s625 = ssub.s32 16, 16
          %626 = vsyncadd [#allocation9], %s625
          %s628 = sshll.u32 [#allocation12], 4
          %s629 = int_to_ptr.vmem [resolvable:$true] %s628
          %631 = dma.hbm_to_vmem [thread:$0]  %s8, 16, %s629, [#allocation9]
        $region36: #{tpu_custom_call.1} parent=11 // pred_fallthru
          _
        // Predicated region
        $region37: #{tpu_custom_call.1} parent=11 // pred_check
          %p632 = pneg %p268
        $region38: #{tpu_custom_call.1} parent=11 // pred_check_branch
          %634 = sbr.rel (%p632) target = $region40
        $region39: #{tpu_custom_call.1} parent=11 // pred_region
          _
        $region40: #{tpu_custom_call.1} parent=11 // pred_fallthru
          _
        // Predicated region
        $region41: #{tpu_custom_call.1} parent=11 // pred_check
          %p635 = pneg %p289
        $region42: #{tpu_custom_call.1} parent=11 // pred_check_branch
          %637 = sbr.rel (%p635) target = $region44
        $region43: #{tpu_custom_call.1} parent=11 // pred_region
          %s639 = ssub.s32 16, 16
          %640 = vsyncadd [#allocation14], %s639
          %s642 = sshll.u32 [#allocation13], 4
          %s643 = int_to_ptr.vmem [resolvable:$true] %s642
          %645 = dma.hbm_to_vmem [thread:$0]  %s10, 16, %s643, [#allocation14]
        $region44: #{tpu_custom_call.1} parent=11 // pred_fallthru
          _
        // Predicated region
        $region45: #{tpu_custom_call.1} parent=11 // pred_check
          %p646 = pneg %p310
        $region46: #{tpu_custom_call.1} parent=11 // pred_check_branch
          %648 = sbr.rel (%p646) target = $region48
        $region47: #{tpu_custom_call.1} parent=11 // pred_region
          %s650 = ssub.s32 512, 512
          %651 = vsyncadd [#allocation14], %s650
          %s652 = sshll.u32 [#allocation15], 4
          %s653 = int_to_ptr.vmem [resolvable:$true] %s652
          %658 = dma.hbm_to_vmem [thread:$0]  %s11, 512, %s653, [#allocation14], 128, 128, 8
        $region48: #{tpu_custom_call.1} parent=11 // pred_fallthru
          _
        // Predicated region
        $region49: #{tpu_custom_call.1} parent=11 // pred_check
          %p659 = pneg %p331
        $region50: #{tpu_custom_call.1} parent=11 // pred_check_branch
          %661 = sbr.rel (%p659) target = $region52
        $region51: #{tpu_custom_call.1} parent=11 // pred_region
          %s663 = ssub.s32 16, 16
          %664 = vsyncadd [#allocation17], %s663
          %s666 = sshll.u32 [#allocation16], 4
          %s667 = int_to_ptr.vmem [resolvable:$true] %s666
          %669 = dma.hbm_to_vmem [thread:$0]  %s12, 16, %s667, [#allocation17]
        $region52: #{tpu_custom_call.1} parent=11 // pred_fallthru
          _
        // Predicated region
        $region53: #{tpu_custom_call.1} parent=11 // pred_check
          %p670 = pneg %p352
        $region54: #{tpu_custom_call.1} parent=11 // pred_check_branch
          %672 = sbr.rel (%p670) target = $region56
        $region55: #{tpu_custom_call.1} parent=11 // pred_region
          %s674 = ssub.s32 512, 512
          %675 = vsyncadd [#allocation17], %s674
          %s676 = sshll.u32 [#allocation18], 4
          %s677 = int_to_ptr.vmem [resolvable:$true] %s676
          %682 = dma.hbm_to_vmem [thread:$0]  %s13, 512, %s677, [#allocation17], 128, 128, 8
        $region56: #{tpu_custom_call.1} parent=11 // pred_fallthru
          _
        // Predicated region
        $region57: #{tpu_custom_call.1} parent=11 // pred_check
          %p683 = pneg %p373
        $region58: #{tpu_custom_call.1} parent=11 // pred_check_branch
          %685 = sbr.rel (%p683) target = $region60
        $region59: #{tpu_custom_call.1} parent=11 // pred_region
          %s687 = ssub.s32 16, 16
          %688 = vsyncadd [#allocation20], %s687
          %s690 = sshll.u32 [#allocation19], 4
          %s691 = int_to_ptr.vmem [resolvable:$true] %s690
          %693 = dma.hbm_to_vmem [thread:$0]  %s14, 16, %s691, [#allocation20]
        $region60: #{tpu_custom_call.1} parent=11 // pred_fallthru
          _
        // Predicated region
        $region61: #{tpu_custom_call.1} parent=11 // pred_check
          %p694 = pneg %p394
        $region62: #{tpu_custom_call.1} parent=11 // pred_check_branch
          %696 = sbr.rel (%p694) target = $region64
        $region63: #{tpu_custom_call.1} parent=11 // pred_region
          _
        $region64: #{tpu_custom_call.1} parent=11 // pred_fallthru
          _
        // Predicated region
        $region65: #{tpu_custom_call.1} parent=11 // pred_check
          %p697 = pneg %p415
        $region66: #{tpu_custom_call.1} parent=11 // pred_check_branch
          %699 = sbr.rel (%p697) target = $region68
        $region67: #{tpu_custom_call.1} parent=11 // pred_region
          %s701 = ssub.s32 16, 16
          %702 = vsyncadd [#allocation20], %s701
          %s704 = sshll.u32 [#allocation21], 4
          %s705 = int_to_ptr.vmem [resolvable:$true] %s704
          %707 = dma.hbm_to_vmem [thread:$0]  %s16, 16, %s705, [#allocation20]
        $region68: #{tpu_custom_call.1} parent=11 // pred_fallthru
          _
        // Predicated region
        $region69: #{tpu_custom_call.1} parent=11 // pred_check
          %p708 = pneg %p436
        $region70: #{tpu_custom_call.1} parent=11 // pred_check_branch
          %710 = sbr.rel (%p708) target = $region72
        $region71: #{tpu_custom_call.1} parent=11 // pred_region
          %s712 = ssub.s32 16, 16
          %713 = vsyncadd [#allocation23], %s712
          %s715 = sshll.u32 [#allocation22], 4
          %s716 = int_to_ptr.vmem [resolvable:$true] %s715
          %718 = dma.hbm_to_vmem [thread:$0]  %s17, 16, %s716, [#allocation23]
        $region72: #{tpu_custom_call.1} parent=11 // pred_fallthru
          _
        // Predicated region
        $region73: #{tpu_custom_call.1} parent=11 // pred_check
          %p719 = pneg %p457
        $region74: #{tpu_custom_call.1} parent=11 // pred_check_branch
          %721 = sbr.rel (%p719) target = $region76
        $region75: #{tpu_custom_call.1} parent=11 // pred_region
          _
        $region76: #{tpu_custom_call.1} parent=11 // pred_fallthru
          _
        // Predicated region
        $region77: #{tpu_custom_call.1} parent=11 // pred_check
          %p722 = pneg %p478
        $region78: #{tpu_custom_call.1} parent=11 // pred_check_branch
          %724 = sbr.rel (%p722) target = $region80
        $region79: #{tpu_custom_call.1} parent=11 // pred_region
          _
        $region80: #{tpu_custom_call.1} parent=11 // pred_fallthru
          _
        // Predicated region
        $region81: #{tpu_custom_call.1} parent=11 // pred_check
          %p725 = pneg %p499
        $region82: #{tpu_custom_call.1} parent=11 // pred_check_branch
          %727 = sbr.rel (%p725) target = $region84
        $region83: #{tpu_custom_call.1} parent=11 // pred_region
          _
        $region84: #{tpu_custom_call.1} parent=11 // pred_fallthru
          _
        // Predicated region
        $region85: #{tpu_custom_call.1} parent=11 // pred_check
          %p728 = pneg %p520
        $region86: #{tpu_custom_call.1} parent=11 // pred_check_branch
          %730 = sbr.rel (%p728) target = $region88
        $region87: #{tpu_custom_call.1} parent=11 // pred_region
          _
        $region88: #{tpu_custom_call.1} parent=11 // pred_fallthru
          _
        // Predicated region
        $region89: #{tpu_custom_call.1} parent=11 // pred_check
          %p731 = pneg %p541
        $region90: #{tpu_custom_call.1} parent=11 // pred_check_branch
          %733 = sbr.rel (%p731) target = $region92
        $region91: #{tpu_custom_call.1} parent=11 // pred_region
          _
        $region92: #{tpu_custom_call.1} parent=11 // pred_fallthru
          _
      $region12: #{tpu_custom_call.1} parent=5 // pred_fallthru
        _
      %p734 = scmp.lt.s32.totalorder %s43, 2
      // Predicated region
      $region93: #{tpu_custom_call.1} parent=5 // pred_check
        %p735 = pneg %p734
      $region94: #{tpu_custom_call.1} parent=5 // pred_check_branch
        %737 = sbr.rel (%p735) target = $region96
      $region95: #{tpu_custom_call.1} parent=5 // pred_region
        // Predicated region
        $region97: #{tpu_custom_call.1} parent=95 // pred_check
          %p738 = pneg %p63
        $region98: #{tpu_custom_call.1} parent=95 // pred_check_branch
          %740 = sbr.rel (%p738) target = $region100
        $region99: #{tpu_custom_call.1} parent=95 // pred_region
          %s741 = sand.u32 %s43, 1
          %s742 = scalar_lea.sflag [#allocation3], %s741
          %s743 = sand.u32 %s53, 1
          %s744 = smul.addr %s743, 8
          %s745 = scalar_lea.vmem [#allocation2], %s744
          %s747 = ssub.s32 128, 128
          %748 = vsyncadd %s742, %s747
          %s749 = smul.addr %s43, 128
          %s750 = scalar_lea.hbm %s0, %s749
          %s752 = sshll.u32 %s745, 4
          %s753 = int_to_ptr.vmem [resolvable:$true] %s752
          %755 = dma.hbm_to_vmem [thread:$0]  %s750, 128, %s753, %s742
        $region100: #{tpu_custom_call.1} parent=95 // pred_fallthru
          _
        // Predicated region
        $region101: #{tpu_custom_call.1} parent=95 // pred_check
          %p756 = pneg %p89
        $region102: #{tpu_custom_call.1} parent=95 // pred_check_branch
          %758 = sbr.rel (%p756) target = $region104
        $region103: #{tpu_custom_call.1} parent=95 // pred_region
          %s759 = sand.u32 %s43, 1
          %s760 = scalar_lea.sflag [#allocation6], %s759
          %s761 = sand.u32 %s79, 1
          %s762 = smul.addr %s761, 8
          %s763 = scalar_lea.vmem [#allocation5], %s762
          %s765 = ssub.s32 128, 128
          %766 = vsyncadd %s760, %s765
          %s767 = smul.addr %s43, 128
          %s768 = scalar_lea.hbm %s1, %s767
          %s770 = sshll.u32 %s763, 4
          %s771 = int_to_ptr.vmem [resolvable:$true] %s770
          %773 = dma.hbm_to_vmem [thread:$0]  %s768, 128, %s771, %s760
        $region104: #{tpu_custom_call.1} parent=95 // pred_fallthru
          _
        // Predicated region
        $region105: #{tpu_custom_call.1} parent=95 // pred_check
          %p774 = pneg %p157
        $region106: #{tpu_custom_call.1} parent=95 // pred_check_branch
          %776 = sbr.rel (%p774) target = $region108
        $region107: #{tpu_custom_call.1} parent=95 // pred_region
          %s777 = sand.u32 %s43, 1
          %s778 = scalar_lea.sflag [#allocation3], %s777
          %s779 = sand.u32 %s147, 1
          %s780 = scalar_lea.vmem [#allocation10], %s779
          %s782 = ssub.s32 16, 16
          %783 = vsyncadd %s778, %s782
          %s784 = smul.addr %s43, 16
          %s785 = scalar_lea.hbm %s4, %s784
          %s787 = sshll.u32 %s780, 4
          %s788 = int_to_ptr.vmem [resolvable:$true] %s787
          %790 = dma.hbm_to_vmem [thread:$0]  %s785, 16, %s788, %s778
        $region108: #{tpu_custom_call.1} parent=95 // pred_fallthru
          _
      $region96: #{tpu_custom_call.1} parent=5 // pred_fallthru
        _
      %p791 = scmp.le.s32.totalorder 1, %s43
      %p792 = scmp.lt.s32.totalorder %s43, 3
      %p793 = pnand %p791, %p792
      %p794 = pneg %p793
      // Predicated region
      $region109: #{tpu_custom_call.1} parent=5 // pred_check
        _
      $region110: #{tpu_custom_call.1} parent=5 // pred_check_branch
        %796 = sbr.rel (%p793) target = $region112
      $region111: #{tpu_custom_call.1} parent=5 // pred_region
        %s797 = ssub.s32 %s43, 1
        %s798 = sand.u32 %s48, 1
        %s799 = scalar_lea.sflag [#allocation3], %s798
        %s800 = sand.u32 %s56, 1
        %s801 = smul.addr %s800, 8
        %s802 = scalar_lea.vmem [#allocation2], %s801
        // Predicated region
        $region113: #{tpu_custom_call.1} parent=111 // pred_check
          %p803 = pneg %p69
        $region114: #{tpu_custom_call.1} parent=111 // pred_check_branch
          %805 = sbr.rel (%p803) target = $region116
        $region115: #{tpu_custom_call.1} parent=111 // pred_region
          %806 = dma.done %s799, 128
        $region116: #{tpu_custom_call.1} parent=111 // pred_fallthru
          _
        %s807 = sand.u32 %s48, 1
        %s808 = scalar_lea.sflag [#allocation6], %s807
        %s809 = sand.u32 %s82, 1
        %s810 = smul.addr %s809, 8
        %s811 = scalar_lea.vmem [#allocation5], %s810
        // Predicated region
        $region117: #{tpu_custom_call.1} parent=111 // pred_check
          %p812 = pneg %p95
        $region118: #{tpu_custom_call.1} parent=111 // pred_check_branch
          %814 = sbr.rel (%p812) target = $region120
        $region119: #{tpu_custom_call.1} parent=111 // pred_region
          %815 = dma.done %s808, 128
        $region120: #{tpu_custom_call.1} parent=111 // pred_fallthru
          _
        // Predicated region
        $region121: #{tpu_custom_call.1} parent=111 // pred_check
          %p816 = pneg %p116
        $region122: #{tpu_custom_call.1} parent=111 // pred_check_branch
          %818 = sbr.rel (%p816) target = $region124
        $region123: #{tpu_custom_call.1} parent=111 // pred_region
          %819 = dma.done [#allocation6], 128
        $region124: #{tpu_custom_call.1} parent=111 // pred_fallthru
          _
        // Predicated region
        $region125: #{tpu_custom_call.1} parent=111 // pred_check
          %p820 = pneg %p137
        $region126: #{tpu_custom_call.1} parent=111 // pred_check_branch
          %822 = sbr.rel (%p820) target = $region128
        $region127: #{tpu_custom_call.1} parent=111 // pred_region
          %823 = dma.done [#allocation9], 128
        $region128: #{tpu_custom_call.1} parent=111 // pred_fallthru
          _
        %s824 = sand.u32 %s48, 1
        %s825 = scalar_lea.sflag [#allocation3], %s824
        %s826 = sand.u32 %s150, 1
        %s827 = scalar_lea.vmem [#allocation10], %s826
        // Predicated region
        $region129: #{tpu_custom_call.1} parent=111 // pred_check
          %p828 = pneg %p163
        $region130: #{tpu_custom_call.1} parent=111 // pred_check_branch
          %830 = sbr.rel (%p828) target = $region132
        $region131: #{tpu_custom_call.1} parent=111 // pred_region
          %831 = dma.done %s825, 16
        $region132: #{tpu_custom_call.1} parent=111 // pred_fallthru
          _
        // Predicated region
        $region133: #{tpu_custom_call.1} parent=111 // pred_check
          %p832 = pneg %p205
        $region134: #{tpu_custom_call.1} parent=111 // pred_check_branch
          %834 = sbr.rel (%p832) target = $region136
        $region135: #{tpu_custom_call.1} parent=111 // pred_region
          %835 = dma.done [#allocation6], 16
        $region136: #{tpu_custom_call.1} parent=111 // pred_fallthru
          _
        // Predicated region
        $region137: #{tpu_custom_call.1} parent=111 // pred_check
          %p836 = pneg %p247
        $region138: #{tpu_custom_call.1} parent=111 // pred_check_branch
          %838 = sbr.rel (%p836) target = $region140
        $region139: #{tpu_custom_call.1} parent=111 // pred_region
          %839 = dma.done [#allocation9], 16
        $region140: #{tpu_custom_call.1} parent=111 // pred_fallthru
          _
        // Predicated region
        $region141: #{tpu_custom_call.1} parent=111 // pred_check
          %p840 = pneg %p289
        $region142: #{tpu_custom_call.1} parent=111 // pred_check_branch
          %842 = sbr.rel (%p840) target = $region144
        $region143: #{tpu_custom_call.1} parent=111 // pred_region
          %843 = dma.done [#allocation14], 16
        $region144: #{tpu_custom_call.1} parent=111 // pred_fallthru
          _
        // Predicated region
        $region145: #{tpu_custom_call.1} parent=111 // pred_check
          %p844 = pneg %p310
        $region146: #{tpu_custom_call.1} parent=111 // pred_check_branch
          %846 = sbr.rel (%p844) target = $region148
        $region147: #{tpu_custom_call.1} parent=111 // pred_region
          %847 = dma.done [#allocation14], 512
        $region148: #{tpu_custom_call.1} parent=111 // pred_fallthru
          _
        // Predicated region
        $region149: #{tpu_custom_call.1} parent=111 // pred_check
          %p848 = pneg %p331
        $region150: #{tpu_custom_call.1} parent=111 // pred_check_branch
          %850 = sbr.rel (%p848) target = $region152
        $region151: #{tpu_custom_call.1} parent=111 // pred_region
          %851 = dma.done [#allocation17], 16
        $region152: #{tpu_custom_call.1} parent=111 // pred_fallthru
          _
        // Predicated region
        $region153: #{tpu_custom_call.1} parent=111 // pred_check
          %p852 = pneg %p352
        $region154: #{tpu_custom_call.1} parent=111 // pred_check_branch
          %854 = sbr.rel (%p852) target = $region156
        $region155: #{tpu_custom_call.1} parent=111 // pred_region
          %855 = dma.done [#allocation17], 512
        $region156: #{tpu_custom_call.1} parent=111 // pred_fallthru
          _
        // Predicated region
        $region157: #{tpu_custom_call.1} parent=111 // pred_check
          %p856 = pneg %p373
        $region158: #{tpu_custom_call.1} parent=111 // pred_check_branch
          %858 = sbr.rel (%p856) target = $region160
        $region159: #{tpu_custom_call.1} parent=111 // pred_region
          %859 = dma.done [#allocation20], 16
        $region160: #{tpu_custom_call.1} parent=111 // pred_fallthru
          _
        // Predicated region
        $region161: #{tpu_custom_call.1} parent=111 // pred_check
          %p860 = pneg %p415
        $region162: #{tpu_custom_call.1} parent=111 // pred_check_branch
          %862 = sbr.rel (%p860) target = $region164
        $region163: #{tpu_custom_call.1} parent=111 // pred_region
          %863 = dma.done [#allocation20], 16
        $region164: #{tpu_custom_call.1} parent=111 // pred_fallthru
          _
        // Predicated region
        $region165: #{tpu_custom_call.1} parent=111 // pred_check
          %p864 = pneg %p436
        $region166: #{tpu_custom_call.1} parent=111 // pred_check_branch
          %866 = sbr.rel (%p864) target = $region168
        $region167: #{tpu_custom_call.1} parent=111 // pred_region
          %867 = dma.done [#allocation23], 16
        $region168: #{tpu_custom_call.1} parent=111 // pred_fallthru
          _
        %s868 = sand.u32 %s48, 1
        %s869 = scalar_lea.sflag [#allocation3], %s868
        %s870 = sand.u32 %s56, 1
        %s871 = smul.addr %s870, 8
        %s872 = scalar_lea.vmem [#allocation2], %s871
        %p873 = pneg %p69
        %p874 = pneg %p66
        %s875 = sand.u32 %s48, 1
        %s876 = scalar_lea.sflag [#allocation6], %s875
        %s877 = sand.u32 %s82, 1
        %s878 = smul.addr %s877, 8
        %s879 = scalar_lea.vmem [#allocation5], %s878
        %p880 = pneg %p95
        %p881 = pneg %p92
        %p882 = pneg %p116
        %p883 = pneg %p113
        %p884 = pneg %p137
        %p885 = pneg %p134
        %s886 = sand.u32 %s48, 1
        %s887 = scalar_lea.sflag [#allocation3], %s886
        %s888 = sand.u32 %s150, 1
        %s889 = scalar_lea.vmem [#allocation10], %s888
        %p890 = pneg %p163
        %p891 = pneg %p160
        %p892 = pneg %p184
        %p893 = pneg %p181
        %p894 = pneg %p205
        %p895 = pneg %p202
        %p896 = pneg %p226
        %p897 = pneg %p223
        %p898 = pneg %p247
        %p899 = pneg %p244
        %p900 = pneg %p268
        %p901 = pneg %p265
        %p902 = pneg %p289
        %p903 = pneg %p286
        %p904 = pneg %p310
        %p905 = pneg %p307
        %p906 = pneg %p331
        %p907 = pneg %p328
        %p908 = pneg %p352
        %p909 = pneg %p349
        %p910 = pneg %p373
        %p911 = pneg %p370
        %p912 = pneg %p394
        %p913 = pneg %p391
        %p914 = pneg %p415
        %p915 = pneg %p412
        %p916 = pneg %p436
        %p917 = pneg %p433
        %p918 = pneg %p457
        %p919 = pneg %p454
        %p920 = pneg %p478
        %p921 = pneg %p475
        %p922 = pneg %p499
        %p923 = pneg %p496
        %p924 = pneg %p520
        %p925 = pneg %p517
        %p926 = pneg %p541
        %p927 = pneg %p538
        %p928 = pneg %p567
        %p929 = pneg %p564
        %s930 = sand.u32 %s554, 1
        %s931 = scalar_lea.sflag [#allocation4], %s930
        %s932 = sand.u32 %s554, 1
        %s933 = smul.addr %s932, 8
        %s934 = scalar_lea.vmem [#allocation24], %s933
        %v935 = vld [vmem:[%s5] sm:$0xff]
        %v936 = vld [vmem:[%s5 + $0x8] sm:$0xff]
        %v937 = vld [vmem:[%s5 + $0x10] sm:$0xff]
        %v938 = vld [vmem:[%s5 + $0x18] sm:$0xff]
        %v939 = vld [vmem:[#allocation11] sm:$0x1]
        %v940 = vld [vmem:[%s7] sm:$0xff]
        %v941 = vld [vmem:[%s7 + $0x8] sm:$0xff]
        %v942 = vld [vmem:[%s7 + $0x10] sm:$0xff]
        %v943 = vld [vmem:[%s7 + $0x18] sm:$0xff]
        %v944 = vld [vmem:[#allocation12] sm:$0x1]
        %v945 = vld [vmem:[%s9] sm:$0xff]
        %v946 = vld [vmem:[%s9 + $0x8] sm:$0xff]
        %v947 = vld [vmem:[%s9 + $0x10] sm:$0xff]
        %v948 = vld [vmem:[%s9 + $0x18] sm:$0xff]
        %v949 = vld [vmem:[#allocation13] sm:$0x1]
        %v950 = vld [vmem:[#allocation15] sm:$0xff]
        %v951 = vld [vmem:[#allocation15 + $0x8] sm:$0xff]
        %v952 = vld [vmem:[#allocation15 + $0x10] sm:$0xff]
        %v953 = vld [vmem:[#allocation15 + $0x18] sm:$0xff]
        %v954 = vld [vmem:[#allocation16] sm:$0x1]
        %v955 = vld [vmem:[#allocation18] sm:$0xff]
        %v956 = vld [vmem:[#allocation18 + $0x8] sm:$0xff]
        %v957 = vld [vmem:[#allocation18 + $0x10] sm:$0xff]
        %v958 = vld [vmem:[#allocation18 + $0x18] sm:$0xff]
        %v959 = vld [vmem:[#allocation19] sm:$0x1]
        %v960 = vld [vmem:[%s15] sm:$0xff]
        %v961 = vld [vmem:[%s15 + $0x8] sm:$0xff]
        %v962 = vld [vmem:[%s15 + $0x10] sm:$0xff]
        %v963 = vld [vmem:[%s15 + $0x18] sm:$0xff]
        %v964 = vld [vmem:[%s15 + $0x20] sm:$0xff]
        %v965 = vld [vmem:[%s15 + $0x28] sm:$0xff]
        %v966 = vld [vmem:[%s15 + $0x30] sm:$0xff]
        %v967 = vld [vmem:[%s15 + $0x38] sm:$0xff]
        %v968 = vld [vmem:[#allocation21] sm:$0x1]
        %v969 = vld [vmem:[#allocation22] sm:$0x1]
        %v970 = vld [vmem:[%s18] sm:$0x1]
        %v971 = vld [vmem:[%s19] sm:$0x1]
        %v972 = vld [vmem:[%s20] sm:$0x1]
        %v973 = vld [vmem:[%s802] sm:$0xff]
        %v974 = vmul.f32 %v973, 0.17677669
        %v975 = vld [vmem:[#allocation7] sm:$0xff]
        %v976 = vadd.f32 %v974, %v975
        %vm977 = vcmask 261120
        %v978 = vsel %vm977, %v976, 0.0
        %979 = vadd.xlane.f32.xlu0 %v978
        %v980 = vpop.xlane.xlu0 %979
        %v981 = vrcp.pop 32.0
        %v982 = vmul.f32 %v980, %v981
        %v983 = vsub.f32 %v976, %v982
        %v984 = vmul.f32 %v983, %v983
        %v985 = vsel %vm977, %v984, 0.0
        %986 = vadd.xlane.f32.xlu0 %v985
        %v987 = vpop.xlane.xlu0 %986
        %v988 = vmul.f32 %v987, %v981
        %v989 = vadd.f32 %v988, 1e-06
        %v990 = vrsqrt.pop %v989
        %v991 = vmul.f32 %v983, %v990
        %v993 = vlaneseq
        %v994 = vshrl.u32 %v993, 7
        %v995 = vsub.s32 0, %v994
        %v996 = vrot.slane %v969, %v995
        %v998 = vmul.f32 %v991, %v996
        %v1000 = vlaneseq
        %v1001 = vshrl.u32 %v1000, 7
        %v1002 = vsub.s32 0, %v1001
        %v1003 = vrot.slane %v970, %v1002
        %v1005 = vadd.f32 %v998, %v1003
        %v1007 = vlaneseq
        %v1008 = vshrl.u32 %v1007, 7
        %v1009 = vsub.s32 0, %v1008
        %v1010 = vrot.slane %v959, %v1009
        %v1013 = vsel %vm977, %v1005, 0
        %1015 = vmatprep.subr.mxu0 0.0
        %1016 = vmatpush1.msra.mxu0 %v955
        %1017 = vmatprep.subr.mxu0 0.0
        %1018 = vmatpush1.msra.mxu0 %v956
        %1019 = vmatprep.subr.mxu0 0.0
        %1020 = vmatpush1.msra.mxu0 %v957
        %1021 = vmatprep.subr.mxu0 0.0
        %1022 = vmatpush1.msra.mxu0 %v958
        %1023 = vmatprep.subr.mxu0 0.0
        %1024 = vmatpush1.msra.mxu0 0.0
        %1025 = vmatprep.subr.mxu0 0.0
        %1026 = vmatpush1.msra.mxu0 0.0
        %1027 = vmatprep.subr.mxu0 0.0
        %1028 = vmatpush1.msra.mxu0 0.0
        %1029 = vmatprep.subr.mxu0 0.0
        %1030 = vmatpush1.msra.mxu0 0.0
        %1031 = vmatprep.subr.mxu0 0.0
        %1032 = vmatpush1.msra.mxu0 0.0
        %1033 = vmatprep.subr.mxu0 0.0
        %1034 = vmatpush1.msra.mxu0 0.0
        %1035 = vmatprep.subr.mxu0 0.0
        %1036 = vmatpush1.msra.mxu0 0.0
        %1037 = vmatprep.subr.mxu0 0.0
        %1038 = vmatpush1.msra.mxu0 0.0
        %1039 = vmatprep.subr.mxu0 0.0
        %1040 = vmatpush1.msra.mxu0 0.0
        %1041 = vmatprep.subr.mxu0 0.0
        %1042 = vmatpush1.msra.mxu0 0.0
        %1043 = vmatprep.subr.mxu0 0.0
        %1044 = vmatpush1.msra.mxu0 0.0
        %1045 = vmatprep.subr.mxu0 0.0
        %1046 = vmatpush1.msra.mxu0 0.0
        %1047 = vmatprep.subr.mxu0 0.0
        %1048 = vmatpush1.msra.mxu0 0.0
        %1049 = vmatprep.subr.mxu0 0.0
        %1050 = vmatpush1.msra.mxu0 0.0
        %1051 = vmatprep.subr.mxu0 0.0
        %1052 = vmatpush1.msra.mxu0 0.0
        %1053 = vmatprep.subr.mxu0 0.0
        %1054 = vmatpush1.msra.mxu0 0.0
        %1055 = vmatprep.subr.mxu0 0.0
        %1056 = vmatpush1.msra.mxu0 0.0
        %1057 = vmatprep.subr.mxu0 0.0
        %1058 = vmatpush1.msra.mxu0 0.0
        %1059 = vmatprep.subr.mxu0 0.0
        %1060 = vmatpush1.msra.mxu0 0.0
        %1061 = vmatprep.subr.mxu0 0.0
        %1062 = vmatpush1.msra.mxu0 0.0
        %1063 = vmatprep.subr.mxu0 0.0
        %1064 = vmatpush1.msra.mxu0 0.0
        %1065 = vmatprep.subr.mxu0 0.0
        %1066 = vmatpush1.msra.mxu0 0.0
        %1067 = vmatprep.subr.mxu0 0.0
        %1068 = vmatpush1.msra.mxu0 0.0
        %1069 = vmatprep.subr.mxu0 0.0
        %1070 = vmatpush1.msra.mxu0 0.0
        %1071 = vmatprep.subr.mxu0 0.0
        %1072 = vmatpush1.msra.mxu0 0.0
        %1073 = vmatprep.subr.mxu0 0.0
        %1074 = vmatpush1.msra.mxu0 0.0
        %1075 = vmatprep.subr.mxu0 0.0
        %1076 = vmatpush1.msra.mxu0 0.0
        %1077 = vmatprep.subr.mxu0 0.0
        %1078 = vmatpush1.msra.mxu0 0.0
        %1079 = vmatprep.mubr.f32.mxu0 0.0
        %1080 = vmatmul.mubr.f32.gmra.mrb[0].mxu0 %v1013
        %v1081 = vpop.f32.mrb[0].mxu0
        %v1082 = vadd.f32 %v1010, %v1081
        %v1083 = vpop.f32.mrb[0].mxu0
        %1084 = vdwg.mxu0
        %v1085 = vmax.f32 %v1082, 0.0
        %v1087 = vlaneseq
        %v1088 = vshrl.u32 %v1087, 7
        %v1089 = vsub.s32 0, %v1088
        %v1090 = vrot.slane %v968, %v1089
        %vm1092 = vcmask 523264
        %v1094 = vsel %vm1092, %v1085, 0
        %1096 = vmatprep.subr.mxu0 0.0
        %1097 = vmatpush1.msra.mxu0 %v960
        %1098 = vmatprep.subr.mxu0 0.0
        %1099 = vmatpush1.msra.mxu0 %v961
        %1100 = vmatprep.subr.mxu0 0.0
        %1101 = vmatpush1.msra.mxu0 %v962
        %1102 = vmatprep.subr.mxu0 0.0
        %1103 = vmatpush1.msra.mxu0 %v963
        %1104 = vmatprep.subr.mxu0 0.0
        %1105 = vmatpush1.msra.mxu0 %v964
        %1106 = vmatprep.subr.mxu0 0.0
        %1107 = vmatpush1.msra.mxu0 %v965
        %1108 = vmatprep.subr.mxu0 0.0
        %1109 = vmatpush1.msra.mxu0 %v966
        %1110 = vmatprep.subr.mxu0 0.0
        %1111 = vmatpush1.msra.mxu0 %v967
        %1112 = vmatprep.subr.mxu0 0.0
        %1113 = vmatpush1.msra.mxu0 0.0
        %1114 = vmatprep.subr.mxu0 0.0
        %1115 = vmatpush1.msra.mxu0 0.0
        %1116 = vmatprep.subr.mxu0 0.0
        %1117 = vmatpush1.msra.mxu0 0.0
        %1118 = vmatprep.subr.mxu0 0.0
        %1119 = vmatpush1.msra.mxu0 0.0
        %1120 = vmatprep.subr.mxu0 0.0
        %1121 = vmatpush1.msra.mxu0 0.0
        %1122 = vmatprep.subr.mxu0 0.0
        %1123 = vmatpush1.msra.mxu0 0.0
        %1124 = vmatprep.subr.mxu0 0.0
        %1125 = vmatpush1.msra.mxu0 0.0
        %1126 = vmatprep.subr.mxu0 0.0
        %1127 = vmatpush1.msra.mxu0 0.0
        %1128 = vmatprep.subr.mxu0 0.0
        %1129 = vmatpush1.msra.mxu0 0.0
        %1130 = vmatprep.subr.mxu0 0.0
        %1131 = vmatpush1.msra.mxu0 0.0
        %1132 = vmatprep.subr.mxu0 0.0
        %1133 = vmatpush1.msra.mxu0 0.0
        %1134 = vmatprep.subr.mxu0 0.0
        %1135 = vmatpush1.msra.mxu0 0.0
        %1136 = vmatprep.subr.mxu0 0.0
        %1137 = vmatpush1.msra.mxu0 0.0
        %1138 = vmatprep.subr.mxu0 0.0
        %1139 = vmatpush1.msra.mxu0 0.0
        %1140 = vmatprep.subr.mxu0 0.0
        %1141 = vmatpush1.msra.mxu0 0.0
        %1142 = vmatprep.subr.mxu0 0.0
        %1143 = vmatpush1.msra.mxu0 0.0
        %1144 = vmatprep.subr.mxu0 0.0
        %1145 = vmatpush1.msra.mxu0 0.0
        %1146 = vmatprep.subr.mxu0 0.0
        %1147 = vmatpush1.msra.mxu0 0.0
        %1148 = vmatprep.subr.mxu0 0.0
        %1149 = vmatpush1.msra.mxu0 0.0
        %1150 = vmatprep.subr.mxu0 0.0
        %1151 = vmatpush1.msra.mxu0 0.0
        %1152 = vmatprep.subr.mxu0 0.0
        %1153 = vmatpush1.msra.mxu0 0.0
        %1154 = vmatprep.subr.mxu0 0.0
        %1155 = vmatpush1.msra.mxu0 0.0
        %1156 = vmatprep.subr.mxu0 0.0
        %1157 = vmatpush1.msra.mxu0 0.0
        %1158 = vmatprep.subr.mxu0 0.0
        %1159 = vmatpush1.msra.mxu0 0.0
        %1160 = vmatprep.mubr.f32.mxu0 0.0
        %1161 = vmatmul.mubr.f32.gmra.mrb[0].mxu0 %v1094
        %v1162 = vpop.f32.mrb[0].mxu0
        %v1163 = vadd.f32 %v1090, %v1162
        %v1164 = vpop.f32.mrb[0].mxu0
        %1165 = vdwg.mxu0
        %v1166 = vadd.f32 %v976, %v1163
        %v1167 = vsel %vm977, %v1166, 0.0
        %1168 = vadd.xlane.f32.xlu0 %v1167
        %v1169 = vpop.xlane.xlu0 %1168
        %v1170 = vmul.f32 %v1169, %v981
        %v1171 = vsub.f32 %v1166, %v1170
        %v1172 = vmul.f32 %v1171, %v1171
        %v1173 = vsel %vm977, %v1172, 0.0
        %1174 = vadd.xlane.f32.xlu0 %v1173
        %v1175 = vpop.xlane.xlu0 %1174
        %v1176 = vrcp.pop 31.0
        %v1177 = vmul.f32 %v1175, %v1176
        %v1178 = vrsqrt.pop %v1177
        %v1179 = vmul.f32 %v1177, %v1178
        %vm1180 = vcmp.eq.f32.partialorder %v1177, inf
        %v1181 = vsel %vm1180, %v1177, %v1179
        %vm1182 = vcmp.eq.f32.partialorder %v1177, 0.0
        %v1183 = vand.u32 %v1177, 2147483648
        %v1184 = vsel %vm1182, %v1183, %v1181
        %v1186 = vlaneseq
        %v1187 = vshrl.u32 %v1186, 7
        %v1188 = vsub.s32 0, %v1187
        %v1189 = vrot.slane %v971, %v1188
        %v1191 = vmul.f32 %v1189, %v1171
        %v1192 = vadd.f32 %v1184, 1e-06
        %v1193 = vrcp.pop %v1192
        %v1194 = vmul.f32 %v1191, %v1193
        %v1196 = vlaneseq
        %v1197 = vshrl.u32 %v1196, 7
        %v1198 = vsub.s32 0, %v1197
        %v1199 = vrot.slane %v972, %v1198
        %v1201 = vadd.f32 %v1194, %v1199
        %v1202 = vsel %vm977, %v1201, 0.0
        %1203 = vadd.xlane.f32.xlu0 %v1202
        %v1204 = vpop.xlane.xlu0 %1203
        %v1205 = vmul.f32 %v1204, %v981
        %v1206 = vsub.f32 %v1201, %v1205
        %v1207 = vmul.f32 %v1206, %v1206
        %v1208 = vsel %vm977, %v1207, 0.0
        %1209 = vadd.xlane.f32.xlu0 %v1208
        %v1210 = vpop.xlane.xlu0 %1209
        %v1211 = vmul.f32 %v1210, %v981
        %v1212 = vadd.f32 %v1211, 1e-06
        %v1213 = vrsqrt.pop %v1212
        %v1214 = vmul.f32 %v1206, %v1213
        %v1215 = vmul.f32 %v1214, %v996
        %v1216 = vadd.f32 %v1215, %v1003
        %v1218 = vsel %vm977, %v1216, 0
        %1220 = vmatprep.subr.mxu0 0.0
        %1221 = vmatpush1.msra.mxu0 %v955
        %1222 = vmatprep.subr.mxu0 0.0
        %1223 = vmatpush1.msra.mxu0 %v956
        %1224 = vmatprep.subr.mxu0 0.0
        %1225 = vmatpush1.msra.mxu0 %v957
        %1226 = vmatprep.subr.mxu0 0.0
        %1227 = vmatpush1.msra.mxu0 %v958
        %1228 = vmatprep.subr.mxu0 0.0
        %1229 = vmatpush1.msra.mxu0 0.0
        %1230 = vmatprep.subr.mxu0 0.0
        %1231 = vmatpush1.msra.mxu0 0.0
        %1232 = vmatprep.subr.mxu0 0.0
        %1233 = vmatpush1.msra.mxu0 0.0
        %1234 = vmatprep.subr.mxu0 0.0
        %1235 = vmatpush1.msra.mxu0 0.0
        %1236 = vmatprep.subr.mxu0 0.0
        %1237 = vmatpush1.msra.mxu0 0.0
        %1238 = vmatprep.subr.mxu0 0.0
        %1239 = vmatpush1.msra.mxu0 0.0
        %1240 = vmatprep.subr.mxu0 0.0
        %1241 = vmatpush1.msra.mxu0 0.0
        %1242 = vmatprep.subr.mxu0 0.0
        %1243 = vmatpush1.msra.mxu0 0.0
        %1244 = vmatprep.subr.mxu0 0.0
        %1245 = vmatpush1.msra.mxu0 0.0
        %1246 = vmatprep.subr.mxu0 0.0
        %1247 = vmatpush1.msra.mxu0 0.0
        %1248 = vmatprep.subr.mxu0 0.0
        %1249 = vmatpush1.msra.mxu0 0.0
        %1250 = vmatprep.subr.mxu0 0.0
        %1251 = vmatpush1.msra.mxu0 0.0
        %1252 = vmatprep.subr.mxu0 0.0
        %1253 = vmatpush1.msra.mxu0 0.0
        %1254 = vmatprep.subr.mxu0 0.0
        %1255 = vmatpush1.msra.mxu0 0.0
        %1256 = vmatprep.subr.mxu0 0.0
        %1257 = vmatpush1.msra.mxu0 0.0
        %1258 = vmatprep.subr.mxu0 0.0
        %1259 = vmatpush1.msra.mxu0 0.0
        %1260 = vmatprep.subr.mxu0 0.0
        %1261 = vmatpush1.msra.mxu0 0.0
        %1262 = vmatprep.subr.mxu0 0.0
        %1263 = vmatpush1.msra.mxu0 0.0
        %1264 = vmatprep.subr.mxu0 0.0
        %1265 = vmatpush1.msra.mxu0 0.0
        %1266 = vmatprep.subr.mxu0 0.0
        %1267 = vmatpush1.msra.mxu0 0.0
        %1268 = vmatprep.subr.mxu0 0.0
        %1269 = vmatpush1.msra.mxu0 0.0
        %1270 = vmatprep.subr.mxu0 0.0
        %1271 = vmatpush1.msra.mxu0 0.0
        %1272 = vmatprep.subr.mxu0 0.0
        %1273 = vmatpush1.msra.mxu0 0.0
        %1274 = vmatprep.subr.mxu0 0.0
        %1275 = vmatpush1.msra.mxu0 0.0
        %1276 = vmatprep.subr.mxu0 0.0
        %1277 = vmatpush1.msra.mxu0 0.0
        %1278 = vmatprep.subr.mxu0 0.0
        %1279 = vmatpush1.msra.mxu0 0.0
        %1280 = vmatprep.subr.mxu0 0.0
        %1281 = vmatpush1.msra.mxu0 0.0
        %1282 = vmatprep.subr.mxu0 0.0
        %1283 = vmatpush1.msra.mxu0 0.0
        %1284 = vmatprep.mubr.f32.mxu0 0.0
        %1285 = vmatmul.mubr.f32.gmra.mrb[0].mxu0 %v1218
        %v1286 = vpop.f32.mrb[0].mxu0
        %v1287 = vadd.f32 %v1010, %v1286
        %v1288 = vpop.f32.mrb[0].mxu0
        %1289 = vdwg.mxu0
        %v1290 = vmax.f32 %v1287, 0.0
        %v1292 = vsel %vm1092, %v1290, 0
        %1294 = vmatprep.subr.mxu0 0.0
        %1295 = vmatpush1.msra.mxu0 %v960
        %1296 = vmatprep.subr.mxu0 0.0
        %1297 = vmatpush1.msra.mxu0 %v961
        %1298 = vmatprep.subr.mxu0 0.0
        %1299 = vmatpush1.msra.mxu0 %v962
        %1300 = vmatprep.subr.mxu0 0.0
        %1301 = vmatpush1.msra.mxu0 %v963
        %1302 = vmatprep.subr.mxu0 0.0
        %1303 = vmatpush1.msra.mxu0 %v964
        %1304 = vmatprep.subr.mxu0 0.0
        %1305 = vmatpush1.msra.mxu0 %v965
        %1306 = vmatprep.subr.mxu0 0.0
        %1307 = vmatpush1.msra.mxu0 %v966
        %1308 = vmatprep.subr.mxu0 0.0
        %1309 = vmatpush1.msra.mxu0 %v967
        %1310 = vmatprep.subr.mxu0 0.0
        %1311 = vmatpush1.msra.mxu0 0.0
        %1312 = vmatprep.subr.mxu0 0.0
        %1313 = vmatpush1.msra.mxu0 0.0
        %1314 = vmatprep.subr.mxu0 0.0
        %1315 = vmatpush1.msra.mxu0 0.0
        %1316 = vmatprep.subr.mxu0 0.0
        %1317 = vmatpush1.msra.mxu0 0.0
        %1318 = vmatprep.subr.mxu0 0.0
        %1319 = vmatpush1.msra.mxu0 0.0
        %1320 = vmatprep.subr.mxu0 0.0
        %1321 = vmatpush1.msra.mxu0 0.0
        %1322 = vmatprep.subr.mxu0 0.0
        %1323 = vmatpush1.msra.mxu0 0.0
        %1324 = vmatprep.subr.mxu0 0.0
        %1325 = vmatpush1.msra.mxu0 0.0
        %1326 = vmatprep.subr.mxu0 0.0
        %1327 = vmatpush1.msra.mxu0 0.0
        %1328 = vmatprep.subr.mxu0 0.0
        %1329 = vmatpush1.msra.mxu0 0.0
        %1330 = vmatprep.subr.mxu0 0.0
        %1331 = vmatpush1.msra.mxu0 0.0
        %1332 = vmatprep.subr.mxu0 0.0
        %1333 = vmatpush1.msra.mxu0 0.0
        %1334 = vmatprep.subr.mxu0 0.0
        %1335 = vmatpush1.msra.mxu0 0.0
        %1336 = vmatprep.subr.mxu0 0.0
        %1337 = vmatpush1.msra.mxu0 0.0
        %1338 = vmatprep.subr.mxu0 0.0
        %1339 = vmatpush1.msra.mxu0 0.0
        %1340 = vmatprep.subr.mxu0 0.0
        %1341 = vmatpush1.msra.mxu0 0.0
        %1342 = vmatprep.subr.mxu0 0.0
        %1343 = vmatpush1.msra.mxu0 0.0
        %1344 = vmatprep.subr.mxu0 0.0
        %1345 = vmatpush1.msra.mxu0 0.0
        %1346 = vmatprep.subr.mxu0 0.0
        %1347 = vmatpush1.msra.mxu0 0.0
        %1348 = vmatprep.subr.mxu0 0.0
        %1349 = vmatpush1.msra.mxu0 0.0
        %1350 = vmatprep.subr.mxu0 0.0
        %1351 = vmatpush1.msra.mxu0 0.0
        %1352 = vmatprep.subr.mxu0 0.0
        %1353 = vmatpush1.msra.mxu0 0.0
        %1354 = vmatprep.subr.mxu0 0.0
        %1355 = vmatpush1.msra.mxu0 0.0
        %1356 = vmatprep.subr.mxu0 0.0
        %1357 = vmatpush1.msra.mxu0 0.0
        %1358 = vmatprep.mubr.f32.mxu0 0.0
        %1359 = vmatmul.mubr.f32.gmra.mrb[0].mxu0 %v1292
        %v1360 = vpop.f32.mrb[0].mxu0
        %v1361 = vadd.f32 %v1090, %v1360
        %v1362 = vpop.f32.mrb[0].mxu0
        %1363 = vdwg.mxu0
        %v1364 = vadd.f32 %v1201, %v1361
        %v1365 = vsel %vm977, %v1364, 0.0
        %1366 = vadd.xlane.f32.xlu0 %v1365
        %v1367 = vpop.xlane.xlu0 %1366
        %v1368 = vmul.f32 %v1367, %v981
        %v1369 = vsub.f32 %v1364, %v1368
        %v1370 = vmul.f32 %v1369, %v1369
        %v1371 = vsel %vm977, %v1370, 0.0
        %1372 = vadd.xlane.f32.xlu0 %v1371
        %v1373 = vpop.xlane.xlu0 %1372
        %v1374 = vmul.f32 %v1373, %v1176
        %v1375 = vrsqrt.pop %v1374
        %v1376 = vmul.f32 %v1374, %v1375
        %vm1377 = vcmp.eq.f32.partialorder %v1374, inf
        %v1378 = vsel %vm1377, %v1374, %v1376
        %vm1379 = vcmp.eq.f32.partialorder %v1374, 0.0
        %v1380 = vand.u32 %v1374, 2147483648
        %v1381 = vsel %vm1379, %v1380, %v1378
        %v1382 = vmul.f32 %v1189, %v1369
        %v1383 = vadd.f32 %v1381, 1e-06
        %v1384 = vrcp.pop %v1383
        %v1385 = vmul.f32 %v1382, %v1384
        %v1386 = vadd.f32 %v1385, %v1199
        %v1387 = vld [vmem:[#allocation8] sm:$0xff]
        %v1388 = vld [vmem:[%s827] sm:$0x1]
        %v1390 = vlaneseq
        %v1391 = vshrl.u32 %v1390, 7
        %v1392 = vsub.s32 0, %v1391
        %v1393 = vrot.slane %v944, %v1392
        %v1396 = vsel %vm977, %v1386, 0
        %1398 = vmatprep.subr.mxu0 0.0
        %1399 = vmatpush1.msra.mxu0 %v940
        %1400 = vmatprep.subr.mxu0 0.0
        %1401 = vmatpush1.msra.mxu0 %v941
        %1402 = vmatprep.subr.mxu0 0.0
        %1403 = vmatpush1.msra.mxu0 %v942
        %1404 = vmatprep.subr.mxu0 0.0
        %1405 = vmatpush1.msra.mxu0 %v943
        %1406 = vmatprep.subr.mxu0 0.0
        %1407 = vmatpush1.msra.mxu0 0.0
        %1408 = vmatprep.subr.mxu0 0.0
        %1409 = vmatpush1.msra.mxu0 0.0
        %1410 = vmatprep.subr.mxu0 0.0
        %1411 = vmatpush1.msra.mxu0 0.0
        %1412 = vmatprep.subr.mxu0 0.0
        %1413 = vmatpush1.msra.mxu0 0.0
        %1414 = vmatprep.subr.mxu0 0.0
        %1415 = vmatpush1.msra.mxu0 0.0
        %1416 = vmatprep.subr.mxu0 0.0
        %1417 = vmatpush1.msra.mxu0 0.0
        %1418 = vmatprep.subr.mxu0 0.0
        %1419 = vmatpush1.msra.mxu0 0.0
        %1420 = vmatprep.subr.mxu0 0.0
        %1421 = vmatpush1.msra.mxu0 0.0
        %1422 = vmatprep.subr.mxu0 0.0
        %1423 = vmatpush1.msra.mxu0 0.0
        %1424 = vmatprep.subr.mxu0 0.0
        %1425 = vmatpush1.msra.mxu0 0.0
        %1426 = vmatprep.subr.mxu0 0.0
        %1427 = vmatpush1.msra.mxu0 0.0
        %1428 = vmatprep.subr.mxu0 0.0
        %1429 = vmatpush1.msra.mxu0 0.0
        %1430 = vmatprep.subr.mxu0 0.0
        %1431 = vmatpush1.msra.mxu0 0.0
        %1432 = vmatprep.subr.mxu0 0.0
        %1433 = vmatpush1.msra.mxu0 0.0
        %1434 = vmatprep.subr.mxu0 0.0
        %1435 = vmatpush1.msra.mxu0 0.0
        %1436 = vmatprep.subr.mxu0 0.0
        %1437 = vmatpush1.msra.mxu0 0.0
        %1438 = vmatprep.subr.mxu0 0.0
        %1439 = vmatpush1.msra.mxu0 0.0
        %1440 = vmatprep.subr.mxu0 0.0
        %1441 = vmatpush1.msra.mxu0 0.0
        %1442 = vmatprep.subr.mxu0 0.0
        %1443 = vmatpush1.msra.mxu0 0.0
        %1444 = vmatprep.subr.mxu0 0.0
        %1445 = vmatpush1.msra.mxu0 0.0
        %1446 = vmatprep.subr.mxu0 0.0
        %1447 = vmatpush1.msra.mxu0 0.0
        %1448 = vmatprep.subr.mxu0 0.0
        %1449 = vmatpush1.msra.mxu0 0.0
        %1450 = vmatprep.subr.mxu0 0.0
        %1451 = vmatpush1.msra.mxu0 0.0
        %1452 = vmatprep.subr.mxu0 0.0
        %1453 = vmatpush1.msra.mxu0 0.0
        %1454 = vmatprep.subr.mxu0 0.0
        %1455 = vmatpush1.msra.mxu0 0.0
        %1456 = vmatprep.subr.mxu0 0.0
        %1457 = vmatpush1.msra.mxu0 0.0
        %1458 = vmatprep.subr.mxu0 0.0
        %1459 = vmatpush1.msra.mxu0 0.0
        %1460 = vmatprep.subr.mxu0 0.0
        %1461 = vmatpush1.msra.mxu0 0.0
        %1462 = vmatprep.mubr.f32.mxu0 0.0
        %1463 = vmatmul.mubr.f32.gmra.mrb[0].mxu0 %v1396
        %v1464 = vpop.f32.mrb[0].mxu0
        %v1465 = vadd.f32 %v1393, %v1464
        %v1466 = vpop.f32.mrb[0].mxu0
        %1467 = vdwg.mxu0
        %1469 = vrot.lane.b32.xlu0 %v1465, 120
        %v1470 = vpop.permute.xlu0 %1469
        %1471 = vrot.lane.b32.xlu0 %v1465, 112
        %v1472 = vpop.permute.xlu0 %1471
        %1473 = vrot.lane.b32.xlu0 %v1465, 104
        %v1474 = vpop.permute.xlu0 %1473
        %v1475 = vld [vmem:[%s811] sm:$0xff]
        %v1477 = vlaneseq
        %v1478 = vshrl.u32 %v1477, 7
        %v1479 = vsub.s32 0, %v1478
        %v1480 = vrot.slane %v949, %v1479
        %v1483 = vsel %vm977, %v1475, 0
        %1485 = vmatprep.subr.mxu0 0.0
        %1486 = vmatpush1.msra.mxu0 %v945
        %1487 = vmatprep.subr.mxu0 0.0
        %1488 = vmatpush1.msra.mxu0 %v946
        %1489 = vmatprep.subr.mxu0 0.0
        %1490 = vmatpush1.msra.mxu0 %v947
        %1491 = vmatprep.subr.mxu0 0.0
        %1492 = vmatpush1.msra.mxu0 %v948
        %1493 = vmatprep.subr.mxu0 0.0
        %1494 = vmatpush1.msra.mxu0 0.0
        %1495 = vmatprep.subr.mxu0 0.0
        %1496 = vmatpush1.msra.mxu0 0.0
        %1497 = vmatprep.subr.mxu0 0.0
        %1498 = vmatpush1.msra.mxu0 0.0
        %1499 = vmatprep.subr.mxu0 0.0
        %1500 = vmatpush1.msra.mxu0 0.0
        %1501 = vmatprep.subr.mxu0 0.0
        %1502 = vmatpush1.msra.mxu0 0.0
        %1503 = vmatprep.subr.mxu0 0.0
        %1504 = vmatpush1.msra.mxu0 0.0
        %1505 = vmatprep.subr.mxu0 0.0
        %1506 = vmatpush1.msra.mxu0 0.0
        %1507 = vmatprep.subr.mxu0 0.0
        %1508 = vmatpush1.msra.mxu0 0.0
        %1509 = vmatprep.subr.mxu0 0.0
        %1510 = vmatpush1.msra.mxu0 0.0
        %1511 = vmatprep.subr.mxu0 0.0
        %1512 = vmatpush1.msra.mxu0 0.0
        %1513 = vmatprep.subr.mxu0 0.0
        %1514 = vmatpush1.msra.mxu0 0.0
        %1515 = vmatprep.subr.mxu0 0.0
        %1516 = vmatpush1.msra.mxu0 0.0
        %1517 = vmatprep.subr.mxu0 0.0
        %1518 = vmatpush1.msra.mxu0 0.0
        %1519 = vmatprep.subr.mxu0 0.0
        %1520 = vmatpush1.msra.mxu0 0.0
        %1521 = vmatprep.subr.mxu0 0.0
        %1522 = vmatpush1.msra.mxu0 0.0
        %1523 = vmatprep.subr.mxu0 0.0
        %1524 = vmatpush1.msra.mxu0 0.0
        %1525 = vmatprep.subr.mxu0 0.0
        %1526 = vmatpush1.msra.mxu0 0.0
        %1527 = vmatprep.subr.mxu0 0.0
        %1528 = vmatpush1.msra.mxu0 0.0
        %1529 = vmatprep.subr.mxu0 0.0
        %1530 = vmatpush1.msra.mxu0 0.0
        %1531 = vmatprep.subr.mxu0 0.0
        %1532 = vmatpush1.msra.mxu0 0.0
        %1533 = vmatprep.subr.mxu0 0.0
        %1534 = vmatpush1.msra.mxu0 0.0
        %1535 = vmatprep.subr.mxu0 0.0
        %1536 = vmatpush1.msra.mxu0 0.0
        %1537 = vmatprep.subr.mxu0 0.0
        %1538 = vmatpush1.msra.mxu0 0.0
        %1539 = vmatprep.subr.mxu0 0.0
        %1540 = vmatpush1.msra.mxu0 0.0
        %1541 = vmatprep.subr.mxu0 0.0
        %1542 = vmatpush1.msra.mxu0 0.0
        %1543 = vmatprep.subr.mxu0 0.0
        %1544 = vmatpush1.msra.mxu0 0.0
        %1545 = vmatprep.subr.mxu0 0.0
        %1546 = vmatpush1.msra.mxu0 0.0
        %1547 = vmatprep.subr.mxu0 0.0
        %1548 = vmatpush1.msra.mxu0 0.0
        %1549 = vmatprep.mubr.f32.mxu0 0.0
        %1550 = vmatmul.mubr.f32.gmra.mrb[0].mxu0 %v1483
        %v1551 = vpop.f32.mrb[0].mxu0
        %v1552 = vadd.f32 %v1480, %v1551
        %v1553 = vpop.f32.mrb[0].mxu0
        %1554 = vdwg.mxu0
        %1556 = vrot.lane.b32.xlu0 %v1552, 120
        %v1557 = vpop.permute.xlu0 %1556
        %1558 = vrot.lane.b32.xlu0 %v1552, 112
        %v1559 = vpop.permute.xlu0 %1558
        %1560 = vrot.lane.b32.xlu0 %v1552, 104
        %v1561 = vpop.permute.xlu0 %1560
        %1562 = vrot.lane.b32.xlu0 %v1552, 96
        %v1563 = vpop.permute.xlu0 %1562
        %vm1564 = vcmask 64512
        %v1565 = vsel %vm1564, %v1552, 0
        %v1567 = vsel %vm1564, %v1563, 0
        %1569 = vmatprep.subr.mxu0 0.0
        %1570 = vmatpush1.xpose.msra.mxu0 %v1567
        %1571 = vmatprep.subr.mxu0 0.0
        %1572 = vmatpush1.xpose.msra.mxu0 0.0
        %1573 = vmatprep.subr.mxu0 0.0
        %1574 = vmatpush1.xpose.msra.mxu0 0.0
        %1575 = vmatprep.subr.mxu0 0.0
        %1576 = vmatpush1.xpose.msra.mxu0 0.0
        %1577 = vmatprep.subr.mxu0 0.0
        %1578 = vmatpush1.xpose.msra.mxu0 0.0
        %1579 = vmatprep.subr.mxu0 0.0
        %1580 = vmatpush1.xpose.msra.mxu0 0.0
        %1581 = vmatprep.subr.mxu0 0.0
        %1582 = vmatpush1.xpose.msra.mxu0 0.0
        %1583 = vmatprep.subr.mxu0 0.0
        %1584 = vmatpush1.xpose.msra.mxu0 0.0
        %1585 = vmatprep.subr.mxu0 0.0
        %1586 = vmatpush1.xpose.msra.mxu0 0.0
        %1587 = vmatprep.subr.mxu0 0.0
        %1588 = vmatpush1.xpose.msra.mxu0 0.0
        %1589 = vmatprep.subr.mxu0 0.0
        %1590 = vmatpush1.xpose.msra.mxu0 0.0
        %1591 = vmatprep.subr.mxu0 0.0
        %1592 = vmatpush1.xpose.msra.mxu0 0.0
        %1593 = vmatprep.subr.mxu0 0.0
        %1594 = vmatpush1.xpose.msra.mxu0 0.0
        %1595 = vmatprep.subr.mxu0 0.0
        %1596 = vmatpush1.xpose.msra.mxu0 0.0
        %1597 = vmatprep.subr.mxu0 0.0
        %1598 = vmatpush1.xpose.msra.mxu0 0.0
        %1599 = vmatprep.subr.mxu0 0.0
        %1600 = vmatpush1.xpose.msra.mxu0 0.0
        %1601 = vmatprep.subr.mxu0 0.0
        %1602 = vmatpush1.xpose.msra.mxu0 0.0
        %1603 = vmatprep.subr.mxu0 0.0
        %1604 = vmatpush1.xpose.msra.mxu0 0.0
        %1605 = vmatprep.subr.mxu0 0.0
        %1606 = vmatpush1.xpose.msra.mxu0 0.0
        %1607 = vmatprep.subr.mxu0 0.0
        %1608 = vmatpush1.xpose.msra.mxu0 0.0
        %1609 = vmatprep.subr.mxu0 0.0
        %1610 = vmatpush1.xpose.msra.mxu0 0.0
        %1611 = vmatprep.subr.mxu0 0.0
        %1612 = vmatpush1.xpose.msra.mxu0 0.0
        %1613 = vmatprep.subr.mxu0 0.0
        %1614 = vmatpush1.xpose.msra.mxu0 0.0
        %1615 = vmatprep.subr.mxu0 0.0
        %1616 = vmatpush1.xpose.msra.mxu0 0.0
        %1617 = vmatprep.subr.mxu0 0.0
        %1618 = vmatpush1.xpose.msra.mxu0 0.0
        %1619 = vmatprep.subr.mxu0 0.0
        %1620 = vmatpush1.xpose.msra.mxu0 0.0
        %1621 = vmatprep.subr.mxu0 0.0
        %1622 = vmatpush1.xpose.msra.mxu0 0.0
        %1623 = vmatprep.subr.mxu0 0.0
        %1624 = vmatpush1.xpose.msra.mxu0 0.0
        %1625 = vmatprep.subr.mxu0 0.0
        %1626 = vmatpush1.xpose.msra.mxu0 0.0
        %1627 = vmatprep.subr.mxu0 0.0
        %1628 = vmatpush1.xpose.msra.mxu0 0.0
        %1629 = vmatprep.subr.mxu0 0.0
        %1630 = vmatpush1.xpose.msra.mxu0 0.0
        %1631 = vmatprep.subr.mxu0 0.0
        %1632 = vmatpush1.xpose.msra.mxu0 0.0
        %1633 = vmatprep.mubr.f32.mxu0 0.0
        %1634 = vmatmul.mubr.f32.gmra.mrb[0].mxu0 %v1565
        %v1635 = vpop.f32.mrb[0].mxu0
        %v1636 = vadd.f32 0.0, %v1635
        %v1637 = vpop.f32.mrb[0].mxu0
        %1638 = vdwg.mxu0
        %1639 = vrot.lane.b32.xlu0 %v1557, 96
        %v1640 = vpop.permute.xlu0 %1639
        %v1641 = vsel %vm1564, %v1557, 0
        %v1643 = vsel %vm1564, %v1640, 0
        %1645 = vmatprep.subr.mxu0 0.0
        %1646 = vmatpush1.xpose.msra.mxu0 %v1643
        %1647 = vmatprep.subr.mxu0 0.0
        %1648 = vmatpush1.xpose.msra.mxu0 0.0
        %1649 = vmatprep.subr.mxu0 0.0
        %1650 = vmatpush1.xpose.msra.mxu0 0.0
        %1651 = vmatprep.subr.mxu0 0.0
        %1652 = vmatpush1.xpose.msra.mxu0 0.0
        %1653 = vmatprep.subr.mxu0 0.0
        %1654 = vmatpush1.xpose.msra.mxu0 0.0
        %1655 = vmatprep.subr.mxu0 0.0
        %1656 = vmatpush1.xpose.msra.mxu0 0.0
        %1657 = vmatprep.subr.mxu0 0.0
        %1658 = vmatpush1.xpose.msra.mxu0 0.0
        %1659 = vmatprep.subr.mxu0 0.0
        %1660 = vmatpush1.xpose.msra.mxu0 0.0
        %1661 = vmatprep.subr.mxu0 0.0
        %1662 = vmatpush1.xpose.msra.mxu0 0.0
        %1663 = vmatprep.subr.mxu0 0.0
        %1664 = vmatpush1.xpose.msra.mxu0 0.0
        %1665 = vmatprep.subr.mxu0 0.0
        %1666 = vmatpush1.xpose.msra.mxu0 0.0
        %1667 = vmatprep.subr.mxu0 0.0
        %1668 = vmatpush1.xpose.msra.mxu0 0.0
        %1669 = vmatprep.subr.mxu0 0.0
        %1670 = vmatpush1.xpose.msra.mxu0 0.0
        %1671 = vmatprep.subr.mxu0 0.0
        %1672 = vmatpush1.xpose.msra.mxu0 0.0
        %1673 = vmatprep.subr.mxu0 0.0
        %1674 = vmatpush1.xpose.msra.mxu0 0.0
        %1675 = vmatprep.subr.mxu0 0.0
        %1676 = vmatpush1.xpose.msra.mxu0 0.0
        %1677 = vmatprep.subr.mxu0 0.0
        %1678 = vmatpush1.xpose.msra.mxu0 0.0
        %1679 = vmatprep.subr.mxu0 0.0
        %1680 = vmatpush1.xpose.msra.mxu0 0.0
        %1681 = vmatprep.subr.mxu0 0.0
        %1682 = vmatpush1.xpose.msra.mxu0 0.0
        %1683 = vmatprep.subr.mxu0 0.0
        %1684 = vmatpush1.xpose.msra.mxu0 0.0
        %1685 = vmatprep.subr.mxu0 0.0
        %1686 = vmatpush1.xpose.msra.mxu0 0.0
        %1687 = vmatprep.subr.mxu0 0.0
        %1688 = vmatpush1.xpose.msra.mxu0 0.0
        %1689 = vmatprep.subr.mxu0 0.0
        %1690 = vmatpush1.xpose.msra.mxu0 0.0
        %1691 = vmatprep.subr.mxu0 0.0
        %1692 = vmatpush1.xpose.msra.mxu0 0.0
        %1693 = vmatprep.subr.mxu0 0.0
        %1694 = vmatpush1.xpose.msra.mxu0 0.0
        %1695 = vmatprep.subr.mxu0 0.0
        %1696 = vmatpush1.xpose.msra.mxu0 0.0
        %1697 = vmatprep.subr.mxu0 0.0
        %1698 = vmatpush1.xpose.msra.mxu0 0.0
        %1699 = vmatprep.subr.mxu0 0.0
        %1700 = vmatpush1.xpose.msra.mxu0 0.0
        %1701 = vmatprep.subr.mxu0 0.0
        %1702 = vmatpush1.xpose.msra.mxu0 0.0
        %1703 = vmatprep.subr.mxu0 0.0
        %1704 = vmatpush1.xpose.msra.mxu0 0.0
        %1705 = vmatprep.subr.mxu0 0.0
        %1706 = vmatpush1.xpose.msra.mxu0 0.0
        %1707 = vmatprep.subr.mxu0 0.0
        %1708 = vmatpush1.xpose.msra.mxu0 0.0
        %1709 = vmatprep.mubr.f32.mxu0 0.0
        %1710 = vmatmul.mubr.f32.gmra.mrb[0].mxu0 %v1641
        %v1711 = vpop.f32.mrb[0].mxu0
        %v1712 = vadd.f32 0.0, %v1711
        %v1713 = vpop.f32.mrb[0].mxu0
        %1714 = vdwg.mxu0
        %1715 = vrot.lane.b32.xlu0 %v1559, 96
        %v1716 = vpop.permute.xlu0 %1715
        %v1717 = vsel %vm1564, %v1559, 0
        %v1719 = vsel %vm1564, %v1716, 0
        %1721 = vmatprep.subr.mxu0 0.0
        %1722 = vmatpush1.xpose.msra.mxu0 %v1719
        %1723 = vmatprep.subr.mxu0 0.0
        %1724 = vmatpush1.xpose.msra.mxu0 0.0
        %1725 = vmatprep.subr.mxu0 0.0
        %1726 = vmatpush1.xpose.msra.mxu0 0.0
        %1727 = vmatprep.subr.mxu0 0.0
        %1728 = vmatpush1.xpose.msra.mxu0 0.0
        %1729 = vmatprep.subr.mxu0 0.0
        %1730 = vmatpush1.xpose.msra.mxu0 0.0
        %1731 = vmatprep.subr.mxu0 0.0
        %1732 = vmatpush1.xpose.msra.mxu0 0.0
        %1733 = vmatprep.subr.mxu0 0.0
        %1734 = vmatpush1.xpose.msra.mxu0 0.0
        %1735 = vmatprep.subr.mxu0 0.0
        %1736 = vmatpush1.xpose.msra.mxu0 0.0
        %1737 = vmatprep.subr.mxu0 0.0
        %1738 = vmatpush1.xpose.msra.mxu0 0.0
        %1739 = vmatprep.subr.mxu0 0.0
        %1740 = vmatpush1.xpose.msra.mxu0 0.0
        %1741 = vmatprep.subr.mxu0 0.0
        %1742 = vmatpush1.xpose.msra.mxu0 0.0
        %1743 = vmatprep.subr.mxu0 0.0
        %1744 = vmatpush1.xpose.msra.mxu0 0.0
        %1745 = vmatprep.subr.mxu0 0.0
        %1746 = vmatpush1.xpose.msra.mxu0 0.0
        %1747 = vmatprep.subr.mxu0 0.0
        %1748 = vmatpush1.xpose.msra.mxu0 0.0
        %1749 = vmatprep.subr.mxu0 0.0
        %1750 = vmatpush1.xpose.msra.mxu0 0.0
        %1751 = vmatprep.subr.mxu0 0.0
        %1752 = vmatpush1.xpose.msra.mxu0 0.0
        %1753 = vmatprep.subr.mxu0 0.0
        %1754 = vmatpush1.xpose.msra.mxu0 0.0
        %1755 = vmatprep.subr.mxu0 0.0
        %1756 = vmatpush1.xpose.msra.mxu0 0.0
        %1757 = vmatprep.subr.mxu0 0.0
        %1758 = vmatpush1.xpose.msra.mxu0 0.0
        %1759 = vmatprep.subr.mxu0 0.0
        %1760 = vmatpush1.xpose.msra.mxu0 0.0
        %1761 = vmatprep.subr.mxu0 0.0
        %1762 = vmatpush1.xpose.msra.mxu0 0.0
        %1763 = vmatprep.subr.mxu0 0.0
        %1764 = vmatpush1.xpose.msra.mxu0 0.0
        %1765 = vmatprep.subr.mxu0 0.0
        %1766 = vmatpush1.xpose.msra.mxu0 0.0
        %1767 = vmatprep.subr.mxu0 0.0
        %1768 = vmatpush1.xpose.msra.mxu0 0.0
        %1769 = vmatprep.subr.mxu0 0.0
        %1770 = vmatpush1.xpose.msra.mxu0 0.0
        %1771 = vmatprep.subr.mxu0 0.0
        %1772 = vmatpush1.xpose.msra.mxu0 0.0
        %1773 = vmatprep.subr.mxu0 0.0
        %1774 = vmatpush1.xpose.msra.mxu0 0.0
        %1775 = vmatprep.subr.mxu0 0.0
        %1776 = vmatpush1.xpose.msra.mxu0 0.0
        %1777 = vmatprep.subr.mxu0 0.0
        %1778 = vmatpush1.xpose.msra.mxu0 0.0
        %1779 = vmatprep.subr.mxu0 0.0
        %1780 = vmatpush1.xpose.msra.mxu0 0.0
        %1781 = vmatprep.subr.mxu0 0.0
        %1782 = vmatpush1.xpose.msra.mxu0 0.0
        %1783 = vmatprep.subr.mxu0 0.0
        %1784 = vmatpush1.xpose.msra.mxu0 0.0
        %1785 = vmatprep.mubr.f32.mxu0 0.0
        %1786 = vmatmul.mubr.f32.gmra.mrb[0].mxu0 %v1717
        %v1787 = vpop.f32.mrb[0].mxu0
        %v1788 = vadd.f32 0.0, %v1787
        %v1789 = vpop.f32.mrb[0].mxu0
        %1790 = vdwg.mxu0
        %1791 = vrot.lane.b32.xlu0 %v1561, 96
        %v1792 = vpop.permute.xlu0 %1791
        %v1793 = vsel %vm1564, %v1561, 0
        %v1795 = vsel %vm1564, %v1792, 0
        %1797 = vmatprep.subr.mxu0 0.0
        %1798 = vmatpush1.xpose.msra.mxu0 %v1795
        %1799 = vmatprep.subr.mxu0 0.0
        %1800 = vmatpush1.xpose.msra.mxu0 0.0
        %1801 = vmatprep.subr.mxu0 0.0
        %1802 = vmatpush1.xpose.msra.mxu0 0.0
        %1803 = vmatprep.subr.mxu0 0.0
        %1804 = vmatpush1.xpose.msra.mxu0 0.0
        %1805 = vmatprep.subr.mxu0 0.0
        %1806 = vmatpush1.xpose.msra.mxu0 0.0
        %1807 = vmatprep.subr.mxu0 0.0
        %1808 = vmatpush1.xpose.msra.mxu0 0.0
        %1809 = vmatprep.subr.mxu0 0.0
        %1810 = vmatpush1.xpose.msra.mxu0 0.0
        %1811 = vmatprep.subr.mxu0 0.0
        %1812 = vmatpush1.xpose.msra.mxu0 0.0
        %1813 = vmatprep.subr.mxu0 0.0
        %1814 = vmatpush1.xpose.msra.mxu0 0.0
        %1815 = vmatprep.subr.mxu0 0.0
        %1816 = vmatpush1.xpose.msra.mxu0 0.0
        %1817 = vmatprep.subr.mxu0 0.0
        %1818 = vmatpush1.xpose.msra.mxu0 0.0
        %1819 = vmatprep.subr.mxu0 0.0
        %1820 = vmatpush1.xpose.msra.mxu0 0.0
        %1821 = vmatprep.subr.mxu0 0.0
        %1822 = vmatpush1.xpose.msra.mxu0 0.0
        %1823 = vmatprep.subr.mxu0 0.0
        %1824 = vmatpush1.xpose.msra.mxu0 0.0
        %1825 = vmatprep.subr.mxu0 0.0
        %1826 = vmatpush1.xpose.msra.mxu0 0.0
        %1827 = vmatprep.subr.mxu0 0.0
        %1828 = vmatpush1.xpose.msra.mxu0 0.0
        %1829 = vmatprep.subr.mxu0 0.0
        %1830 = vmatpush1.xpose.msra.mxu0 0.0
        %1831 = vmatprep.subr.mxu0 0.0
        %1832 = vmatpush1.xpose.msra.mxu0 0.0
        %1833 = vmatprep.subr.mxu0 0.0
        %1834 = vmatpush1.xpose.msra.mxu0 0.0
        %1835 = vmatprep.subr.mxu0 0.0
        %1836 = vmatpush1.xpose.msra.mxu0 0.0
        %1837 = vmatprep.subr.mxu0 0.0
        %1838 = vmatpush1.xpose.msra.mxu0 0.0
        %1839 = vmatprep.subr.mxu0 0.0
        %1840 = vmatpush1.xpose.msra.mxu0 0.0
        %1841 = vmatprep.subr.mxu0 0.0
        %1842 = vmatpush1.xpose.msra.mxu0 0.0
        %1843 = vmatprep.subr.mxu0 0.0
        %1844 = vmatpush1.xpose.msra.mxu0 0.0
        %1845 = vmatprep.subr.mxu0 0.0
        %1846 = vmatpush1.xpose.msra.mxu0 0.0
        %1847 = vmatprep.subr.mxu0 0.0
        %1848 = vmatpush1.xpose.msra.mxu0 0.0
        %1849 = vmatprep.subr.mxu0 0.0
        %1850 = vmatpush1.xpose.msra.mxu0 0.0
        %1851 = vmatprep.subr.mxu0 0.0
        %1852 = vmatpush1.xpose.msra.mxu0 0.0
        %1853 = vmatprep.subr.mxu0 0.0
        %1854 = vmatpush1.xpose.msra.mxu0 0.0
        %1855 = vmatprep.subr.mxu0 0.0
        %1856 = vmatpush1.xpose.msra.mxu0 0.0
        %1857 = vmatprep.subr.mxu0 0.0
        %1858 = vmatpush1.xpose.msra.mxu0 0.0
        %1859 = vmatprep.subr.mxu0 0.0
        %1860 = vmatpush1.xpose.msra.mxu0 0.0
        %1861 = vmatprep.mubr.f32.mxu0 0.0
        %1862 = vmatmul.mubr.f32.gmra.mrb[0].mxu0 %v1793
        %v1863 = vpop.f32.mrb[0].mxu0
        %v1864 = vadd.f32 0.0, %v1863
        %v1865 = vpop.f32.mrb[0].mxu0
        %1866 = vdwg.mxu0
        %v1867 = vmul.f32 %v1636, 0.35355338
        %v1868 = vmul.f32 %v1712, 0.35355338
        %v1869 = vmul.f32 %v1788, 0.35355338
        %v1870 = vmul.f32 %v1864, 0.35355338
        %vm1871 = vcmp.ne.f32.partialorder %v1387, 0.0
        %v1872 = vsel %vm1871, 1, 0
        %vm1873 = vcmp.eq.s32.totalorder %v1872, 1
        %v1874 = vsel %vm1873, %v1867, -1e+09
        %v1875 = vsel %vm1873, %v1868, -1e+09
        %v1876 = vsel %vm1873, %v1869, -1e+09
        %v1877 = vsel %vm1873, %v1870, -1e+09
        %v1878 = vsel %vm1564, %v1874, -inf
        %1879 = vmax.xlane.f32.xlu0 %v1878
        %v1880 = vpop.xlane.xlu0 %1879
        %v1881 = vsel %vm1564, %v1875, -inf
        %1882 = vmax.xlane.f32.xlu0 %v1881
        %v1883 = vpop.xlane.xlu0 %1882
        %v1884 = vsel %vm1564, %v1876, -inf
        %1885 = vmax.xlane.f32.xlu0 %v1884
        %v1886 = vpop.xlane.xlu0 %1885
        %v1887 = vsel %vm1564, %v1877, -inf
        %1888 = vmax.xlane.f32.xlu0 %v1887
        %v1889 = vpop.xlane.xlu0 %1888
        %v1890 = vsub.f32 %v1874, %v1880
        %v1891 = vsub.f32 %v1875, %v1883
        %v1892 = vsub.f32 %v1876, %v1886
        %v1893 = vsub.f32 %v1877, %v1889
        %v1894 = vmul.f32 %v1890, 1.442695
        %v1895 = vpow.pop %v1894
        %v1896 = vmul.f32 %v1891, 1.442695
        %v1897 = vpow.pop %v1896
        %v1898 = vmul.f32 %v1892, 1.442695
        %v1899 = vpow.pop %v1898
        %v1900 = vmul.f32 %v1893, 1.442695
        %v1901 = vpow.pop %v1900
        %v1902 = vsel %vm1564, %v1895, 0.0
        %1903 = vadd.xlane.f32.xlu0 %v1902
        %v1904 = vpop.xlane.xlu0 %1903
        %v1905 = vsel %vm1564, %v1897, 0.0
        %1906 = vadd.xlane.f32.xlu0 %v1905
        %v1907 = vpop.xlane.xlu0 %1906
        %v1908 = vsel %vm1564, %v1899, 0.0
        %1909 = vadd.xlane.f32.xlu0 %v1908
        %v1910 = vpop.xlane.xlu0 %1909
        %v1911 = vsel %vm1564, %v1901, 0.0
        %1912 = vadd.xlane.f32.xlu0 %v1911
        %v1913 = vpop.xlane.xlu0 %1912
        %v1914 = vrcp.pop %v1904
        %v1915 = vmul.f32 %v1895, %v1914
        %v1916 = vrcp.pop %v1907
        %v1917 = vmul.f32 %v1897, %v1916
        %v1918 = vrcp.pop %v1910
        %v1919 = vmul.f32 %v1899, %v1918
        %v1920 = vrcp.pop %v1913
        %v1921 = vmul.f32 %v1901, %v1920
        %1922 = vrot.lane.b32.xlu0 %v1552, 64
        %v1923 = vpop.permute.xlu0 %1922
        %v1926 = vsel %vm1564, %v1915, 0
        %1928 = vmatprep.subr.mxu0 0.0
        %1929 = vmatpush1.msra.mxu0 %v1923
        %1930 = vmatprep.subr.mxu0 0.0
        %1931 = vmatpush1.msra.mxu0 0.0
        %1932 = vmatprep.subr.mxu0 0.0
        %1933 = vmatpush1.msra.mxu0 0.0
        %1934 = vmatprep.subr.mxu0 0.0
        %1935 = vmatpush1.msra.mxu0 0.0
        %1936 = vmatprep.subr.mxu0 0.0
        %1937 = vmatpush1.msra.mxu0 0.0
        %1938 = vmatprep.subr.mxu0 0.0
        %1939 = vmatpush1.msra.mxu0 0.0
        %1940 = vmatprep.subr.mxu0 0.0
        %1941 = vmatpush1.msra.mxu0 0.0
        %1942 = vmatprep.subr.mxu0 0.0
        %1943 = vmatpush1.msra.mxu0 0.0
        %1944 = vmatprep.subr.mxu0 0.0
        %1945 = vmatpush1.msra.mxu0 0.0
        %1946 = vmatprep.subr.mxu0 0.0
        %1947 = vmatpush1.msra.mxu0 0.0
        %1948 = vmatprep.subr.mxu0 0.0
        %1949 = vmatpush1.msra.mxu0 0.0
        %1950 = vmatprep.subr.mxu0 0.0
        %1951 = vmatpush1.msra.mxu0 0.0
        %1952 = vmatprep.subr.mxu0 0.0
        %1953 = vmatpush1.msra.mxu0 0.0
        %1954 = vmatprep.subr.mxu0 0.0
        %1955 = vmatpush1.msra.mxu0 0.0
        %1956 = vmatprep.subr.mxu0 0.0
        %1957 = vmatpush1.msra.mxu0 0.0
        %1958 = vmatprep.subr.mxu0 0.0
        %1959 = vmatpush1.msra.mxu0 0.0
        %1960 = vmatprep.subr.mxu0 0.0
        %1961 = vmatpush1.msra.mxu0 0.0
        %1962 = vmatprep.subr.mxu0 0.0
        %1963 = vmatpush1.msra.mxu0 0.0
        %1964 = vmatprep.subr.mxu0 0.0
        %1965 = vmatpush1.msra.mxu0 0.0
        %1966 = vmatprep.subr.mxu0 0.0
        %1967 = vmatpush1.msra.mxu0 0.0
        %1968 = vmatprep.subr.mxu0 0.0
        %1969 = vmatpush1.msra.mxu0 0.0
        %1970 = vmatprep.subr.mxu0 0.0
        %1971 = vmatpush1.msra.mxu0 0.0
        %1972 = vmatprep.subr.mxu0 0.0
        %1973 = vmatpush1.msra.mxu0 0.0
        %1974 = vmatprep.subr.mxu0 0.0
        %1975 = vmatpush1.msra.mxu0 0.0
        %1976 = vmatprep.subr.mxu0 0.0
        %1977 = vmatpush1.msra.mxu0 0.0
        %1978 = vmatprep.subr.mxu0 0.0
        %1979 = vmatpush1.msra.mxu0 0.0
        %1980 = vmatprep.subr.mxu0 0.0
        %1981 = vmatpush1.msra.mxu0 0.0
        %1982 = vmatprep.subr.mxu0 0.0
        %1983 = vmatpush1.msra.mxu0 0.0
        %1984 = vmatprep.subr.mxu0 0.0
        %1985 = vmatpush1.msra.mxu0 0.0
        %1986 = vmatprep.subr.mxu0 0.0
        %1987 = vmatpush1.msra.mxu0 0.0
        %1988 = vmatprep.subr.mxu0 0.0
        %1989 = vmatpush1.msra.mxu0 0.0
        %1990 = vmatprep.subr.mxu0 0.0
        %1991 = vmatpush1.msra.mxu0 0.0
        %1992 = vmatprep.mubr.f32.mxu0 0.0
        %1993 = vmatmul.mubr.f32.gmra.mrb[0].mxu0 %v1926
        %v1994 = vpop.f32.mrb[0].mxu0
        %v1995 = vadd.f32 0.0, %v1994
        %v1996 = vpop.f32.mrb[0].mxu0
        %1997 = vdwg.mxu0
        %1998 = vrot.lane.b32.xlu0 %v1557, 64
        %v1999 = vpop.permute.xlu0 %1998
        %v2002 = vsel %vm1564, %v1917, 0
        %2004 = vmatprep.subr.mxu0 0.0
        %2005 = vmatpush1.msra.mxu0 %v1999
        %2006 = vmatprep.subr.mxu0 0.0
        %2007 = vmatpush1.msra.mxu0 0.0
        %2008 = vmatprep.subr.mxu0 0.0
        %2009 = vmatpush1.msra.mxu0 0.0
        %2010 = vmatprep.subr.mxu0 0.0
        %2011 = vmatpush1.msra.mxu0 0.0
        %2012 = vmatprep.subr.mxu0 0.0
        %2013 = vmatpush1.msra.mxu0 0.0
        %2014 = vmatprep.subr.mxu0 0.0
        %2015 = vmatpush1.msra.mxu0 0.0
        %2016 = vmatprep.subr.mxu0 0.0
        %2017 = vmatpush1.msra.mxu0 0.0
        %2018 = vmatprep.subr.mxu0 0.0
        %2019 = vmatpush1.msra.mxu0 0.0
        %2020 = vmatprep.subr.mxu0 0.0
        %2021 = vmatpush1.msra.mxu0 0.0
        %2022 = vmatprep.subr.mxu0 0.0
        %2023 = vmatpush1.msra.mxu0 0.0
        %2024 = vmatprep.subr.mxu0 0.0
        %2025 = vmatpush1.msra.mxu0 0.0
        %2026 = vmatprep.subr.mxu0 0.0
        %2027 = vmatpush1.msra.mxu0 0.0
        %2028 = vmatprep.subr.mxu0 0.0
        %2029 = vmatpush1.msra.mxu0 0.0
        %2030 = vmatprep.subr.mxu0 0.0
        %2031 = vmatpush1.msra.mxu0 0.0
        %2032 = vmatprep.subr.mxu0 0.0
        %2033 = vmatpush1.msra.mxu0 0.0
        %2034 = vmatprep.subr.mxu0 0.0
        %2035 = vmatpush1.msra.mxu0 0.0
        %2036 = vmatprep.subr.mxu0 0.0
        %2037 = vmatpush1.msra.mxu0 0.0
        %2038 = vmatprep.subr.mxu0 0.0
        %2039 = vmatpush1.msra.mxu0 0.0
        %2040 = vmatprep.subr.mxu0 0.0
        %2041 = vmatpush1.msra.mxu0 0.0
        %2042 = vmatprep.subr.mxu0 0.0
        %2043 = vmatpush1.msra.mxu0 0.0
        %2044 = vmatprep.subr.mxu0 0.0
        %2045 = vmatpush1.msra.mxu0 0.0
        %2046 = vmatprep.subr.mxu0 0.0
        %2047 = vmatpush1.msra.mxu0 0.0
        %2048 = vmatprep.subr.mxu0 0.0
        %2049 = vmatpush1.msra.mxu0 0.0
        %2050 = vmatprep.subr.mxu0 0.0
        %2051 = vmatpush1.msra.mxu0 0.0
        %2052 = vmatprep.subr.mxu0 0.0
        %2053 = vmatpush1.msra.mxu0 0.0
        %2054 = vmatprep.subr.mxu0 0.0
        %2055 = vmatpush1.msra.mxu0 0.0
        %2056 = vmatprep.subr.mxu0 0.0
        %2057 = vmatpush1.msra.mxu0 0.0
        %2058 = vmatprep.subr.mxu0 0.0
        %2059 = vmatpush1.msra.mxu0 0.0
        %2060 = vmatprep.subr.mxu0 0.0
        %2061 = vmatpush1.msra.mxu0 0.0
        %2062 = vmatprep.subr.mxu0 0.0
        %2063 = vmatpush1.msra.mxu0 0.0
        %2064 = vmatprep.subr.mxu0 0.0
        %2065 = vmatpush1.msra.mxu0 0.0
        %2066 = vmatprep.subr.mxu0 0.0
        %2067 = vmatpush1.msra.mxu0 0.0
        %2068 = vmatprep.mubr.f32.mxu0 0.0
        %2069 = vmatmul.mubr.f32.gmra.mrb[0].mxu0 %v2002
        %v2070 = vpop.f32.mrb[0].mxu0
        %v2071 = vadd.f32 0.0, %v2070
        %v2072 = vpop.f32.mrb[0].mxu0
        %2073 = vdwg.mxu0
        %2074 = vrot.lane.b32.xlu0 %v1559, 64
        %v2075 = vpop.permute.xlu0 %2074
        %v2078 = vsel %vm1564, %v1919, 0
        %2080 = vmatprep.subr.mxu0 0.0
        %2081 = vmatpush1.msra.mxu0 %v2075
        %2082 = vmatprep.subr.mxu0 0.0
        %2083 = vmatpush1.msra.mxu0 0.0
        %2084 = vmatprep.subr.mxu0 0.0
        %2085 = vmatpush1.msra.mxu0 0.0
        %2086 = vmatprep.subr.mxu0 0.0
        %2087 = vmatpush1.msra.mxu0 0.0
        %2088 = vmatprep.subr.mxu0 0.0
        %2089 = vmatpush1.msra.mxu0 0.0
        %2090 = vmatprep.subr.mxu0 0.0
        %2091 = vmatpush1.msra.mxu0 0.0
        %2092 = vmatprep.subr.mxu0 0.0
        %2093 = vmatpush1.msra.mxu0 0.0
        %2094 = vmatprep.subr.mxu0 0.0
        %2095 = vmatpush1.msra.mxu0 0.0
        %2096 = vmatprep.subr.mxu0 0.0
        %2097 = vmatpush1.msra.mxu0 0.0
        %2098 = vmatprep.subr.mxu0 0.0
        %2099 = vmatpush1.msra.mxu0 0.0
        %2100 = vmatprep.subr.mxu0 0.0
        %2101 = vmatpush1.msra.mxu0 0.0
        %2102 = vmatprep.subr.mxu0 0.0
        %2103 = vmatpush1.msra.mxu0 0.0
        %2104 = vmatprep.subr.mxu0 0.0
        %2105 = vmatpush1.msra.mxu0 0.0
        %2106 = vmatprep.subr.mxu0 0.0
        %2107 = vmatpush1.msra.mxu0 0.0
        %2108 = vmatprep.subr.mxu0 0.0
        %2109 = vmatpush1.msra.mxu0 0.0
        %2110 = vmatprep.subr.mxu0 0.0
        %2111 = vmatpush1.msra.mxu0 0.0
        %2112 = vmatprep.subr.mxu0 0.0
        %2113 = vmatpush1.msra.mxu0 0.0
        %2114 = vmatprep.subr.mxu0 0.0
        %2115 = vmatpush1.msra.mxu0 0.0
        %2116 = vmatprep.subr.mxu0 0.0
        %2117 = vmatpush1.msra.mxu0 0.0
        %2118 = vmatprep.subr.mxu0 0.0
        %2119 = vmatpush1.msra.mxu0 0.0
        %2120 = vmatprep.subr.mxu0 0.0
        %2121 = vmatpush1.msra.mxu0 0.0
        %2122 = vmatprep.subr.mxu0 0.0
        %2123 = vmatpush1.msra.mxu0 0.0
        %2124 = vmatprep.subr.mxu0 0.0
        %2125 = vmatpush1.msra.mxu0 0.0
        %2126 = vmatprep.subr.mxu0 0.0
        %2127 = vmatpush1.msra.mxu0 0.0
        %2128 = vmatprep.subr.mxu0 0.0
        %2129 = vmatpush1.msra.mxu0 0.0
        %2130 = vmatprep.subr.mxu0 0.0
        %2131 = vmatpush1.msra.mxu0 0.0
        %2132 = vmatprep.subr.mxu0 0.0
        %2133 = vmatpush1.msra.mxu0 0.0
        %2134 = vmatprep.subr.mxu0 0.0
        %2135 = vmatpush1.msra.mxu0 0.0
        %2136 = vmatprep.subr.mxu0 0.0
        %2137 = vmatpush1.msra.mxu0 0.0
        %2138 = vmatprep.subr.mxu0 0.0
        %2139 = vmatpush1.msra.mxu0 0.0
        %2140 = vmatprep.subr.mxu0 0.0
        %2141 = vmatpush1.msra.mxu0 0.0
        %2142 = vmatprep.subr.mxu0 0.0
        %2143 = vmatpush1.msra.mxu0 0.0
        %2144 = vmatprep.mubr.f32.mxu0 0.0
        %2145 = vmatmul.mubr.f32.gmra.mrb[0].mxu0 %v2078
        %v2146 = vpop.f32.mrb[0].mxu0
        %v2147 = vadd.f32 0.0, %v2146
        %v2148 = vpop.f32.mrb[0].mxu0
        %2149 = vdwg.mxu0
        %2150 = vrot.lane.b32.xlu0 %v1561, 64
        %v2151 = vpop.permute.xlu0 %2150
        %v2154 = vsel %vm1564, %v1921, 0
        %2156 = vmatprep.subr.mxu0 0.0
        %2157 = vmatpush1.msra.mxu0 %v2151
        %2158 = vmatprep.subr.mxu0 0.0
        %2159 = vmatpush1.msra.mxu0 0.0
        %2160 = vmatprep.subr.mxu0 0.0
        %2161 = vmatpush1.msra.mxu0 0.0
        %2162 = vmatprep.subr.mxu0 0.0
        %2163 = vmatpush1.msra.mxu0 0.0
        %2164 = vmatprep.subr.mxu0 0.0
        %2165 = vmatpush1.msra.mxu0 0.0
        %2166 = vmatprep.subr.mxu0 0.0
        %2167 = vmatpush1.msra.mxu0 0.0
        %2168 = vmatprep.subr.mxu0 0.0
        %2169 = vmatpush1.msra.mxu0 0.0
        %2170 = vmatprep.subr.mxu0 0.0
        %2171 = vmatpush1.msra.mxu0 0.0
        %2172 = vmatprep.subr.mxu0 0.0
        %2173 = vmatpush1.msra.mxu0 0.0
        %2174 = vmatprep.subr.mxu0 0.0
        %2175 = vmatpush1.msra.mxu0 0.0
        %2176 = vmatprep.subr.mxu0 0.0
        %2177 = vmatpush1.msra.mxu0 0.0
        %2178 = vmatprep.subr.mxu0 0.0
        %2179 = vmatpush1.msra.mxu0 0.0
        %2180 = vmatprep.subr.mxu0 0.0
        %2181 = vmatpush1.msra.mxu0 0.0
        %2182 = vmatprep.subr.mxu0 0.0
        %2183 = vmatpush1.msra.mxu0 0.0
        %2184 = vmatprep.subr.mxu0 0.0
        %2185 = vmatpush1.msra.mxu0 0.0
        %2186 = vmatprep.subr.mxu0 0.0
        %2187 = vmatpush1.msra.mxu0 0.0
        %2188 = vmatprep.subr.mxu0 0.0
        %2189 = vmatpush1.msra.mxu0 0.0
        %2190 = vmatprep.subr.mxu0 0.0
        %2191 = vmatpush1.msra.mxu0 0.0
        %2192 = vmatprep.subr.mxu0 0.0
        %2193 = vmatpush1.msra.mxu0 0.0
        %2194 = vmatprep.subr.mxu0 0.0
        %2195 = vmatpush1.msra.mxu0 0.0
        %2196 = vmatprep.subr.mxu0 0.0
        %2197 = vmatpush1.msra.mxu0 0.0
        %2198 = vmatprep.subr.mxu0 0.0
        %2199 = vmatpush1.msra.mxu0 0.0
        %2200 = vmatprep.subr.mxu0 0.0
        %2201 = vmatpush1.msra.mxu0 0.0
        %2202 = vmatprep.subr.mxu0 0.0
        %2203 = vmatpush1.msra.mxu0 0.0
        %2204 = vmatprep.subr.mxu0 0.0
        %2205 = vmatpush1.msra.mxu0 0.0
        %2206 = vmatprep.subr.mxu0 0.0
        %2207 = vmatpush1.msra.mxu0 0.0
        %2208 = vmatprep.subr.mxu0 0.0
        %2209 = vmatpush1.msra.mxu0 0.0
        %2210 = vmatprep.subr.mxu0 0.0
        %2211 = vmatpush1.msra.mxu0 0.0
        %2212 = vmatprep.subr.mxu0 0.0
        %2213 = vmatpush1.msra.mxu0 0.0
        %2214 = vmatprep.subr.mxu0 0.0
        %2215 = vmatpush1.msra.mxu0 0.0
        %2216 = vmatprep.subr.mxu0 0.0
        %2217 = vmatpush1.msra.mxu0 0.0
        %2218 = vmatprep.subr.mxu0 0.0
        %2219 = vmatpush1.msra.mxu0 0.0
        %2220 = vmatprep.mubr.f32.mxu0 0.0
        %2221 = vmatmul.mubr.f32.gmra.mrb[0].mxu0 %v2154
        %v2222 = vpop.f32.mrb[0].mxu0
        %v2223 = vadd.f32 0.0, %v2222
        %v2224 = vpop.f32.mrb[0].mxu0
        %2225 = vdwg.mxu0
        %2227 = vrot.lane.b32.xlu0 %v2071, 8
        %v2228 = vpop.permute.xlu0 %2227
        %2231 = vrot.lane.b32.xlu0 %v2147, 16
        %v2232 = vpop.permute.xlu0 %2231
        %2235 = vrot.lane.b32.xlu0 %v2223, 24
        %v2236 = vpop.permute.xlu0 %2235
        %v2238 = vsel %vm1564, %v1995, %v2228
        %vm2239 = vcmask 130048
        %v2240 = vsel %vm2239, %v2238, %v2232
        %vm2241 = vcmask 195584
        %v2242 = vsel %vm2241, %v2240, %v2236
        %v2244 = vlaneseq
        %v2245 = vshrl.u32 %v2244, 7
        %v2246 = vsub.s32 0, %v2245
        %v2247 = vrot.slane %v954, %v2246
        %v2250 = vsel %vm977, %v2242, 0
        %2252 = vmatprep.subr.mxu0 0.0
        %2253 = vmatpush1.msra.mxu0 %v950
        %2254 = vmatprep.subr.mxu0 0.0
        %2255 = vmatpush1.msra.mxu0 %v951
        %2256 = vmatprep.subr.mxu0 0.0
        %2257 = vmatpush1.msra.mxu0 %v952
        %2258 = vmatprep.subr.mxu0 0.0
        %2259 = vmatpush1.msra.mxu0 %v953
        %2260 = vmatprep.subr.mxu0 0.0
        %2261 = vmatpush1.msra.mxu0 0.0
        %2262 = vmatprep.subr.mxu0 0.0
        %2263 = vmatpush1.msra.mxu0 0.0
        %2264 = vmatprep.subr.mxu0 0.0
        %2265 = vmatpush1.msra.mxu0 0.0
        %2266 = vmatprep.subr.mxu0 0.0
        %2267 = vmatpush1.msra.mxu0 0.0
        %2268 = vmatprep.subr.mxu0 0.0
        %2269 = vmatpush1.msra.mxu0 0.0
        %2270 = vmatprep.subr.mxu0 0.0
        %2271 = vmatpush1.msra.mxu0 0.0
        %2272 = vmatprep.subr.mxu0 0.0
        %2273 = vmatpush1.msra.mxu0 0.0
        %2274 = vmatprep.subr.mxu0 0.0
        %2275 = vmatpush1.msra.mxu0 0.0
        %2276 = vmatprep.subr.mxu0 0.0
        %2277 = vmatpush1.msra.mxu0 0.0
        %2278 = vmatprep.subr.mxu0 0.0
        %2279 = vmatpush1.msra.mxu0 0.0
        %2280 = vmatprep.subr.mxu0 0.0
        %2281 = vmatpush1.msra.mxu0 0.0
        %2282 = vmatprep.subr.mxu0 0.0
        %2283 = vmatpush1.msra.mxu0 0.0
        %2284 = vmatprep.subr.mxu0 0.0
        %2285 = vmatpush1.msra.mxu0 0.0
        %2286 = vmatprep.subr.mxu0 0.0
        %2287 = vmatpush1.msra.mxu0 0.0
        %2288 = vmatprep.subr.mxu0 0.0
        %2289 = vmatpush1.msra.mxu0 0.0
        %2290 = vmatprep.subr.mxu0 0.0
        %2291 = vmatpush1.msra.mxu0 0.0
        %2292 = vmatprep.subr.mxu0 0.0
        %2293 = vmatpush1.msra.mxu0 0.0
        %2294 = vmatprep.subr.mxu0 0.0
        %2295 = vmatpush1.msra.mxu0 0.0
        %2296 = vmatprep.subr.mxu0 0.0
        %2297 = vmatpush1.msra.mxu0 0.0
        %2298 = vmatprep.subr.mxu0 0.0
        %2299 = vmatpush1.msra.mxu0 0.0
        %2300 = vmatprep.subr.mxu0 0.0
        %2301 = vmatpush1.msra.mxu0 0.0
        %2302 = vmatprep.subr.mxu0 0.0
        %2303 = vmatpush1.msra.mxu0 0.0
        %2304 = vmatprep.subr.mxu0 0.0
        %2305 = vmatpush1.msra.mxu0 0.0
        %2306 = vmatprep.subr.mxu0 0.0
        %2307 = vmatpush1.msra.mxu0 0.0
        %2308 = vmatprep.subr.mxu0 0.0
        %2309 = vmatpush1.msra.mxu0 0.0
        %2310 = vmatprep.subr.mxu0 0.0
        %2311 = vmatpush1.msra.mxu0 0.0
        %2312 = vmatprep.subr.mxu0 0.0
        %2313 = vmatpush1.msra.mxu0 0.0
        %2314 = vmatprep.subr.mxu0 0.0
        %2315 = vmatpush1.msra.mxu0 0.0
        %2316 = vmatprep.mubr.f32.mxu0 0.0
        %2317 = vmatmul.mubr.f32.gmra.mrb[0].mxu0 %v2250
        %v2318 = vpop.f32.mrb[0].mxu0
        %v2319 = vadd.f32 %v2247, %v2318
        %v2320 = vpop.f32.mrb[0].mxu0
        %2321 = vdwg.mxu0
        %v2322 = vadd.f32 %v1475, %v2319
        %v2323 = vsel %vm977, %v2322, 0.0
        %2324 = vadd.xlane.f32.xlu0 %v2323
        %v2325 = vpop.xlane.xlu0 %2324
        %v2326 = vmul.f32 %v2325, %v981
        %v2327 = vsub.f32 %v2322, %v2326
        %v2328 = vmul.f32 %v2327, %v2327
        %v2329 = vsel %vm977, %v2328, 0.0
        %2330 = vadd.xlane.f32.xlu0 %v2329
        %v2331 = vpop.xlane.xlu0 %2330
        %v2332 = vmul.f32 %v2331, %v1176
        %v2333 = vrsqrt.pop %v2332
        %v2334 = vmul.f32 %v2332, %v2333
        %vm2335 = vcmp.eq.f32.partialorder %v2332, inf
        %v2336 = vsel %vm2335, %v2332, %v2334
        %vm2337 = vcmp.eq.f32.partialorder %v2332, 0.0
        %v2338 = vand.u32 %v2332, 2147483648
        %v2339 = vsel %vm2337, %v2338, %v2336
        %v2340 = vmul.f32 %v1189, %v2327
        %v2341 = vadd.f32 %v2339, 1e-06
        %v2342 = vrcp.pop %v2341
        %v2343 = vmul.f32 %v2340, %v2342
        %v2344 = vadd.f32 %v2343, %v1199
        %v2346 = vlaneseq
        %v2347 = vshrl.u32 %v2346, 7
        %v2348 = vsub.s32 0, %v2347
        %v2349 = vrot.slane %v939, %v2348
        %v2352 = vsel %vm977, %v2344, 0
        %2354 = vmatprep.subr.mxu0 0.0
        %2355 = vmatpush1.msra.mxu0 %v935
        %2356 = vmatprep.subr.mxu0 0.0
        %2357 = vmatpush1.msra.mxu0 %v936
        %2358 = vmatprep.subr.mxu0 0.0
        %2359 = vmatpush1.msra.mxu0 %v937
        %2360 = vmatprep.subr.mxu0 0.0
        %2361 = vmatpush1.msra.mxu0 %v938
        %2362 = vmatprep.subr.mxu0 0.0
        %2363 = vmatpush1.msra.mxu0 0.0
        %2364 = vmatprep.subr.mxu0 0.0
        %2365 = vmatpush1.msra.mxu0 0.0
        %2366 = vmatprep.subr.mxu0 0.0
        %2367 = vmatpush1.msra.mxu0 0.0
        %2368 = vmatprep.subr.mxu0 0.0
        %2369 = vmatpush1.msra.mxu0 0.0
        %2370 = vmatprep.subr.mxu0 0.0
        %2371 = vmatpush1.msra.mxu0 0.0
        %2372 = vmatprep.subr.mxu0 0.0
        %2373 = vmatpush1.msra.mxu0 0.0
        %2374 = vmatprep.subr.mxu0 0.0
        %2375 = vmatpush1.msra.mxu0 0.0
        %2376 = vmatprep.subr.mxu0 0.0
        %2377 = vmatpush1.msra.mxu0 0.0
        %2378 = vmatprep.subr.mxu0 0.0
        %2379 = vmatpush1.msra.mxu0 0.0
        %2380 = vmatprep.subr.mxu0 0.0
        %2381 = vmatpush1.msra.mxu0 0.0
        %2382 = vmatprep.subr.mxu0 0.0
        %2383 = vmatpush1.msra.mxu0 0.0
        %2384 = vmatprep.subr.mxu0 0.0
        %2385 = vmatpush1.msra.mxu0 0.0
        %2386 = vmatprep.subr.mxu0 0.0
        %2387 = vmatpush1.msra.mxu0 0.0
        %2388 = vmatprep.subr.mxu0 0.0
        %2389 = vmatpush1.msra.mxu0 0.0
        %2390 = vmatprep.subr.mxu0 0.0
        %2391 = vmatpush1.msra.mxu0 0.0
        %2392 = vmatprep.subr.mxu0 0.0
        %2393 = vmatpush1.msra.mxu0 0.0
        %2394 = vmatprep.subr.mxu0 0.0
        %2395 = vmatpush1.msra.mxu0 0.0
        %2396 = vmatprep.subr.mxu0 0.0
        %2397 = vmatpush1.msra.mxu0 0.0
        %2398 = vmatprep.subr.mxu0 0.0
        %2399 = vmatpush1.msra.mxu0 0.0
        %2400 = vmatprep.subr.mxu0 0.0
        %2401 = vmatpush1.msra.mxu0 0.0
        %2402 = vmatprep.subr.mxu0 0.0
        %2403 = vmatpush1.msra.mxu0 0.0
        %2404 = vmatprep.subr.mxu0 0.0
        %2405 = vmatpush1.msra.mxu0 0.0
        %2406 = vmatprep.subr.mxu0 0.0
        %2407 = vmatpush1.msra.mxu0 0.0
        %2408 = vmatprep.subr.mxu0 0.0
        %2409 = vmatpush1.msra.mxu0 0.0
        %2410 = vmatprep.subr.mxu0 0.0
        %2411 = vmatpush1.msra.mxu0 0.0
        %2412 = vmatprep.subr.mxu0 0.0
        %2413 = vmatpush1.msra.mxu0 0.0
        %2414 = vmatprep.subr.mxu0 0.0
        %2415 = vmatpush1.msra.mxu0 0.0
        %2416 = vmatprep.subr.mxu0 0.0
        %2417 = vmatpush1.msra.mxu0 0.0
        %2418 = vmatprep.mubr.f32.mxu0 0.0
        %2419 = vmatmul.mubr.f32.gmra.mrb[0].mxu0 %v2352
        %v2420 = vpop.f32.mrb[0].mxu0
        %v2421 = vadd.f32 %v2349, %v2420
        %v2422 = vpop.f32.mrb[0].mxu0
        %2423 = vdwg.mxu0
        %2425 = vrot.lane.b32.xlu0 %v2421, 120
        %v2426 = vpop.permute.xlu0 %2425
        %2427 = vrot.lane.b32.xlu0 %v2421, 112
        %v2428 = vpop.permute.xlu0 %2427
        %2429 = vrot.lane.b32.xlu0 %v2421, 104
        %v2430 = vpop.permute.xlu0 %2429
        %v2431 = vsel %vm1564, %v2421, 0
        %v2433 = vsel %vm1564, %v1465, 0
        %2435 = vmatprep.subr.mxu0 0.0
        %2436 = vmatpush1.xpose.msra.mxu0 %v2433
        %2437 = vmatprep.subr.mxu0 0.0
        %2438 = vmatpush1.xpose.msra.mxu0 0.0
        %2439 = vmatprep.subr.mxu0 0.0
        %2440 = vmatpush1.xpose.msra.mxu0 0.0
        %2441 = vmatprep.subr.mxu0 0.0
        %2442 = vmatpush1.xpose.msra.mxu0 0.0
        %2443 = vmatprep.subr.mxu0 0.0
        %2444 = vmatpush1.xpose.msra.mxu0 0.0
        %2445 = vmatprep.subr.mxu0 0.0
        %2446 = vmatpush1.xpose.msra.mxu0 0.0
        %2447 = vmatprep.subr.mxu0 0.0
        %2448 = vmatpush1.xpose.msra.mxu0 0.0
        %2449 = vmatprep.subr.mxu0 0.0
        %2450 = vmatpush1.xpose.msra.mxu0 0.0
        %2451 = vmatprep.subr.mxu0 0.0
        %2452 = vmatpush1.xpose.msra.mxu0 0.0
        %2453 = vmatprep.subr.mxu0 0.0
        %2454 = vmatpush1.xpose.msra.mxu0 0.0
        %2455 = vmatprep.subr.mxu0 0.0
        %2456 = vmatpush1.xpose.msra.mxu0 0.0
        %2457 = vmatprep.subr.mxu0 0.0
        %2458 = vmatpush1.xpose.msra.mxu0 0.0
        %2459 = vmatprep.subr.mxu0 0.0
        %2460 = vmatpush1.xpose.msra.mxu0 0.0
        %2461 = vmatprep.subr.mxu0 0.0
        %2462 = vmatpush1.xpose.msra.mxu0 0.0
        %2463 = vmatprep.subr.mxu0 0.0
        %2464 = vmatpush1.xpose.msra.mxu0 0.0
        %2465 = vmatprep.subr.mxu0 0.0
        %2466 = vmatpush1.xpose.msra.mxu0 0.0
        %2467 = vmatprep.subr.mxu0 0.0
        %2468 = vmatpush1.xpose.msra.mxu0 0.0
        %2469 = vmatprep.subr.mxu0 0.0
        %2470 = vmatpush1.xpose.msra.mxu0 0.0
        %2471 = vmatprep.subr.mxu0 0.0
        %2472 = vmatpush1.xpose.msra.mxu0 0.0
        %2473 = vmatprep.subr.mxu0 0.0
        %2474 = vmatpush1.xpose.msra.mxu0 0.0
        %2475 = vmatprep.subr.mxu0 0.0
        %2476 = vmatpush1.xpose.msra.mxu0 0.0
        %2477 = vmatprep.subr.mxu0 0.0
        %2478 = vmatpush1.xpose.msra.mxu0 0.0
        %2479 = vmatprep.subr.mxu0 0.0
        %2480 = vmatpush1.xpose.msra.mxu0 0.0
        %2481 = vmatprep.subr.mxu0 0.0
        %2482 = vmatpush1.xpose.msra.mxu0 0.0
        %2483 = vmatprep.subr.mxu0 0.0
        %2484 = vmatpush1.xpose.msra.mxu0 0.0
        %2485 = vmatprep.subr.mxu0 0.0
        %2486 = vmatpush1.xpose.msra.mxu0 0.0
        %2487 = vmatprep.subr.mxu0 0.0
        %2488 = vmatpush1.xpose.msra.mxu0 0.0
        %2489 = vmatprep.subr.mxu0 0.0
        %2490 = vmatpush1.xpose.msra.mxu0 0.0
        %2491 = vmatprep.subr.mxu0 0.0
        %2492 = vmatpush1.xpose.msra.mxu0 0.0
        %2493 = vmatprep.subr.mxu0 0.0
        %2494 = vmatpush1.xpose.msra.mxu0 0.0
        %2495 = vmatprep.subr.mxu0 0.0
        %2496 = vmatpush1.xpose.msra.mxu0 0.0
        %2497 = vmatprep.subr.mxu0 0.0
        %2498 = vmatpush1.xpose.msra.mxu0 0.0
        %2499 = vmatprep.mubr.f32.mxu0 0.0
        %2500 = vmatmul.mubr.f32.gmra.mrb[0].mxu0 %v2431
        %v2501 = vpop.f32.mrb[0].mxu0
        %v2502 = vadd.f32 0.0, %v2501
        %v2503 = vpop.f32.mrb[0].mxu0
        %2504 = vdwg.mxu0
        %v2505 = vsel %vm1564, %v2426, 0
        %v2507 = vsel %vm1564, %v1470, 0
        %2509 = vmatprep.subr.mxu0 0.0
        %2510 = vmatpush1.xpose.msra.mxu0 %v2507
        %2511 = vmatprep.subr.mxu0 0.0
        %2512 = vmatpush1.xpose.msra.mxu0 0.0
        %2513 = vmatprep.subr.mxu0 0.0
        %2514 = vmatpush1.xpose.msra.mxu0 0.0
        %2515 = vmatprep.subr.mxu0 0.0
        %2516 = vmatpush1.xpose.msra.mxu0 0.0
        %2517 = vmatprep.subr.mxu0 0.0
        %2518 = vmatpush1.xpose.msra.mxu0 0.0
        %2519 = vmatprep.subr.mxu0 0.0
        %2520 = vmatpush1.xpose.msra.mxu0 0.0
        %2521 = vmatprep.subr.mxu0 0.0
        %2522 = vmatpush1.xpose.msra.mxu0 0.0
        %2523 = vmatprep.subr.mxu0 0.0
        %2524 = vmatpush1.xpose.msra.mxu0 0.0
        %2525 = vmatprep.subr.mxu0 0.0
        %2526 = vmatpush1.xpose.msra.mxu0 0.0
        %2527 = vmatprep.subr.mxu0 0.0
        %2528 = vmatpush1.xpose.msra.mxu0 0.0
        %2529 = vmatprep.subr.mxu0 0.0
        %2530 = vmatpush1.xpose.msra.mxu0 0.0
        %2531 = vmatprep.subr.mxu0 0.0
        %2532 = vmatpush1.xpose.msra.mxu0 0.0
        %2533 = vmatprep.subr.mxu0 0.0
        %2534 = vmatpush1.xpose.msra.mxu0 0.0
        %2535 = vmatprep.subr.mxu0 0.0
        %2536 = vmatpush1.xpose.msra.mxu0 0.0
        %2537 = vmatprep.subr.mxu0 0.0
        %2538 = vmatpush1.xpose.msra.mxu0 0.0
        %2539 = vmatprep.subr.mxu0 0.0
        %2540 = vmatpush1.xpose.msra.mxu0 0.0
        %2541 = vmatprep.subr.mxu0 0.0
        %2542 = vmatpush1.xpose.msra.mxu0 0.0
        %2543 = vmatprep.subr.mxu0 0.0
        %2544 = vmatpush1.xpose.msra.mxu0 0.0
        %2545 = vmatprep.subr.mxu0 0.0
        %2546 = vmatpush1.xpose.msra.mxu0 0.0
        %2547 = vmatprep.subr.mxu0 0.0
        %2548 = vmatpush1.xpose.msra.mxu0 0.0
        %2549 = vmatprep.subr.mxu0 0.0
        %2550 = vmatpush1.xpose.msra.mxu0 0.0
        %2551 = vmatprep.subr.mxu0 0.0
        %2552 = vmatpush1.xpose.msra.mxu0 0.0
        %2553 = vmatprep.subr.mxu0 0.0
        %2554 = vmatpush1.xpose.msra.mxu0 0.0
        %2555 = vmatprep.subr.mxu0 0.0
        %2556 = vmatpush1.xpose.msra.mxu0 0.0
        %2557 = vmatprep.subr.mxu0 0.0
        %2558 = vmatpush1.xpose.msra.mxu0 0.0
        %2559 = vmatprep.subr.mxu0 0.0
        %2560 = vmatpush1.xpose.msra.mxu0 0.0
        %2561 = vmatprep.subr.mxu0 0.0
        %2562 = vmatpush1.xpose.msra.mxu0 0.0
        %2563 = vmatprep.subr.mxu0 0.0
        %2564 = vmatpush1.xpose.msra.mxu0 0.0
        %2565 = vmatprep.subr.mxu0 0.0
        %2566 = vmatpush1.xpose.msra.mxu0 0.0
        %2567 = vmatprep.subr.mxu0 0.0
        %2568 = vmatpush1.xpose.msra.mxu0 0.0
        %2569 = vmatprep.subr.mxu0 0.0
        %2570 = vmatpush1.xpose.msra.mxu0 0.0
        %2571 = vmatprep.subr.mxu0 0.0
        %2572 = vmatpush1.xpose.msra.mxu0 0.0
        %2573 = vmatprep.mubr.f32.mxu0 0.0
        %2574 = vmatmul.mubr.f32.gmra.mrb[0].mxu0 %v2505
        %v2575 = vpop.f32.mrb[0].mxu0
        %v2576 = vadd.f32 0.0, %v2575
        %v2577 = vpop.f32.mrb[0].mxu0
        %2578 = vdwg.mxu0
        %v2579 = vsel %vm1564, %v2428, 0
        %v2581 = vsel %vm1564, %v1472, 0
        %2583 = vmatprep.subr.mxu0 0.0
        %2584 = vmatpush1.xpose.msra.mxu0 %v2581
        %2585 = vmatprep.subr.mxu0 0.0
        %2586 = vmatpush1.xpose.msra.mxu0 0.0
        %2587 = vmatprep.subr.mxu0 0.0
        %2588 = vmatpush1.xpose.msra.mxu0 0.0
        %2589 = vmatprep.subr.mxu0 0.0
        %2590 = vmatpush1.xpose.msra.mxu0 0.0
        %2591 = vmatprep.subr.mxu0 0.0
        %2592 = vmatpush1.xpose.msra.mxu0 0.0
        %2593 = vmatprep.subr.mxu0 0.0
        %2594 = vmatpush1.xpose.msra.mxu0 0.0
        %2595 = vmatprep.subr.mxu0 0.0
        %2596 = vmatpush1.xpose.msra.mxu0 0.0
        %2597 = vmatprep.subr.mxu0 0.0
        %2598 = vmatpush1.xpose.msra.mxu0 0.0
        %2599 = vmatprep.subr.mxu0 0.0
        %2600 = vmatpush1.xpose.msra.mxu0 0.0
        %2601 = vmatprep.subr.mxu0 0.0
        %2602 = vmatpush1.xpose.msra.mxu0 0.0
        %2603 = vmatprep.subr.mxu0 0.0
        %2604 = vmatpush1.xpose.msra.mxu0 0.0
        %2605 = vmatprep.subr.mxu0 0.0
        %2606 = vmatpush1.xpose.msra.mxu0 0.0
        %2607 = vmatprep.subr.mxu0 0.0
        %2608 = vmatpush1.xpose.msra.mxu0 0.0
        %2609 = vmatprep.subr.mxu0 0.0
        %2610 = vmatpush1.xpose.msra.mxu0 0.0
        %2611 = vmatprep.subr.mxu0 0.0
        %2612 = vmatpush1.xpose.msra.mxu0 0.0
        %2613 = vmatprep.subr.mxu0 0.0
        %2614 = vmatpush1.xpose.msra.mxu0 0.0
        %2615 = vmatprep.subr.mxu0 0.0
        %2616 = vmatpush1.xpose.msra.mxu0 0.0
        %2617 = vmatprep.subr.mxu0 0.0
        %2618 = vmatpush1.xpose.msra.mxu0 0.0
        %2619 = vmatprep.subr.mxu0 0.0
        %2620 = vmatpush1.xpose.msra.mxu0 0.0
        %2621 = vmatprep.subr.mxu0 0.0
        %2622 = vmatpush1.xpose.msra.mxu0 0.0
        %2623 = vmatprep.subr.mxu0 0.0
        %2624 = vmatpush1.xpose.msra.mxu0 0.0
        %2625 = vmatprep.subr.mxu0 0.0
        %2626 = vmatpush1.xpose.msra.mxu0 0.0
        %2627 = vmatprep.subr.mxu0 0.0
        %2628 = vmatpush1.xpose.msra.mxu0 0.0
        %2629 = vmatprep.subr.mxu0 0.0
        %2630 = vmatpush1.xpose.msra.mxu0 0.0
        %2631 = vmatprep.subr.mxu0 0.0
        %2632 = vmatpush1.xpose.msra.mxu0 0.0
        %2633 = vmatprep.subr.mxu0 0.0
        %2634 = vmatpush1.xpose.msra.mxu0 0.0
        %2635 = vmatprep.subr.mxu0 0.0
        %2636 = vmatpush1.xpose.msra.mxu0 0.0
        %2637 = vmatprep.subr.mxu0 0.0
        %2638 = vmatpush1.xpose.msra.mxu0 0.0
        %2639 = vmatprep.subr.mxu0 0.0
        %2640 = vmatpush1.xpose.msra.mxu0 0.0
        %2641 = vmatprep.subr.mxu0 0.0
        %2642 = vmatpush1.xpose.msra.mxu0 0.0
        %2643 = vmatprep.subr.mxu0 0.0
        %2644 = vmatpush1.xpose.msra.mxu0 0.0
        %2645 = vmatprep.subr.mxu0 0.0
        %2646 = vmatpush1.xpose.msra.mxu0 0.0
        %2647 = vmatprep.mubr.f32.mxu0 0.0
        %2648 = vmatmul.mubr.f32.gmra.mrb[0].mxu0 %v2579
        %v2649 = vpop.f32.mrb[0].mxu0
        %v2650 = vadd.f32 0.0, %v2649
        %v2651 = vpop.f32.mrb[0].mxu0
        %2652 = vdwg.mxu0
        %v2653 = vsel %vm1564, %v2430, 0
        %v2655 = vsel %vm1564, %v1474, 0
        %2657 = vmatprep.subr.mxu0 0.0
        %2658 = vmatpush1.xpose.msra.mxu0 %v2655
        %2659 = vmatprep.subr.mxu0 0.0
        %2660 = vmatpush1.xpose.msra.mxu0 0.0
        %2661 = vmatprep.subr.mxu0 0.0
        %2662 = vmatpush1.xpose.msra.mxu0 0.0
        %2663 = vmatprep.subr.mxu0 0.0
        %2664 = vmatpush1.xpose.msra.mxu0 0.0
        %2665 = vmatprep.subr.mxu0 0.0
        %2666 = vmatpush1.xpose.msra.mxu0 0.0
        %2667 = vmatprep.subr.mxu0 0.0
        %2668 = vmatpush1.xpose.msra.mxu0 0.0
        %2669 = vmatprep.subr.mxu0 0.0
        %2670 = vmatpush1.xpose.msra.mxu0 0.0
        %2671 = vmatprep.subr.mxu0 0.0
        %2672 = vmatpush1.xpose.msra.mxu0 0.0
        %2673 = vmatprep.subr.mxu0 0.0
        %2674 = vmatpush1.xpose.msra.mxu0 0.0
        %2675 = vmatprep.subr.mxu0 0.0
        %2676 = vmatpush1.xpose.msra.mxu0 0.0
        %2677 = vmatprep.subr.mxu0 0.0
        %2678 = vmatpush1.xpose.msra.mxu0 0.0
        %2679 = vmatprep.subr.mxu0 0.0
        %2680 = vmatpush1.xpose.msra.mxu0 0.0
        %2681 = vmatprep.subr.mxu0 0.0
        %2682 = vmatpush1.xpose.msra.mxu0 0.0
        %2683 = vmatprep.subr.mxu0 0.0
        %2684 = vmatpush1.xpose.msra.mxu0 0.0
        %2685 = vmatprep.subr.mxu0 0.0
        %2686 = vmatpush1.xpose.msra.mxu0 0.0
        %2687 = vmatprep.subr.mxu0 0.0
        %2688 = vmatpush1.xpose.msra.mxu0 0.0
        %2689 = vmatprep.subr.mxu0 0.0
        %2690 = vmatpush1.xpose.msra.mxu0 0.0
        %2691 = vmatprep.subr.mxu0 0.0
        %2692 = vmatpush1.xpose.msra.mxu0 0.0
        %2693 = vmatprep.subr.mxu0 0.0
        %2694 = vmatpush1.xpose.msra.mxu0 0.0
        %2695 = vmatprep.subr.mxu0 0.0
        %2696 = vmatpush1.xpose.msra.mxu0 0.0
        %2697 = vmatprep.subr.mxu0 0.0
        %2698 = vmatpush1.xpose.msra.mxu0 0.0
        %2699 = vmatprep.subr.mxu0 0.0
        %2700 = vmatpush1.xpose.msra.mxu0 0.0
        %2701 = vmatprep.subr.mxu0 0.0
        %2702 = vmatpush1.xpose.msra.mxu0 0.0
        %2703 = vmatprep.subr.mxu0 0.0
        %2704 = vmatpush1.xpose.msra.mxu0 0.0
        %2705 = vmatprep.subr.mxu0 0.0
        %2706 = vmatpush1.xpose.msra.mxu0 0.0
        %2707 = vmatprep.subr.mxu0 0.0
        %2708 = vmatpush1.xpose.msra.mxu0 0.0
        %2709 = vmatprep.subr.mxu0 0.0
        %2710 = vmatpush1.xpose.msra.mxu0 0.0
        %2711 = vmatprep.subr.mxu0 0.0
        %2712 = vmatpush1.xpose.msra.mxu0 0.0
        %2713 = vmatprep.subr.mxu0 0.0
        %2714 = vmatpush1.xpose.msra.mxu0 0.0
        %2715 = vmatprep.subr.mxu0 0.0
        %2716 = vmatpush1.xpose.msra.mxu0 0.0
        %2717 = vmatprep.subr.mxu0 0.0
        %2718 = vmatpush1.xpose.msra.mxu0 0.0
        %2719 = vmatprep.subr.mxu0 0.0
        %2720 = vmatpush1.xpose.msra.mxu0 0.0
        %2721 = vmatprep.mubr.f32.mxu0 0.0
        %2722 = vmatmul.mubr.f32.gmra.mrb[0].mxu0 %v2653
        %v2723 = vpop.f32.mrb[0].mxu0
        %v2724 = vadd.f32 0.0, %v2723
        %v2725 = vpop.f32.mrb[0].mxu0
        %2726 = vdwg.mxu0
        %v2727 = vmul.f32 %v2502, 0.35355338
        %v2728 = vmul.f32 %v2576, 0.35355338
        %v2729 = vmul.f32 %v2650, 0.35355338
        %v2730 = vmul.f32 %v2724, 0.35355338
        %vm2731 = vcmp.ne.f32.partialorder %v1388, 0.0
        %v2732 = vsel %vm2731, 1, 0
        %v2733 = vlaneseq
        %v2734 = vshrl.u32 %v2733, 7
        %v2735 = vsub.s32 0, %v2734
        %v2736 = vrot.slane %v2732, %v2735
        %vm2737 = vcmp.eq.s32.totalorder %v2736, 1
        %v2738 = vsel %vm2737, %v2727, -1e+09
        %v2739 = vsel %vm2737, %v2728, -1e+09
        %v2740 = vsel %vm2737, %v2729, -1e+09
        %v2741 = vsel %vm2737, %v2730, -1e+09
        %v2742 = vsel %vm1564, %v2738, -inf
        %2743 = vmax.xlane.f32.xlu0 %v2742
        %v2744 = vpop.xlane.xlu0 %2743
        %v2745 = vsel %vm1564, %v2739, -inf
        %2746 = vmax.xlane.f32.xlu0 %v2745
        %v2747 = vpop.xlane.xlu0 %2746
        %v2748 = vsel %vm1564, %v2740, -inf
        %2749 = vmax.xlane.f32.xlu0 %v2748
        %v2750 = vpop.xlane.xlu0 %2749
        %v2751 = vsel %vm1564, %v2741, -inf
        %2752 = vmax.xlane.f32.xlu0 %v2751
        %v2753 = vpop.xlane.xlu0 %2752
        %v2754 = vsub.f32 %v2738, %v2744
        %v2755 = vsub.f32 %v2739, %v2747
        %v2756 = vsub.f32 %v2740, %v2750
        %v2757 = vsub.f32 %v2741, %v2753
        %v2758 = vmul.f32 %v2754, 1.442695
        %v2759 = vpow.pop %v2758
        %v2760 = vmul.f32 %v2755, 1.442695
        %v2761 = vpow.pop %v2760
        %v2762 = vmul.f32 %v2756, 1.442695
        %v2763 = vpow.pop %v2762
        %v2764 = vmul.f32 %v2757, 1.442695
        %v2765 = vpow.pop %v2764
        %v2766 = vsel %vm1564, %v2759, 0.0
        %2767 = vadd.xlane.f32.xlu0 %v2766
        %v2768 = vpop.xlane.xlu0 %2767
        %v2769 = vsel %vm1564, %v2761, 0.0
        %2770 = vadd.xlane.f32.xlu0 %v2769
        %v2771 = vpop.xlane.xlu0 %2770
        %v2772 = vsel %vm1564, %v2763, 0.0
        %2773 = vadd.xlane.f32.xlu0 %v2772
        %v2774 = vpop.xlane.xlu0 %2773
        %v2775 = vsel %vm1564, %v2765, 0.0
        %2776 = vadd.xlane.f32.xlu0 %v2775
        %v2777 = vpop.xlane.xlu0 %2776
        %v2778 = vrcp.pop %v2768
        %v2779 = vmul.f32 %v2759, %v2778
        %v2780 = vrcp.pop %v2771
        %v2781 = vmul.f32 %v2761, %v2780
        %v2782 = vrcp.pop %v2774
        %v2783 = vmul.f32 %v2763, %v2782
        %v2784 = vrcp.pop %v2777
        %v2785 = vmul.f32 %v2765, %v2784
        %2786 = vrot.lane.b32.xlu0 %v1465, 96
        %v2787 = vpop.permute.xlu0 %2786
        %v2790 = vsel %vm1564, %v2779, 0
        %2792 = vmatprep.subr.mxu0 0.0
        %2793 = vmatpush1.msra.mxu0 %v2787
        %2794 = vmatprep.subr.mxu0 0.0
        %2795 = vmatpush1.msra.mxu0 0.0
        %2796 = vmatprep.subr.mxu0 0.0
        %2797 = vmatpush1.msra.mxu0 0.0
        %2798 = vmatprep.subr.mxu0 0.0
        %2799 = vmatpush1.msra.mxu0 0.0
        %2800 = vmatprep.subr.mxu0 0.0
        %2801 = vmatpush1.msra.mxu0 0.0
        %2802 = vmatprep.subr.mxu0 0.0
        %2803 = vmatpush1.msra.mxu0 0.0
        %2804 = vmatprep.subr.mxu0 0.0
        %2805 = vmatpush1.msra.mxu0 0.0
        %2806 = vmatprep.subr.mxu0 0.0
        %2807 = vmatpush1.msra.mxu0 0.0
        %2808 = vmatprep.subr.mxu0 0.0
        %2809 = vmatpush1.msra.mxu0 0.0
        %2810 = vmatprep.subr.mxu0 0.0
        %2811 = vmatpush1.msra.mxu0 0.0
        %2812 = vmatprep.subr.mxu0 0.0
        %2813 = vmatpush1.msra.mxu0 0.0
        %2814 = vmatprep.subr.mxu0 0.0
        %2815 = vmatpush1.msra.mxu0 0.0
        %2816 = vmatprep.subr.mxu0 0.0
        %2817 = vmatpush1.msra.mxu0 0.0
        %2818 = vmatprep.subr.mxu0 0.0
        %2819 = vmatpush1.msra.mxu0 0.0
        %2820 = vmatprep.subr.mxu0 0.0
        %2821 = vmatpush1.msra.mxu0 0.0
        %2822 = vmatprep.subr.mxu0 0.0
        %2823 = vmatpush1.msra.mxu0 0.0
        %2824 = vmatprep.subr.mxu0 0.0
        %2825 = vmatpush1.msra.mxu0 0.0
        %2826 = vmatprep.subr.mxu0 0.0
        %2827 = vmatpush1.msra.mxu0 0.0
        %2828 = vmatprep.subr.mxu0 0.0
        %2829 = vmatpush1.msra.mxu0 0.0
        %2830 = vmatprep.subr.mxu0 0.0
        %2831 = vmatpush1.msra.mxu0 0.0
        %2832 = vmatprep.subr.mxu0 0.0
        %2833 = vmatpush1.msra.mxu0 0.0
        %2834 = vmatprep.subr.mxu0 0.0
        %2835 = vmatpush1.msra.mxu0 0.0
        %2836 = vmatprep.subr.mxu0 0.0
        %2837 = vmatpush1.msra.mxu0 0.0
        %2838 = vmatprep.subr.mxu0 0.0
        %2839 = vmatpush1.msra.mxu0 0.0
        %2840 = vmatprep.subr.mxu0 0.0
        %2841 = vmatpush1.msra.mxu0 0.0
        %2842 = vmatprep.subr.mxu0 0.0
        %2843 = vmatpush1.msra.mxu0 0.0
        %2844 = vmatprep.subr.mxu0 0.0
        %2845 = vmatpush1.msra.mxu0 0.0
        %2846 = vmatprep.subr.mxu0 0.0
        %2847 = vmatpush1.msra.mxu0 0.0
        %2848 = vmatprep.subr.mxu0 0.0
        %2849 = vmatpush1.msra.mxu0 0.0
        %2850 = vmatprep.subr.mxu0 0.0
        %2851 = vmatpush1.msra.mxu0 0.0
        %2852 = vmatprep.subr.mxu0 0.0
        %2853 = vmatpush1.msra.mxu0 0.0
        %2854 = vmatprep.subr.mxu0 0.0
        %2855 = vmatpush1.msra.mxu0 0.0
        %2856 = vmatprep.mubr.f32.mxu0 0.0
        %2857 = vmatmul.mubr.f32.gmra.mrb[0].mxu0 %v2790
        %v2858 = vpop.f32.mrb[0].mxu0
        %v2859 = vadd.f32 0.0, %v2858
        %v2860 = vpop.f32.mrb[0].mxu0
        %2861 = vdwg.mxu0
        %2862 = vrot.lane.b32.xlu0 %v1470, 96
        %v2863 = vpop.permute.xlu0 %2862
        %v2866 = vsel %vm1564, %v2781, 0
        %2868 = vmatprep.subr.mxu0 0.0
        %2869 = vmatpush1.msra.mxu0 %v2863
        %2870 = vmatprep.subr.mxu0 0.0
        %2871 = vmatpush1.msra.mxu0 0.0
        %2872 = vmatprep.subr.mxu0 0.0
        %2873 = vmatpush1.msra.mxu0 0.0
        %2874 = vmatprep.subr.mxu0 0.0
        %2875 = vmatpush1.msra.mxu0 0.0
        %2876 = vmatprep.subr.mxu0 0.0
        %2877 = vmatpush1.msra.mxu0 0.0
        %2878 = vmatprep.subr.mxu0 0.0
        %2879 = vmatpush1.msra.mxu0 0.0
        %2880 = vmatprep.subr.mxu0 0.0
        %2881 = vmatpush1.msra.mxu0 0.0
        %2882 = vmatprep.subr.mxu0 0.0
        %2883 = vmatpush1.msra.mxu0 0.0
        %2884 = vmatprep.subr.mxu0 0.0
        %2885 = vmatpush1.msra.mxu0 0.0
        %2886 = vmatprep.subr.mxu0 0.0
        %2887 = vmatpush1.msra.mxu0 0.0
        %2888 = vmatprep.subr.mxu0 0.0
        %2889 = vmatpush1.msra.mxu0 0.0
        %2890 = vmatprep.subr.mxu0 0.0
        %2891 = vmatpush1.msra.mxu0 0.0
        %2892 = vmatprep.subr.mxu0 0.0
        %2893 = vmatpush1.msra.mxu0 0.0
        %2894 = vmatprep.subr.mxu0 0.0
        %2895 = vmatpush1.msra.mxu0 0.0
        %2896 = vmatprep.subr.mxu0 0.0
        %2897 = vmatpush1.msra.mxu0 0.0
        %2898 = vmatprep.subr.mxu0 0.0
        %2899 = vmatpush1.msra.mxu0 0.0
        %2900 = vmatprep.subr.mxu0 0.0
        %2901 = vmatpush1.msra.mxu0 0.0
        %2902 = vmatprep.subr.mxu0 0.0
        %2903 = vmatpush1.msra.mxu0 0.0
        %2904 = vmatprep.subr.mxu0 0.0
        %2905 = vmatpush1.msra.mxu0 0.0
        %2906 = vmatprep.subr.mxu0 0.0
        %2907 = vmatpush1.msra.mxu0 0.0
        %2908 = vmatprep.subr.mxu0 0.0
        %2909 = vmatpush1.msra.mxu0 0.0
        %2910 = vmatprep.subr.mxu0 0.0
        %2911 = vmatpush1.msra.mxu0 0.0
        %2912 = vmatprep.subr.mxu0 0.0
        %2913 = vmatpush1.msra.mxu0 0.0
        %2914 = vmatprep.subr.mxu0 0.0
        %2915 = vmatpush1.msra.mxu0 0.0
        %2916 = vmatprep.subr.mxu0 0.0
        %2917 = vmatpush1.msra.mxu0 0.0
        %2918 = vmatprep.subr.mxu0 0.0
        %2919 = vmatpush1.msra.mxu0 0.0
        %2920 = vmatprep.subr.mxu0 0.0
        %2921 = vmatpush1.msra.mxu0 0.0
        %2922 = vmatprep.subr.mxu0 0.0
        %2923 = vmatpush1.msra.mxu0 0.0
        %2924 = vmatprep.subr.mxu0 0.0
        %2925 = vmatpush1.msra.mxu0 0.0
        %2926 = vmatprep.subr.mxu0 0.0
        %2927 = vmatpush1.msra.mxu0 0.0
        %2928 = vmatprep.subr.mxu0 0.0
        %2929 = vmatpush1.msra.mxu0 0.0
        %2930 = vmatprep.subr.mxu0 0.0
        %2931 = vmatpush1.msra.mxu0 0.0
        %2932 = vmatprep.mubr.f32.mxu0 0.0
        %2933 = vmatmul.mubr.f32.gmra.mrb[0].mxu0 %v2866
        %v2934 = vpop.f32.mrb[0].mxu0
        %v2935 = vadd.f32 0.0, %v2934
        %v2936 = vpop.f32.mrb[0].mxu0
        %2937 = vdwg.mxu0
        %2938 = vrot.lane.b32.xlu0 %v1472, 96
        %v2939 = vpop.permute.xlu0 %2938
        %v2942 = vsel %vm1564, %v2783, 0
        %2944 = vmatprep.subr.mxu0 0.0
        %2945 = vmatpush1.msra.mxu0 %v2939
        %2946 = vmatprep.subr.mxu0 0.0
        %2947 = vmatpush1.msra.mxu0 0.0
        %2948 = vmatprep.subr.mxu0 0.0
        %2949 = vmatpush1.msra.mxu0 0.0
        %2950 = vmatprep.subr.mxu0 0.0
        %2951 = vmatpush1.msra.mxu0 0.0
        %2952 = vmatprep.subr.mxu0 0.0
        %2953 = vmatpush1.msra.mxu0 0.0
        %2954 = vmatprep.subr.mxu0 0.0
        %2955 = vmatpush1.msra.mxu0 0.0
        %2956 = vmatprep.subr.mxu0 0.0
        %2957 = vmatpush1.msra.mxu0 0.0
        %2958 = vmatprep.subr.mxu0 0.0
        %2959 = vmatpush1.msra.mxu0 0.0
        %2960 = vmatprep.subr.mxu0 0.0
        %2961 = vmatpush1.msra.mxu0 0.0
        %2962 = vmatprep.subr.mxu0 0.0
        %2963 = vmatpush1.msra.mxu0 0.0
        %2964 = vmatprep.subr.mxu0 0.0
        %2965 = vmatpush1.msra.mxu0 0.0
        %2966 = vmatprep.subr.mxu0 0.0
        %2967 = vmatpush1.msra.mxu0 0.0
        %2968 = vmatprep.subr.mxu0 0.0
        %2969 = vmatpush1.msra.mxu0 0.0
        %2970 = vmatprep.subr.mxu0 0.0
        %2971 = vmatpush1.msra.mxu0 0.0
        %2972 = vmatprep.subr.mxu0 0.0
        %2973 = vmatpush1.msra.mxu0 0.0
        %2974 = vmatprep.subr.mxu0 0.0
        %2975 = vmatpush1.msra.mxu0 0.0
        %2976 = vmatprep.subr.mxu0 0.0
        %2977 = vmatpush1.msra.mxu0 0.0
        %2978 = vmatprep.subr.mxu0 0.0
        %2979 = vmatpush1.msra.mxu0 0.0
        %2980 = vmatprep.subr.mxu0 0.0
        %2981 = vmatpush1.msra.mxu0 0.0
        %2982 = vmatprep.subr.mxu0 0.0
        %2983 = vmatpush1.msra.mxu0 0.0
        %2984 = vmatprep.subr.mxu0 0.0
        %2985 = vmatpush1.msra.mxu0 0.0
        %2986 = vmatprep.subr.mxu0 0.0
        %2987 = vmatpush1.msra.mxu0 0.0
        %2988 = vmatprep.subr.mxu0 0.0
        %2989 = vmatpush1.msra.mxu0 0.0
        %2990 = vmatprep.subr.mxu0 0.0
        %2991 = vmatpush1.msra.mxu0 0.0
        %2992 = vmatprep.subr.mxu0 0.0
        %2993 = vmatpush1.msra.mxu0 0.0
        %2994 = vmatprep.subr.mxu0 0.0
        %2995 = vmatpush1.msra.mxu0 0.0
        %2996 = vmatprep.subr.mxu0 0.0
        %2997 = vmatpush1.msra.mxu0 0.0
        %2998 = vmatprep.subr.mxu0 0.0
        %2999 = vmatpush1.msra.mxu0 0.0
        %3000 = vmatprep.subr.mxu0 0.0
        %3001 = vmatpush1.msra.mxu0 0.0
        %3002 = vmatprep.subr.mxu0 0.0
        %3003 = vmatpush1.msra.mxu0 0.0
        %3004 = vmatprep.subr.mxu0 0.0
        %3005 = vmatpush1.msra.mxu0 0.0
        %3006 = vmatprep.subr.mxu0 0.0
        %3007 = vmatpush1.msra.mxu0 0.0
        %3008 = vmatprep.mubr.f32.mxu0 0.0
        %3009 = vmatmul.mubr.f32.gmra.mrb[0].mxu0 %v2942
        %v3010 = vpop.f32.mrb[0].mxu0
        %v3011 = vadd.f32 0.0, %v3010
        %v3012 = vpop.f32.mrb[0].mxu0
        %3013 = vdwg.mxu0
        %3014 = vrot.lane.b32.xlu0 %v1474, 96
        %v3015 = vpop.permute.xlu0 %3014
        %v3018 = vsel %vm1564, %v2785, 0
        %3020 = vmatprep.subr.mxu0 0.0
        %3021 = vmatpush1.msra.mxu0 %v3015
        %3022 = vmatprep.subr.mxu0 0.0
        %3023 = vmatpush1.msra.mxu0 0.0
        %3024 = vmatprep.subr.mxu0 0.0
        %3025 = vmatpush1.msra.mxu0 0.0
        %3026 = vmatprep.subr.mxu0 0.0
        %3027 = vmatpush1.msra.mxu0 0.0
        %3028 = vmatprep.subr.mxu0 0.0
        %3029 = vmatpush1.msra.mxu0 0.0
        %3030 = vmatprep.subr.mxu0 0.0
        %3031 = vmatpush1.msra.mxu0 0.0
        %3032 = vmatprep.subr.mxu0 0.0
        %3033 = vmatpush1.msra.mxu0 0.0
        %3034 = vmatprep.subr.mxu0 0.0
        %3035 = vmatpush1.msra.mxu0 0.0
        %3036 = vmatprep.subr.mxu0 0.0
        %3037 = vmatpush1.msra.mxu0 0.0
        %3038 = vmatprep.subr.mxu0 0.0
        %3039 = vmatpush1.msra.mxu0 0.0
        %3040 = vmatprep.subr.mxu0 0.0
        %3041 = vmatpush1.msra.mxu0 0.0
        %3042 = vmatprep.subr.mxu0 0.0
        %3043 = vmatpush1.msra.mxu0 0.0
        %3044 = vmatprep.subr.mxu0 0.0
        %3045 = vmatpush1.msra.mxu0 0.0
        %3046 = vmatprep.subr.mxu0 0.0
        %3047 = vmatpush1.msra.mxu0 0.0
        %3048 = vmatprep.subr.mxu0 0.0
        %3049 = vmatpush1.msra.mxu0 0.0
        %3050 = vmatprep.subr.mxu0 0.0
        %3051 = vmatpush1.msra.mxu0 0.0
        %3052 = vmatprep.subr.mxu0 0.0
        %3053 = vmatpush1.msra.mxu0 0.0
        %3054 = vmatprep.subr.mxu0 0.0
        %3055 = vmatpush1.msra.mxu0 0.0
        %3056 = vmatprep.subr.mxu0 0.0
        %3057 = vmatpush1.msra.mxu0 0.0
        %3058 = vmatprep.subr.mxu0 0.0
        %3059 = vmatpush1.msra.mxu0 0.0
        %3060 = vmatprep.subr.mxu0 0.0
        %3061 = vmatpush1.msra.mxu0 0.0
        %3062 = vmatprep.subr.mxu0 0.0
        %3063 = vmatpush1.msra.mxu0 0.0
        %3064 = vmatprep.subr.mxu0 0.0
        %3065 = vmatpush1.msra.mxu0 0.0
        %3066 = vmatprep.subr.mxu0 0.0
        %3067 = vmatpush1.msra.mxu0 0.0
        %3068 = vmatprep.subr.mxu0 0.0
        %3069 = vmatpush1.msra.mxu0 0.0
        %3070 = vmatprep.subr.mxu0 0.0
        %3071 = vmatpush1.msra.mxu0 0.0
        %3072 = vmatprep.subr.mxu0 0.0
        %3073 = vmatpush1.msra.mxu0 0.0
        %3074 = vmatprep.subr.mxu0 0.0
        %3075 = vmatpush1.msra.mxu0 0.0
        %3076 = vmatprep.subr.mxu0 0.0
        %3077 = vmatpush1.msra.mxu0 0.0
        %3078 = vmatprep.subr.mxu0 0.0
        %3079 = vmatpush1.msra.mxu0 0.0
        %3080 = vmatprep.subr.mxu0 0.0
        %3081 = vmatpush1.msra.mxu0 0.0
        %3082 = vmatprep.subr.mxu0 0.0
        %3083 = vmatpush1.msra.mxu0 0.0
        %3084 = vmatprep.mubr.f32.mxu0 0.0
        %3085 = vmatmul.mubr.f32.gmra.mrb[0].mxu0 %v3018
        %v3086 = vpop.f32.mrb[0].mxu0
        %v3087 = vadd.f32 0.0, %v3086
        %v3088 = vpop.f32.mrb[0].mxu0
        %3089 = vdwg.mxu0
        %3091 = vrot.lane.b32.xlu0 %v2935, 8
        %v3092 = vpop.permute.xlu0 %3091
        %3095 = vrot.lane.b32.xlu0 %v3011, 16
        %v3096 = vpop.permute.xlu0 %3095
        %3099 = vrot.lane.b32.xlu0 %v3087, 24
        %v3100 = vpop.permute.xlu0 %3099
        %v3102 = vsel %vm1564, %v2859, %v3092
        %v3103 = vsel %vm2239, %v3102, %v3096
        %v3104 = vsel %vm2241, %v3103, %v3100
        %v3106 = vsel %vm977, %v3104, 0
        %3108 = vmatprep.subr.mxu0 0.0
        %3109 = vmatpush1.msra.mxu0 %v950
        %3110 = vmatprep.subr.mxu0 0.0
        %3111 = vmatpush1.msra.mxu0 %v951
        %3112 = vmatprep.subr.mxu0 0.0
        %3113 = vmatpush1.msra.mxu0 %v952
        %3114 = vmatprep.subr.mxu0 0.0
        %3115 = vmatpush1.msra.mxu0 %v953
        %3116 = vmatprep.subr.mxu0 0.0
        %3117 = vmatpush1.msra.mxu0 0.0
        %3118 = vmatprep.subr.mxu0 0.0
        %3119 = vmatpush1.msra.mxu0 0.0
        %3120 = vmatprep.subr.mxu0 0.0
        %3121 = vmatpush1.msra.mxu0 0.0
        %3122 = vmatprep.subr.mxu0 0.0
        %3123 = vmatpush1.msra.mxu0 0.0
        %3124 = vmatprep.subr.mxu0 0.0
        %3125 = vmatpush1.msra.mxu0 0.0
        %3126 = vmatprep.subr.mxu0 0.0
        %3127 = vmatpush1.msra.mxu0 0.0
        %3128 = vmatprep.subr.mxu0 0.0
        %3129 = vmatpush1.msra.mxu0 0.0
        %3130 = vmatprep.subr.mxu0 0.0
        %3131 = vmatpush1.msra.mxu0 0.0
        %3132 = vmatprep.subr.mxu0 0.0
        %3133 = vmatpush1.msra.mxu0 0.0
        %3134 = vmatprep.subr.mxu0 0.0
        %3135 = vmatpush1.msra.mxu0 0.0
        %3136 = vmatprep.subr.mxu0 0.0
        %3137 = vmatpush1.msra.mxu0 0.0
        %3138 = vmatprep.subr.mxu0 0.0
        %3139 = vmatpush1.msra.mxu0 0.0
        %3140 = vmatprep.subr.mxu0 0.0
        %3141 = vmatpush1.msra.mxu0 0.0
        %3142 = vmatprep.subr.mxu0 0.0
        %3143 = vmatpush1.msra.mxu0 0.0
        %3144 = vmatprep.subr.mxu0 0.0
        %3145 = vmatpush1.msra.mxu0 0.0
        %3146 = vmatprep.subr.mxu0 0.0
        %3147 = vmatpush1.msra.mxu0 0.0
        %3148 = vmatprep.subr.mxu0 0.0
        %3149 = vmatpush1.msra.mxu0 0.0
        %3150 = vmatprep.subr.mxu0 0.0
        %3151 = vmatpush1.msra.mxu0 0.0
        %3152 = vmatprep.subr.mxu0 0.0
        %3153 = vmatpush1.msra.mxu0 0.0
        %3154 = vmatprep.subr.mxu0 0.0
        %3155 = vmatpush1.msra.mxu0 0.0
        %3156 = vmatprep.subr.mxu0 0.0
        %3157 = vmatpush1.msra.mxu0 0.0
        %3158 = vmatprep.subr.mxu0 0.0
        %3159 = vmatpush1.msra.mxu0 0.0
        %3160 = vmatprep.subr.mxu0 0.0
        %3161 = vmatpush1.msra.mxu0 0.0
        %3162 = vmatprep.subr.mxu0 0.0
        %3163 = vmatpush1.msra.mxu0 0.0
        %3164 = vmatprep.subr.mxu0 0.0
        %3165 = vmatpush1.msra.mxu0 0.0
        %3166 = vmatprep.subr.mxu0 0.0
        %3167 = vmatpush1.msra.mxu0 0.0
        %3168 = vmatprep.subr.mxu0 0.0
        %3169 = vmatpush1.msra.mxu0 0.0
        %3170 = vmatprep.subr.mxu0 0.0
        %3171 = vmatpush1.msra.mxu0 0.0
        %3172 = vmatprep.mubr.f32.mxu0 0.0
        %3173 = vmatmul.mubr.f32.gmra.mrb[0].mxu0 %v3106
        %v3174 = vpop.f32.mrb[0].mxu0
        %v3175 = vadd.f32 %v2247, %v3174
        %v3176 = vpop.f32.mrb[0].mxu0
        %3177 = vdwg.mxu0
        %v3178 = vadd.f32 %v2344, %v3175
        %v3179 = vsel %vm977, %v3178, 0.0
        %3180 = vadd.xlane.f32.xlu0 %v3179
        %v3181 = vpop.xlane.xlu0 %3180
        %v3182 = vmul.f32 %v3181, %v981
        %v3183 = vsub.f32 %v3178, %v3182
        %v3184 = vmul.f32 %v3183, %v3183
        %v3185 = vsel %vm977, %v3184, 0.0
        %3186 = vadd.xlane.f32.xlu0 %v3185
        %v3187 = vpop.xlane.xlu0 %3186
        %v3188 = vmul.f32 %v3187, %v1176
        %v3189 = vrsqrt.pop %v3188
        %v3190 = vmul.f32 %v3188, %v3189
        %vm3191 = vcmp.eq.f32.partialorder %v3188, inf
        %v3192 = vsel %vm3191, %v3188, %v3190
        %vm3193 = vcmp.eq.f32.partialorder %v3188, 0.0
        %v3194 = vand.u32 %v3188, 2147483648
        %v3195 = vsel %vm3193, %v3194, %v3192
        %v3196 = vmul.f32 %v1189, %v3183
        %v3197 = vadd.f32 %v3195, 1e-06
        %v3198 = vrcp.pop %v3197
        %v3199 = vmul.f32 %v3196, %v3198
        %v3200 = vadd.f32 %v3199, %v1199
        %v3201 = vsel %vm977, %v3200, 0.0
        %3202 = vadd.xlane.f32.xlu0 %v3201
        %v3203 = vpop.xlane.xlu0 %3202
        %v3204 = vmul.f32 %v3203, %v981
        %v3205 = vsub.f32 %v3200, %v3204
        %v3206 = vmul.f32 %v3205, %v3205
        %v3207 = vsel %vm977, %v3206, 0.0
        %3208 = vadd.xlane.f32.xlu0 %v3207
        %v3209 = vpop.xlane.xlu0 %3208
        %v3210 = vmul.f32 %v3209, %v981
        %v3211 = vadd.f32 %v3210, 1e-06
        %v3212 = vrsqrt.pop %v3211
        %v3213 = vmul.f32 %v3205, %v3212
        %v3214 = vmul.f32 %v3213, %v996
        %v3215 = vadd.f32 %v3214, %v1003
        %v3217 = vsel %vm977, %v3215, 0
        %3219 = vmatprep.subr.mxu0 0.0
        %3220 = vmatpush1.msra.mxu0 %v955
        %3221 = vmatprep.subr.mxu0 0.0
        %3222 = vmatpush1.msra.mxu0 %v956
        %3223 = vmatprep.subr.mxu0 0.0
        %3224 = vmatpush1.msra.mxu0 %v957
        %3225 = vmatprep.subr.mxu0 0.0
        %3226 = vmatpush1.msra.mxu0 %v958
        %3227 = vmatprep.subr.mxu0 0.0
        %3228 = vmatpush1.msra.mxu0 0.0
        %3229 = vmatprep.subr.mxu0 0.0
        %3230 = vmatpush1.msra.mxu0 0.0
        %3231 = vmatprep.subr.mxu0 0.0
        %3232 = vmatpush1.msra.mxu0 0.0
        %3233 = vmatprep.subr.mxu0 0.0
        %3234 = vmatpush1.msra.mxu0 0.0
        %3235 = vmatprep.subr.mxu0 0.0
        %3236 = vmatpush1.msra.mxu0 0.0
        %3237 = vmatprep.subr.mxu0 0.0
        %3238 = vmatpush1.msra.mxu0 0.0
        %3239 = vmatprep.subr.mxu0 0.0
        %3240 = vmatpush1.msra.mxu0 0.0
        %3241 = vmatprep.subr.mxu0 0.0
        %3242 = vmatpush1.msra.mxu0 0.0
        %3243 = vmatprep.subr.mxu0 0.0
        %3244 = vmatpush1.msra.mxu0 0.0
        %3245 = vmatprep.subr.mxu0 0.0
        %3246 = vmatpush1.msra.mxu0 0.0
        %3247 = vmatprep.subr.mxu0 0.0
        %3248 = vmatpush1.msra.mxu0 0.0
        %3249 = vmatprep.subr.mxu0 0.0
        %3250 = vmatpush1.msra.mxu0 0.0
        %3251 = vmatprep.subr.mxu0 0.0
        %3252 = vmatpush1.msra.mxu0 0.0
        %3253 = vmatprep.subr.mxu0 0.0
        %3254 = vmatpush1.msra.mxu0 0.0
        %3255 = vmatprep.subr.mxu0 0.0
        %3256 = vmatpush1.msra.mxu0 0.0
        %3257 = vmatprep.subr.mxu0 0.0
        %3258 = vmatpush1.msra.mxu0 0.0
        %3259 = vmatprep.subr.mxu0 0.0
        %3260 = vmatpush1.msra.mxu0 0.0
        %3261 = vmatprep.subr.mxu0 0.0
        %3262 = vmatpush1.msra.mxu0 0.0
        %3263 = vmatprep.subr.mxu0 0.0
        %3264 = vmatpush1.msra.mxu0 0.0
        %3265 = vmatprep.subr.mxu0 0.0
        %3266 = vmatpush1.msra.mxu0 0.0
        %3267 = vmatprep.subr.mxu0 0.0
        %3268 = vmatpush1.msra.mxu0 0.0
        %3269 = vmatprep.subr.mxu0 0.0
        %3270 = vmatpush1.msra.mxu0 0.0
        %3271 = vmatprep.subr.mxu0 0.0
        %3272 = vmatpush1.msra.mxu0 0.0
        %3273 = vmatprep.subr.mxu0 0.0
        %3274 = vmatpush1.msra.mxu0 0.0
        %3275 = vmatprep.subr.mxu0 0.0
        %3276 = vmatpush1.msra.mxu0 0.0
        %3277 = vmatprep.subr.mxu0 0.0
        %3278 = vmatpush1.msra.mxu0 0.0
        %3279 = vmatprep.subr.mxu0 0.0
        %3280 = vmatpush1.msra.mxu0 0.0
        %3281 = vmatprep.subr.mxu0 0.0
        %3282 = vmatpush1.msra.mxu0 0.0
        %3283 = vmatprep.mubr.f32.mxu0 0.0
        %3284 = vmatmul.mubr.f32.gmra.mrb[0].mxu0 %v3217
        %v3285 = vpop.f32.mrb[0].mxu0
        %v3286 = vadd.f32 %v1010, %v3285
        %v3287 = vpop.f32.mrb[0].mxu0
        %3288 = vdwg.mxu0
        %v3289 = vmax.f32 %v3286, 0.0
        %v3291 = vsel %vm1092, %v3289, 0
        %3293 = vmatprep.subr.mxu0 0.0
        %3294 = vmatpush1.msra.mxu0 %v960
        %3295 = vmatprep.subr.mxu0 0.0
        %3296 = vmatpush1.msra.mxu0 %v961
        %3297 = vmatprep.subr.mxu0 0.0
        %3298 = vmatpush1.msra.mxu0 %v962
        %3299 = vmatprep.subr.mxu0 0.0
        %3300 = vmatpush1.msra.mxu0 %v963
        %3301 = vmatprep.subr.mxu0 0.0
        %3302 = vmatpush1.msra.mxu0 %v964
        %3303 = vmatprep.subr.mxu0 0.0
        %3304 = vmatpush1.msra.mxu0 %v965
        %3305 = vmatprep.subr.mxu0 0.0
        %3306 = vmatpush1.msra.mxu0 %v966
        %3307 = vmatprep.subr.mxu0 0.0
        %3308 = vmatpush1.msra.mxu0 %v967
        %3309 = vmatprep.subr.mxu0 0.0
        %3310 = vmatpush1.msra.mxu0 0.0
        %3311 = vmatprep.subr.mxu0 0.0
        %3312 = vmatpush1.msra.mxu0 0.0
        %3313 = vmatprep.subr.mxu0 0.0
        %3314 = vmatpush1.msra.mxu0 0.0
        %3315 = vmatprep.subr.mxu0 0.0
        %3316 = vmatpush1.msra.mxu0 0.0
        %3317 = vmatprep.subr.mxu0 0.0
        %3318 = vmatpush1.msra.mxu0 0.0
        %3319 = vmatprep.subr.mxu0 0.0
        %3320 = vmatpush1.msra.mxu0 0.0
        %3321 = vmatprep.subr.mxu0 0.0
        %3322 = vmatpush1.msra.mxu0 0.0
        %3323 = vmatprep.subr.mxu0 0.0
        %3324 = vmatpush1.msra.mxu0 0.0
        %3325 = vmatprep.subr.mxu0 0.0
        %3326 = vmatpush1.msra.mxu0 0.0
        %3327 = vmatprep.subr.mxu0 0.0
        %3328 = vmatpush1.msra.mxu0 0.0
        %3329 = vmatprep.subr.mxu0 0.0
        %3330 = vmatpush1.msra.mxu0 0.0
        %3331 = vmatprep.subr.mxu0 0.0
        %3332 = vmatpush1.msra.mxu0 0.0
        %3333 = vmatprep.subr.mxu0 0.0
        %3334 = vmatpush1.msra.mxu0 0.0
        %3335 = vmatprep.subr.mxu0 0.0
        %3336 = vmatpush1.msra.mxu0 0.0
        %3337 = vmatprep.subr.mxu0 0.0
        %3338 = vmatpush1.msra.mxu0 0.0
        %3339 = vmatprep.subr.mxu0 0.0
        %3340 = vmatpush1.msra.mxu0 0.0
        %3341 = vmatprep.subr.mxu0 0.0
        %3342 = vmatpush1.msra.mxu0 0.0
        %3343 = vmatprep.subr.mxu0 0.0
        %3344 = vmatpush1.msra.mxu0 0.0
        %3345 = vmatprep.subr.mxu0 0.0
        %3346 = vmatpush1.msra.mxu0 0.0
        %3347 = vmatprep.subr.mxu0 0.0
        %3348 = vmatpush1.msra.mxu0 0.0
        %3349 = vmatprep.subr.mxu0 0.0
        %3350 = vmatpush1.msra.mxu0 0.0
        %3351 = vmatprep.subr.mxu0 0.0
        %3352 = vmatpush1.msra.mxu0 0.0
        %3353 = vmatprep.subr.mxu0 0.0
        %3354 = vmatpush1.msra.mxu0 0.0
        %3355 = vmatprep.subr.mxu0 0.0
        %3356 = vmatpush1.msra.mxu0 0.0
        %3357 = vmatprep.mubr.f32.mxu0 0.0
        %3358 = vmatmul.mubr.f32.gmra.mrb[0].mxu0 %v3291
        %v3359 = vpop.f32.mrb[0].mxu0
        %v3360 = vadd.f32 %v1090, %v3359
        %v3361 = vpop.f32.mrb[0].mxu0
        %3362 = vdwg.mxu0
        %v3363 = vadd.f32 %v3200, %v3360
        %v3364 = vsel %vm977, %v3363, 0.0
        %3365 = vadd.xlane.f32.xlu0 %v3364
        %v3366 = vpop.xlane.xlu0 %3365
        %v3367 = vmul.f32 %v3366, %v981
        %v3368 = vsub.f32 %v3363, %v3367
        %v3369 = vmul.f32 %v3368, %v3368
        %v3370 = vsel %vm977, %v3369, 0.0
        %3371 = vadd.xlane.f32.xlu0 %v3370
        %v3372 = vpop.xlane.xlu0 %3371
        %v3373 = vmul.f32 %v3372, %v1176
        %v3374 = vrsqrt.pop %v3373
        %v3375 = vmul.f32 %v3373, %v3374
        %vm3376 = vcmp.eq.f32.partialorder %v3373, inf
        %v3377 = vsel %vm3376, %v3373, %v3375
        %vm3378 = vcmp.eq.f32.partialorder %v3373, 0.0
        %v3379 = vand.u32 %v3373, 2147483648
        %v3380 = vsel %vm3378, %v3379, %v3377
        %v3381 = vmul.f32 %v1189, %v3368
        %v3382 = vadd.f32 %v3380, 1e-06
        %v3383 = vrcp.pop %v3382
        %v3384 = vmul.f32 %v3381, %v3383
        %v3385 = vadd.f32 %v3384, %v1199
        %v3387 = vsel %vm977, %v3385, 0
        %3389 = vmatprep.subr.mxu0 0.0
        %3390 = vmatpush1.msra.mxu0 %v945
        %3391 = vmatprep.subr.mxu0 0.0
        %3392 = vmatpush1.msra.mxu0 %v946
        %3393 = vmatprep.subr.mxu0 0.0
        %3394 = vmatpush1.msra.mxu0 %v947
        %3395 = vmatprep.subr.mxu0 0.0
        %3396 = vmatpush1.msra.mxu0 %v948
        %3397 = vmatprep.subr.mxu0 0.0
        %3398 = vmatpush1.msra.mxu0 0.0
        %3399 = vmatprep.subr.mxu0 0.0
        %3400 = vmatpush1.msra.mxu0 0.0
        %3401 = vmatprep.subr.mxu0 0.0
        %3402 = vmatpush1.msra.mxu0 0.0
        %3403 = vmatprep.subr.mxu0 0.0
        %3404 = vmatpush1.msra.mxu0 0.0
        %3405 = vmatprep.subr.mxu0 0.0
        %3406 = vmatpush1.msra.mxu0 0.0
        %3407 = vmatprep.subr.mxu0 0.0
        %3408 = vmatpush1.msra.mxu0 0.0
        %3409 = vmatprep.subr.mxu0 0.0
        %3410 = vmatpush1.msra.mxu0 0.0
        %3411 = vmatprep.subr.mxu0 0.0
        %3412 = vmatpush1.msra.mxu0 0.0
        %3413 = vmatprep.subr.mxu0 0.0
        %3414 = vmatpush1.msra.mxu0 0.0
        %3415 = vmatprep.subr.mxu0 0.0
        %3416 = vmatpush1.msra.mxu0 0.0
        %3417 = vmatprep.subr.mxu0 0.0
        %3418 = vmatpush1.msra.mxu0 0.0
        %3419 = vmatprep.subr.mxu0 0.0
        %3420 = vmatpush1.msra.mxu0 0.0
        %3421 = vmatprep.subr.mxu0 0.0
        %3422 = vmatpush1.msra.mxu0 0.0
        %3423 = vmatprep.subr.mxu0 0.0
        %3424 = vmatpush1.msra.mxu0 0.0
        %3425 = vmatprep.subr.mxu0 0.0
        %3426 = vmatpush1.msra.mxu0 0.0
        %3427 = vmatprep.subr.mxu0 0.0
        %3428 = vmatpush1.msra.mxu0 0.0
        %3429 = vmatprep.subr.mxu0 0.0
        %3430 = vmatpush1.msra.mxu0 0.0
        %3431 = vmatprep.subr.mxu0 0.0
        %3432 = vmatpush1.msra.mxu0 0.0
        %3433 = vmatprep.subr.mxu0 0.0
        %3434 = vmatpush1.msra.mxu0 0.0
        %3435 = vmatprep.subr.mxu0 0.0
        %3436 = vmatpush1.msra.mxu0 0.0
        %3437 = vmatprep.subr.mxu0 0.0
        %3438 = vmatpush1.msra.mxu0 0.0
        %3439 = vmatprep.subr.mxu0 0.0
        %3440 = vmatpush1.msra.mxu0 0.0
        %3441 = vmatprep.subr.mxu0 0.0
        %3442 = vmatpush1.msra.mxu0 0.0
        %3443 = vmatprep.subr.mxu0 0.0
        %3444 = vmatpush1.msra.mxu0 0.0
        %3445 = vmatprep.subr.mxu0 0.0
        %3446 = vmatpush1.msra.mxu0 0.0
        %3447 = vmatprep.subr.mxu0 0.0
        %3448 = vmatpush1.msra.mxu0 0.0
        %3449 = vmatprep.subr.mxu0 0.0
        %3450 = vmatpush1.msra.mxu0 0.0
        %3451 = vmatprep.subr.mxu0 0.0
        %3452 = vmatpush1.msra.mxu0 0.0
        %3453 = vmatprep.mubr.f32.mxu0 0.0
        %3454 = vmatmul.mubr.f32.gmra.mrb[0].mxu0 %v3387
        %v3455 = vpop.f32.mrb[0].mxu0
        %v3456 = vadd.f32 %v1480, %v3455
        %v3457 = vpop.f32.mrb[0].mxu0
        %3458 = vdwg.mxu0
        %3460 = vrot.lane.b32.xlu0 %v3456, 120
        %v3461 = vpop.permute.xlu0 %3460
        %3462 = vrot.lane.b32.xlu0 %v3456, 112
        %v3463 = vpop.permute.xlu0 %3462
        %3464 = vrot.lane.b32.xlu0 %v3456, 104
        %v3465 = vpop.permute.xlu0 %3464
        %3466 = vrot.lane.b32.xlu0 %v3456, 96
        %v3467 = vpop.permute.xlu0 %3466
        %v3468 = vsel %vm1564, %v3456, 0
        %v3470 = vsel %vm1564, %v3467, 0
        %3472 = vmatprep.subr.mxu0 0.0
        %3473 = vmatpush1.xpose.msra.mxu0 %v3470
        %3474 = vmatprep.subr.mxu0 0.0
        %3475 = vmatpush1.xpose.msra.mxu0 0.0
        %3476 = vmatprep.subr.mxu0 0.0
        %3477 = vmatpush1.xpose.msra.mxu0 0.0
        %3478 = vmatprep.subr.mxu0 0.0
        %3479 = vmatpush1.xpose.msra.mxu0 0.0
        %3480 = vmatprep.subr.mxu0 0.0
        %3481 = vmatpush1.xpose.msra.mxu0 0.0
        %3482 = vmatprep.subr.mxu0 0.0
        %3483 = vmatpush1.xpose.msra.mxu0 0.0
        %3484 = vmatprep.subr.mxu0 0.0
        %3485 = vmatpush1.xpose.msra.mxu0 0.0
        %3486 = vmatprep.subr.mxu0 0.0
        %3487 = vmatpush1.xpose.msra.mxu0 0.0
        %3488 = vmatprep.subr.mxu0 0.0
        %3489 = vmatpush1.xpose.msra.mxu0 0.0
        %3490 = vmatprep.subr.mxu0 0.0
        %3491 = vmatpush1.xpose.msra.mxu0 0.0
        %3492 = vmatprep.subr.mxu0 0.0
        %3493 = vmatpush1.xpose.msra.mxu0 0.0
        %3494 = vmatprep.subr.mxu0 0.0
        %3495 = vmatpush1.xpose.msra.mxu0 0.0
        %3496 = vmatprep.subr.mxu0 0.0
        %3497 = vmatpush1.xpose.msra.mxu0 0.0
        %3498 = vmatprep.subr.mxu0 0.0
        %3499 = vmatpush1.xpose.msra.mxu0 0.0
        %3500 = vmatprep.subr.mxu0 0.0
        %3501 = vmatpush1.xpose.msra.mxu0 0.0
        %3502 = vmatprep.subr.mxu0 0.0
        %3503 = vmatpush1.xpose.msra.mxu0 0.0
        %3504 = vmatprep.subr.mxu0 0.0
        %3505 = vmatpush1.xpose.msra.mxu0 0.0
        %3506 = vmatprep.subr.mxu0 0.0
        %3507 = vmatpush1.xpose.msra.mxu0 0.0
        %3508 = vmatprep.subr.mxu0 0.0
        %3509 = vmatpush1.xpose.msra.mxu0 0.0
        %3510 = vmatprep.subr.mxu0 0.0
        %3511 = vmatpush1.xpose.msra.mxu0 0.0
        %3512 = vmatprep.subr.mxu0 0.0
        %3513 = vmatpush1.xpose.msra.mxu0 0.0
        %3514 = vmatprep.subr.mxu0 0.0
        %3515 = vmatpush1.xpose.msra.mxu0 0.0
        %3516 = vmatprep.subr.mxu0 0.0
        %3517 = vmatpush1.xpose.msra.mxu0 0.0
        %3518 = vmatprep.subr.mxu0 0.0
        %3519 = vmatpush1.xpose.msra.mxu0 0.0
        %3520 = vmatprep.subr.mxu0 0.0
        %3521 = vmatpush1.xpose.msra.mxu0 0.0
        %3522 = vmatprep.subr.mxu0 0.0
        %3523 = vmatpush1.xpose.msra.mxu0 0.0
        %3524 = vmatprep.subr.mxu0 0.0
        %3525 = vmatpush1.xpose.msra.mxu0 0.0
        %3526 = vmatprep.subr.mxu0 0.0
        %3527 = vmatpush1.xpose.msra.mxu0 0.0
        %3528 = vmatprep.subr.mxu0 0.0
        %3529 = vmatpush1.xpose.msra.mxu0 0.0
        %3530 = vmatprep.subr.mxu0 0.0
        %3531 = vmatpush1.xpose.msra.mxu0 0.0
        %3532 = vmatprep.subr.mxu0 0.0
        %3533 = vmatpush1.xpose.msra.mxu0 0.0
        %3534 = vmatprep.subr.mxu0 0.0
        %3535 = vmatpush1.xpose.msra.mxu0 0.0
        %3536 = vmatprep.mubr.f32.mxu0 0.0
        %3537 = vmatmul.mubr.f32.gmra.mrb[0].mxu0 %v3468
        %v3538 = vpop.f32.mrb[0].mxu0
        %v3539 = vadd.f32 0.0, %v3538
        %v3540 = vpop.f32.mrb[0].mxu0
        %3541 = vdwg.mxu0
        %3542 = vrot.lane.b32.xlu0 %v3461, 96
        %v3543 = vpop.permute.xlu0 %3542
        %v3544 = vsel %vm1564, %v3461, 0
        %v3546 = vsel %vm1564, %v3543, 0
        %3548 = vmatprep.subr.mxu0 0.0
        %3549 = vmatpush1.xpose.msra.mxu0 %v3546
        %3550 = vmatprep.subr.mxu0 0.0
        %3551 = vmatpush1.xpose.msra.mxu0 0.0
        %3552 = vmatprep.subr.mxu0 0.0
        %3553 = vmatpush1.xpose.msra.mxu0 0.0
        %3554 = vmatprep.subr.mxu0 0.0
        %3555 = vmatpush1.xpose.msra.mxu0 0.0
        %3556 = vmatprep.subr.mxu0 0.0
        %3557 = vmatpush1.xpose.msra.mxu0 0.0
        %3558 = vmatprep.subr.mxu0 0.0
        %3559 = vmatpush1.xpose.msra.mxu0 0.0
        %3560 = vmatprep.subr.mxu0 0.0
        %3561 = vmatpush1.xpose.msra.mxu0 0.0
        %3562 = vmatprep.subr.mxu0 0.0
        %3563 = vmatpush1.xpose.msra.mxu0 0.0
        %3564 = vmatprep.subr.mxu0 0.0
        %3565 = vmatpush1.xpose.msra.mxu0 0.0
        %3566 = vmatprep.subr.mxu0 0.0
        %3567 = vmatpush1.xpose.msra.mxu0 0.0
        %3568 = vmatprep.subr.mxu0 0.0
        %3569 = vmatpush1.xpose.msra.mxu0 0.0
        %3570 = vmatprep.subr.mxu0 0.0
        %3571 = vmatpush1.xpose.msra.mxu0 0.0
        %3572 = vmatprep.subr.mxu0 0.0
        %3573 = vmatpush1.xpose.msra.mxu0 0.0
        %3574 = vmatprep.subr.mxu0 0.0
        %3575 = vmatpush1.xpose.msra.mxu0 0.0
        %3576 = vmatprep.subr.mxu0 0.0
        %3577 = vmatpush1.xpose.msra.mxu0 0.0
        %3578 = vmatprep.subr.mxu0 0.0
        %3579 = vmatpush1.xpose.msra.mxu0 0.0
        %3580 = vmatprep.subr.mxu0 0.0
        %3581 = vmatpush1.xpose.msra.mxu0 0.0
        %3582 = vmatprep.subr.mxu0 0.0
        %3583 = vmatpush1.xpose.msra.mxu0 0.0
        %3584 = vmatprep.subr.mxu0 0.0
        %3585 = vmatpush1.xpose.msra.mxu0 0.0
        %3586 = vmatprep.subr.mxu0 0.0
        %3587 = vmatpush1.xpose.msra.mxu0 0.0
        %3588 = vmatprep.subr.mxu0 0.0
        %3589 = vmatpush1.xpose.msra.mxu0 0.0
        %3590 = vmatprep.subr.mxu0 0.0
        %3591 = vmatpush1.xpose.msra.mxu0 0.0
        %3592 = vmatprep.subr.mxu0 0.0
        %3593 = vmatpush1.xpose.msra.mxu0 0.0
        %3594 = vmatprep.subr.mxu0 0.0
        %3595 = vmatpush1.xpose.msra.mxu0 0.0
        %3596 = vmatprep.subr.mxu0 0.0
        %3597 = vmatpush1.xpose.msra.mxu0 0.0
        %3598 = vmatprep.subr.mxu0 0.0
        %3599 = vmatpush1.xpose.msra.mxu0 0.0
        %3600 = vmatprep.subr.mxu0 0.0
        %3601 = vmatpush1.xpose.msra.mxu0 0.0
        %3602 = vmatprep.subr.mxu0 0.0
        %3603 = vmatpush1.xpose.msra.mxu0 0.0
        %3604 = vmatprep.subr.mxu0 0.0
        %3605 = vmatpush1.xpose.msra.mxu0 0.0
        %3606 = vmatprep.subr.mxu0 0.0
        %3607 = vmatpush1.xpose.msra.mxu0 0.0
        %3608 = vmatprep.subr.mxu0 0.0
        %3609 = vmatpush1.xpose.msra.mxu0 0.0
        %3610 = vmatprep.subr.mxu0 0.0
        %3611 = vmatpush1.xpose.msra.mxu0 0.0
        %3612 = vmatprep.mubr.f32.mxu0 0.0
        %3613 = vmatmul.mubr.f32.gmra.mrb[0].mxu0 %v3544
        %v3614 = vpop.f32.mrb[0].mxu0
        %v3615 = vadd.f32 0.0, %v3614
        %v3616 = vpop.f32.mrb[0].mxu0
        %3617 = vdwg.mxu0
        %3618 = vrot.lane.b32.xlu0 %v3463, 96
        %v3619 = vpop.permute.xlu0 %3618
        %v3620 = vsel %vm1564, %v3463, 0
        %v3622 = vsel %vm1564, %v3619, 0
        %3624 = vmatprep.subr.mxu0 0.0
        %3625 = vmatpush1.xpose.msra.mxu0 %v3622
        %3626 = vmatprep.subr.mxu0 0.0
        %3627 = vmatpush1.xpose.msra.mxu0 0.0
        %3628 = vmatprep.subr.mxu0 0.0
        %3629 = vmatpush1.xpose.msra.mxu0 0.0
        %3630 = vmatprep.subr.mxu0 0.0
        %3631 = vmatpush1.xpose.msra.mxu0 0.0
        %3632 = vmatprep.subr.mxu0 0.0
        %3633 = vmatpush1.xpose.msra.mxu0 0.0
        %3634 = vmatprep.subr.mxu0 0.0
        %3635 = vmatpush1.xpose.msra.mxu0 0.0
        %3636 = vmatprep.subr.mxu0 0.0
        %3637 = vmatpush1.xpose.msra.mxu0 0.0
        %3638 = vmatprep.subr.mxu0 0.0
        %3639 = vmatpush1.xpose.msra.mxu0 0.0
        %3640 = vmatprep.subr.mxu0 0.0
        %3641 = vmatpush1.xpose.msra.mxu0 0.0
        %3642 = vmatprep.subr.mxu0 0.0
        %3643 = vmatpush1.xpose.msra.mxu0 0.0
        %3644 = vmatprep.subr.mxu0 0.0
        %3645 = vmatpush1.xpose.msra.mxu0 0.0
        %3646 = vmatprep.subr.mxu0 0.0
        %3647 = vmatpush1.xpose.msra.mxu0 0.0
        %3648 = vmatprep.subr.mxu0 0.0
        %3649 = vmatpush1.xpose.msra.mxu0 0.0
        %3650 = vmatprep.subr.mxu0 0.0
        %3651 = vmatpush1.xpose.msra.mxu0 0.0
        %3652 = vmatprep.subr.mxu0 0.0
        %3653 = vmatpush1.xpose.msra.mxu0 0.0
        %3654 = vmatprep.subr.mxu0 0.0
        %3655 = vmatpush1.xpose.msra.mxu0 0.0
        %3656 = vmatprep.subr.mxu0 0.0
        %3657 = vmatpush1.xpose.msra.mxu0 0.0
        %3658 = vmatprep.subr.mxu0 0.0
        %3659 = vmatpush1.xpose.msra.mxu0 0.0
        %3660 = vmatprep.subr.mxu0 0.0
        %3661 = vmatpush1.xpose.msra.mxu0 0.0
        %3662 = vmatprep.subr.mxu0 0.0
        %3663 = vmatpush1.xpose.msra.mxu0 0.0
        %3664 = vmatprep.subr.mxu0 0.0
        %3665 = vmatpush1.xpose.msra.mxu0 0.0
        %3666 = vmatprep.subr.mxu0 0.0
        %3667 = vmatpush1.xpose.msra.mxu0 0.0
        %3668 = vmatprep.subr.mxu0 0.0
        %3669 = vmatpush1.xpose.msra.mxu0 0.0
        %3670 = vmatprep.subr.mxu0 0.0
        %3671 = vmatpush1.xpose.msra.mxu0 0.0
        %3672 = vmatprep.subr.mxu0 0.0
        %3673 = vmatpush1.xpose.msra.mxu0 0.0
        %3674 = vmatprep.subr.mxu0 0.0
        %3675 = vmatpush1.xpose.msra.mxu0 0.0
        %3676 = vmatprep.subr.mxu0 0.0
        %3677 = vmatpush1.xpose.msra.mxu0 0.0
        %3678 = vmatprep.subr.mxu0 0.0
        %3679 = vmatpush1.xpose.msra.mxu0 0.0
        %3680 = vmatprep.subr.mxu0 0.0
        %3681 = vmatpush1.xpose.msra.mxu0 0.0
        %3682 = vmatprep.subr.mxu0 0.0
        %3683 = vmatpush1.xpose.msra.mxu0 0.0
        %3684 = vmatprep.subr.mxu0 0.0
        %3685 = vmatpush1.xpose.msra.mxu0 0.0
        %3686 = vmatprep.subr.mxu0 0.0
        %3687 = vmatpush1.xpose.msra.mxu0 0.0
        %3688 = vmatprep.mubr.f32.mxu0 0.0
        %3689 = vmatmul.mubr.f32.gmra.mrb[0].mxu0 %v3620
        %v3690 = vpop.f32.mrb[0].mxu0
        %v3691 = vadd.f32 0.0, %v3690
        %v3692 = vpop.f32.mrb[0].mxu0
        %3693 = vdwg.mxu0
        %3694 = vrot.lane.b32.xlu0 %v3465, 96
        %v3695 = vpop.permute.xlu0 %3694
        %v3696 = vsel %vm1564, %v3465, 0
        %v3698 = vsel %vm1564, %v3695, 0
        %3700 = vmatprep.subr.mxu0 0.0
        %3701 = vmatpush1.xpose.msra.mxu0 %v3698
        %3702 = vmatprep.subr.mxu0 0.0
        %3703 = vmatpush1.xpose.msra.mxu0 0.0
        %3704 = vmatprep.subr.mxu0 0.0
        %3705 = vmatpush1.xpose.msra.mxu0 0.0
        %3706 = vmatprep.subr.mxu0 0.0
        %3707 = vmatpush1.xpose.msra.mxu0 0.0
        %3708 = vmatprep.subr.mxu0 0.0
        %3709 = vmatpush1.xpose.msra.mxu0 0.0
        %3710 = vmatprep.subr.mxu0 0.0
        %3711 = vmatpush1.xpose.msra.mxu0 0.0
        %3712 = vmatprep.subr.mxu0 0.0
        %3713 = vmatpush1.xpose.msra.mxu0 0.0
        %3714 = vmatprep.subr.mxu0 0.0
        %3715 = vmatpush1.xpose.msra.mxu0 0.0
        %3716 = vmatprep.subr.mxu0 0.0
        %3717 = vmatpush1.xpose.msra.mxu0 0.0
        %3718 = vmatprep.subr.mxu0 0.0
        %3719 = vmatpush1.xpose.msra.mxu0 0.0
        %3720 = vmatprep.subr.mxu0 0.0
        %3721 = vmatpush1.xpose.msra.mxu0 0.0
        %3722 = vmatprep.subr.mxu0 0.0
        %3723 = vmatpush1.xpose.msra.mxu0 0.0
        %3724 = vmatprep.subr.mxu0 0.0
        %3725 = vmatpush1.xpose.msra.mxu0 0.0
        %3726 = vmatprep.subr.mxu0 0.0
        %3727 = vmatpush1.xpose.msra.mxu0 0.0
        %3728 = vmatprep.subr.mxu0 0.0
        %3729 = vmatpush1.xpose.msra.mxu0 0.0
        %3730 = vmatprep.subr.mxu0 0.0
        %3731 = vmatpush1.xpose.msra.mxu0 0.0
        %3732 = vmatprep.subr.mxu0 0.0
        %3733 = vmatpush1.xpose.msra.mxu0 0.0
        %3734 = vmatprep.subr.mxu0 0.0
        %3735 = vmatpush1.xpose.msra.mxu0 0.0
        %3736 = vmatprep.subr.mxu0 0.0
        %3737 = vmatpush1.xpose.msra.mxu0 0.0
        %3738 = vmatprep.subr.mxu0 0.0
        %3739 = vmatpush1.xpose.msra.mxu0 0.0
        %3740 = vmatprep.subr.mxu0 0.0
        %3741 = vmatpush1.xpose.msra.mxu0 0.0
        %3742 = vmatprep.subr.mxu0 0.0
        %3743 = vmatpush1.xpose.msra.mxu0 0.0
        %3744 = vmatprep.subr.mxu0 0.0
        %3745 = vmatpush1.xpose.msra.mxu0 0.0
        %3746 = vmatprep.subr.mxu0 0.0
        %3747 = vmatpush1.xpose.msra.mxu0 0.0
        %3748 = vmatprep.subr.mxu0 0.0
        %3749 = vmatpush1.xpose.msra.mxu0 0.0
        %3750 = vmatprep.subr.mxu0 0.0
        %3751 = vmatpush1.xpose.msra.mxu0 0.0
        %3752 = vmatprep.subr.mxu0 0.0
        %3753 = vmatpush1.xpose.msra.mxu0 0.0
        %3754 = vmatprep.subr.mxu0 0.0
        %3755 = vmatpush1.xpose.msra.mxu0 0.0
        %3756 = vmatprep.subr.mxu0 0.0
        %3757 = vmatpush1.xpose.msra.mxu0 0.0
        %3758 = vmatprep.subr.mxu0 0.0
        %3759 = vmatpush1.xpose.msra.mxu0 0.0
        %3760 = vmatprep.subr.mxu0 0.0
        %3761 = vmatpush1.xpose.msra.mxu0 0.0
        %3762 = vmatprep.subr.mxu0 0.0
        %3763 = vmatpush1.xpose.msra.mxu0 0.0
        %3764 = vmatprep.mubr.f32.mxu0 0.0
        %3765 = vmatmul.mubr.f32.gmra.mrb[0].mxu0 %v3696
        %v3766 = vpop.f32.mrb[0].mxu0
        %v3767 = vadd.f32 0.0, %v3766
        %v3768 = vpop.f32.mrb[0].mxu0
        %3769 = vdwg.mxu0
        %v3770 = vmul.f32 %v3539, 0.35355338
        %v3771 = vmul.f32 %v3615, 0.35355338
        %v3772 = vmul.f32 %v3691, 0.35355338
        %v3773 = vmul.f32 %v3767, 0.35355338
        %v3774 = vsel %vm1873, %v3770, -1e+09
        %v3775 = vsel %vm1873, %v3771, -1e+09
        %v3776 = vsel %vm1873, %v3772, -1e+09
        %v3777 = vsel %vm1873, %v3773, -1e+09
        %v3778 = vsel %vm1564, %v3774, -inf
        %3779 = vmax.xlane.f32.xlu0 %v3778
        %v3780 = vpop.xlane.xlu0 %3779
        %v3781 = vsel %vm1564, %v3775, -inf
        %3782 = vmax.xlane.f32.xlu0 %v3781
        %v3783 = vpop.xlane.xlu0 %3782
        %v3784 = vsel %vm1564, %v3776, -inf
        %3785 = vmax.xlane.f32.xlu0 %v3784
        %v3786 = vpop.xlane.xlu0 %3785
        %v3787 = vsel %vm1564, %v3777, -inf
        %3788 = vmax.xlane.f32.xlu0 %v3787
        %v3789 = vpop.xlane.xlu0 %3788
        %v3790 = vsub.f32 %v3774, %v3780
        %v3791 = vsub.f32 %v3775, %v3783
        %v3792 = vsub.f32 %v3776, %v3786
        %v3793 = vsub.f32 %v3777, %v3789
        %v3794 = vmul.f32 %v3790, 1.442695
        %v3795 = vpow.pop %v3794
        %v3796 = vmul.f32 %v3791, 1.442695
        %v3797 = vpow.pop %v3796
        %v3798 = vmul.f32 %v3792, 1.442695
        %v3799 = vpow.pop %v3798
        %v3800 = vmul.f32 %v3793, 1.442695
        %v3801 = vpow.pop %v3800
        %v3802 = vsel %vm1564, %v3795, 0.0
        %3803 = vadd.xlane.f32.xlu0 %v3802
        %v3804 = vpop.xlane.xlu0 %3803
        %v3805 = vsel %vm1564, %v3797, 0.0
        %3806 = vadd.xlane.f32.xlu0 %v3805
        %v3807 = vpop.xlane.xlu0 %3806
        %v3808 = vsel %vm1564, %v3799, 0.0
        %3809 = vadd.xlane.f32.xlu0 %v3808
        %v3810 = vpop.xlane.xlu0 %3809
        %v3811 = vsel %vm1564, %v3801, 0.0
        %3812 = vadd.xlane.f32.xlu0 %v3811
        %v3813 = vpop.xlane.xlu0 %3812
        %v3814 = vrcp.pop %v3804
        %v3815 = vmul.f32 %v3795, %v3814
        %v3816 = vrcp.pop %v3807
        %v3817 = vmul.f32 %v3797, %v3816
        %v3818 = vrcp.pop %v3810
        %v3819 = vmul.f32 %v3799, %v3818
        %v3820 = vrcp.pop %v3813
        %v3821 = vmul.f32 %v3801, %v3820
        %3822 = vrot.lane.b32.xlu0 %v3456, 64
        %v3823 = vpop.permute.xlu0 %3822
        %v3826 = vsel %vm1564, %v3815, 0
        %3828 = vmatprep.subr.mxu0 0.0
        %3829 = vmatpush1.msra.mxu0 %v3823
        %3830 = vmatprep.subr.mxu0 0.0
        %3831 = vmatpush1.msra.mxu0 0.0
        %3832 = vmatprep.subr.mxu0 0.0
        %3833 = vmatpush1.msra.mxu0 0.0
        %3834 = vmatprep.subr.mxu0 0.0
        %3835 = vmatpush1.msra.mxu0 0.0
        %3836 = vmatprep.subr.mxu0 0.0
        %3837 = vmatpush1.msra.mxu0 0.0
        %3838 = vmatprep.subr.mxu0 0.0
        %3839 = vmatpush1.msra.mxu0 0.0
        %3840 = vmatprep.subr.mxu0 0.0
        %3841 = vmatpush1.msra.mxu0 0.0
        %3842 = vmatprep.subr.mxu0 0.0
        %3843 = vmatpush1.msra.mxu0 0.0
        %3844 = vmatprep.subr.mxu0 0.0
        %3845 = vmatpush1.msra.mxu0 0.0
        %3846 = vmatprep.subr.mxu0 0.0
        %3847 = vmatpush1.msra.mxu0 0.0
        %3848 = vmatprep.subr.mxu0 0.0
        %3849 = vmatpush1.msra.mxu0 0.0
        %3850 = vmatprep.subr.mxu0 0.0
        %3851 = vmatpush1.msra.mxu0 0.0
        %3852 = vmatprep.subr.mxu0 0.0
        %3853 = vmatpush1.msra.mxu0 0.0
        %3854 = vmatprep.subr.mxu0 0.0
        %3855 = vmatpush1.msra.mxu0 0.0
        %3856 = vmatprep.subr.mxu0 0.0
        %3857 = vmatpush1.msra.mxu0 0.0
        %3858 = vmatprep.subr.mxu0 0.0
        %3859 = vmatpush1.msra.mxu0 0.0
        %3860 = vmatprep.subr.mxu0 0.0
        %3861 = vmatpush1.msra.mxu0 0.0
        %3862 = vmatprep.subr.mxu0 0.0
        %3863 = vmatpush1.msra.mxu0 0.0
        %3864 = vmatprep.subr.mxu0 0.0
        %3865 = vmatpush1.msra.mxu0 0.0
        %3866 = vmatprep.subr.mxu0 0.0
        %3867 = vmatpush1.msra.mxu0 0.0
        %3868 = vmatprep.subr.mxu0 0.0
        %3869 = vmatpush1.msra.mxu0 0.0
        %3870 = vmatprep.subr.mxu0 0.0
        %3871 = vmatpush1.msra.mxu0 0.0
        %3872 = vmatprep.subr.mxu0 0.0
        %3873 = vmatpush1.msra.mxu0 0.0
        %3874 = vmatprep.subr.mxu0 0.0
        %3875 = vmatpush1.msra.mxu0 0.0
        %3876 = vmatprep.subr.mxu0 0.0
        %3877 = vmatpush1.msra.mxu0 0.0
        %3878 = vmatprep.subr.mxu0 0.0
        %3879 = vmatpush1.msra.mxu0 0.0
        %3880 = vmatprep.subr.mxu0 0.0
        %3881 = vmatpush1.msra.mxu0 0.0
        %3882 = vmatprep.subr.mxu0 0.0
        %3883 = vmatpush1.msra.mxu0 0.0
        %3884 = vmatprep.subr.mxu0 0.0
        %3885 = vmatpush1.msra.mxu0 0.0
        %3886 = vmatprep.subr.mxu0 0.0
        %3887 = vmatpush1.msra.mxu0 0.0
        %3888 = vmatprep.subr.mxu0 0.0
        %3889 = vmatpush1.msra.mxu0 0.0
        %3890 = vmatprep.subr.mxu0 0.0
        %3891 = vmatpush1.msra.mxu0 0.0
        %3892 = vmatprep.mubr.f32.mxu0 0.0
        %3893 = vmatmul.mubr.f32.gmra.mrb[0].mxu0 %v3826
        %v3894 = vpop.f32.mrb[0].mxu0
        %v3895 = vadd.f32 0.0, %v3894
        %v3896 = vpop.f32.mrb[0].mxu0
        %3897 = vdwg.mxu0
        %3898 = vrot.lane.b32.xlu0 %v3461, 64
        %v3899 = vpop.permute.xlu0 %3898
        %v3902 = vsel %vm1564, %v3817, 0
        %3904 = vmatprep.subr.mxu0 0.0
        %3905 = vmatpush1.msra.mxu0 %v3899
        %3906 = vmatprep.subr.mxu0 0.0
        %3907 = vmatpush1.msra.mxu0 0.0
        %3908 = vmatprep.subr.mxu0 0.0
        %3909 = vmatpush1.msra.mxu0 0.0
        %3910 = vmatprep.subr.mxu0 0.0
        %3911 = vmatpush1.msra.mxu0 0.0
        %3912 = vmatprep.subr.mxu0 0.0
        %3913 = vmatpush1.msra.mxu0 0.0
        %3914 = vmatprep.subr.mxu0 0.0
        %3915 = vmatpush1.msra.mxu0 0.0
        %3916 = vmatprep.subr.mxu0 0.0
        %3917 = vmatpush1.msra.mxu0 0.0
        %3918 = vmatprep.subr.mxu0 0.0
        %3919 = vmatpush1.msra.mxu0 0.0
        %3920 = vmatprep.subr.mxu0 0.0
        %3921 = vmatpush1.msra.mxu0 0.0
        %3922 = vmatprep.subr.mxu0 0.0
        %3923 = vmatpush1.msra.mxu0 0.0
        %3924 = vmatprep.subr.mxu0 0.0
        %3925 = vmatpush1.msra.mxu0 0.0
        %3926 = vmatprep.subr.mxu0 0.0
        %3927 = vmatpush1.msra.mxu0 0.0
        %3928 = vmatprep.subr.mxu0 0.0
        %3929 = vmatpush1.msra.mxu0 0.0
        %3930 = vmatprep.subr.mxu0 0.0
        %3931 = vmatpush1.msra.mxu0 0.0
        %3932 = vmatprep.subr.mxu0 0.0
        %3933 = vmatpush1.msra.mxu0 0.0
        %3934 = vmatprep.subr.mxu0 0.0
        %3935 = vmatpush1.msra.mxu0 0.0
        %3936 = vmatprep.subr.mxu0 0.0
        %3937 = vmatpush1.msra.mxu0 0.0
        %3938 = vmatprep.subr.mxu0 0.0
        %3939 = vmatpush1.msra.mxu0 0.0
        %3940 = vmatprep.subr.mxu0 0.0
        %3941 = vmatpush1.msra.mxu0 0.0
        %3942 = vmatprep.subr.mxu0 0.0
        %3943 = vmatpush1.msra.mxu0 0.0
        %3944 = vmatprep.subr.mxu0 0.0
        %3945 = vmatpush1.msra.mxu0 0.0
        %3946 = vmatprep.subr.mxu0 0.0
        %3947 = vmatpush1.msra.mxu0 0.0
        %3948 = vmatprep.subr.mxu0 0.0
        %3949 = vmatpush1.msra.mxu0 0.0
        %3950 = vmatprep.subr.mxu0 0.0
        %3951 = vmatpush1.msra.mxu0 0.0
        %3952 = vmatprep.subr.mxu0 0.0
        %3953 = vmatpush1.msra.mxu0 0.0
        %3954 = vmatprep.subr.mxu0 0.0
        %3955 = vmatpush1.msra.mxu0 0.0
        %3956 = vmatprep.subr.mxu0 0.0
        %3957 = vmatpush1.msra.mxu0 0.0
        %3958 = vmatprep.subr.mxu0 0.0
        %3959 = vmatpush1.msra.mxu0 0.0
        %3960 = vmatprep.subr.mxu0 0.0
        %3961 = vmatpush1.msra.mxu0 0.0
        %3962 = vmatprep.subr.mxu0 0.0
        %3963 = vmatpush1.msra.mxu0 0.0
        %3964 = vmatprep.subr.mxu0 0.0
        %3965 = vmatpush1.msra.mxu0 0.0
        %3966 = vmatprep.subr.mxu0 0.0
        %3967 = vmatpush1.msra.mxu0 0.0
        %3968 = vmatprep.mubr.f32.mxu0 0.0
        %3969 = vmatmul.mubr.f32.gmra.mrb[0].mxu0 %v3902
        %v3970 = vpop.f32.mrb[0].mxu0
        %v3971 = vadd.f32 0.0, %v3970
        %v3972 = vpop.f32.mrb[0].mxu0
        %3973 = vdwg.mxu0
        %3974 = vrot.lane.b32.xlu0 %v3463, 64
        %v3975 = vpop.permute.xlu0 %3974
        %v3978 = vsel %vm1564, %v3819, 0
        %3980 = vmatprep.subr.mxu0 0.0
        %3981 = vmatpush1.msra.mxu0 %v3975
        %3982 = vmatprep.subr.mxu0 0.0
        %3983 = vmatpush1.msra.mxu0 0.0
        %3984 = vmatprep.subr.mxu0 0.0
        %3985 = vmatpush1.msra.mxu0 0.0
        %3986 = vmatprep.subr.mxu0 0.0
        %3987 = vmatpush1.msra.mxu0 0.0
        %3988 = vmatprep.subr.mxu0 0.0
        %3989 = vmatpush1.msra.mxu0 0.0
        %3990 = vmatprep.subr.mxu0 0.0
        %3991 = vmatpush1.msra.mxu0 0.0
        %3992 = vmatprep.subr.mxu0 0.0
        %3993 = vmatpush1.msra.mxu0 0.0
        %3994 = vmatprep.subr.mxu0 0.0
        %3995 = vmatpush1.msra.mxu0 0.0
        %3996 = vmatprep.subr.mxu0 0.0
        %3997 = vmatpush1.msra.mxu0 0.0
        %3998 = vmatprep.subr.mxu0 0.0
        %3999 = vmatpush1.msra.mxu0 0.0
        %4000 = vmatprep.subr.mxu0 0.0
        %4001 = vmatpush1.msra.mxu0 0.0
        %4002 = vmatprep.subr.mxu0 0.0
        %4003 = vmatpush1.msra.mxu0 0.0
        %4004 = vmatprep.subr.mxu0 0.0
        %4005 = vmatpush1.msra.mxu0 0.0
        %4006 = vmatprep.subr.mxu0 0.0
        %4007 = vmatpush1.msra.mxu0 0.0
        %4008 = vmatprep.subr.mxu0 0.0
        %4009 = vmatpush1.msra.mxu0 0.0
        %4010 = vmatprep.subr.mxu0 0.0
        %4011 = vmatpush1.msra.mxu0 0.0
        %4012 = vmatprep.subr.mxu0 0.0
        %4013 = vmatpush1.msra.mxu0 0.0
        %4014 = vmatprep.subr.mxu0 0.0
        %4015 = vmatpush1.msra.mxu0 0.0
        %4016 = vmatprep.subr.mxu0 0.0
        %4017 = vmatpush1.msra.mxu0 0.0
        %4018 = vmatprep.subr.mxu0 0.0
        %4019 = vmatpush1.msra.mxu0 0.0
        %4020 = vmatprep.subr.mxu0 0.0
        %4021 = vmatpush1.msra.mxu0 0.0
        %4022 = vmatprep.subr.mxu0 0.0
        %4023 = vmatpush1.msra.mxu0 0.0
        %4024 = vmatprep.subr.mxu0 0.0
        %4025 = vmatpush1.msra.mxu0 0.0
        %4026 = vmatprep.subr.mxu0 0.0
        %4027 = vmatpush1.msra.mxu0 0.0
        %4028 = vmatprep.subr.mxu0 0.0
        %4029 = vmatpush1.msra.mxu0 0.0
        %4030 = vmatprep.subr.mxu0 0.0
        %4031 = vmatpush1.msra.mxu0 0.0
        %4032 = vmatprep.subr.mxu0 0.0
        %4033 = vmatpush1.msra.mxu0 0.0
        %4034 = vmatprep.subr.mxu0 0.0
        %4035 = vmatpush1.msra.mxu0 0.0
        %4036 = vmatprep.subr.mxu0 0.0
        %4037 = vmatpush1.msra.mxu0 0.0
        %4038 = vmatprep.subr.mxu0 0.0
        %4039 = vmatpush1.msra.mxu0 0.0
        %4040 = vmatprep.subr.mxu0 0.0
        %4041 = vmatpush1.msra.mxu0 0.0
        %4042 = vmatprep.subr.mxu0 0.0
        %4043 = vmatpush1.msra.mxu0 0.0
        %4044 = vmatprep.mubr.f32.mxu0 0.0
        %4045 = vmatmul.mubr.f32.gmra.mrb[0].mxu0 %v3978
        %v4046 = vpop.f32.mrb[0].mxu0
        %v4047 = vadd.f32 0.0, %v4046
        %v4048 = vpop.f32.mrb[0].mxu0
        %4049 = vdwg.mxu0
        %4050 = vrot.lane.b32.xlu0 %v3465, 64
        %v4051 = vpop.permute.xlu0 %4050
        %v4054 = vsel %vm1564, %v3821, 0
        %4056 = vmatprep.subr.mxu0 0.0
        %4057 = vmatpush1.msra.mxu0 %v4051
        %4058 = vmatprep.subr.mxu0 0.0
        %4059 = vmatpush1.msra.mxu0 0.0
        %4060 = vmatprep.subr.mxu0 0.0
        %4061 = vmatpush1.msra.mxu0 0.0
        %4062 = vmatprep.subr.mxu0 0.0
        %4063 = vmatpush1.msra.mxu0 0.0
        %4064 = vmatprep.subr.mxu0 0.0
        %4065 = vmatpush1.msra.mxu0 0.0
        %4066 = vmatprep.subr.mxu0 0.0
        %4067 = vmatpush1.msra.mxu0 0.0
        %4068 = vmatprep.subr.mxu0 0.0
        %4069 = vmatpush1.msra.mxu0 0.0
        %4070 = vmatprep.subr.mxu0 0.0
        %4071 = vmatpush1.msra.mxu0 0.0
        %4072 = vmatprep.subr.mxu0 0.0
        %4073 = vmatpush1.msra.mxu0 0.0
        %4074 = vmatprep.subr.mxu0 0.0
        %4075 = vmatpush1.msra.mxu0 0.0
        %4076 = vmatprep.subr.mxu0 0.0
        %4077 = vmatpush1.msra.mxu0 0.0
        %4078 = vmatprep.subr.mxu0 0.0
        %4079 = vmatpush1.msra.mxu0 0.0
        %4080 = vmatprep.subr.mxu0 0.0
        %4081 = vmatpush1.msra.mxu0 0.0
        %4082 = vmatprep.subr.mxu0 0.0
        %4083 = vmatpush1.msra.mxu0 0.0
        %4084 = vmatprep.subr.mxu0 0.0
        %4085 = vmatpush1.msra.mxu0 0.0
        %4086 = vmatprep.subr.mxu0 0.0
        %4087 = vmatpush1.msra.mxu0 0.0
        %4088 = vmatprep.subr.mxu0 0.0
        %4089 = vmatpush1.msra.mxu0 0.0
        %4090 = vmatprep.subr.mxu0 0.0
        %4091 = vmatpush1.msra.mxu0 0.0
        %4092 = vmatprep.subr.mxu0 0.0
        %4093 = vmatpush1.msra.mxu0 0.0
        %4094 = vmatprep.subr.mxu0 0.0
        %4095 = vmatpush1.msra.mxu0 0.0
        %4096 = vmatprep.subr.mxu0 0.0
        %4097 = vmatpush1.msra.mxu0 0.0
        %4098 = vmatprep.subr.mxu0 0.0
        %4099 = vmatpush1.msra.mxu0 0.0
        %4100 = vmatprep.subr.mxu0 0.0
        %4101 = vmatpush1.msra.mxu0 0.0
        %4102 = vmatprep.subr.mxu0 0.0
        %4103 = vmatpush1.msra.mxu0 0.0
        %4104 = vmatprep.subr.mxu0 0.0
        %4105 = vmatpush1.msra.mxu0 0.0
        %4106 = vmatprep.subr.mxu0 0.0
        %4107 = vmatpush1.msra.mxu0 0.0
        %4108 = vmatprep.subr.mxu0 0.0
        %4109 = vmatpush1.msra.mxu0 0.0
        %4110 = vmatprep.subr.mxu0 0.0
        %4111 = vmatpush1.msra.mxu0 0.0
        %4112 = vmatprep.subr.mxu0 0.0
        %4113 = vmatpush1.msra.mxu0 0.0
        %4114 = vmatprep.subr.mxu0 0.0
        %4115 = vmatpush1.msra.mxu0 0.0
        %4116 = vmatprep.subr.mxu0 0.0
        %4117 = vmatpush1.msra.mxu0 0.0
        %4118 = vmatprep.subr.mxu0 0.0
        %4119 = vmatpush1.msra.mxu0 0.0
        %4120 = vmatprep.mubr.f32.mxu0 0.0
        %4121 = vmatmul.mubr.f32.gmra.mrb[0].mxu0 %v4054
        %v4122 = vpop.f32.mrb[0].mxu0
        %v4123 = vadd.f32 0.0, %v4122
        %v4124 = vpop.f32.mrb[0].mxu0
        %4125 = vdwg.mxu0
        %4127 = vrot.lane.b32.xlu0 %v3971, 8
        %v4128 = vpop.permute.xlu0 %4127
        %4131 = vrot.lane.b32.xlu0 %v4047, 16
        %v4132 = vpop.permute.xlu0 %4131
        %4135 = vrot.lane.b32.xlu0 %v4123, 24
        %v4136 = vpop.permute.xlu0 %4135
        %v4138 = vsel %vm1564, %v3895, %v4128
        %v4139 = vsel %vm2239, %v4138, %v4132
        %v4140 = vsel %vm2241, %v4139, %v4136
        %v4142 = vsel %vm977, %v4140, 0
        %4144 = vmatprep.subr.mxu0 0.0
        %4145 = vmatpush1.msra.mxu0 %v950
        %4146 = vmatprep.subr.mxu0 0.0
        %4147 = vmatpush1.msra.mxu0 %v951
        %4148 = vmatprep.subr.mxu0 0.0
        %4149 = vmatpush1.msra.mxu0 %v952
        %4150 = vmatprep.subr.mxu0 0.0
        %4151 = vmatpush1.msra.mxu0 %v953
        %4152 = vmatprep.subr.mxu0 0.0
        %4153 = vmatpush1.msra.mxu0 0.0
        %4154 = vmatprep.subr.mxu0 0.0
        %4155 = vmatpush1.msra.mxu0 0.0
        %4156 = vmatprep.subr.mxu0 0.0
        %4157 = vmatpush1.msra.mxu0 0.0
        %4158 = vmatprep.subr.mxu0 0.0
        %4159 = vmatpush1.msra.mxu0 0.0
        %4160 = vmatprep.subr.mxu0 0.0
        %4161 = vmatpush1.msra.mxu0 0.0
        %4162 = vmatprep.subr.mxu0 0.0
        %4163 = vmatpush1.msra.mxu0 0.0
        %4164 = vmatprep.subr.mxu0 0.0
        %4165 = vmatpush1.msra.mxu0 0.0
        %4166 = vmatprep.subr.mxu0 0.0
        %4167 = vmatpush1.msra.mxu0 0.0
        %4168 = vmatprep.subr.mxu0 0.0
        %4169 = vmatpush1.msra.mxu0 0.0
        %4170 = vmatprep.subr.mxu0 0.0
        %4171 = vmatpush1.msra.mxu0 0.0
        %4172 = vmatprep.subr.mxu0 0.0
        %4173 = vmatpush1.msra.mxu0 0.0
        %4174 = vmatprep.subr.mxu0 0.0
        %4175 = vmatpush1.msra.mxu0 0.0
        %4176 = vmatprep.subr.mxu0 0.0
        %4177 = vmatpush1.msra.mxu0 0.0
        %4178 = vmatprep.subr.mxu0 0.0
        %4179 = vmatpush1.msra.mxu0 0.0
        %4180 = vmatprep.subr.mxu0 0.0
        %4181 = vmatpush1.msra.mxu0 0.0
        %4182 = vmatprep.subr.mxu0 0.0
        %4183 = vmatpush1.msra.mxu0 0.0
        %4184 = vmatprep.subr.mxu0 0.0
        %4185 = vmatpush1.msra.mxu0 0.0
        %4186 = vmatprep.subr.mxu0 0.0
        %4187 = vmatpush1.msra.mxu0 0.0
        %4188 = vmatprep.subr.mxu0 0.0
        %4189 = vmatpush1.msra.mxu0 0.0
        %4190 = vmatprep.subr.mxu0 0.0
        %4191 = vmatpush1.msra.mxu0 0.0
        %4192 = vmatprep.subr.mxu0 0.0
        %4193 = vmatpush1.msra.mxu0 0.0
        %4194 = vmatprep.subr.mxu0 0.0
        %4195 = vmatpush1.msra.mxu0 0.0
        %4196 = vmatprep.subr.mxu0 0.0
        %4197 = vmatpush1.msra.mxu0 0.0
        %4198 = vmatprep.subr.mxu0 0.0
        %4199 = vmatpush1.msra.mxu0 0.0
        %4200 = vmatprep.subr.mxu0 0.0
        %4201 = vmatpush1.msra.mxu0 0.0
        %4202 = vmatprep.subr.mxu0 0.0
        %4203 = vmatpush1.msra.mxu0 0.0
        %4204 = vmatprep.subr.mxu0 0.0
        %4205 = vmatpush1.msra.mxu0 0.0
        %4206 = vmatprep.subr.mxu0 0.0
        %4207 = vmatpush1.msra.mxu0 0.0
        %4208 = vmatprep.mubr.f32.mxu0 0.0
        %4209 = vmatmul.mubr.f32.gmra.mrb[0].mxu0 %v4142
        %v4210 = vpop.f32.mrb[0].mxu0
        %v4211 = vadd.f32 %v2247, %v4210
        %v4212 = vpop.f32.mrb[0].mxu0
        %4213 = vdwg.mxu0
        %v4214 = vadd.f32 %v3385, %v4211
        %v4215 = vsel %vm977, %v4214, 0.0
        %4216 = vadd.xlane.f32.xlu0 %v4215
        %v4217 = vpop.xlane.xlu0 %4216
        %v4218 = vmul.f32 %v4217, %v981
        %v4219 = vsub.f32 %v4214, %v4218
        %v4220 = vmul.f32 %v4219, %v4219
        %v4221 = vsel %vm977, %v4220, 0.0
        %4222 = vadd.xlane.f32.xlu0 %v4221
        %v4223 = vpop.xlane.xlu0 %4222
        %v4224 = vmul.f32 %v4223, %v1176
        %v4225 = vrsqrt.pop %v4224
        %v4226 = vmul.f32 %v4224, %v4225
        %vm4227 = vcmp.eq.f32.partialorder %v4224, inf
        %v4228 = vsel %vm4227, %v4224, %v4226
        %vm4229 = vcmp.eq.f32.partialorder %v4224, 0.0
        %v4230 = vand.u32 %v4224, 2147483648
        %v4231 = vsel %vm4229, %v4230, %v4228
        %v4232 = vmul.f32 %v1189, %v4219
        %v4233 = vadd.f32 %v4231, 1e-06
        %v4234 = vrcp.pop %v4233
        %v4235 = vmul.f32 %v4232, %v4234
        %v4236 = vadd.f32 %v4235, %v1199
        %v4238 = vsel %vm977, %v4236, 0
        %4240 = vmatprep.subr.mxu0 0.0
        %4241 = vmatpush1.msra.mxu0 %v935
        %4242 = vmatprep.subr.mxu0 0.0
        %4243 = vmatpush1.msra.mxu0 %v936
        %4244 = vmatprep.subr.mxu0 0.0
        %4245 = vmatpush1.msra.mxu0 %v937
        %4246 = vmatprep.subr.mxu0 0.0
        %4247 = vmatpush1.msra.mxu0 %v938
        %4248 = vmatprep.subr.mxu0 0.0
        %4249 = vmatpush1.msra.mxu0 0.0
        %4250 = vmatprep.subr.mxu0 0.0
        %4251 = vmatpush1.msra.mxu0 0.0
        %4252 = vmatprep.subr.mxu0 0.0
        %4253 = vmatpush1.msra.mxu0 0.0
        %4254 = vmatprep.subr.mxu0 0.0
        %4255 = vmatpush1.msra.mxu0 0.0
        %4256 = vmatprep.subr.mxu0 0.0
        %4257 = vmatpush1.msra.mxu0 0.0
        %4258 = vmatprep.subr.mxu0 0.0
        %4259 = vmatpush1.msra.mxu0 0.0
        %4260 = vmatprep.subr.mxu0 0.0
        %4261 = vmatpush1.msra.mxu0 0.0
        %4262 = vmatprep.subr.mxu0 0.0
        %4263 = vmatpush1.msra.mxu0 0.0
        %4264 = vmatprep.subr.mxu0 0.0
        %4265 = vmatpush1.msra.mxu0 0.0
        %4266 = vmatprep.subr.mxu0 0.0
        %4267 = vmatpush1.msra.mxu0 0.0
        %4268 = vmatprep.subr.mxu0 0.0
        %4269 = vmatpush1.msra.mxu0 0.0
        %4270 = vmatprep.subr.mxu0 0.0
        %4271 = vmatpush1.msra.mxu0 0.0
        %4272 = vmatprep.subr.mxu0 0.0
        %4273 = vmatpush1.msra.mxu0 0.0
        %4274 = vmatprep.subr.mxu0 0.0
        %4275 = vmatpush1.msra.mxu0 0.0
        %4276 = vmatprep.subr.mxu0 0.0
        %4277 = vmatpush1.msra.mxu0 0.0
        %4278 = vmatprep.subr.mxu0 0.0
        %4279 = vmatpush1.msra.mxu0 0.0
        %4280 = vmatprep.subr.mxu0 0.0
        %4281 = vmatpush1.msra.mxu0 0.0
        %4282 = vmatprep.subr.mxu0 0.0
        %4283 = vmatpush1.msra.mxu0 0.0
        %4284 = vmatprep.subr.mxu0 0.0
        %4285 = vmatpush1.msra.mxu0 0.0
        %4286 = vmatprep.subr.mxu0 0.0
        %4287 = vmatpush1.msra.mxu0 0.0
        %4288 = vmatprep.subr.mxu0 0.0
        %4289 = vmatpush1.msra.mxu0 0.0
        %4290 = vmatprep.subr.mxu0 0.0
        %4291 = vmatpush1.msra.mxu0 0.0
        %4292 = vmatprep.subr.mxu0 0.0
        %4293 = vmatpush1.msra.mxu0 0.0
        %4294 = vmatprep.subr.mxu0 0.0
        %4295 = vmatpush1.msra.mxu0 0.0
        %4296 = vmatprep.subr.mxu0 0.0
        %4297 = vmatpush1.msra.mxu0 0.0
        %4298 = vmatprep.subr.mxu0 0.0
        %4299 = vmatpush1.msra.mxu0 0.0
        %4300 = vmatprep.subr.mxu0 0.0
        %4301 = vmatpush1.msra.mxu0 0.0
        %4302 = vmatprep.subr.mxu0 0.0
        %4303 = vmatpush1.msra.mxu0 0.0
        %4304 = vmatprep.mubr.f32.mxu0 0.0
        %4305 = vmatmul.mubr.f32.gmra.mrb[0].mxu0 %v4238
        %v4306 = vpop.f32.mrb[0].mxu0
        %v4307 = vadd.f32 %v2349, %v4306
        %v4308 = vpop.f32.mrb[0].mxu0
        %4309 = vdwg.mxu0
        %4311 = vrot.lane.b32.xlu0 %v4307, 120
        %v4312 = vpop.permute.xlu0 %4311
        %4313 = vrot.lane.b32.xlu0 %v4307, 112
        %v4314 = vpop.permute.xlu0 %4313
        %4315 = vrot.lane.b32.xlu0 %v4307, 104
        %v4316 = vpop.permute.xlu0 %4315
        %v4317 = vsel %vm1564, %v4307, 0
        %4319 = vmatprep.subr.mxu0 0.0
        %4320 = vmatpush1.xpose.msra.mxu0 %v2433
        %4321 = vmatprep.subr.mxu0 0.0
        %4322 = vmatpush1.xpose.msra.mxu0 0.0
        %4323 = vmatprep.subr.mxu0 0.0
        %4324 = vmatpush1.xpose.msra.mxu0 0.0
        %4325 = vmatprep.subr.mxu0 0.0
        %4326 = vmatpush1.xpose.msra.mxu0 0.0
        %4327 = vmatprep.subr.mxu0 0.0
        %4328 = vmatpush1.xpose.msra.mxu0 0.0
        %4329 = vmatprep.subr.mxu0 0.0
        %4330 = vmatpush1.xpose.msra.mxu0 0.0
        %4331 = vmatprep.subr.mxu0 0.0
        %4332 = vmatpush1.xpose.msra.mxu0 0.0
        %4333 = vmatprep.subr.mxu0 0.0
        %4334 = vmatpush1.xpose.msra.mxu0 0.0
        %4335 = vmatprep.subr.mxu0 0.0
        %4336 = vmatpush1.xpose.msra.mxu0 0.0
        %4337 = vmatprep.subr.mxu0 0.0
        %4338 = vmatpush1.xpose.msra.mxu0 0.0
        %4339 = vmatprep.subr.mxu0 0.0
        %4340 = vmatpush1.xpose.msra.mxu0 0.0
        %4341 = vmatprep.subr.mxu0 0.0
        %4342 = vmatpush1.xpose.msra.mxu0 0.0
        %4343 = vmatprep.subr.mxu0 0.0
        %4344 = vmatpush1.xpose.msra.mxu0 0.0
        %4345 = vmatprep.subr.mxu0 0.0
        %4346 = vmatpush1.xpose.msra.mxu0 0.0
        %4347 = vmatprep.subr.mxu0 0.0
        %4348 = vmatpush1.xpose.msra.mxu0 0.0
        %4349 = vmatprep.subr.mxu0 0.0
        %4350 = vmatpush1.xpose.msra.mxu0 0.0
        %4351 = vmatprep.subr.mxu0 0.0
        %4352 = vmatpush1.xpose.msra.mxu0 0.0
        %4353 = vmatprep.subr.mxu0 0.0
        %4354 = vmatpush1.xpose.msra.mxu0 0.0
        %4355 = vmatprep.subr.mxu0 0.0
        %4356 = vmatpush1.xpose.msra.mxu0 0.0
        %4357 = vmatprep.subr.mxu0 0.0
        %4358 = vmatpush1.xpose.msra.mxu0 0.0
        %4359 = vmatprep.subr.mxu0 0.0
        %4360 = vmatpush1.xpose.msra.mxu0 0.0
        %4361 = vmatprep.subr.mxu0 0.0
        %4362 = vmatpush1.xpose.msra.mxu0 0.0
        %4363 = vmatprep.subr.mxu0 0.0
        %4364 = vmatpush1.xpose.msra.mxu0 0.0
        %4365 = vmatprep.subr.mxu0 0.0
        %4366 = vmatpush1.xpose.msra.mxu0 0.0
        %4367 = vmatprep.subr.mxu0 0.0
        %4368 = vmatpush1.xpose.msra.mxu0 0.0
        %4369 = vmatprep.subr.mxu0 0.0
        %4370 = vmatpush1.xpose.msra.mxu0 0.0
        %4371 = vmatprep.subr.mxu0 0.0
        %4372 = vmatpush1.xpose.msra.mxu0 0.0
        %4373 = vmatprep.subr.mxu0 0.0
        %4374 = vmatpush1.xpose.msra.mxu0 0.0
        %4375 = vmatprep.subr.mxu0 0.0
        %4376 = vmatpush1.xpose.msra.mxu0 0.0
        %4377 = vmatprep.subr.mxu0 0.0
        %4378 = vmatpush1.xpose.msra.mxu0 0.0
        %4379 = vmatprep.subr.mxu0 0.0
        %4380 = vmatpush1.xpose.msra.mxu0 0.0
        %4381 = vmatprep.subr.mxu0 0.0
        %4382 = vmatpush1.xpose.msra.mxu0 0.0
        %4383 = vmatprep.mubr.f32.mxu0 0.0
        %4384 = vmatmul.mubr.f32.gmra.mrb[0].mxu0 %v4317
        %v4385 = vpop.f32.mrb[0].mxu0
        %v4386 = vadd.f32 0.0, %v4385
        %v4387 = vpop.f32.mrb[0].mxu0
        %4388 = vdwg.mxu0
        %v4389 = vsel %vm1564, %v4312, 0
        %4391 = vmatprep.subr.mxu0 0.0
        %4392 = vmatpush1.xpose.msra.mxu0 %v2507
        %4393 = vmatprep.subr.mxu0 0.0
        %4394 = vmatpush1.xpose.msra.mxu0 0.0
        %4395 = vmatprep.subr.mxu0 0.0
        %4396 = vmatpush1.xpose.msra.mxu0 0.0
        %4397 = vmatprep.subr.mxu0 0.0
        %4398 = vmatpush1.xpose.msra.mxu0 0.0
        %4399 = vmatprep.subr.mxu0 0.0
        %4400 = vmatpush1.xpose.msra.mxu0 0.0
        %4401 = vmatprep.subr.mxu0 0.0
        %4402 = vmatpush1.xpose.msra.mxu0 0.0
        %4403 = vmatprep.subr.mxu0 0.0
        %4404 = vmatpush1.xpose.msra.mxu0 0.0
        %4405 = vmatprep.subr.mxu0 0.0
        %4406 = vmatpush1.xpose.msra.mxu0 0.0
        %4407 = vmatprep.subr.mxu0 0.0
        %4408 = vmatpush1.xpose.msra.mxu0 0.0
        %4409 = vmatprep.subr.mxu0 0.0
        %4410 = vmatpush1.xpose.msra.mxu0 0.0
        %4411 = vmatprep.subr.mxu0 0.0
        %4412 = vmatpush1.xpose.msra.mxu0 0.0
        %4413 = vmatprep.subr.mxu0 0.0
        %4414 = vmatpush1.xpose.msra.mxu0 0.0
        %4415 = vmatprep.subr.mxu0 0.0
        %4416 = vmatpush1.xpose.msra.mxu0 0.0
        %4417 = vmatprep.subr.mxu0 0.0
        %4418 = vmatpush1.xpose.msra.mxu0 0.0
        %4419 = vmatprep.subr.mxu0 0.0
        %4420 = vmatpush1.xpose.msra.mxu0 0.0
        %4421 = vmatprep.subr.mxu0 0.0
        %4422 = vmatpush1.xpose.msra.mxu0 0.0
        %4423 = vmatprep.subr.mxu0 0.0
        %4424 = vmatpush1.xpose.msra.mxu0 0.0
        %4425 = vmatprep.subr.mxu0 0.0
        %4426 = vmatpush1.xpose.msra.mxu0 0.0
        %4427 = vmatprep.subr.mxu0 0.0
        %4428 = vmatpush1.xpose.msra.mxu0 0.0
        %4429 = vmatprep.subr.mxu0 0.0
        %4430 = vmatpush1.xpose.msra.mxu0 0.0
        %4431 = vmatprep.subr.mxu0 0.0
        %4432 = vmatpush1.xpose.msra.mxu0 0.0
        %4433 = vmatprep.subr.mxu0 0.0
        %4434 = vmatpush1.xpose.msra.mxu0 0.0
        %4435 = vmatprep.subr.mxu0 0.0
        %4436 = vmatpush1.xpose.msra.mxu0 0.0
        %4437 = vmatprep.subr.mxu0 0.0
        %4438 = vmatpush1.xpose.msra.mxu0 0.0
        %4439 = vmatprep.subr.mxu0 0.0
        %4440 = vmatpush1.xpose.msra.mxu0 0.0
        %4441 = vmatprep.subr.mxu0 0.0
        %4442 = vmatpush1.xpose.msra.mxu0 0.0
        %4443 = vmatprep.subr.mxu0 0.0
        %4444 = vmatpush1.xpose.msra.mxu0 0.0
        %4445 = vmatprep.subr.mxu0 0.0
        %4446 = vmatpush1.xpose.msra.mxu0 0.0
        %4447 = vmatprep.subr.mxu0 0.0
        %4448 = vmatpush1.xpose.msra.mxu0 0.0
        %4449 = vmatprep.subr.mxu0 0.0
        %4450 = vmatpush1.xpose.msra.mxu0 0.0
        %4451 = vmatprep.subr.mxu0 0.0
        %4452 = vmatpush1.xpose.msra.mxu0 0.0
        %4453 = vmatprep.subr.mxu0 0.0
        %4454 = vmatpush1.xpose.msra.mxu0 0.0
        %4455 = vmatprep.mubr.f32.mxu0 0.0
        %4456 = vmatmul.mubr.f32.gmra.mrb[0].mxu0 %v4389
        %v4457 = vpop.f32.mrb[0].mxu0
        %v4458 = vadd.f32 0.0, %v4457
        %v4459 = vpop.f32.mrb[0].mxu0
        %4460 = vdwg.mxu0
        %v4461 = vsel %vm1564, %v4314, 0
        %4463 = vmatprep.subr.mxu0 0.0
        %4464 = vmatpush1.xpose.msra.mxu0 %v2581
        %4465 = vmatprep.subr.mxu0 0.0
        %4466 = vmatpush1.xpose.msra.mxu0 0.0
        %4467 = vmatprep.subr.mxu0 0.0
        %4468 = vmatpush1.xpose.msra.mxu0 0.0
        %4469 = vmatprep.subr.mxu0 0.0
        %4470 = vmatpush1.xpose.msra.mxu0 0.0
        %4471 = vmatprep.subr.mxu0 0.0
        %4472 = vmatpush1.xpose.msra.mxu0 0.0
        %4473 = vmatprep.subr.mxu0 0.0
        %4474 = vmatpush1.xpose.msra.mxu0 0.0
        %4475 = vmatprep.subr.mxu0 0.0
        %4476 = vmatpush1.xpose.msra.mxu0 0.0
        %4477 = vmatprep.subr.mxu0 0.0
        %4478 = vmatpush1.xpose.msra.mxu0 0.0
        %4479 = vmatprep.subr.mxu0 0.0
        %4480 = vmatpush1.xpose.msra.mxu0 0.0
        %4481 = vmatprep.subr.mxu0 0.0
        %4482 = vmatpush1.xpose.msra.mxu0 0.0
        %4483 = vmatprep.subr.mxu0 0.0
        %4484 = vmatpush1.xpose.msra.mxu0 0.0
        %4485 = vmatprep.subr.mxu0 0.0
        %4486 = vmatpush1.xpose.msra.mxu0 0.0
        %4487 = vmatprep.subr.mxu0 0.0
        %4488 = vmatpush1.xpose.msra.mxu0 0.0
        %4489 = vmatprep.subr.mxu0 0.0
        %4490 = vmatpush1.xpose.msra.mxu0 0.0
        %4491 = vmatprep.subr.mxu0 0.0
        %4492 = vmatpush1.xpose.msra.mxu0 0.0
        %4493 = vmatprep.subr.mxu0 0.0
        %4494 = vmatpush1.xpose.msra.mxu0 0.0
        %4495 = vmatprep.subr.mxu0 0.0
        %4496 = vmatpush1.xpose.msra.mxu0 0.0
        %4497 = vmatprep.subr.mxu0 0.0
        %4498 = vmatpush1.xpose.msra.mxu0 0.0
        %4499 = vmatprep.subr.mxu0 0.0
        %4500 = vmatpush1.xpose.msra.mxu0 0.0
        %4501 = vmatprep.subr.mxu0 0.0
        %4502 = vmatpush1.xpose.msra.mxu0 0.0
        %4503 = vmatprep.subr.mxu0 0.0
        %4504 = vmatpush1.xpose.msra.mxu0 0.0
        %4505 = vmatprep.subr.mxu0 0.0
        %4506 = vmatpush1.xpose.msra.mxu0 0.0
        %4507 = vmatprep.subr.mxu0 0.0
        %4508 = vmatpush1.xpose.msra.mxu0 0.0
        %4509 = vmatprep.subr.mxu0 0.0
        %4510 = vmatpush1.xpose.msra.mxu0 0.0
        %4511 = vmatprep.subr.mxu0 0.0
        %4512 = vmatpush1.xpose.msra.mxu0 0.0
        %4513 = vmatprep.subr.mxu0 0.0
        %4514 = vmatpush1.xpose.msra.mxu0 0.0
        %4515 = vmatprep.subr.mxu0 0.0
        %4516 = vmatpush1.xpose.msra.mxu0 0.0
        %4517 = vmatprep.subr.mxu0 0.0
        %4518 = vmatpush1.xpose.msra.mxu0 0.0
        %4519 = vmatprep.subr.mxu0 0.0
        %4520 = vmatpush1.xpose.msra.mxu0 0.0
        %4521 = vmatprep.subr.mxu0 0.0
        %4522 = vmatpush1.xpose.msra.mxu0 0.0
        %4523 = vmatprep.subr.mxu0 0.0
        %4524 = vmatpush1.xpose.msra.mxu0 0.0
        %4525 = vmatprep.subr.mxu0 0.0
        %4526 = vmatpush1.xpose.msra.mxu0 0.0
        %4527 = vmatprep.mubr.f32.mxu0 0.0
        %4528 = vmatmul.mubr.f32.gmra.mrb[0].mxu0 %v4461
        %v4529 = vpop.f32.mrb[0].mxu0
        %v4530 = vadd.f32 0.0, %v4529
        %v4531 = vpop.f32.mrb[0].mxu0
        %4532 = vdwg.mxu0
        %v4533 = vsel %vm1564, %v4316, 0
        %4535 = vmatprep.subr.mxu0 0.0
        %4536 = vmatpush1.xpose.msra.mxu0 %v2655
        %4537 = vmatprep.subr.mxu0 0.0
        %4538 = vmatpush1.xpose.msra.mxu0 0.0
        %4539 = vmatprep.subr.mxu0 0.0
        %4540 = vmatpush1.xpose.msra.mxu0 0.0
        %4541 = vmatprep.subr.mxu0 0.0
        %4542 = vmatpush1.xpose.msra.mxu0 0.0
        %4543 = vmatprep.subr.mxu0 0.0
        %4544 = vmatpush1.xpose.msra.mxu0 0.0
        %4545 = vmatprep.subr.mxu0 0.0
        %4546 = vmatpush1.xpose.msra.mxu0 0.0
        %4547 = vmatprep.subr.mxu0 0.0
        %4548 = vmatpush1.xpose.msra.mxu0 0.0
        %4549 = vmatprep.subr.mxu0 0.0
        %4550 = vmatpush1.xpose.msra.mxu0 0.0
        %4551 = vmatprep.subr.mxu0 0.0
        %4552 = vmatpush1.xpose.msra.mxu0 0.0
        %4553 = vmatprep.subr.mxu0 0.0
        %4554 = vmatpush1.xpose.msra.mxu0 0.0
        %4555 = vmatprep.subr.mxu0 0.0
        %4556 = vmatpush1.xpose.msra.mxu0 0.0
        %4557 = vmatprep.subr.mxu0 0.0
        %4558 = vmatpush1.xpose.msra.mxu0 0.0
        %4559 = vmatprep.subr.mxu0 0.0
        %4560 = vmatpush1.xpose.msra.mxu0 0.0
        %4561 = vmatprep.subr.mxu0 0.0
        %4562 = vmatpush1.xpose.msra.mxu0 0.0
        %4563 = vmatprep.subr.mxu0 0.0
        %4564 = vmatpush1.xpose.msra.mxu0 0.0
        %4565 = vmatprep.subr.mxu0 0.0
        %4566 = vmatpush1.xpose.msra.mxu0 0.0
        %4567 = vmatprep.subr.mxu0 0.0
        %4568 = vmatpush1.xpose.msra.mxu0 0.0
        %4569 = vmatprep.subr.mxu0 0.0
        %4570 = vmatpush1.xpose.msra.mxu0 0.0
        %4571 = vmatprep.subr.mxu0 0.0
        %4572 = vmatpush1.xpose.msra.mxu0 0.0
        %4573 = vmatprep.subr.mxu0 0.0
        %4574 = vmatpush1.xpose.msra.mxu0 0.0
        %4575 = vmatprep.subr.mxu0 0.0
        %4576 = vmatpush1.xpose.msra.mxu0 0.0
        %4577 = vmatprep.subr.mxu0 0.0
        %4578 = vmatpush1.xpose.msra.mxu0 0.0
        %4579 = vmatprep.subr.mxu0 0.0
        %4580 = vmatpush1.xpose.msra.mxu0 0.0
        %4581 = vmatprep.subr.mxu0 0.0
        %4582 = vmatpush1.xpose.msra.mxu0 0.0
        %4583 = vmatprep.subr.mxu0 0.0
        %4584 = vmatpush1.xpose.msra.mxu0 0.0
        %4585 = vmatprep.subr.mxu0 0.0
        %4586 = vmatpush1.xpose.msra.mxu0 0.0
        %4587 = vmatprep.subr.mxu0 0.0
        %4588 = vmatpush1.xpose.msra.mxu0 0.0
        %4589 = vmatprep.subr.mxu0 0.0
        %4590 = vmatpush1.xpose.msra.mxu0 0.0
        %4591 = vmatprep.subr.mxu0 0.0
        %4592 = vmatpush1.xpose.msra.mxu0 0.0
        %4593 = vmatprep.subr.mxu0 0.0
        %4594 = vmatpush1.xpose.msra.mxu0 0.0
        %4595 = vmatprep.subr.mxu0 0.0
        %4596 = vmatpush1.xpose.msra.mxu0 0.0
        %4597 = vmatprep.subr.mxu0 0.0
        %4598 = vmatpush1.xpose.msra.mxu0 0.0
        %4599 = vmatprep.mubr.f32.mxu0 0.0
        %4600 = vmatmul.mubr.f32.gmra.mrb[0].mxu0 %v4533
        %v4601 = vpop.f32.mrb[0].mxu0
        %v4602 = vadd.f32 0.0, %v4601
        %v4603 = vpop.f32.mrb[0].mxu0
        %4604 = vdwg.mxu0
        %v4605 = vmul.f32 %v4386, 0.35355338
        %v4606 = vmul.f32 %v4458, 0.35355338
        %v4607 = vmul.f32 %v4530, 0.35355338
        %v4608 = vmul.f32 %v4602, 0.35355338
        %v4609 = vsel %vm2737, %v4605, -1e+09
        %v4610 = vsel %vm2737, %v4606, -1e+09
        %v4611 = vsel %vm2737, %v4607, -1e+09
        %v4612 = vsel %vm2737, %v4608, -1e+09
        %v4613 = vsel %vm1564, %v4609, -inf
        %4614 = vmax.xlane.f32.xlu0 %v4613
        %v4615 = vpop.xlane.xlu0 %4614
        %v4616 = vsel %vm1564, %v4610, -inf
        %4617 = vmax.xlane.f32.xlu0 %v4616
        %v4618 = vpop.xlane.xlu0 %4617
        %v4619 = vsel %vm1564, %v4611, -inf
        %4620 = vmax.xlane.f32.xlu0 %v4619
        %v4621 = vpop.xlane.xlu0 %4620
        %v4622 = vsel %vm1564, %v4612, -inf
        %4623 = vmax.xlane.f32.xlu0 %v4622
        %v4624 = vpop.xlane.xlu0 %4623
        %v4625 = vsub.f32 %v4609, %v4615
        %v4626 = vsub.f32 %v4610, %v4618
        %v4627 = vsub.f32 %v4611, %v4621
        %v4628 = vsub.f32 %v4612, %v4624
        %v4629 = vmul.f32 %v4625, 1.442695
        %v4630 = vpow.pop %v4629
        %v4631 = vmul.f32 %v4626, 1.442695
        %v4632 = vpow.pop %v4631
        %v4633 = vmul.f32 %v4627, 1.442695
        %v4634 = vpow.pop %v4633
        %v4635 = vmul.f32 %v4628, 1.442695
        %v4636 = vpow.pop %v4635
        %v4637 = vsel %vm1564, %v4630, 0.0
        %4638 = vadd.xlane.f32.xlu0 %v4637
        %v4639 = vpop.xlane.xlu0 %4638
        %v4640 = vsel %vm1564, %v4632, 0.0
        %4641 = vadd.xlane.f32.xlu0 %v4640
        %v4642 = vpop.xlane.xlu0 %4641
        %v4643 = vsel %vm1564, %v4634, 0.0
        %4644 = vadd.xlane.f32.xlu0 %v4643
        %v4645 = vpop.xlane.xlu0 %4644
        %v4646 = vsel %vm1564, %v4636, 0.0
        %4647 = vadd.xlane.f32.xlu0 %v4646
        %v4648 = vpop.xlane.xlu0 %4647
        %v4649 = vrcp.pop %v4639
        %v4650 = vmul.f32 %v4630, %v4649
        %v4651 = vrcp.pop %v4642
        %v4652 = vmul.f32 %v4632, %v4651
        %v4653 = vrcp.pop %v4645
        %v4654 = vmul.f32 %v4634, %v4653
        %v4655 = vrcp.pop %v4648
        %v4656 = vmul.f32 %v4636, %v4655
        %v4658 = vsel %vm1564, %v4650, 0
        %4660 = vmatprep.subr.mxu0 0.0
        %4661 = vmatpush1.msra.mxu0 %v2787
        %4662 = vmatprep.subr.mxu0 0.0
        %4663 = vmatpush1.msra.mxu0 0.0
        %4664 = vmatprep.subr.mxu0 0.0
        %4665 = vmatpush1.msra.mxu0 0.0
        %4666 = vmatprep.subr.mxu0 0.0
        %4667 = vmatpush1.msra.mxu0 0.0
        %4668 = vmatprep.subr.mxu0 0.0
        %4669 = vmatpush1.msra.mxu0 0.0
        %4670 = vmatprep.subr.mxu0 0.0
        %4671 = vmatpush1.msra.mxu0 0.0
        %4672 = vmatprep.subr.mxu0 0.0
        %4673 = vmatpush1.msra.mxu0 0.0
        %4674 = vmatprep.subr.mxu0 0.0
        %4675 = vmatpush1.msra.mxu0 0.0
        %4676 = vmatprep.subr.mxu0 0.0
        %4677 = vmatpush1.msra.mxu0 0.0
        %4678 = vmatprep.subr.mxu0 0.0
        %4679 = vmatpush1.msra.mxu0 0.0
        %4680 = vmatprep.subr.mxu0 0.0
        %4681 = vmatpush1.msra.mxu0 0.0
        %4682 = vmatprep.subr.mxu0 0.0
        %4683 = vmatpush1.msra.mxu0 0.0
        %4684 = vmatprep.subr.mxu0 0.0
        %4685 = vmatpush1.msra.mxu0 0.0
        %4686 = vmatprep.subr.mxu0 0.0
        %4687 = vmatpush1.msra.mxu0 0.0
        %4688 = vmatprep.subr.mxu0 0.0
        %4689 = vmatpush1.msra.mxu0 0.0
        %4690 = vmatprep.subr.mxu0 0.0
        %4691 = vmatpush1.msra.mxu0 0.0
        %4692 = vmatprep.subr.mxu0 0.0
        %4693 = vmatpush1.msra.mxu0 0.0
        %4694 = vmatprep.subr.mxu0 0.0
        %4695 = vmatpush1.msra.mxu0 0.0
        %4696 = vmatprep.subr.mxu0 0.0
        %4697 = vmatpush1.msra.mxu0 0.0
        %4698 = vmatprep.subr.mxu0 0.0
        %4699 = vmatpush1.msra.mxu0 0.0
        %4700 = vmatprep.subr.mxu0 0.0
        %4701 = vmatpush1.msra.mxu0 0.0
        %4702 = vmatprep.subr.mxu0 0.0
        %4703 = vmatpush1.msra.mxu0 0.0
        %4704 = vmatprep.subr.mxu0 0.0
        %4705 = vmatpush1.msra.mxu0 0.0
        %4706 = vmatprep.subr.mxu0 0.0
        %4707 = vmatpush1.msra.mxu0 0.0
        %4708 = vmatprep.subr.mxu0 0.0
        %4709 = vmatpush1.msra.mxu0 0.0
        %4710 = vmatprep.subr.mxu0 0.0
        %4711 = vmatpush1.msra.mxu0 0.0
        %4712 = vmatprep.subr.mxu0 0.0
        %4713 = vmatpush1.msra.mxu0 0.0
        %4714 = vmatprep.subr.mxu0 0.0
        %4715 = vmatpush1.msra.mxu0 0.0
        %4716 = vmatprep.subr.mxu0 0.0
        %4717 = vmatpush1.msra.mxu0 0.0
        %4718 = vmatprep.subr.mxu0 0.0
        %4719 = vmatpush1.msra.mxu0 0.0
        %4720 = vmatprep.subr.mxu0 0.0
        %4721 = vmatpush1.msra.mxu0 0.0
        %4722 = vmatprep.subr.mxu0 0.0
        %4723 = vmatpush1.msra.mxu0 0.0
        %4724 = vmatprep.mubr.f32.mxu0 0.0
        %4725 = vmatmul.mubr.f32.gmra.mrb[0].mxu0 %v4658
        %v4726 = vpop.f32.mrb[0].mxu0
        %v4727 = vadd.f32 0.0, %v4726
        %v4728 = vpop.f32.mrb[0].mxu0
        %4729 = vdwg.mxu0
        %v4731 = vsel %vm1564, %v4652, 0
        %4733 = vmatprep.subr.mxu0 0.0
        %4734 = vmatpush1.msra.mxu0 %v2863
        %4735 = vmatprep.subr.mxu0 0.0
        %4736 = vmatpush1.msra.mxu0 0.0
        %4737 = vmatprep.subr.mxu0 0.0
        %4738 = vmatpush1.msra.mxu0 0.0
        %4739 = vmatprep.subr.mxu0 0.0
        %4740 = vmatpush1.msra.mxu0 0.0
        %4741 = vmatprep.subr.mxu0 0.0
        %4742 = vmatpush1.msra.mxu0 0.0
        %4743 = vmatprep.subr.mxu0 0.0
        %4744 = vmatpush1.msra.mxu0 0.0
        %4745 = vmatprep.subr.mxu0 0.0
        %4746 = vmatpush1.msra.mxu0 0.0
        %4747 = vmatprep.subr.mxu0 0.0
        %4748 = vmatpush1.msra.mxu0 0.0
        %4749 = vmatprep.subr.mxu0 0.0
        %4750 = vmatpush1.msra.mxu0 0.0
        %4751 = vmatprep.subr.mxu0 0.0
        %4752 = vmatpush1.msra.mxu0 0.0
        %4753 = vmatprep.subr.mxu0 0.0
        %4754 = vmatpush1.msra.mxu0 0.0
        %4755 = vmatprep.subr.mxu0 0.0
        %4756 = vmatpush1.msra.mxu0 0.0
        %4757 = vmatprep.subr.mxu0 0.0
        %4758 = vmatpush1.msra.mxu0 0.0
        %4759 = vmatprep.subr.mxu0 0.0
        %4760 = vmatpush1.msra.mxu0 0.0
        %4761 = vmatprep.subr.mxu0 0.0
        %4762 = vmatpush1.msra.mxu0 0.0
        %4763 = vmatprep.subr.mxu0 0.0
        %4764 = vmatpush1.msra.mxu0 0.0
        %4765 = vmatprep.subr.mxu0 0.0
        %4766 = vmatpush1.msra.mxu0 0.0
        %4767 = vmatprep.subr.mxu0 0.0
        %4768 = vmatpush1.msra.mxu0 0.0
        %4769 = vmatprep.subr.mxu0 0.0
        %4770 = vmatpush1.msra.mxu0 0.0
        %4771 = vmatprep.subr.mxu0 0.0
        %4772 = vmatpush1.msra.mxu0 0.0
        %4773 = vmatprep.subr.mxu0 0.0
        %4774 = vmatpush1.msra.mxu0 0.0
        %4775 = vmatprep.subr.mxu0 0.0
        %4776 = vmatpush1.msra.mxu0 0.0
        %4777 = vmatprep.subr.mxu0 0.0
        %4778 = vmatpush1.msra.mxu0 0.0
        %4779 = vmatprep.subr.mxu0 0.0
        %4780 = vmatpush1.msra.mxu0 0.0
        %4781 = vmatprep.subr.mxu0 0.0
        %4782 = vmatpush1.msra.mxu0 0.0
        %4783 = vmatprep.subr.mxu0 0.0
        %4784 = vmatpush1.msra.mxu0 0.0
        %4785 = vmatprep.subr.mxu0 0.0
        %4786 = vmatpush1.msra.mxu0 0.0
        %4787 = vmatprep.subr.mxu0 0.0
        %4788 = vmatpush1.msra.mxu0 0.0
        %4789 = vmatprep.subr.mxu0 0.0
        %4790 = vmatpush1.msra.mxu0 0.0
        %4791 = vmatprep.subr.mxu0 0.0
        %4792 = vmatpush1.msra.mxu0 0.0
        %4793 = vmatprep.subr.mxu0 0.0
        %4794 = vmatpush1.msra.mxu0 0.0
        %4795 = vmatprep.subr.mxu0 0.0
        %4796 = vmatpush1.msra.mxu0 0.0
        %4797 = vmatprep.mubr.f32.mxu0 0.0
        %4798 = vmatmul.mubr.f32.gmra.mrb[0].mxu0 %v4731
        %v4799 = vpop.f32.mrb[0].mxu0
        %v4800 = vadd.f32 0.0, %v4799
        %v4801 = vpop.f32.mrb[0].mxu0
        %4802 = vdwg.mxu0
        %v4804 = vsel %vm1564, %v4654, 0
        %4806 = vmatprep.subr.mxu0 0.0
        %4807 = vmatpush1.msra.mxu0 %v2939
        %4808 = vmatprep.subr.mxu0 0.0
        %4809 = vmatpush1.msra.mxu0 0.0
        %4810 = vmatprep.subr.mxu0 0.0
        %4811 = vmatpush1.msra.mxu0 0.0
        %4812 = vmatprep.subr.mxu0 0.0
        %4813 = vmatpush1.msra.mxu0 0.0
        %4814 = vmatprep.subr.mxu0 0.0
        %4815 = vmatpush1.msra.mxu0 0.0
        %4816 = vmatprep.subr.mxu0 0.0
        %4817 = vmatpush1.msra.mxu0 0.0
        %4818 = vmatprep.subr.mxu0 0.0
        %4819 = vmatpush1.msra.mxu0 0.0
        %4820 = vmatprep.subr.mxu0 0.0
        %4821 = vmatpush1.msra.mxu0 0.0
        %4822 = vmatprep.subr.mxu0 0.0
        %4823 = vmatpush1.msra.mxu0 0.0
        %4824 = vmatprep.subr.mxu0 0.0
        %4825 = vmatpush1.msra.mxu0 0.0
        %4826 = vmatprep.subr.mxu0 0.0
        %4827 = vmatpush1.msra.mxu0 0.0
        %4828 = vmatprep.subr.mxu0 0.0
        %4829 = vmatpush1.msra.mxu0 0.0
        %4830 = vmatprep.subr.mxu0 0.0
        %4831 = vmatpush1.msra.mxu0 0.0
        %4832 = vmatprep.subr.mxu0 0.0
        %4833 = vmatpush1.msra.mxu0 0.0
        %4834 = vmatprep.subr.mxu0 0.0
        %4835 = vmatpush1.msra.mxu0 0.0
        %4836 = vmatprep.subr.mxu0 0.0
        %4837 = vmatpush1.msra.mxu0 0.0
        %4838 = vmatprep.subr.mxu0 0.0
        %4839 = vmatpush1.msra.mxu0 0.0
        %4840 = vmatprep.subr.mxu0 0.0
        %4841 = vmatpush1.msra.mxu0 0.0
        %4842 = vmatprep.subr.mxu0 0.0
        %4843 = vmatpush1.msra.mxu0 0.0
        %4844 = vmatprep.subr.mxu0 0.0
        %4845 = vmatpush1.msra.mxu0 0.0
        %4846 = vmatprep.subr.mxu0 0.0
        %4847 = vmatpush1.msra.mxu0 0.0
        %4848 = vmatprep.subr.mxu0 0.0
        %4849 = vmatpush1.msra.mxu0 0.0
        %4850 = vmatprep.subr.mxu0 0.0
        %4851 = vmatpush1.msra.mxu0 0.0
        %4852 = vmatprep.subr.mxu0 0.0
        %4853 = vmatpush1.msra.mxu0 0.0
        %4854 = vmatprep.subr.mxu0 0.0
        %4855 = vmatpush1.msra.mxu0 0.0
        %4856 = vmatprep.subr.mxu0 0.0
        %4857 = vmatpush1.msra.mxu0 0.0
        %4858 = vmatprep.subr.mxu0 0.0
        %4859 = vmatpush1.msra.mxu0 0.0
        %4860 = vmatprep.subr.mxu0 0.0
        %4861 = vmatpush1.msra.mxu0 0.0
        %4862 = vmatprep.subr.mxu0 0.0
        %4863 = vmatpush1.msra.mxu0 0.0
        %4864 = vmatprep.subr.mxu0 0.0
        %4865 = vmatpush1.msra.mxu0 0.0
        %4866 = vmatprep.subr.mxu0 0.0
        %4867 = vmatpush1.msra.mxu0 0.0
        %4868 = vmatprep.subr.mxu0 0.0
        %4869 = vmatpush1.msra.mxu0 0.0
        %4870 = vmatprep.mubr.f32.mxu0 0.0
        %4871 = vmatmul.mubr.f32.gmra.mrb[0].mxu0 %v4804
        %v4872 = vpop.f32.mrb[0].mxu0
        %v4873 = vadd.f32 0.0, %v4872
        %v4874 = vpop.f32.mrb[0].mxu0
        %4875 = vdwg.mxu0
        %v4877 = vsel %vm1564, %v4656, 0
        %4879 = vmatprep.subr.mxu0 0.0
        %4880 = vmatpush1.msra.mxu0 %v3015
        %4881 = vmatprep.subr.mxu0 0.0
        %4882 = vmatpush1.msra.mxu0 0.0
        %4883 = vmatprep.subr.mxu0 0.0
        %4884 = vmatpush1.msra.mxu0 0.0
        %4885 = vmatprep.subr.mxu0 0.0
        %4886 = vmatpush1.msra.mxu0 0.0
        %4887 = vmatprep.subr.mxu0 0.0
        %4888 = vmatpush1.msra.mxu0 0.0
        %4889 = vmatprep.subr.mxu0 0.0
        %4890 = vmatpush1.msra.mxu0 0.0
        %4891 = vmatprep.subr.mxu0 0.0
        %4892 = vmatpush1.msra.mxu0 0.0
        %4893 = vmatprep.subr.mxu0 0.0
        %4894 = vmatpush1.msra.mxu0 0.0
        %4895 = vmatprep.subr.mxu0 0.0
        %4896 = vmatpush1.msra.mxu0 0.0
        %4897 = vmatprep.subr.mxu0 0.0
        %4898 = vmatpush1.msra.mxu0 0.0
        %4899 = vmatprep.subr.mxu0 0.0
        %4900 = vmatpush1.msra.mxu0 0.0
        %4901 = vmatprep.subr.mxu0 0.0
        %4902 = vmatpush1.msra.mxu0 0.0
        %4903 = vmatprep.subr.mxu0 0.0
        %4904 = vmatpush1.msra.mxu0 0.0
        %4905 = vmatprep.subr.mxu0 0.0
        %4906 = vmatpush1.msra.mxu0 0.0
        %4907 = vmatprep.subr.mxu0 0.0
        %4908 = vmatpush1.msra.mxu0 0.0
        %4909 = vmatprep.subr.mxu0 0.0
        %4910 = vmatpush1.msra.mxu0 0.0
        %4911 = vmatprep.subr.mxu0 0.0
        %4912 = vmatpush1.msra.mxu0 0.0
        %4913 = vmatprep.subr.mxu0 0.0
        %4914 = vmatpush1.msra.mxu0 0.0
        %4915 = vmatprep.subr.mxu0 0.0
        %4916 = vmatpush1.msra.mxu0 0.0
        %4917 = vmatprep.subr.mxu0 0.0
        %4918 = vmatpush1.msra.mxu0 0.0
        %4919 = vmatprep.subr.mxu0 0.0
        %4920 = vmatpush1.msra.mxu0 0.0
        %4921 = vmatprep.subr.mxu0 0.0
        %4922 = vmatpush1.msra.mxu0 0.0
        %4923 = vmatprep.subr.mxu0 0.0
        %4924 = vmatpush1.msra.mxu0 0.0
        %4925 = vmatprep.subr.mxu0 0.0
        %4926 = vmatpush1.msra.mxu0 0.0
        %4927 = vmatprep.subr.mxu0 0.0
        %4928 = vmatpush1.msra.mxu0 0.0
        %4929 = vmatprep.subr.mxu0 0.0
        %4930 = vmatpush1.msra.mxu0 0.0
        %4931 = vmatprep.subr.mxu0 0.0
        %4932 = vmatpush1.msra.mxu0 0.0
        %4933 = vmatprep.subr.mxu0 0.0
        %4934 = vmatpush1.msra.mxu0 0.0
        %4935 = vmatprep.subr.mxu0 0.0
        %4936 = vmatpush1.msra.mxu0 0.0
        %4937 = vmatprep.subr.mxu0 0.0
        %4938 = vmatpush1.msra.mxu0 0.0
        %4939 = vmatprep.subr.mxu0 0.0
        %4940 = vmatpush1.msra.mxu0 0.0
        %4941 = vmatprep.subr.mxu0 0.0
        %4942 = vmatpush1.msra.mxu0 0.0
        %4943 = vmatprep.mubr.f32.mxu0 0.0
        %4944 = vmatmul.mubr.f32.gmra.mrb[0].mxu0 %v4877
        %v4945 = vpop.f32.mrb[0].mxu0
        %v4946 = vadd.f32 0.0, %v4945
        %v4947 = vpop.f32.mrb[0].mxu0
        %4948 = vdwg.mxu0
        %4950 = vrot.lane.b32.xlu0 %v4800, 8
        %v4951 = vpop.permute.xlu0 %4950
        %4954 = vrot.lane.b32.xlu0 %v4873, 16
        %v4955 = vpop.permute.xlu0 %4954
        %4958 = vrot.lane.b32.xlu0 %v4946, 24
        %v4959 = vpop.permute.xlu0 %4958
        %v4961 = vsel %vm1564, %v4727, %v4951
        %v4962 = vsel %vm2239, %v4961, %v4955
        %v4963 = vsel %vm2241, %v4962, %v4959
        %v4965 = vsel %vm977, %v4963, 0
        %4967 = vmatprep.subr.mxu0 0.0
        %4968 = vmatpush1.msra.mxu0 %v950
        %4969 = vmatprep.subr.mxu0 0.0
        %4970 = vmatpush1.msra.mxu0 %v951
        %4971 = vmatprep.subr.mxu0 0.0
        %4972 = vmatpush1.msra.mxu0 %v952
        %4973 = vmatprep.subr.mxu0 0.0
        %4974 = vmatpush1.msra.mxu0 %v953
        %4975 = vmatprep.subr.mxu0 0.0
        %4976 = vmatpush1.msra.mxu0 0.0
        %4977 = vmatprep.subr.mxu0 0.0
        %4978 = vmatpush1.msra.mxu0 0.0
        %4979 = vmatprep.subr.mxu0 0.0
        %4980 = vmatpush1.msra.mxu0 0.0
        %4981 = vmatprep.subr.mxu0 0.0
        %4982 = vmatpush1.msra.mxu0 0.0
        %4983 = vmatprep.subr.mxu0 0.0
        %4984 = vmatpush1.msra.mxu0 0.0
        %4985 = vmatprep.subr.mxu0 0.0
        %4986 = vmatpush1.msra.mxu0 0.0
        %4987 = vmatprep.subr.mxu0 0.0
        %4988 = vmatpush1.msra.mxu0 0.0
        %4989 = vmatprep.subr.mxu0 0.0
        %4990 = vmatpush1.msra.mxu0 0.0
        %4991 = vmatprep.subr.mxu0 0.0
        %4992 = vmatpush1.msra.mxu0 0.0
        %4993 = vmatprep.subr.mxu0 0.0
        %4994 = vmatpush1.msra.mxu0 0.0
        %4995 = vmatprep.subr.mxu0 0.0
        %4996 = vmatpush1.msra.mxu0 0.0
        %4997 = vmatprep.subr.mxu0 0.0
        %4998 = vmatpush1.msra.mxu0 0.0
        %4999 = vmatprep.subr.mxu0 0.0
        %5000 = vmatpush1.msra.mxu0 0.0
        %5001 = vmatprep.subr.mxu0 0.0
        %5002 = vmatpush1.msra.mxu0 0.0
        %5003 = vmatprep.subr.mxu0 0.0
        %5004 = vmatpush1.msra.mxu0 0.0
        %5005 = vmatprep.subr.mxu0 0.0
        %5006 = vmatpush1.msra.mxu0 0.0
        %5007 = vmatprep.subr.mxu0 0.0
        %5008 = vmatpush1.msra.mxu0 0.0
        %5009 = vmatprep.subr.mxu0 0.0
        %5010 = vmatpush1.msra.mxu0 0.0
        %5011 = vmatprep.subr.mxu0 0.0
        %5012 = vmatpush1.msra.mxu0 0.0
        %5013 = vmatprep.subr.mxu0 0.0
        %5014 = vmatpush1.msra.mxu0 0.0
        %5015 = vmatprep.subr.mxu0 0.0
        %5016 = vmatpush1.msra.mxu0 0.0
        %5017 = vmatprep.subr.mxu0 0.0
        %5018 = vmatpush1.msra.mxu0 0.0
        %5019 = vmatprep.subr.mxu0 0.0
        %5020 = vmatpush1.msra.mxu0 0.0
        %5021 = vmatprep.subr.mxu0 0.0
        %5022 = vmatpush1.msra.mxu0 0.0
        %5023 = vmatprep.subr.mxu0 0.0
        %5024 = vmatpush1.msra.mxu0 0.0
        %5025 = vmatprep.subr.mxu0 0.0
        %5026 = vmatpush1.msra.mxu0 0.0
        %5027 = vmatprep.subr.mxu0 0.0
        %5028 = vmatpush1.msra.mxu0 0.0
        %5029 = vmatprep.subr.mxu0 0.0
        %5030 = vmatpush1.msra.mxu0 0.0
        %5031 = vmatprep.mubr.f32.mxu0 0.0
        %5032 = vmatmul.mubr.f32.gmra.mrb[0].mxu0 %v4965
        %v5033 = vpop.f32.mrb[0].mxu0
        %v5034 = vadd.f32 %v2247, %v5033
        %v5035 = vpop.f32.mrb[0].mxu0
        %5036 = vdwg.mxu0
        %v5037 = vadd.f32 %v4236, %v5034
        %v5038 = vsel %vm977, %v5037, 0.0
        %5039 = vadd.xlane.f32.xlu0 %v5038
        %v5040 = vpop.xlane.xlu0 %5039
        %v5041 = vmul.f32 %v5040, %v981
        %v5042 = vsub.f32 %v5037, %v5041
        %v5043 = vmul.f32 %v5042, %v5042
        %v5044 = vsel %vm977, %v5043, 0.0
        %5045 = vadd.xlane.f32.xlu0 %v5044
        %v5046 = vpop.xlane.xlu0 %5045
        %v5047 = vmul.f32 %v5046, %v1176
        %v5048 = vrsqrt.pop %v5047
        %v5049 = vmul.f32 %v5047, %v5048
        %vm5050 = vcmp.eq.f32.partialorder %v5047, inf
        %v5051 = vsel %vm5050, %v5047, %v5049
        %vm5052 = vcmp.eq.f32.partialorder %v5047, 0.0
        %v5053 = vand.u32 %v5047, 2147483648
        %v5054 = vsel %vm5052, %v5053, %v5051
        %v5055 = vmul.f32 %v1189, %v5042
        %v5056 = vadd.f32 %v5054, 1e-06
        %v5057 = vrcp.pop %v5056
        %v5058 = vmul.f32 %v5055, %v5057
        %v5059 = vadd.f32 %v5058, %v1199
        %v5060 = vsel %vm977, %v5059, 0.0
        %5061 = vadd.xlane.f32.xlu0 %v5060
        %v5062 = vpop.xlane.xlu0 %5061
        %v5063 = vmul.f32 %v5062, %v981
        %v5064 = vsub.f32 %v5059, %v5063
        %v5065 = vmul.f32 %v5064, %v5064
        %v5066 = vsel %vm977, %v5065, 0.0
        %5067 = vadd.xlane.f32.xlu0 %v5066
        %v5068 = vpop.xlane.xlu0 %5067
        %v5069 = vmul.f32 %v5068, %v981
        %v5070 = vadd.f32 %v5069, 1e-06
        %v5071 = vrsqrt.pop %v5070
        %v5072 = vmul.f32 %v5064, %v5071
        %v5073 = vmul.f32 %v5072, %v996
        %v5074 = vadd.f32 %v5073, %v1003
        %v5076 = vsel %vm977, %v5074, 0
        %5078 = vmatprep.subr.mxu0 0.0
        %5079 = vmatpush1.msra.mxu0 %v955
        %5080 = vmatprep.subr.mxu0 0.0
        %5081 = vmatpush1.msra.mxu0 %v956
        %5082 = vmatprep.subr.mxu0 0.0
        %5083 = vmatpush1.msra.mxu0 %v957
        %5084 = vmatprep.subr.mxu0 0.0
        %5085 = vmatpush1.msra.mxu0 %v958
        %5086 = vmatprep.subr.mxu0 0.0
        %5087 = vmatpush1.msra.mxu0 0.0
        %5088 = vmatprep.subr.mxu0 0.0
        %5089 = vmatpush1.msra.mxu0 0.0
        %5090 = vmatprep.subr.mxu0 0.0
        %5091 = vmatpush1.msra.mxu0 0.0
        %5092 = vmatprep.subr.mxu0 0.0
        %5093 = vmatpush1.msra.mxu0 0.0
        %5094 = vmatprep.subr.mxu0 0.0
        %5095 = vmatpush1.msra.mxu0 0.0
        %5096 = vmatprep.subr.mxu0 0.0
        %5097 = vmatpush1.msra.mxu0 0.0
        %5098 = vmatprep.subr.mxu0 0.0
        %5099 = vmatpush1.msra.mxu0 0.0
        %5100 = vmatprep.subr.mxu0 0.0
        %5101 = vmatpush1.msra.mxu0 0.0
        %5102 = vmatprep.subr.mxu0 0.0
        %5103 = vmatpush1.msra.mxu0 0.0
        %5104 = vmatprep.subr.mxu0 0.0
        %5105 = vmatpush1.msra.mxu0 0.0
        %5106 = vmatprep.subr.mxu0 0.0
        %5107 = vmatpush1.msra.mxu0 0.0
        %5108 = vmatprep.subr.mxu0 0.0
        %5109 = vmatpush1.msra.mxu0 0.0
        %5110 = vmatprep.subr.mxu0 0.0
        %5111 = vmatpush1.msra.mxu0 0.0
        %5112 = vmatprep.subr.mxu0 0.0
        %5113 = vmatpush1.msra.mxu0 0.0
        %5114 = vmatprep.subr.mxu0 0.0
        %5115 = vmatpush1.msra.mxu0 0.0
        %5116 = vmatprep.subr.mxu0 0.0
        %5117 = vmatpush1.msra.mxu0 0.0
        %5118 = vmatprep.subr.mxu0 0.0
        %5119 = vmatpush1.msra.mxu0 0.0
        %5120 = vmatprep.subr.mxu0 0.0
        %5121 = vmatpush1.msra.mxu0 0.0
        %5122 = vmatprep.subr.mxu0 0.0
        %5123 = vmatpush1.msra.mxu0 0.0
        %5124 = vmatprep.subr.mxu0 0.0
        %5125 = vmatpush1.msra.mxu0 0.0
        %5126 = vmatprep.subr.mxu0 0.0
        %5127 = vmatpush1.msra.mxu0 0.0
        %5128 = vmatprep.subr.mxu0 0.0
        %5129 = vmatpush1.msra.mxu0 0.0
        %5130 = vmatprep.subr.mxu0 0.0
        %5131 = vmatpush1.msra.mxu0 0.0
        %5132 = vmatprep.subr.mxu0 0.0
        %5133 = vmatpush1.msra.mxu0 0.0
        %5134 = vmatprep.subr.mxu0 0.0
        %5135 = vmatpush1.msra.mxu0 0.0
        %5136 = vmatprep.subr.mxu0 0.0
        %5137 = vmatpush1.msra.mxu0 0.0
        %5138 = vmatprep.subr.mxu0 0.0
        %5139 = vmatpush1.msra.mxu0 0.0
        %5140 = vmatprep.subr.mxu0 0.0
        %5141 = vmatpush1.msra.mxu0 0.0
        %5142 = vmatprep.mubr.f32.mxu0 0.0
        %5143 = vmatmul.mubr.f32.gmra.mrb[0].mxu0 %v5076
        %v5144 = vpop.f32.mrb[0].mxu0
        %v5145 = vadd.f32 %v1010, %v5144
        %v5146 = vpop.f32.mrb[0].mxu0
        %5147 = vdwg.mxu0
        %v5148 = vmax.f32 %v5145, 0.0
        %v5150 = vsel %vm1092, %v5148, 0
        %5152 = vmatprep.subr.mxu0 0.0
        %5153 = vmatpush1.msra.mxu0 %v960
        %5154 = vmatprep.subr.mxu0 0.0
        %5155 = vmatpush1.msra.mxu0 %v961
        %5156 = vmatprep.subr.mxu0 0.0
        %5157 = vmatpush1.msra.mxu0 %v962
        %5158 = vmatprep.subr.mxu0 0.0
        %5159 = vmatpush1.msra.mxu0 %v963
        %5160 = vmatprep.subr.mxu0 0.0
        %5161 = vmatpush1.msra.mxu0 %v964
        %5162 = vmatprep.subr.mxu0 0.0
        %5163 = vmatpush1.msra.mxu0 %v965
        %5164 = vmatprep.subr.mxu0 0.0
        %5165 = vmatpush1.msra.mxu0 %v966
        %5166 = vmatprep.subr.mxu0 0.0
        %5167 = vmatpush1.msra.mxu0 %v967
        %5168 = vmatprep.subr.mxu0 0.0
        %5169 = vmatpush1.msra.mxu0 0.0
        %5170 = vmatprep.subr.mxu0 0.0
        %5171 = vmatpush1.msra.mxu0 0.0
        %5172 = vmatprep.subr.mxu0 0.0
        %5173 = vmatpush1.msra.mxu0 0.0
        %5174 = vmatprep.subr.mxu0 0.0
        %5175 = vmatpush1.msra.mxu0 0.0
        %5176 = vmatprep.subr.mxu0 0.0
        %5177 = vmatpush1.msra.mxu0 0.0
        %5178 = vmatprep.subr.mxu0 0.0
        %5179 = vmatpush1.msra.mxu0 0.0
        %5180 = vmatprep.subr.mxu0 0.0
        %5181 = vmatpush1.msra.mxu0 0.0
        %5182 = vmatprep.subr.mxu0 0.0
        %5183 = vmatpush1.msra.mxu0 0.0
        %5184 = vmatprep.subr.mxu0 0.0
        %5185 = vmatpush1.msra.mxu0 0.0
        %5186 = vmatprep.subr.mxu0 0.0
        %5187 = vmatpush1.msra.mxu0 0.0
        %5188 = vmatprep.subr.mxu0 0.0
        %5189 = vmatpush1.msra.mxu0 0.0
        %5190 = vmatprep.subr.mxu0 0.0
        %5191 = vmatpush1.msra.mxu0 0.0
        %5192 = vmatprep.subr.mxu0 0.0
        %5193 = vmatpush1.msra.mxu0 0.0
        %5194 = vmatprep.subr.mxu0 0.0
        %5195 = vmatpush1.msra.mxu0 0.0
        %5196 = vmatprep.subr.mxu0 0.0
        %5197 = vmatpush1.msra.mxu0 0.0
        %5198 = vmatprep.subr.mxu0 0.0
        %5199 = vmatpush1.msra.mxu0 0.0
        %5200 = vmatprep.subr.mxu0 0.0
        %5201 = vmatpush1.msra.mxu0 0.0
        %5202 = vmatprep.subr.mxu0 0.0
        %5203 = vmatpush1.msra.mxu0 0.0
        %5204 = vmatprep.subr.mxu0 0.0
        %5205 = vmatpush1.msra.mxu0 0.0
        %5206 = vmatprep.subr.mxu0 0.0
        %5207 = vmatpush1.msra.mxu0 0.0
        %5208 = vmatprep.subr.mxu0 0.0
        %5209 = vmatpush1.msra.mxu0 0.0
        %5210 = vmatprep.subr.mxu0 0.0
        %5211 = vmatpush1.msra.mxu0 0.0
        %5212 = vmatprep.subr.mxu0 0.0
        %5213 = vmatpush1.msra.mxu0 0.0
        %5214 = vmatprep.subr.mxu0 0.0
        %5215 = vmatpush1.msra.mxu0 0.0
        %5216 = vmatprep.mubr.f32.mxu0 0.0
        %5217 = vmatmul.mubr.f32.gmra.mrb[0].mxu0 %v5150
        %v5218 = vpop.f32.mrb[0].mxu0
        %v5219 = vadd.f32 %v1090, %v5218
        %v5220 = vpop.f32.mrb[0].mxu0
        %5221 = vdwg.mxu0
        %v5222 = vadd.f32 %v5059, %v5219
        %v5223 = vsel %vm977, %v5222, 0.0
        %5224 = vadd.xlane.f32.xlu0 %v5223
        %v5225 = vpop.xlane.xlu0 %5224
        %v5226 = vmul.f32 %v5225, %v981
        %v5227 = vsub.f32 %v5222, %v5226
        %v5228 = vmul.f32 %v5227, %v5227
        %v5229 = vsel %vm977, %v5228, 0.0
        %5230 = vadd.xlane.f32.xlu0 %v5229
        %v5231 = vpop.xlane.xlu0 %5230
        %v5232 = vmul.f32 %v5231, %v1176
        %v5233 = vrsqrt.pop %v5232
        %v5234 = vmul.f32 %v5232, %v5233
        %vm5235 = vcmp.eq.f32.partialorder %v5232, inf
        %v5236 = vsel %vm5235, %v5232, %v5234
        %vm5237 = vcmp.eq.f32.partialorder %v5232, 0.0
        %v5238 = vand.u32 %v5232, 2147483648
        %v5239 = vsel %vm5237, %v5238, %v5236
        %v5240 = vmul.f32 %v1189, %v5227
        %v5241 = vadd.f32 %v5239, 1e-06
        %v5242 = vrcp.pop %v5241
        %v5243 = vmul.f32 %v5240, %v5242
        %v5244 = vadd.f32 %v5243, %v1199
        %v5245 = vld [vmem:[%s21] sm:$0xff]
        %v5246 = vld [vmem:[%s21 + $0x8] sm:$0xff]
        %v5247 = vld [vmem:[%s21 + $0x10] sm:$0xff]
        %v5248 = vld [vmem:[%s21 + $0x18] sm:$0xff]
        %v5249 = vld [vmem:[%s22] sm:$0x1]
        %v5251 = vlaneseq
        %v5252 = vshrl.u32 %v5251, 7
        %v5253 = vsub.s32 0, %v5252
        %v5254 = vrot.slane %v5249, %v5253
        %v5257 = vsel %vm977, %v5244, 0
        %5259 = vmatprep.subr.mxu0 0.0
        %5260 = vmatpush1.msra.mxu0 %v5245
        %5261 = vmatprep.subr.mxu0 0.0
        %5262 = vmatpush1.msra.mxu0 %v5246
        %5263 = vmatprep.subr.mxu0 0.0
        %5264 = vmatpush1.msra.mxu0 %v5247
        %5265 = vmatprep.subr.mxu0 0.0
        %5266 = vmatpush1.msra.mxu0 %v5248
        %5267 = vmatprep.subr.mxu0 0.0
        %5268 = vmatpush1.msra.mxu0 0.0
        %5269 = vmatprep.subr.mxu0 0.0
        %5270 = vmatpush1.msra.mxu0 0.0
        %5271 = vmatprep.subr.mxu0 0.0
        %5272 = vmatpush1.msra.mxu0 0.0
        %5273 = vmatprep.subr.mxu0 0.0
        %5274 = vmatpush1.msra.mxu0 0.0
        %5275 = vmatprep.subr.mxu0 0.0
        %5276 = vmatpush1.msra.mxu0 0.0
        %5277 = vmatprep.subr.mxu0 0.0
        %5278 = vmatpush1.msra.mxu0 0.0
        %5279 = vmatprep.subr.mxu0 0.0
        %5280 = vmatpush1.msra.mxu0 0.0
        %5281 = vmatprep.subr.mxu0 0.0
        %5282 = vmatpush1.msra.mxu0 0.0
        %5283 = vmatprep.subr.mxu0 0.0
        %5284 = vmatpush1.msra.mxu0 0.0
        %5285 = vmatprep.subr.mxu0 0.0
        %5286 = vmatpush1.msra.mxu0 0.0
        %5287 = vmatprep.subr.mxu0 0.0
        %5288 = vmatpush1.msra.mxu0 0.0
        %5289 = vmatprep.subr.mxu0 0.0
        %5290 = vmatpush1.msra.mxu0 0.0
        %5291 = vmatprep.subr.mxu0 0.0
        %5292 = vmatpush1.msra.mxu0 0.0
        %5293 = vmatprep.subr.mxu0 0.0
        %5294 = vmatpush1.msra.mxu0 0.0
        %5295 = vmatprep.subr.mxu0 0.0
        %5296 = vmatpush1.msra.mxu0 0.0
        %5297 = vmatprep.subr.mxu0 0.0
        %5298 = vmatpush1.msra.mxu0 0.0
        %5299 = vmatprep.subr.mxu0 0.0
        %5300 = vmatpush1.msra.mxu0 0.0
        %5301 = vmatprep.subr.mxu0 0.0
        %5302 = vmatpush1.msra.mxu0 0.0
        %5303 = vmatprep.subr.mxu0 0.0
        %5304 = vmatpush1.msra.mxu0 0.0
        %5305 = vmatprep.subr.mxu0 0.0
        %5306 = vmatpush1.msra.mxu0 0.0
        %5307 = vmatprep.subr.mxu0 0.0
        %5308 = vmatpush1.msra.mxu0 0.0
        %5309 = vmatprep.subr.mxu0 0.0
        %5310 = vmatpush1.msra.mxu0 0.0
        %5311 = vmatprep.subr.mxu0 0.0
        %5312 = vmatpush1.msra.mxu0 0.0
        %5313 = vmatprep.subr.mxu0 0.0
        %5314 = vmatpush1.msra.mxu0 0.0
        %5315 = vmatprep.subr.mxu0 0.0
        %5316 = vmatpush1.msra.mxu0 0.0
        %5317 = vmatprep.subr.mxu0 0.0
        %5318 = vmatpush1.msra.mxu0 0.0
        %5319 = vmatprep.subr.mxu0 0.0
        %5320 = vmatpush1.msra.mxu0 0.0
        %5321 = vmatprep.subr.mxu0 0.0
        %5322 = vmatpush1.msra.mxu0 0.0
        %5323 = vmatprep.mubr.f32.mxu0 0.0
        %5324 = vmatmul.mubr.f32.gmra.mrb[0].mxu0 %v5257
        %v5325 = vpop.f32.mrb[0].mxu0
        %v5326 = vadd.f32 %v5254, %v5325
        %v5327 = vpop.f32.mrb[0].mxu0
        %5328 = vdwg.mxu0
        %5329 = vmax.xlane.f32.xlu0 %v5326
        %v5330 = vpop.xlane.xlu0 %5329
        %v5331 = vsub.f32 %v5326, %v5330
        %v5332 = vmul.f32 %v5331, 1.442695
        %v5333 = vpow.pop %v5332
        %5334 = vadd.xlane.f32.xlu0 %v5333
        %v5335 = vpop.xlane.xlu0 %5334
        %v5336 = vlog2.pop %v5335
        %v5337 = vmul.f32 %v5336, 0.6931472
        %v5338 = vadd.f32 %v5337, %v5330
        %v5339 = vsub.f32 %v5326, %v5338
        %5340 = vst [vmem:[%s934] sm:$0xff] %v5339
        %s5341 = sand.u32 %s554, 1
        %s5342 = scalar_lea.sflag [#allocation4], %s5341
        %s5343 = sand.u32 %s554, 1
        %s5344 = smul.addr %s5343, 8
        %s5345 = scalar_lea.vmem [#allocation24], %s5344
        // Predicated region
        $region169: #{tpu_custom_call.1} parent=111 // pred_check
          %p5346 = pneg %p564
        $region170: #{tpu_custom_call.1} parent=111 // pred_check_branch
          %5348 = sbr.rel (%p5346) target = $region172
        $region171: #{tpu_custom_call.1} parent=111 // pred_region
          %s5350 = ssub.s32 128, 128
          %5351 = vsyncadd %s5342, %s5350
          %s5352 = smul.addr %s48, 128
          %s5353 = scalar_lea.hbm %s23, %s5352
          %s5355 = sshll.u32 %s5345, 4
          %s5356 = int_to_ptr.vmem [resolvable:$true] %s5355
          %5358 = dma.vmem_to_hbm [thread:$0]  %s5356, 128, %s5353, %s5342
        $region172: #{tpu_custom_call.1} parent=111 // pred_fallthru
          _
      $region112: #{tpu_custom_call.1} parent=5 // pred_fallthru
        _
      %p5359 = scmp.le.s32.totalorder 2, %s43
      // Predicated region
      $region173: #{tpu_custom_call.1} parent=5 // pred_check
        %p5360 = pneg %p5359
      $region174: #{tpu_custom_call.1} parent=5 // pred_check_branch
        %5362 = sbr.rel (%p5360) target = $region176
      $region175: #{tpu_custom_call.1} parent=5 // pred_region
        %s5363 = ssub.s32 %s43, 2
        // Predicated region
        $region177: #{tpu_custom_call.1} parent=175 // pred_check
          %p5364 = pneg %p570
        $region178: #{tpu_custom_call.1} parent=175 // pred_check_branch
          %5366 = sbr.rel (%p5364) target = $region180
        $region179: #{tpu_custom_call.1} parent=175 // pred_region
          %s5367 = sand.u32 %s555, 1
          %s5368 = scalar_lea.sflag [#allocation4], %s5367
          %s5369 = sand.u32 %s555, 1
          %s5370 = smul.addr %s5369, 8
          %s5371 = scalar_lea.vmem [#allocation24], %s5370
          %5372 = dma.done %s5368, 128
        $region180: #{tpu_custom_call.1} parent=175 // pred_fallthru
          _
      $region176: #{tpu_custom_call.1} parent=5 // pred_fallthru
        _
    $region6: #{tpu_custom_call.1} parent=1 // loop_footer
      %s47 = sadd.s32 1, %s43
    $region7: #{tpu_custom_call.1} parent=1 // loop_footer_branch
      %42 = sbr.rel target = $region3
    $region8: #{tpu_custom_call.1} parent=1 // loop_exit
      _
    %5373 = vsyncpa [#allocation3], 1
    %s5374 = scalar_lea.sflag [#allocation3], 1
    %5375 = vsyncpa %s5374, 1
    %5376 = vsyncpa [#allocation6], 1
    %s5377 = scalar_lea.sflag [#allocation6], 1
    %5378 = vsyncpa %s5377, 1
    %5379 = vsyncpa [#allocation9], 1
    %5380 = vsyncpa [#allocation14], 1
    %5381 = vsyncpa [#allocation17], 1
    %5382 = vsyncpa [#allocation20], 1
    %5383 = vsyncpa [#allocation23], 1
    %5384 = vsyncpa [#allocation4], 1
    %s5385 = scalar_lea.sflag [#allocation4], 1
    %5386 = vsyncpa %s5385, 1

</llo_original>
